<compile_context>
chip_gen: v5e
topology: v5e:2x2
jax: 0.10.0
libtpu: 0.0.40
codegen_flags: <defaults>
</compile_context>

<pallas_src>
import functools
import math

import jax
import jax.numpy as jnp
from jax.experimental import pallas as pl
from jax.experimental.pallas import tpu as pltpu


_NEG_SLOPE = 0.01                       # nn.LeakyReLU() default
_VMEM_LIMIT = 32 * 1024 * 1024          # explicit scoped-VMEM ceiling (safe on v5e/v6e/v7x)


# ---------------------------------------------------------------------------
# Kernel 1: conv-as-GEMM with fused bias (+ LeakyReLU + BN) epilogue
# ---------------------------------------------------------------------------

def _gemm_kernel(x_ref, w_ref, b_ref, scale_ref, shift_ref, o_ref, *, fuse_act_bn):
    acc = jnp.dot(x_ref[...], w_ref[...], preferred_element_type=jnp.float32)
    acc = acc + b_ref[...]                                  # (1, N) broadcast
    if fuse_act_bn:
        acc = jnp.where(acc > 0, acc, _NEG_SLOPE * acc)     # LeakyReLU
        acc = acc * scale_ref[...] + shift_ref[...]         # inference BatchNorm
    o_ref[...] = acc.astype(o_ref.dtype)


def conv_gemm(x, w, b, scale, shift, *, fuse_act_bn, out_dtype=jnp.bfloat16, tm=512):
    """x:(M,K) bf16, w:(K,N) bf16 -> (M,N) out_dtype (f32 accumulation)."""
    M, K = x.shape
    N = w.shape[1]
    tm = min(tm, M)                     # 512 (mult of 8) or the full M
    grid = (pl.cdiv(M, tm),)            # ragged tail: OOB rows read garbage that is
                                        # never written back -> no pad/slice round trip
    return pl.pallas_call(
        functools.partial(_gemm_kernel, fuse_act_bn=fuse_act_bn),
        out_shape=jax.ShapeDtypeStruct((M, N), out_dtype),
        grid=grid,
        in_specs=[
            pl.BlockSpec((tm, K), lambda i: (i, 0)),
            pl.BlockSpec((K, N), lambda i: (0, 0)),     # weights stay resident
            pl.BlockSpec((1, N), lambda i: (0, 0)),
            pl.BlockSpec((1, N), lambda i: (0, 0)),
            pl.BlockSpec((1, N), lambda i: (0, 0)),
        ],
        out_specs=pl.BlockSpec((tm, N), lambda i: (i, 0)),
        compiler_params=pltpu.CompilerParams(
            dimension_semantics=("parallel",),
            vmem_limit_bytes=_VMEM_LIMIT),
    )(x, w,
      b.reshape(1, N).astype(jnp.float32),
      scale.reshape(1, N).astype(jnp.float32),
      shift.reshape(1, N).astype(jnp.float32))


# ---------------------------------------------------------------------------
# Kernel 2: fused 2x2 max-pool -> LeakyReLU -> BatchNorm
# ---------------------------------------------------------------------------

def _pool_act_bn_kernel(x_ref, scale_ref, shift_ref, o_ref, *, cout):
    # x_ref block: (bm, 2, pw, 2*C); the 2x2 window is (axis 1) x (lane halves).
    a = x_ref[:, 0].astype(jnp.float32)                 # (bm, pw, 2C) even rows
    b = x_ref[:, 1].astype(jnp.float32)                 # (bm, pw, 2C) odd rows
    m = jnp.maximum(a, b)                               # pool over window rows
    m = jnp.maximum(m[:, :, :cout], m[:, :, cout:])     # pool over window cols
    m = jnp.where(m > 0, m, _NEG_SLOPE * m)             # LeakyReLU (after pool)
    m = m * scale_ref[...] + shift_ref[...]             # inference BatchNorm
    o_ref[...] = m.astype(o_ref.dtype)


def maxpool2_act_bn(y, scale, shift, *, out_dtype=jnp.bfloat16,
                    target_block_bytes=2 * 1024 * 1024):
    """y:(B,OH,OW,C) -> (B,OH//2,OW//2,C), fused max_pool2d(2) + LeakyReLU + BN."""
    B, oh, ow, C = y.shape
    ph, pw = oh // 2, ow // 2
    if oh != 2 * ph or ow != 2 * pw:
        y = y[:, :2 * ph, :2 * pw, :]   # PyTorch floor mode drops the odd edge
    # Free row-major reshape: window rows -> axis 1, window cols -> lane halves.
    y = y.reshape(B * ph, 2, pw, 2 * C)
    rows = B * ph
    row_bytes = 2 * pw * 2 * C * y.dtype.itemsize
    bm = max(8, (target_block_bytes // max(row_bytes, 1)) // 8 * 8)
    bm = min(bm, rows)
    out = pl.pallas_call(
        functools.partial(_pool_act_bn_kernel, cout=C),
        out_shape=jax.ShapeDtypeStruct((rows, pw, C), out_dtype),
        grid=(pl.cdiv(rows, bm),),
        in_specs=[
            pl.BlockSpec((bm, 2, pw, 2 * C), lambda i: (i, 0, 0, 0)),
            pl.BlockSpec((1, 1, C), lambda i: (0, 0, 0)),
            pl.BlockSpec((1, 1, C), lambda i: (0, 0, 0)),
        ],
        out_specs=pl.BlockSpec((bm, pw, C), lambda i: (i, 0, 0)),
        compiler_params=pltpu.CompilerParams(
            dimension_semantics=("parallel",),
            vmem_limit_bytes=_VMEM_LIMIT),
    )(y,
      scale.reshape(1, 1, C).astype(jnp.float32),
      shift.reshape(1, 1, C).astype(jnp.float32))
    return out.reshape(B, ph, pw, C)


# ---------------------------------------------------------------------------
# JAX glue: im2col, parameter init, full forward
# ---------------------------------------------------------------------------

def im2col(x_nhwc, k, stride, pad):
    """Extract kxk patches.  Returns (B*OH*OW, k*k*C), OH, OW."""
    # TODO(synk): replace im2col+GEMM with a direct-conv Pallas kernel (weight
    # resident in VMEM, k*k shifted dot-accumulates) to remove the k*k-fold HBM
    # inflation of the patch matrix.
    if pad:
        x_nhwc = jnp.pad(x_nhwc, ((0, 0), (pad, pad), (pad, pad), (0, 0)))
    B, H, W, C = x_nhwc.shape
    oh = (H - k) // stride + 1
    ow = (W - k) // stride + 1
    views = []
    for i in range(k):
        for j in range(k):
            views.append(x_nhwc[:, i:i + stride * oh:stride,
                                 j:j + stride * ow:stride, :])
    p = jnp.stack(views, axis=3)          # (B, oh, ow, k*k, C)
    return p.reshape(B * oh * ow, k * k * C), oh, ow


# (name, kernel, stride, pad, pool)
_CONV_SPECS = [
    ("conv1", 5, 2, 1, False),
    ("conv2", 3, 1, 0, False),
    ("conv3", 3, 1, 1, True),
    ("conv4", 3, 1, 1, True),
    ("conv5", 3, 1, 1, True),
    ("conv6", 3, 1, 1, True),
]
_CONV_CHANNELS = {"conv1": 16, "conv2": 32, "conv3": 64,
                  "conv4": 64, "conv5": 128, "conv6": 64}


def init_params(key, nc, num_classes, in_features):
    params = {}
    cin = nc
    for name, k, _, _, _ in _CONV_SPECS:
        cout = _CONV_CHANNELS[name]
        key, kw_, kb_ = jax.random.split(key, 3)
        fan_in = cin * k * k
        bound = 1.0 / math.sqrt(fan_in)
        # weight layout (k, k, cin, cout) flattened -> matches im2col feature order
        w = jax.random.uniform(kw_, (k, k, cin, cout), jnp.float32, -bound, bound)
        w = w.reshape(k * k * cin, cout)
        b = jax.random.uniform(kb_, (cout,), jnp.float32, -bound, bound)
        gamma = jnp.ones((cout,), jnp.float32)       # BatchNorm2d defaults
        beta = jnp.zeros((cout,), jnp.float32)
        mean = jnp.zeros((cout,), jnp.float32)
        var = jnp.ones((cout,), jnp.float32)
        params[name] = (w, b, gamma, beta, mean, var)
        cin = cout
    key, kw_, kb_ = jax.random.split(key, 3)
    bound = 1.0 / math.sqrt(in_features)
    params["linear"] = (
        jax.random.uniform(kw_, (in_features, num_classes), jnp.float32,
                           -bound, bound),
        jax.random.uniform(kb_, (num_classes,), jnp.float32, -bound, bound),
    )
    return params


def cancer_cnn_forward(x_nchw, params):
    eps = 1e-3
    # NCHW (PyTorch) -> NHWC, bf16 activations (f32 accumulation in kernels).
    x = jnp.transpose(x_nchw, (0, 2, 3, 1)).astype(jnp.bfloat16)
    B = x.shape[0]

    for name, k, stride, pad, pool in _CONV_SPECS:
        w, b, gamma, beta, mean, var = params[name]
        scale = gamma / jnp.sqrt(var + eps)          # inference-mode BatchNorm2d
        shift = beta - mean * scale
        oc = w.shape[1]

        patches, oh, ow = im2col(x, k, stride, pad)
        y = conv_gemm(patches, w.astype(jnp.bfloat16), b, scale, shift,
                      fuse_act_bn=not pool)
        y = y.reshape(B, oh, ow, oc)
        if pool:
            # BasicConv2d order: conv -> maxpool -> LeakyReLU -> BN (fused kernel)
            y = maxpool2_act_bn(y, scale, shift)
        x = y
        # Dropout(p=0.1): identity at inference.

    # PyTorch flattens in NCHW order: x.view(B, -1)
    llw = jnp.transpose(x, (0, 3, 1, 2)).reshape(B, -1).astype(jnp.float32)
    wlin, blin = params["linear"]
    # Final Linear: N=num_classes is tiny (lane-sparse) -> plain XLA dot.
    logits = llw @ wlin + blin
    return logits, llw


def _conv_out(s, k, stride, pad):
    return (s + 2 * pad - k) // stride + 1


def flatten_features(img_size):
    s = img_size
    for _, k, stride, pad, pool in _CONV_SPECS:
        s = _conv_out(s, k, stride, pad)
        if pool:
            s = s // 2
    return 64 * s * s


if __name__ == "__main__":
    # Small shapes consistent with the module (imgSize=67 survives all 4 pools;
    # the original imgSize=299 gives 5184 flatten features as in the spec).
    B, nc, img_size, num_classes = 2, 3, 67, 4

    key = jax.random.PRNGKey(0)
    kx, kp = jax.random.split(key)
    x = jax.random.normal(kx, (B, nc, img_size, img_size), jnp.float32)

    in_features = flatten_features(img_size)
    params = init_params(kp, nc, num_classes, in_features)

    fwd = jax.jit(lambda xx: cancer_cnn_forward(xx, params))
    logits, llw = fwd(x)
    jax.block_until_ready((logits, llw))

    assert logits.shape == (B, num_classes), logits.shape
    assert llw.shape == (B, in_features), llw.shape
    assert bool(jnp.all(jnp.isfinite(logits)))
    print("KERNEL_OK")
</pallas_src>

<mosaic_0001>
module attributes {stable_mosaic.version = 11 : i64} {
  func.func @_gemm_kernel(%arg0: i32, %arg1: memref<512x75xbf16, #tpu.memory_space<vmem>>, %arg2: memref<75x16xbf16, #tpu.memory_space<vmem>>, %arg3: memref<1x16xf32, #tpu.memory_space<vmem>>, %arg4: memref<1x16xf32, #tpu.memory_space<vmem>>, %arg5: memref<1x16xf32, #tpu.memory_space<vmem>>, %arg6: memref<512x16xbf16, #tpu.memory_space<vmem>>) attributes {dimension_semantics = [#tpu.dimension_semantics<parallel>], iteration_bounds = array<i64: 5>, scalar_prefetch = 0 : i64, scratch_operands = 0 : i64, tpu.core_type = #tpu.core_type<tc>, window_params = [{transform_indices = @transform_0, window_bounds = array<i64: 512, 75>}, {pipeline_mode = #tpu.pipeline_mode<synchronous>, transform_indices = @transform_1, window_bounds = array<i64: 75, 16>}, {pipeline_mode = #tpu.pipeline_mode<synchronous>, transform_indices = @transform_2, window_bounds = array<i64: 1, 16>}, {pipeline_mode = #tpu.pipeline_mode<synchronous>, transform_indices = @transform_3, window_bounds = array<i64: 1, 16>}, {pipeline_mode = #tpu.pipeline_mode<synchronous>, transform_indices = @transform_4, window_bounds = array<i64: 1, 16>}, {transform_indices = @transform_5, window_bounds = array<i64: 512, 16>}]} {
    %c0 = arith.constant 0 : index
    %c0_0 = arith.constant 0 : index
    %0 = vector.load %arg1[%c0, %c0_0] : memref<512x75xbf16, #tpu.memory_space<vmem>>, vector<512x75xbf16>
    %c0_1 = arith.constant 0 : index
    %c0_2 = arith.constant 0 : index
    %1 = vector.load %arg2[%c0_1, %c0_2] : memref<75x16xbf16, #tpu.memory_space<vmem>>, vector<75x16xbf16>
    %cst = arith.constant dense<0.000000e+00> : vector<512x16xf32>
    %2 = tpu.matmul %0, %1, %cst {dimension_numbers = #tpu.dot_dimension_numbers<[1], [0], [0], [1], [0, 0, 1, 1], [], []>} : vector<512x75xbf16>, vector<75x16xbf16>, vector<512x16xf32> -> vector<512x16xf32>
    %c0_3 = arith.constant 0 : index
    %c0_4 = arith.constant 0 : index
    %3 = vector.load %arg3[%c0_3, %c0_4] : memref<1x16xf32, #tpu.memory_space<vmem>>, vector<1x16xf32>
    %4 = vector.broadcast %3 : vector<1x16xf32> to vector<512x16xf32>
    %5 = arith.addf %2, %4 : vector<512x16xf32>
    %cst_5 = arith.constant 0.000000e+00 : f32
    %6 = vector.broadcast %cst_5 : f32 to vector<512x16xf32>
    %7 = arith.cmpf ogt, %5, %6 : vector<512x16xf32>
    %cst_6 = arith.constant 0.00999999977 : f32
    %8 = vector.broadcast %cst_6 : f32 to vector<512x16xf32>
    %9 = arith.mulf %8, %5 : vector<512x16xf32>
    %10 = arith.select %7, %5, %9 : vector<512x16xi1>, vector<512x16xf32>
    %c0_7 = arith.constant 0 : index
    %c0_8 = arith.constant 0 : index
    %11 = vector.load %arg4[%c0_7, %c0_8] : memref<1x16xf32, #tpu.memory_space<vmem>>, vector<1x16xf32>
    %12 = vector.broadcast %11 : vector<1x16xf32> to vector<512x16xf32>
    %13 = arith.mulf %10, %12 : vector<512x16xf32>
    %c0_9 = arith.constant 0 : index
    %c0_10 = arith.constant 0 : index
    %14 = vector.load %arg5[%c0_9, %c0_10] : memref<1x16xf32, #tpu.memory_space<vmem>>, vector<1x16xf32>
    %15 = vector.broadcast %14 : vector<1x16xf32> to vector<512x16xf32>
    %16 = arith.addf %13, %15 : vector<512x16xf32>
    %17 = arith.truncf %16 : vector<512x16xf32> to vector<512x16xbf16>
    %c0_11 = arith.constant 0 : index
    %c0_12 = arith.constant 0 : index
    %18 = vector.load %arg6[%c0_11, %c0_12] : memref<512x16xbf16, #tpu.memory_space<vmem>>, vector<512x16xbf16>
    tpu.vector_store %arg6[%c0_11, %c0_12], %17 {strides = array<i32>} : memref<512x16xbf16, #tpu.memory_space<vmem>>, vector<512x16xbf16>,
    return
  }
  func.func @transform_0(%arg0: i32) -> (i32, i32) {
    %c0_i32 = arith.constant 0 : i32
    %c0_i32_0 = arith.constant 0 : i32
    return %arg0, %c0_i32 : i32, i32
  }
  func.func @transform_1(%arg0: i32) -> (i32, i32) {
    %c0_i32 = arith.constant 0 : i32
    %c0_i32_0 = arith.constant 0 : i32
    %c0_i32_1 = arith.constant 0 : i32
    return %c0_i32, %c0_i32_0 : i32, i32
  }
  func.func @transform_2(%arg0: i32) -> (i32, i32) {
    %c0_i32 = arith.constant 0 : i32
    %c0_i32_0 = arith.constant 0 : i32
    %c0_i32_1 = arith.constant 0 : i32
    return %c0_i32, %c0_i32_0 : i32, i32
  }
  func.func @transform_3(%arg0: i32) -> (i32, i32) {
    %c0_i32 = arith.constant 0 : i32
    %c0_i32_0 = arith.constant 0 : i32
    %c0_i32_1 = arith.constant 0 : i32
    return %c0_i32, %c0_i32_0 : i32, i32
  }
  func.func @transform_4(%arg0: i32) -> (i32, i32) {
    %c0_i32 = arith.constant 0 : i32
    %c0_i32_0 = arith.constant 0 : i32
    %c0_i32_1 = arith.constant 0 : i32
    return %c0_i32, %c0_i32_0 : i32, i32
  }
  func.func @transform_5(%arg0: i32) -> (i32, i32) {
    %c0_i32 = arith.constant 0 : i32
    %c0_i32_0 = arith.constant 0 : i32
    return %arg0, %c0_i32 : i32, i32
  }
}

module attributes {stable_mosaic.version = 11 : i64} {
  func.func @_gemm_kernel(%arg0: i32, %arg1: memref<512x144xbf16, #tpu.memory_space<vmem>>, %arg2: memref<144x32xbf16, #tpu.memory_space<vmem>>, %arg3: memref<1x32xf32, #tpu.memory_space<vmem>>, %arg4: memref<1x32xf32, #tpu.memory_space<vmem>>, %arg5: memref<1x32xf32, #tpu.memory_space<vmem>>, %arg6: memref<512x32xbf16, #tpu.memory_space<vmem>>) attributes {dimension_semantics = [#tpu.dimension_semantics<parallel>], iteration_bounds = array<i64: 4>, scalar_prefetch = 0 : i64, scratch_operands = 0 : i64, tpu.core_type = #tpu.core_type<tc>, window_params = [{transform_indices = @transform_0, window_bounds = array<i64: 512, 144>}, {pipeline_mode = #tpu.pipeline_mode<synchronous>, transform_indices = @transform_1, window_bounds = array<i64: 144, 32>}, {pipeline_mode = #tpu.pipeline_mode<synchronous>, transform_indices = @transform_2, window_bounds = array<i64: 1, 32>}, {pipeline_mode = #tpu.pipeline_mode<synchronous>, transform_indices = @transform_3, window_bounds = array<i64: 1, 32>}, {pipeline_mode = #tpu.pipeline_mode<synchronous>, transform_indices = @transform_4, window_bounds = array<i64: 1, 32>}, {transform_indices = @transform_5, window_bounds = array<i64: 512, 32>}]} {
    %c0 = arith.constant 0 : index
    %c0_0 = arith.constant 0 : index
    %0 = vector.load %arg1[%c0, %c0_0] : memref<512x144xbf16, #tpu.memory_space<vmem>>, vector<512x144xbf16>
    %c0_1 = arith.constant 0 : index
    %c0_2 = arith.constant 0 : index
    %1 = vector.load %arg2[%c0_1, %c0_2] : memref<144x32xbf16, #tpu.memory_space<vmem>>, vector<144x32xbf16>
    %cst = arith.constant dense<0.000000e+00> : vector<512x32xf32>
    %2 = tpu.matmul %0, %1, %cst {dimension_numbers = #tpu.dot_dimension_numbers<[1], [0], [0], [1], [0, 0, 1, 1], [], []>} : vector<512x144xbf16>, vector<144x32xbf16>, vector<512x32xf32> -> vector<512x32xf32>
    %c0_3 = arith.constant 0 : index
    %c0_4 = arith.constant 0 : index
    %3 = vector.load %arg3[%c0_3, %c0_4] : memref<1x32xf32, #tpu.memory_space<vmem>>, vector<1x32xf32>
    %4 = vector.broadcast %3 : vector<1x32xf32> to vector<512x32xf32>
    %5 = arith.addf %2, %4 : vector<512x32xf32>
    %cst_5 = arith.constant 0.000000e+00 : f32
    %6 = vector.broadcast %cst_5 : f32 to vector<512x32xf32>
    %7 = arith.cmpf ogt, %5, %6 : vector<512x32xf32>
    %cst_6 = arith.constant 0.00999999977 : f32
    %8 = vector.broadcast %cst_6 : f32 to vector<512x32xf32>
    %9 = arith.mulf %8, %5 : vector<512x32xf32>
    %10 = arith.select %7, %5, %9 : vector<512x32xi1>, vector<512x32xf32>
    %c0_7 = arith.constant 0 : index
    %c0_8 = arith.constant 0 : index
    %11 = vector.load %arg4[%c0_7, %c0_8] : memref<1x32xf32, #tpu.memory_space<vmem>>, vector<1x32xf32>
    %12 = vector.broadcast %11 : vector<1x32xf32> to vector<512x32xf32>
    %13 = arith.mulf %10, %12 : vector<512x32xf32>
    %c0_9 = arith.constant 0 : index
    %c0_10 = arith.constant 0 : index
    %14 = vector.load %arg5[%c0_9, %c0_10] : memref<1x32xf32, #tpu.memory_space<vmem>>, vector<1x32xf32>
    %15 = vector.broadcast %14 : vector<1x32xf32> to vector<512x32xf32>
    %16 = arith.addf %13, %15 : vector<512x32xf32>
    %17 = arith.truncf %16 : vector<512x32xf32> to vector<512x32xbf16>
    %c0_11 = arith.constant 0 : index
    %c0_12 = arith.constant 0 : index
    %18 = vector.load %arg6[%c0_11, %c0_12] : memref<512x32xbf16, #tpu.memory_space<vmem>>, vector<512x32xbf16>
    tpu.vector_store %arg6[%c0_11, %c0_12], %17 {strides = array<i32>} : memref<512x32xbf16, #tpu.memory_space<vmem>>, vector<512x32xbf16>,
    return
  }
  func.func @transform_0(%arg0: i32) -> (i32, i32) {
    %c0_i32 = arith.constant 0 : i32
    %c0_i32_0 = arith.constant 0 : i32
    return %arg0, %c0_i32 : i32, i32
  }
  func.func @transform_1(%arg0: i32) -> (i32, i32) {
    %c0_i32 = arith.constant 0 : i32
    %c0_i32_0 = arith.constant 0 : i32
    %c0_i32_1 = arith.constant 0 : i32
    return %c0_i32, %c0_i32_0 : i32, i32
  }
  func.func @transform_2(%arg0: i32) -> (i32, i32) {
    %c0_i32 = arith.constant 0 : i32
    %c0_i32_0 = arith.constant 0 : i32
    %c0_i32_1 = arith.constant 0 : i32
    return %c0_i32, %c0_i32_0 : i32, i32
  }
  func.func @transform_3(%arg0: i32) -> (i32, i32) {
    %c0_i32 = arith.constant 0 : i32
    %c0_i32_0 = arith.constant 0 : i32
    %c0_i32_1 = arith.constant 0 : i32
    return %c0_i32, %c0_i32_0 : i32, i32
  }
  func.func @transform_4(%arg0: i32) -> (i32, i32) {
    %c0_i32 = arith.constant 0 : i32
    %c0_i32_0 = arith.constant 0 : i32
    %c0_i32_1 = arith.constant 0 : i32
    return %c0_i32, %c0_i32_0 : i32, i32
  }
  func.func @transform_5(%arg0: i32) -> (i32, i32) {
    %c0_i32 = arith.constant 0 : i32
    %c0_i32_0 = arith.constant 0 : i32
    return %arg0, %c0_i32 : i32, i32
  }
}

module attributes {stable_mosaic.version = 11 : i64} {
  func.func @_gemm_kernel(%arg0: i32, %arg1: memref<512x288xbf16, #tpu.memory_space<vmem>>, %arg2: memref<288x64xbf16, #tpu.memory_space<vmem>>, %arg3: memref<1x64xf32, #tpu.memory_space<vmem>>, %arg4: memref<1x64xf32, #tpu.memory_space<vmem>>, %arg5: memref<1x64xf32, #tpu.memory_space<vmem>>, %arg6: memref<512x64xbf16, #tpu.memory_space<vmem>>) attributes {dimension_semantics = [#tpu.dimension_semantics<parallel>], iteration_bounds = array<i64: 4>, scalar_prefetch = 0 : i64, scratch_operands = 0 : i64, tpu.core_type = #tpu.core_type<tc>, window_params = [{transform_indices = @transform_0, window_bounds = array<i64: 512, 288>}, {pipeline_mode = #tpu.pipeline_mode<synchronous>, transform_indices = @transform_1, window_bounds = array<i64: 288, 64>}, {pipeline_mode = #tpu.pipeline_mode<synchronous>, transform_indices = @transform_2, window_bounds = array<i64: 1, 64>}, {pipeline_mode = #tpu.pipeline_mode<synchronous>, transform_indices = @transform_3, window_bounds = array<i64: 1, 64>}, {pipeline_mode = #tpu.pipeline_mode<synchronous>, transform_indices = @transform_4, window_bounds = array<i64: 1, 64>}, {transform_indices = @transform_5, window_bounds = array<i64: 512, 64>}]} {
    %c0 = arith.constant 0 : index
    %c0_0 = arith.constant 0 : index
    %0 = vector.load %arg1[%c0, %c0_0] : memref<512x288xbf16, #tpu.memory_space<vmem>>, vector<512x288xbf16>
    %c0_1 = arith.constant 0 : index
    %c0_2 = arith.constant 0 : index
    %1 = vector.load %arg2[%c0_1, %c0_2] : memref<288x64xbf16, #tpu.memory_space<vmem>>, vector<288x64xbf16>
    %cst = arith.constant dense<0.000000e+00> : vector<512x64xf32>
    %2 = tpu.matmul %0, %1, %cst {dimension_numbers = #tpu.dot_dimension_numbers<[1], [0], [0], [1], [0, 0, 1, 1], [], []>} : vector<512x288xbf16>, vector<288x64xbf16>, vector<512x64xf32> -> vector<512x64xf32>
    %c0_3 = arith.constant 0 : index
    %c0_4 = arith.constant 0 : index
    %3 = vector.load %arg3[%c0_3, %c0_4] : memref<1x64xf32, #tpu.memory_space<vmem>>, vector<1x64xf32>
    %4 = vector.broadcast %3 : vector<1x64xf32> to vector<512x64xf32>
    %5 = arith.addf %2, %4 : vector<512x64xf32>
    %6 = arith.truncf %5 : vector<512x64xf32> to vector<512x64xbf16>
    %c0_5 = arith.constant 0 : index
    %c0_6 = arith.constant 0 : index
    %7 = vector.load %arg6[%c0_5, %c0_6] : memref<512x64xbf16, #tpu.memory_space<vmem>>, vector<512x64xbf16>
    tpu.vector_store %arg6[%c0_5, %c0_6], %6 {strides = array<i32>} : memref<512x64xbf16, #tpu.memory_space<vmem>>, vector<512x64xbf16>,
    return
  }
  func.func @transform_0(%arg0: i32) -> (i32, i32) {
    %c0_i32 = arith.constant 0 : i32
    %c0_i32_0 = arith.constant 0 : i32
    return %arg0, %c0_i32 : i32, i32
  }
  func.func @transform_1(%arg0: i32) -> (i32, i32) {
    %c0_i32 = arith.constant 0 : i32
    %c0_i32_0 = arith.constant 0 : i32
    %c0_i32_1 = arith.constant 0 : i32
    return %c0_i32, %c0_i32_0 : i32, i32
  }
  func.func @transform_2(%arg0: i32) -> (i32, i32) {
    %c0_i32 = arith.constant 0 : i32
    %c0_i32_0 = arith.constant 0 : i32
    %c0_i32_1 = arith.constant 0 : i32
    return %c0_i32, %c0_i32_0 : i32, i32
  }
  func.func @transform_3(%arg0: i32) -> (i32, i32) {
    %c0_i32 = arith.constant 0 : i32
    %c0_i32_0 = arith.constant 0 : i32
    %c0_i32_1 = arith.constant 0 : i32
    return %c0_i32, %c0_i32_0 : i32, i32
  }
  func.func @transform_4(%arg0: i32) -> (i32, i32) {
    %c0_i32 = arith.constant 0 : i32
    %c0_i32_0 = arith.constant 0 : i32
    %c0_i32_1 = arith.constant 0 : i32
    return %c0_i32, %c0_i32_0 : i32, i32
  }
  func.func @transform_5(%arg0: i32) -> (i32, i32) {
    %c0_i32 = arith.constant 0 : i32
    %c0_i32_0 = arith.constant 0 : i32
    return %arg0, %c0_i32 : i32, i32
  }
}

module attributes {stable_mosaic.version = 11 : i64} {
  func.func @_pool_act_bn_kernel(%arg0: i32, %arg1: memref<30x2x15x128xbf16, #tpu.memory_space<vmem>>, %arg2: memref<1x1x64xf32, #tpu.memory_space<vmem>>, %arg3: memref<1x1x64xf32, #tpu.memory_space<vmem>>, %arg4: memref<30x15x64xbf16, #tpu.memory_space<vmem>>) attributes {dimension_semantics = [#tpu.dimension_semantics<parallel>], iteration_bounds = array<i64: 1>, scalar_prefetch = 0 : i64, scratch_operands = 0 : i64, tpu.core_type = #tpu.core_type<tc>, window_params = [{transform_indices = @transform_0, window_bounds = array<i64: 30, 2, 15, 128>}, {pipeline_mode = #tpu.pipeline_mode<synchronous>, transform_indices = @transform_1, window_bounds = array<i64: 1, 1, 64>}, {pipeline_mode = #tpu.pipeline_mode<synchronous>, transform_indices = @transform_2, window_bounds = array<i64: 1, 1, 64>}, {transform_indices = @transform_3, window_bounds = array<i64: 30, 15, 64>}]} {
    %c0 = arith.constant 0 : index
    %c0_0 = arith.constant 0 : index
    %c0_1 = arith.constant 0 : index
    %c0_2 = arith.constant 0 : index
    %0 = vector.load %arg1[%c0, %c0_0, %c0_1, %c0_2] : memref<30x2x15x128xbf16, #tpu.memory_space<vmem>>, vector<30x1x15x128xbf16>
    %1 = vector.shape_cast %0 : vector<30x1x15x128xbf16> to vector<30x15x128xbf16>
    %2 = arith.extf %1 : vector<30x15x128xbf16> to vector<30x15x128xf32>
    %c0_3 = arith.constant 0 : index
    %c1 = arith.constant 1 : index
    %c0_4 = arith.constant 0 : index
    %c0_5 = arith.constant 0 : index
    %3 = vector.load %arg1[%c0_3, %c1, %c0_4, %c0_5] : memref<30x2x15x128xbf16, #tpu.memory_space<vmem>>, vector<30x1x15x128xbf16>
    %4 = vector.shape_cast %3 : vector<30x1x15x128xbf16> to vector<30x15x128xbf16>
    %5 = arith.extf %4 : vector<30x15x128xbf16> to vector<30x15x128xf32>
    %6 = arith.maximumf %2, %5 : vector<30x15x128xf32>
    %7 = vector.extract_strided_slice %6 {offsets = [0, 0, 0], sizes = [30, 15, 64], strides = [1, 1, 1]} : vector<30x15x128xf32> to vector<30x15x64xf32>
    %8 = vector.extract_strided_slice %6 {offsets = [0, 0, 64], sizes = [30, 15, 64], strides = [1, 1, 1]} : vector<30x15x128xf32> to vector<30x15x64xf32>
    %9 = arith.maximumf %7, %8 : vector<30x15x64xf32>
    %cst = arith.constant 0.000000e+00 : f32
    %10 = vector.broadcast %cst : f32 to vector<30x15x64xf32>
    %11 = arith.cmpf ogt, %9, %10 : vector<30x15x64xf32>
    %cst_6 = arith.constant 0.00999999977 : f32
    %12 = vector.broadcast %cst_6 : f32 to vector<30x15x64xf32>
    %13 = arith.mulf %12, %9 : vector<30x15x64xf32>
    %14 = arith.select %11, %9, %13 : vector<30x15x64xi1>, vector<30x15x64xf32>
    %c0_7 = arith.constant 0 : index
    %c0_8 = arith.constant 0 : index
    %c0_9 = arith.constant 0 : index
    %15 = vector.load %arg2[%c0_7, %c0_8, %c0_9] : memref<1x1x64xf32, #tpu.memory_space<vmem>>, vector<1x1x64xf32>
    %16 = vector.broadcast %15 : vector<1x1x64xf32> to vector<30x15x64xf32>
    %17 = arith.mulf %14, %16 : vector<30x15x64xf32>
    %c0_10 = arith.constant 0 : index
    %c0_11 = arith.constant 0 : index
    %c0_12 = arith.constant 0 : index
    %18 = vector.load %arg3[%c0_10, %c0_11, %c0_12] : memref<1x1x64xf32, #tpu.memory_space<vmem>>, vector<1x1x64xf32>
    %19 = vector.broadcast %18 : vector<1x1x64xf32> to vector<30x15x64xf32>
    %20 = arith.addf %17, %19 : vector<30x15x64xf32>
    %21 = arith.truncf %20 : vector<30x15x64xf32> to vector<30x15x64xbf16>
    %c0_13 = arith.constant 0 : index
    %c0_14 = arith.constant 0 : index
    %c0_15 = arith.constant 0 : index
    %22 = vector.load %arg4[%c0_13, %c0_14, %c0_15] : memref<30x15x64xbf16, #tpu.memory_space<vmem>>, vector<30x15x64xbf16>
    tpu.vector_store %arg4[%c0_13, %c0_14, %c0_15], %21 {strides = array<i32>} : memref<30x15x64xbf16, #tpu.memory_space<vmem>>, vector<30x15x64xbf16>,
    return
  }
  func.func @transform_0(%arg0: i32) -> (i32, i32, i32, i32) {
    %c0_i32 = arith.constant 0 : i32
    %c0_i32_0 = arith.constant 0 : i32
    %c0_i32_1 = arith.constant 0 : i32
    %c0_i32_2 = arith.constant 0 : i32
    return %arg0, %c0_i32, %c0_i32_0, %c0_i32_1 : i32, i32, i32, i32
  }
  func.func @transform_1(%arg0: i32) -> (i32, i32, i32) {
    %c0_i32 = arith.constant 0 : i32
    %c0_i32_0 = arith.constant 0 : i32
    %c0_i32_1 = arith.constant 0 : i32
    %c0_i32_2 = arith.constant 0 : i32
    return %c0_i32, %c0_i32_0, %c0_i32_1 : i32, i32, i32
  }
  func.func @transform_2(%arg0: i32) -> (i32, i32, i32) {
    %c0_i32 = arith.constant 0 : i32
    %c0_i32_0 = arith.constant 0 : i32
    %c0_i32_1 = arith.constant 0 : i32
    %c0_i32_2 = arith.constant 0 : i32
    return %c0_i32, %c0_i32_0, %c0_i32_1 : i32, i32, i32
  }
  func.func @transform_3(%arg0: i32) -> (i32, i32, i32) {
    %c0_i32 = arith.constant 0 : i32
    %c0_i32_0 = arith.constant 0 : i32
    %c0_i32_1 = arith.constant 0 : i32
    return %arg0, %c0_i32, %c0_i32_0 : i32, i32, i32
  }
}

module attributes {stable_mosaic.version = 11 : i64} {
  func.func @_gemm_kernel(%arg0: i32, %arg1: memref<450x576xbf16, #tpu.memory_space<vmem>>, %arg2: memref<576x64xbf16, #tpu.memory_space<vmem>>, %arg3: memref<1x64xf32, #tpu.memory_space<vmem>>, %arg4: memref<1x64xf32, #tpu.memory_space<vmem>>, %arg5: memref<1x64xf32, #tpu.memory_space<vmem>>, %arg6: memref<450x64xbf16, #tpu.memory_space<vmem>>) attributes {dimension_semantics = [#tpu.dimension_semantics<parallel>], iteration_bounds = array<i64: 1>, scalar_prefetch = 0 : i64, scratch_operands = 0 : i64, tpu.core_type = #tpu.core_type<tc>, window_params = [{transform_indices = @transform_0, window_bounds = array<i64: 450, 576>}, {pipeline_mode = #tpu.pipeline_mode<synchronous>, transform_indices = @transform_1, window_bounds = array<i64: 576, 64>}, {pipeline_mode = #tpu.pipeline_mode<synchronous>, transform_indices = @transform_2, window_bounds = array<i64: 1, 64>}, {pipeline_mode = #tpu.pipeline_mode<synchronous>, transform_indices = @transform_3, window_bounds = array<i64: 1, 64>}, {pipeline_mode = #tpu.pipeline_mode<synchronous>, transform_indices = @transform_4, window_bounds = array<i64: 1, 64>}, {transform_indices = @transform_5, window_bounds = array<i64: 450, 64>}]} {
    %c0 = arith.constant 0 : index
    %c0_0 = arith.constant 0 : index
    %0 = vector.load %arg1[%c0, %c0_0] : memref<450x576xbf16, #tpu.memory_space<vmem>>, vector<450x576xbf16>
    %c0_1 = arith.constant 0 : index
    %c0_2 = arith.constant 0 : index
    %1 = vector.load %arg2[%c0_1, %c0_2] : memref<576x64xbf16, #tpu.memory_space<vmem>>, vector<576x64xbf16>
    %cst = arith.constant dense<0.000000e+00> : vector<450x64xf32>
    %2 = tpu.matmul %0, %1, %cst {dimension_numbers = #tpu.dot_dimension_numbers<[1], [0], [0], [1], [0, 0, 1, 1], [], []>} : vector<450x576xbf16>, vector<576x64xbf16>, vector<450x64xf32> -> vector<450x64xf32>
    %c0_3 = arith.constant 0 : index
    %c0_4 = arith.constant 0 : index
    %3 = vector.load %arg3[%c0_3, %c0_4] : memref<1x64xf32, #tpu.memory_space<vmem>>, vector<1x64xf32>
    %4 = vector.broadcast %3 : vector<1x64xf32> to vector<450x64xf32>
    %5 = arith.addf %2, %4 : vector<450x64xf32>
    %6 = arith.truncf %5 : vector<450x64xf32> to vector<450x64xbf16>
    %c0_5 = arith.constant 0 : index
    %c0_6 = arith.constant 0 : index
    %7 = vector.load %arg6[%c0_5, %c0_6] : memref<450x64xbf16, #tpu.memory_space<vmem>>, vector<450x64xbf16>
    tpu.vector_store %arg6[%c0_5, %c0_6], %6 {strides = array<i32>} : memref<450x64xbf16, #tpu.memory_space<vmem>>, vector<450x64xbf16>,
    return
  }
  func.func @transform_0(%arg0: i32) -> (i32, i32) {
    %c0_i32 = arith.constant 0 : i32
    %c0_i32_0 = arith.constant 0 : i32
    return %arg0, %c0_i32 : i32, i32
  }
  func.func @transform_1(%arg0: i32) -> (i32, i32) {
    %c0_i32 = arith.constant 0 : i32
    %c0_i32_0 = arith.constant 0 : i32
    %c0_i32_1 = arith.constant 0 : i32
    return %c0_i32, %c0_i32_0 : i32, i32
  }
  func.func @transform_2(%arg0: i32) -> (i32, i32) {
    %c0_i32 = arith.constant 0 : i32
    %c0_i32_0 = arith.constant 0 : i32
    %c0_i32_1 = arith.constant 0 : i32
    return %c0_i32, %c0_i32_0 : i32, i32
  }
  func.func @transform_3(%arg0: i32) -> (i32, i32) {
    %c0_i32 = arith.constant 0 : i32
    %c0_i32_0 = arith.constant 0 : i32
    %c0_i32_1 = arith.constant 0 : i32
    return %c0_i32, %c0_i32_0 : i32, i32
  }
  func.func @transform_4(%arg0: i32) -> (i32, i32) {
    %c0_i32 = arith.constant 0 : i32
    %c0_i32_0 = arith.constant 0 : i32
    %c0_i32_1 = arith.constant 0 : i32
    return %c0_i32, %c0_i32_0 : i32, i32
  }
  func.func @transform_5(%arg0: i32) -> (i32, i32) {
    %c0_i32 = arith.constant 0 : i32
    %c0_i32_0 = arith.constant 0 : i32
    return %arg0, %c0_i32 : i32, i32
  }
}

module attributes {stable_mosaic.version = 11 : i64} {
  func.func @_pool_act_bn_kernel(%arg0: i32, %arg1: memref<14x2x7x128xbf16, #tpu.memory_space<vmem>>, %arg2: memref<1x1x64xf32, #tpu.memory_space<vmem>>, %arg3: memref<1x1x64xf32, #tpu.memory_space<vmem>>, %arg4: memref<14x7x64xbf16, #tpu.memory_space<vmem>>) attributes {dimension_semantics = [#tpu.dimension_semantics<parallel>], iteration_bounds = array<i64: 1>, scalar_prefetch = 0 : i64, scratch_operands = 0 : i64, tpu.core_type = #tpu.core_type<tc>, window_params = [{transform_indices = @transform_0, window_bounds = array<i64: 14, 2, 7, 128>}, {pipeline_mode = #tpu.pipeline_mode<synchronous>, transform_indices = @transform_1, window_bounds = array<i64: 1, 1, 64>}, {pipeline_mode = #tpu.pipeline_mode<synchronous>, transform_indices = @transform_2, window_bounds = array<i64: 1, 1, 64>}, {transform_indices = @transform_3, window_bounds = array<i64: 14, 7, 64>}]} {
    %c0 = arith.constant 0 : index
    %c0_0 = arith.constant 0 : index
    %c0_1 = arith.constant 0 : index
    %c0_2 = arith.constant 0 : index
    %0 = vector.load %arg1[%c0, %c0_0, %c0_1, %c0_2] : memref<14x2x7x128xbf16, #tpu.memory_space<vmem>>, vector<14x1x7x128xbf16>
    %1 = vector.shape_cast %0 : vector<14x1x7x128xbf16> to vector<14x7x128xbf16>
    %2 = arith.extf %1 : vector<14x7x128xbf16> to vector<14x7x128xf32>
    %c0_3 = arith.constant 0 : index
    %c1 = arith.constant 1 : index
    %c0_4 = arith.constant 0 : index
    %c0_5 = arith.constant 0 : index
    %3 = vector.load %arg1[%c0_3, %c1, %c0_4, %c0_5] : memref<14x2x7x128xbf16, #tpu.memory_space<vmem>>, vector<14x1x7x128xbf16>
    %4 = vector.shape_cast %3 : vector<14x1x7x128xbf16> to vector<14x7x128xbf16>
    %5 = arith.extf %4 : vector<14x7x128xbf16> to vector<14x7x128xf32>
    %6 = arith.maximumf %2, %5 : vector<14x7x128xf32>
    %7 = vector.extract_strided_slice %6 {offsets = [0, 0, 0], sizes = [14, 7, 64], strides = [1, 1, 1]} : vector<14x7x128xf32> to vector<14x7x64xf32>
    %8 = vector.extract_strided_slice %6 {offsets = [0, 0, 64], sizes = [14, 7, 64], strides = [1, 1, 1]} : vector<14x7x128xf32> to vector<14x7x64xf32>
    %9 = arith.maximumf %7, %8 : vector<14x7x64xf32>
    %cst = arith.constant 0.000000e+00 : f32
    %10 = vector.broadcast %cst : f32 to vector<14x7x64xf32>
    %11 = arith.cmpf ogt, %9, %10 : vector<14x7x64xf32>
    %cst_6 = arith.constant 0.00999999977 : f32
    %12 = vector.broadcast %cst_6 : f32 to vector<14x7x64xf32>
    %13 = arith.mulf %12, %9 : vector<14x7x64xf32>
    %14 = arith.select %11, %9, %13 : vector<14x7x64xi1>, vector<14x7x64xf32>
    %c0_7 = arith.constant 0 : index
    %c0_8 = arith.constant 0 : index
    %c0_9 = arith.constant 0 : index
    %15 = vector.load %arg2[%c0_7, %c0_8, %c0_9] : memref<1x1x64xf32, #tpu.memory_space<vmem>>, vector<1x1x64xf32>
    %16 = vector.broadcast %15 : vector<1x1x64xf32> to vector<14x7x64xf32>
    %17 = arith.mulf %14, %16 : vector<14x7x64xf32>
    %c0_10 = arith.constant 0 : index
    %c0_11 = arith.constant 0 : index
    %c0_12 = arith.constant 0 : index
    %18 = vector.load %arg3[%c0_10, %c0_11, %c0_12] : memref<1x1x64xf32, #tpu.memory_space<vmem>>, vector<1x1x64xf32>
    %19 = vector.broadcast %18 : vector<1x1x64xf32> to vector<14x7x64xf32>
    %20 = arith.addf %17, %19 : vector<14x7x64xf32>
    %21 = arith.truncf %20 : vector<14x7x64xf32> to vector<14x7x64xbf16>
    %c0_13 = arith.constant 0 : index
    %c0_14 = arith.constant 0 : index
    %c0_15 = arith.constant 0 : index
    %22 = vector.load %arg4[%c0_13, %c0_14, %c0_15] : memref<14x7x64xbf16, #tpu.memory_space<vmem>>, vector<14x7x64xbf16>
    tpu.vector_store %arg4[%c0_13, %c0_14, %c0_15], %21 {strides = array<i32>} : memref<14x7x64xbf16, #tpu.memory_space<vmem>>, vector<14x7x64xbf16>,
    return
  }
  func.func @transform_0(%arg0: i32) -> (i32, i32, i32, i32) {
    %c0_i32 = arith.constant 0 : i32
    %c0_i32_0 = arith.constant 0 : i32
    %c0_i32_1 = arith.constant 0 : i32
    %c0_i32_2 = arith.constant 0 : i32
    return %arg0, %c0_i32, %c0_i32_0, %c0_i32_1 : i32, i32, i32, i32
  }
  func.func @transform_1(%arg0: i32) -> (i32, i32, i32) {
    %c0_i32 = arith.constant 0 : i32
    %c0_i32_0 = arith.constant 0 : i32
    %c0_i32_1 = arith.constant 0 : i32
    %c0_i32_2 = arith.constant 0 : i32
    return %c0_i32, %c0_i32_0, %c0_i32_1 : i32, i32, i32
  }
  func.func @transform_2(%arg0: i32) -> (i32, i32, i32) {
    %c0_i32 = arith.constant 0 : i32
    %c0_i32_0 = arith.constant 0 : i32
    %c0_i32_1 = arith.constant 0 : i32
    %c0_i32_2 = arith.constant 0 : i32
    return %c0_i32, %c0_i32_0, %c0_i32_1 : i32, i32, i32
  }
  func.func @transform_3(%arg0: i32) -> (i32, i32, i32) {
    %c0_i32 = arith.constant 0 : i32
    %c0_i32_0 = arith.constant 0 : i32
    %c0_i32_1 = arith.constant 0 : i32
    return %arg0, %c0_i32, %c0_i32_0 : i32, i32, i32
  }
}

module attributes {stable_mosaic.version = 11 : i64} {
  func.func @_gemm_kernel(%arg0: i32, %arg1: memref<98x576xbf16, #tpu.memory_space<vmem>>, %arg2: memref<576x128xbf16, #tpu.memory_space<vmem>>, %arg3: memref<1x128xf32, #tpu.memory_space<vmem>>, %arg4: memref<1x128xf32, #tpu.memory_space<vmem>>, %arg5: memref<1x128xf32, #tpu.memory_space<vmem>>, %arg6: memref<98x128xbf16, #tpu.memory_space<vmem>>) attributes {dimension_semantics = [#tpu.dimension_semantics<parallel>], iteration_bounds = array<i64: 1>, scalar_prefetch = 0 : i64, scratch_operands = 0 : i64, tpu.core_type = #tpu.core_type<tc>, window_params = [{transform_indices = @transform_0, window_bounds = array<i64: 98, 576>}, {pipeline_mode = #tpu.pipeline_mode<synchronous>, transform_indices = @transform_1, window_bounds = array<i64: 576, 128>}, {pipeline_mode = #tpu.pipeline_mode<synchronous>, transform_indices = @transform_2, window_bounds = array<i64: 1, 128>}, {pipeline_mode = #tpu.pipeline_mode<synchronous>, transform_indices = @transform_3, window_bounds = array<i64: 1, 128>}, {pipeline_mode = #tpu.pipeline_mode<synchronous>, transform_indices = @transform_4, window_bounds = array<i64: 1, 128>}, {transform_indices = @transform_5, window_bounds = array<i64: 98, 128>}]} {
    %c0 = arith.constant 0 : index
    %c0_0 = arith.constant 0 : index
    %0 = vector.load %arg1[%c0, %c0_0] : memref<98x576xbf16, #tpu.memory_space<vmem>>, vector<98x576xbf16>
    %c0_1 = arith.constant 0 : index
    %c0_2 = arith.constant 0 : index
    %1 = vector.load %arg2[%c0_1, %c0_2] : memref<576x128xbf16, #tpu.memory_space<vmem>>, vector<576x128xbf16>
    %cst = arith.constant dense<0.000000e+00> : vector<98x128xf32>
    %2 = tpu.matmul %0, %1, %cst {dimension_numbers = #tpu.dot_dimension_numbers<[1], [0], [0], [1], [0, 0, 1, 1], [], []>} : vector<98x576xbf16>, vector<576x128xbf16>, vector<98x128xf32> -> vector<98x128xf32>
    %c0_3 = arith.constant 0 : index
    %c0_4 = arith.constant 0 : index
    %3 = vector.load %arg3[%c0_3, %c0_4] : memref<1x128xf32, #tpu.memory_space<vmem>>, vector<1x128xf32>
    %4 = vector.broadcast %3 : vector<1x128xf32> to vector<98x128xf32>
    %5 = arith.addf %2, %4 : vector<98x128xf32>
    %6 = arith.truncf %5 : vector<98x128xf32> to vector<98x128xbf16>
    %c0_5 = arith.constant 0 : index
    %c0_6 = arith.constant 0 : index
    %7 = vector.load %arg6[%c0_5, %c0_6] : memref<98x128xbf16, #tpu.memory_space<vmem>>, vector<98x128xbf16>
    tpu.vector_store %arg6[%c0_5, %c0_6], %6 {strides = array<i32>} : memref<98x128xbf16, #tpu.memory_space<vmem>>, vector<98x128xbf16>,
    return
  }
  func.func @transform_0(%arg0: i32) -> (i32, i32) {
    %c0_i32 = arith.constant 0 : i32
    %c0_i32_0 = arith.constant 0 : i32
    return %arg0, %c0_i32 : i32, i32
  }
  func.func @transform_1(%arg0: i32) -> (i32, i32) {
    %c0_i32 = arith.constant 0 : i32
    %c0_i32_0 = arith.constant 0 : i32
    %c0_i32_1 = arith.constant 0 : i32
    return %c0_i32, %c0_i32_0 : i32, i32
  }
  func.func @transform_2(%arg0: i32) -> (i32, i32) {
    %c0_i32 = arith.constant 0 : i32
    %c0_i32_0 = arith.constant 0 : i32
    %c0_i32_1 = arith.constant 0 : i32
    return %c0_i32, %c0_i32_0 : i32, i32
  }
  func.func @transform_3(%arg0: i32) -> (i32, i32) {
    %c0_i32 = arith.constant 0 : i32
    %c0_i32_0 = arith.constant 0 : i32
    %c0_i32_1 = arith.constant 0 : i32
    return %c0_i32, %c0_i32_0 : i32, i32
  }
  func.func @transform_4(%arg0: i32) -> (i32, i32) {
    %c0_i32 = arith.constant 0 : i32
    %c0_i32_0 = arith.constant 0 : i32
    %c0_i32_1 = arith.constant 0 : i32
    return %c0_i32, %c0_i32_0 : i32, i32
  }
  func.func @transform_5(%arg0: i32) -> (i32, i32) {
    %c0_i32 = arith.constant 0 : i32
    %c0_i32_0 = arith.constant 0 : i32
    return %arg0, %c0_i32 : i32, i32
  }
}

module attributes {stable_mosaic.version = 11 : i64} {
  func.func @_pool_act_bn_kernel(%arg0: i32, %arg1: memref<6x2x3x256xbf16, #tpu.memory_space<vmem>>, %arg2: memref<1x1x128xf32, #tpu.memory_space<vmem>>, %arg3: memref<1x1x128xf32, #tpu.memory_space<vmem>>, %arg4: memref<6x3x128xbf16, #tpu.memory_space<vmem>>) attributes {dimension_semantics = [#tpu.dimension_semantics<parallel>], iteration_bounds = array<i64: 1>, scalar_prefetch = 0 : i64, scratch_operands = 0 : i64, tpu.core_type = #tpu.core_type<tc>, window_params = [{transform_indices = @transform_0, window_bounds = array<i64: 6, 2, 3, 256>}, {pipeline_mode = #tpu.pipeline_mode<synchronous>, transform_indices = @transform_1, window_bounds = array<i64: 1, 1, 128>}, {pipeline_mode = #tpu.pipeline_mode<synchronous>, transform_indices = @transform_2, window_bounds = array<i64: 1, 1, 128>}, {transform_indices = @transform_3, window_bounds = array<i64: 6, 3, 128>}]} {
    %c0 = arith.constant 0 : index
    %c0_0 = arith.constant 0 : index
    %c0_1 = arith.constant 0 : index
    %c0_2 = arith.constant 0 : index
    %0 = vector.load %arg1[%c0, %c0_0, %c0_1, %c0_2] : memref<6x2x3x256xbf16, #tpu.memory_space<vmem>>, vector<6x1x3x256xbf16>
    %1 = vector.shape_cast %0 : vector<6x1x3x256xbf16> to vector<6x3x256xbf16>
    %2 = arith.extf %1 : vector<6x3x256xbf16> to vector<6x3x256xf32>
    %c0_3 = arith.constant 0 : index
    %c1 = arith.constant 1 : index
    %c0_4 = arith.constant 0 : index
    %c0_5 = arith.constant 0 : index
    %3 = vector.load %arg1[%c0_3, %c1, %c0_4, %c0_5] : memref<6x2x3x256xbf16, #tpu.memory_space<vmem>>, vector<6x1x3x256xbf16>
    %4 = vector.shape_cast %3 : vector<6x1x3x256xbf16> to vector<6x3x256xbf16>
    %5 = arith.extf %4 : vector<6x3x256xbf16> to vector<6x3x256xf32>
    %6 = arith.maximumf %2, %5 : vector<6x3x256xf32>
    %7 = vector.extract_strided_slice %6 {offsets = [0, 0, 0], sizes = [6, 3, 128], strides = [1, 1, 1]} : vector<6x3x256xf32> to vector<6x3x128xf32>
    %8 = vector.extract_strided_slice %6 {offsets = [0, 0, 128], sizes = [6, 3, 128], strides = [1, 1, 1]} : vector<6x3x256xf32> to vector<6x3x128xf32>
    %9 = arith.maximumf %7, %8 : vector<6x3x128xf32>
    %cst = arith.constant 0.000000e+00 : f32
    %10 = vector.broadcast %cst : f32 to vector<6x3x128xf32>
    %11 = arith.cmpf ogt, %9, %10 : vector<6x3x128xf32>
    %cst_6 = arith.constant 0.00999999977 : f32
    %12 = vector.broadcast %cst_6 : f32 to vector<6x3x128xf32>
    %13 = arith.mulf %12, %9 : vector<6x3x128xf32>
    %14 = arith.select %11, %9, %13 : vector<6x3x128xi1>, vector<6x3x128xf32>
    %c0_7 = arith.constant 0 : index
    %c0_8 = arith.constant 0 : index
    %c0_9 = arith.constant 0 : index
    %15 = vector.load %arg2[%c0_7, %c0_8, %c0_9] : memref<1x1x128xf32, #tpu.memory_space<vmem>>, vector<1x1x128xf32>
    %16 = vector.broadcast %15 : vector<1x1x128xf32> to vector<6x3x128xf32>
    %17 = arith.mulf %14, %16 : vector<6x3x128xf32>
    %c0_10 = arith.constant 0 : index
    %c0_11 = arith.constant 0 : index
    %c0_12 = arith.constant 0 : index
    %18 = vector.load %arg3[%c0_10, %c0_11, %c0_12] : memref<1x1x128xf32, #tpu.memory_space<vmem>>, vector<1x1x128xf32>
    %19 = vector.broadcast %18 : vector<1x1x128xf32> to vector<6x3x128xf32>
    %20 = arith.addf %17, %19 : vector<6x3x128xf32>
    %21 = arith.truncf %20 : vector<6x3x128xf32> to vector<6x3x128xbf16>
    %c0_13 = arith.constant 0 : index
    %c0_14 = arith.constant 0 : index
    %c0_15 = arith.constant 0 : index
    %22 = vector.load %arg4[%c0_13, %c0_14, %c0_15] : memref<6x3x128xbf16, #tpu.memory_space<vmem>>, vector<6x3x128xbf16>
    tpu.vector_store %arg4[%c0_13, %c0_14, %c0_15], %21 {strides = array<i32>} : memref<6x3x128xbf16, #tpu.memory_space<vmem>>, vector<6x3x128xbf16>,
    return
  }
  func.func @transform_0(%arg0: i32) -> (i32, i32, i32, i32) {
    %c0_i32 = arith.constant 0 : i32
    %c0_i32_0 = arith.constant 0 : i32
    %c0_i32_1 = arith.constant 0 : i32
    %c0_i32_2 = arith.constant 0 : i32
    return %arg0, %c0_i32, %c0_i32_0, %c0_i32_1 : i32, i32, i32, i32
  }
  func.func @transform_1(%arg0: i32) -> (i32, i32, i32) {
    %c0_i32 = arith.constant 0 : i32
    %c0_i32_0 = arith.constant 0 : i32
    %c0_i32_1 = arith.constant 0 : i32
    %c0_i32_2 = arith.constant 0 : i32
    return %c0_i32, %c0_i32_0, %c0_i32_1 : i32, i32, i32
  }
  func.func @transform_2(%arg0: i32) -> (i32, i32, i32) {
    %c0_i32 = arith.constant 0 : i32
    %c0_i32_0 = arith.constant 0 : i32
    %c0_i32_1 = arith.constant 0 : i32
    %c0_i32_2 = arith.constant 0 : i32
    return %c0_i32, %c0_i32_0, %c0_i32_1 : i32, i32, i32
  }
  func.func @transform_3(%arg0: i32) -> (i32, i32, i32) {
    %c0_i32 = arith.constant 0 : i32
    %c0_i32_0 = arith.constant 0 : i32
    %c0_i32_1 = arith.constant 0 : i32
    return %arg0, %c0_i32, %c0_i32_0 : i32, i32, i32
  }
}

module attributes {stable_mosaic.version = 11 : i64} {
  func.func @_gemm_kernel(%arg0: i32, %arg1: memref<18x1152xbf16, #tpu.memory_space<vmem>>, %arg2: memref<1152x64xbf16, #tpu.memory_space<vmem>>, %arg3: memref<1x64xf32, #tpu.memory_space<vmem>>, %arg4: memref<1x64xf32, #tpu.memory_space<vmem>>, %arg5: memref<1x64xf32, #tpu.memory_space<vmem>>, %arg6: memref<18x64xbf16, #tpu.memory_space<vmem>>) attributes {dimension_semantics = [#tpu.dimension_semantics<parallel>], iteration_bounds = array<i64: 1>, scalar_prefetch = 0 : i64, scratch_operands = 0 : i64, tpu.core_type = #tpu.core_type<tc>, window_params = [{transform_indices = @transform_0, window_bounds = array<i64: 18, 1152>}, {pipeline_mode = #tpu.pipeline_mode<synchronous>, transform_indices = @transform_1, window_bounds = array<i64: 1152, 64>}, {pipeline_mode = #tpu.pipeline_mode<synchronous>, transform_indices = @transform_2, window_bounds = array<i64: 1, 64>}, {pipeline_mode = #tpu.pipeline_mode<synchronous>, transform_indices = @transform_3, window_bounds = array<i64: 1, 64>}, {pipeline_mode = #tpu.pipeline_mode<synchronous>, transform_indices = @transform_4, window_bounds = array<i64: 1, 64>}, {transform_indices = @transform_5, window_bounds = array<i64: 18, 64>}]} {
    %c0 = arith.constant 0 : index
    %c0_0 = arith.constant 0 : index
    %0 = vector.load %arg1[%c0, %c0_0] : memref<18x1152xbf16, #tpu.memory_space<vmem>>, vector<18x1152xbf16>
    %c0_1 = arith.constant 0 : index
    %c0_2 = arith.constant 0 : index
    %1 = vector.load %arg2[%c0_1, %c0_2] : memref<1152x64xbf16, #tpu.memory_space<vmem>>, vector<1152x64xbf16>
    %cst = arith.constant dense<0.000000e+00> : vector<18x64xf32>
    %2 = tpu.matmul %0, %1, %cst {dimension_numbers = #tpu.dot_dimension_numbers<[1], [0], [0], [1], [0, 0, 1, 1], [], []>} : vector<18x1152xbf16>, vector<1152x64xbf16>, vector<18x64xf32> -> vector<18x64xf32>
    %c0_3 = arith.constant 0 : index
    %c0_4 = arith.constant 0 : index
    %3 = vector.load %arg3[%c0_3, %c0_4] : memref<1x64xf32, #tpu.memory_space<vmem>>, vector<1x64xf32>
    %4 = vector.broadcast %3 : vector<1x64xf32> to vector<18x64xf32>
    %5 = arith.addf %2, %4 : vector<18x64xf32>
    %6 = arith.truncf %5 : vector<18x64xf32> to vector<18x64xbf16>
    %c0_5 = arith.constant 0 : index
    %c0_6 = arith.constant 0 : index
    %7 = vector.load %arg6[%c0_5, %c0_6] : memref<18x64xbf16, #tpu.memory_space<vmem>>, vector<18x64xbf16>
    tpu.vector_store %arg6[%c0_5, %c0_6], %6 {strides = array<i32>} : memref<18x64xbf16, #tpu.memory_space<vmem>>, vector<18x64xbf16>,
    return
  }
  func.func @transform_0(%arg0: i32) -> (i32, i32) {
    %c0_i32 = arith.constant 0 : i32
    %c0_i32_0 = arith.constant 0 : i32
    return %arg0, %c0_i32 : i32, i32
  }
  func.func @transform_1(%arg0: i32) -> (i32, i32) {
    %c0_i32 = arith.constant 0 : i32
    %c0_i32_0 = arith.constant 0 : i32
    %c0_i32_1 = arith.constant 0 : i32
    return %c0_i32, %c0_i32_0 : i32, i32
  }
  func.func @transform_2(%arg0: i32) -> (i32, i32) {
    %c0_i32 = arith.constant 0 : i32
    %c0_i32_0 = arith.constant 0 : i32
    %c0_i32_1 = arith.constant 0 : i32
    return %c0_i32, %c0_i32_0 : i32, i32
  }
  func.func @transform_3(%arg0: i32) -> (i32, i32) {
    %c0_i32 = arith.constant 0 : i32
    %c0_i32_0 = arith.constant 0 : i32
    %c0_i32_1 = arith.constant 0 : i32
    return %c0_i32, %c0_i32_0 : i32, i32
  }
  func.func @transform_4(%arg0: i32) -> (i32, i32) {
    %c0_i32 = arith.constant 0 : i32
    %c0_i32_0 = arith.constant 0 : i32
    %c0_i32_1 = arith.constant 0 : i32
    return %c0_i32, %c0_i32_0 : i32, i32
  }
  func.func @transform_5(%arg0: i32) -> (i32, i32) {
    %c0_i32 = arith.constant 0 : i32
    %c0_i32_0 = arith.constant 0 : i32
    return %arg0, %c0_i32 : i32, i32
  }
}

module attributes {stable_mosaic.version = 11 : i64} {
  func.func @_pool_act_bn_kernel(%arg0: i32, %arg1: memref<2x2x1x128xbf16, #tpu.memory_space<vmem>>, %arg2: memref<1x1x64xf32, #tpu.memory_space<vmem>>, %arg3: memref<1x1x64xf32, #tpu.memory_space<vmem>>, %arg4: memref<2x1x64xbf16, #tpu.memory_space<vmem>>) attributes {dimension_semantics = [#tpu.dimension_semantics<parallel>], iteration_bounds = array<i64: 1>, scalar_prefetch = 0 : i64, scratch_operands = 0 : i64, tpu.core_type = #tpu.core_type<tc>, window_params = [{transform_indices = @transform_0, window_bounds = array<i64: 2, 2, 1, 128>}, {pipeline_mode = #tpu.pipeline_mode<synchronous>, transform_indices = @transform_1, window_bounds = array<i64: 1, 1, 64>}, {pipeline_mode = #tpu.pipeline_mode<synchronous>, transform_indices = @transform_2, window_bounds = array<i64: 1, 1, 64>}, {transform_indices = @transform_3, window_bounds = array<i64: 2, 1, 64>}]} {
    %c0 = arith.constant 0 : index
    %c0_0 = arith.constant 0 : index
    %c0_1 = arith.constant 0 : index
    %c0_2 = arith.constant 0 : index
    %0 = vector.load %arg1[%c0, %c0_0, %c0_1, %c0_2] : memref<2x2x1x128xbf16, #tpu.memory_space<vmem>>, vector<2x1x1x128xbf16>
    %1 = vector.shape_cast %0 : vector<2x1x1x128xbf16> to vector<2x1x128xbf16>
    %2 = arith.extf %1 : vector<2x1x128xbf16> to vector<2x1x128xf32>
    %c0_3 = arith.constant 0 : index
    %c1 = arith.constant 1 : index
    %c0_4 = arith.constant 0 : index
    %c0_5 = arith.constant 0 : index
    %3 = vector.load %arg1[%c0_3, %c1, %c0_4, %c0_5] : memref<2x2x1x128xbf16, #tpu.memory_space<vmem>>, vector<2x1x1x128xbf16>
    %4 = vector.shape_cast %3 : vector<2x1x1x128xbf16> to vector<2x1x128xbf16>
    %5 = arith.extf %4 : vector<2x1x128xbf16> to vector<2x1x128xf32>
    %6 = arith.maximumf %2, %5 : vector<2x1x128xf32>
    %7 = vector.extract_strided_slice %6 {offsets = [0, 0, 0], sizes = [2, 1, 64], strides = [1, 1, 1]} : vector<2x1x128xf32> to vector<2x1x64xf32>
    %8 = vector.extract_strided_slice %6 {offsets = [0, 0, 64], sizes = [2, 1, 64], strides = [1, 1, 1]} : vector<2x1x128xf32> to vector<2x1x64xf32>
    %9 = arith.maximumf %7, %8 : vector<2x1x64xf32>
    %cst = arith.constant 0.000000e+00 : f32
    %10 = vector.broadcast %cst : f32 to vector<2x1x64xf32>
    %11 = arith.cmpf ogt, %9, %10 : vector<2x1x64xf32>
    %cst_6 = arith.constant 0.00999999977 : f32
    %12 = vector.broadcast %cst_6 : f32 to vector<2x1x64xf32>
    %13 = arith.mulf %12, %9 : vector<2x1x64xf32>
    %14 = arith.select %11, %9, %13 : vector<2x1x64xi1>, vector<2x1x64xf32>
    %c0_7 = arith.constant 0 : index
    %c0_8 = arith.constant 0 : index
    %c0_9 = arith.constant 0 : index
    %15 = vector.load %arg2[%c0_7, %c0_8, %c0_9] : memref<1x1x64xf32, #tpu.memory_space<vmem>>, vector<1x1x64xf32>
    %16 = vector.broadcast %15 : vector<1x1x64xf32> to vector<2x1x64xf32>
    %17 = arith.mulf %14, %16 : vector<2x1x64xf32>
    %c0_10 = arith.constant 0 : index
    %c0_11 = arith.constant 0 : index
    %c0_12 = arith.constant 0 : index
    %18 = vector.load %arg3[%c0_10, %c0_11, %c0_12] : memref<1x1x64xf32, #tpu.memory_space<vmem>>, vector<1x1x64xf32>
    %19 = vector.broadcast %18 : vector<1x1x64xf32> to vector<2x1x64xf32>
    %20 = arith.addf %17, %19 : vector<2x1x64xf32>
    %21 = arith.truncf %20 : vector<2x1x64xf32> to vector<2x1x64xbf16>
    %c0_13 = arith.constant 0 : index
    %c0_14 = arith.constant 0 : index
    %c0_15 = arith.constant 0 : index
    %22 = vector.load %arg4[%c0_13, %c0_14, %c0_15] : memref<2x1x64xbf16, #tpu.memory_space<vmem>>, vector<2x1x64xbf16>
    tpu.vector_store %arg4[%c0_13, %c0_14, %c0_15], %21 {strides = array<i32>} : memref<2x1x64xbf16, #tpu.memory_space<vmem>>, vector<2x1x64xbf16>,
    return
  }
  func.func @transform_0(%arg0: i32) -> (i32, i32, i32, i32) {
    %c0_i32 = arith.constant 0 : i32
    %c0_i32_0 = arith.constant 0 : i32
    %c0_i32_1 = arith.constant 0 : i32
    %c0_i32_2 = arith.constant 0 : i32
    return %arg0, %c0_i32, %c0_i32_0, %c0_i32_1 : i32, i32, i32, i32
  }
  func.func @transform_1(%arg0: i32) -> (i32, i32, i32) {
    %c0_i32 = arith.constant 0 : i32
    %c0_i32_0 = arith.constant 0 : i32
    %c0_i32_1 = arith.constant 0 : i32
    %c0_i32_2 = arith.constant 0 : i32
    return %c0_i32, %c0_i32_0, %c0_i32_1 : i32, i32, i32
  }
  func.func @transform_2(%arg0: i32) -> (i32, i32, i32) {
    %c0_i32 = arith.constant 0 : i32
    %c0_i32_0 = arith.constant 0 : i32
    %c0_i32_1 = arith.constant 0 : i32
    %c0_i32_2 = arith.constant 0 : i32
    return %c0_i32, %c0_i32_0, %c0_i32_1 : i32, i32, i32
  }
  func.func @transform_3(%arg0: i32) -> (i32, i32, i32) {
    %c0_i32 = arith.constant 0 : i32
    %c0_i32_0 = arith.constant 0 : i32
    %c0_i32_1 = arith.constant 0 : i32
    return %arg0, %c0_i32, %c0_i32_0 : i32, i32, i32
  }
}

</mosaic_0001>

<llo_original>
// kernel: _lambda_.10
$region0: #{_lambda_.10}
  #allocation0 [shape = 'u32[]', space=smem, size = 0x4, offset = 0x4, fixed_abs, tag = 'smem constant byte address 0x4 - core index']
  #allocation1 [shape = 'u32[72,128]{1,0:T(1,128)}', space=vmem, size = 0x9000, scoped, tag = 'internal scratch']
  %s0 = inlined_call_operand.vmem [shape: bf16[2178,75], index: 0, kind: input, shape index: {}]
  %s1 = inlined_call_operand.vmem [shape: bf16[75,16], index: 1, kind: input, shape index: {}]
  %s2 = inlined_call_operand.vmem [shape: f32[1,16], index: 2, kind: input, shape index: {}]
  %s3 = inlined_call_operand.vmem [shape: f32[1,16], index: 3, kind: input, shape index: {}]
  %s4 = inlined_call_operand.vmem [shape: f32[1,16], index: 4, kind: input, shape index: {}]
  %s5 = inlined_call_operand.vmem [shape: bf16[2178,16], index: 5, kind: output, shape index: {}]
  %s6 = sld [smem:[#allocation0]]
  $region97: #{_lambda_.10} parent=0
    _
  %s8 = ssub.s32 1, %s6
  %s9 = scalar_select 0, %s8, %s6
  $region1: #{_lambda_.10} parent=0
    #allocation2 [shape = 'u8[262144]{0}', space=vmem, size = 0x40000, scoped, tag = 'output window, operand 0']
    loop: start=0, step=1, limit=7
    $region2: #{_lambda_.10} parent=1 // loop_pre_header
      _
    $region3: #{_lambda_.10} parent=1 // loop_header
      %s11 = sphi 0, %s15
      %p12 = scmp.ge.s32.totalorder %s11, 7
      %s21 = sphi 0, %s23
      %s24 = sphi 0, %s21
      %s25 = sphi 0, %s24
      %s41 = sphi 0, %s25
      %s45 = sphi 0, %s45
      %s47 = sphi 0, %s45
      %s48 = sphi 0, %s47
      %s62 = sphi 0, %s48
      %s66 = sphi 0, %s66
      %s68 = sphi 0, %s66
      %s69 = sphi 0, %s68
      %s83 = sphi 0, %s69
      %s87 = sphi 0, %s87
      %s89 = sphi 0, %s87
      %s90 = sphi 0, %s89
      %s104 = sphi 0, %s90
      %s108 = sphi 0, %s108
      %s110 = sphi 0, %s108
      %s111 = sphi 0, %s110
      %s125 = sphi 0, %s111
      %s131 = sphi 0, %s133
      %s134 = sphi 0, %s131
      %s135 = sphi 0, %s134
      %s151 = sphi 0, %s135
    $region4: #{_lambda_.10} parent=1 // loop_header_branch
      %14 = sbr.rel (%p12) target = $region8
    $region5: #{_lambda_.10} parent=1 // loop_body
      %s16 = ssub.s32 %s11, 1
      %s17 = ssub.s32 %s11, 2
      %s18 = sadd.s32 %s11, 1
      %s19 = ssub.s32 %s11, %s18
      %p20 = scmp.eq.s32.totalorder %s19, 0
      %s22 = sadd.s32 %s21, 1
      %s23 = scalar_select %p20, %s21, %s22
      %p26 = pneg %p20
      %p27 = scmp.eq.s32.totalorder %s11, 4
      %p28 = por %p26, %p27
      %p29 = scmp.ne.s32.totalorder %s21, %s24
      %p30 = scmp.eq.s32.totalorder %s11, 0
      %p31 = por %p29, %p30
      %p32 = scmp.ne.s32.totalorder %s21, %s24
      %p33 = scmp.eq.s32.totalorder %s16, 4
      %p34 = por %p32, %p33
      %p35 = scmp.ne.s32.totalorder %s24, %s25
      %p36 = scmp.eq.s32.totalorder %s16, 0
      %p37 = por %p35, %p36
      %p38 = scmp.ne.s32.totalorder %s24, %s25
      %p39 = scmp.eq.s32.totalorder %s17, 4
      %p40 = por %p38, %p39
      %p42 = scmp.ne.s32.totalorder %s25, %s41
      %p43 = scmp.eq.s32.totalorder %s17, 0
      %p44 = por %p42, %p43
      %s46 = sadd.s32 %s45, 1
      %p49 = scmp.eq.s32.totalorder %s11, 4
      %p50 = scmp.ne.s32.totalorder %s45, %s47
      %p51 = scmp.eq.s32.totalorder %s11, 0
      %p52 = por %p50, %p51
      %p53 = scmp.ne.s32.totalorder %s45, %s47
      %p54 = scmp.eq.s32.totalorder %s16, 4
      %p55 = por %p53, %p54
      %p56 = scmp.ne.s32.totalorder %s47, %s48
      %p57 = scmp.eq.s32.totalorder %s16, 0
      %p58 = por %p56, %p57
      %p59 = scmp.ne.s32.totalorder %s47, %s48
      %p60 = scmp.eq.s32.totalorder %s17, 4
      %p61 = por %p59, %p60
      %p63 = scmp.ne.s32.totalorder %s48, %s62
      %p64 = scmp.eq.s32.totalorder %s17, 0
      %p65 = por %p63, %p64
      %s67 = sadd.s32 %s66, 1
      %p70 = scmp.eq.s32.totalorder %s11, 4
      %p71 = scmp.ne.s32.totalorder %s66, %s68
      %p72 = scmp.eq.s32.totalorder %s11, 0
      %p73 = por %p71, %p72
      %p74 = scmp.ne.s32.totalorder %s66, %s68
      %p75 = scmp.eq.s32.totalorder %s16, 4
      %p76 = por %p74, %p75
      %p77 = scmp.ne.s32.totalorder %s68, %s69
      %p78 = scmp.eq.s32.totalorder %s16, 0
      %p79 = por %p77, %p78
      %p80 = scmp.ne.s32.totalorder %s68, %s69
      %p81 = scmp.eq.s32.totalorder %s17, 4
      %p82 = por %p80, %p81
      %p84 = scmp.ne.s32.totalorder %s69, %s83
      %p85 = scmp.eq.s32.totalorder %s17, 0
      %p86 = por %p84, %p85
      %s88 = sadd.s32 %s87, 1
      %p91 = scmp.eq.s32.totalorder %s11, 4
      %p92 = scmp.ne.s32.totalorder %s87, %s89
      %p93 = scmp.eq.s32.totalorder %s11, 0
      %p94 = por %p92, %p93
      %p95 = scmp.ne.s32.totalorder %s87, %s89
      %p96 = scmp.eq.s32.totalorder %s16, 4
      %p97 = por %p95, %p96
      %p98 = scmp.ne.s32.totalorder %s89, %s90
      %p99 = scmp.eq.s32.totalorder %s16, 0
      %p100 = por %p98, %p99
      %p101 = scmp.ne.s32.totalorder %s89, %s90
      %p102 = scmp.eq.s32.totalorder %s17, 4
      %p103 = por %p101, %p102
      %p105 = scmp.ne.s32.totalorder %s90, %s104
      %p106 = scmp.eq.s32.totalorder %s17, 0
      %p107 = por %p105, %p106
      %s109 = sadd.s32 %s108, 1
      %p112 = scmp.eq.s32.totalorder %s11, 4
      %p113 = scmp.ne.s32.totalorder %s108, %s110
      %p114 = scmp.eq.s32.totalorder %s11, 0
      %p115 = por %p113, %p114
      %p116 = scmp.ne.s32.totalorder %s108, %s110
      %p117 = scmp.eq.s32.totalorder %s16, 4
      %p118 = por %p116, %p117
      %p119 = scmp.ne.s32.totalorder %s110, %s111
      %p120 = scmp.eq.s32.totalorder %s16, 0
      %p121 = por %p119, %p120
      %p122 = scmp.ne.s32.totalorder %s110, %s111
      %p123 = scmp.eq.s32.totalorder %s17, 4
      %p124 = por %p122, %p123
      %p126 = scmp.ne.s32.totalorder %s111, %s125
      %p127 = scmp.eq.s32.totalorder %s17, 0
      %p128 = por %p126, %p127
      %s129 = ssub.s32 %s11, %s18
      %p130 = scmp.eq.s32.totalorder %s129, 0
      %s132 = sadd.s32 %s131, 1
      %s133 = scalar_select %p130, %s131, %s132
      %p136 = pneg %p130
      %p137 = scmp.eq.s32.totalorder %s11, 4
      %p138 = por %p136, %p137
      %p139 = scmp.ne.s32.totalorder %s131, %s134
      %p140 = scmp.eq.s32.totalorder %s11, 0
      %p141 = por %p139, %p140
      %p142 = scmp.ne.s32.totalorder %s131, %s134
      %p143 = scmp.eq.s32.totalorder %s16, 4
      %p144 = por %p142, %p143
      %p145 = scmp.ne.s32.totalorder %s134, %s135
      %p146 = scmp.eq.s32.totalorder %s16, 0
      %p147 = por %p145, %p146
      %p148 = scmp.ne.s32.totalorder %s134, %s135
      %p149 = scmp.eq.s32.totalorder %s17, 4
      %p150 = por %p148, %p149
      %p152 = scmp.ne.s32.totalorder %s135, %s151
      %p153 = scmp.eq.s32.totalorder %s17, 0
      %p154 = por %p152, %p153
      %p155 = scmp.le.s32.totalorder 1, %s11
      %p156 = scmp.lt.s32.totalorder %s11, 6
      %p157 = pnand %p155, %p156
      %p158 = pneg %p157
      // Predicated region
      $region9: #{_lambda_.10} parent=5 // pred_check
        _
      $region10: #{_lambda_.10} parent=5 // pred_check_branch
        %160 = sbr.rel (%p157) target = $region12
      $region11: #{_lambda_.10} parent=5 // pred_region
        %s161 = ssub.s32 %s11, 1
        // Predicated region
        $region13: #{_lambda_.10} parent=11 // pred_check
          %p162 = pneg %p58
        $region14: #{_lambda_.10} parent=11 // pred_check_branch
          %164 = sbr.rel (%p162) target = $region16
        $region15: #{_lambda_.10} parent=11 // pred_region
          _
        $region16: #{_lambda_.10} parent=11 // pred_fallthru
          _
        // Predicated region
        $region17: #{_lambda_.10} parent=11 // pred_check
          %p165 = pneg %p79
        $region18: #{_lambda_.10} parent=11 // pred_check_branch
          %167 = sbr.rel (%p165) target = $region20
        $region19: #{_lambda_.10} parent=11 // pred_region
          _
        $region20: #{_lambda_.10} parent=11 // pred_fallthru
          _
        // Predicated region
        $region21: #{_lambda_.10} parent=11 // pred_check
          %p168 = pneg %p100
        $region22: #{_lambda_.10} parent=11 // pred_check_branch
          %170 = sbr.rel (%p168) target = $region24
        $region23: #{_lambda_.10} parent=11 // pred_region
          _
        $region24: #{_lambda_.10} parent=11 // pred_fallthru
          _
        // Predicated region
        $region25: #{_lambda_.10} parent=11 // pred_check
          %p171 = pneg %p121
        $region26: #{_lambda_.10} parent=11 // pred_check_branch
          %173 = sbr.rel (%p171) target = $region28
        $region27: #{_lambda_.10} parent=11 // pred_region
          _
        $region28: #{_lambda_.10} parent=11 // pred_fallthru
          _
      $region12: #{_lambda_.10} parent=5 // pred_fallthru
        _
      %p174 = scmp.lt.s32.totalorder %s11, 5
      // Predicated region
      $region29: #{_lambda_.10} parent=5 // pred_check
        %p175 = pneg %p174
      $region30: #{_lambda_.10} parent=5 // pred_check_branch
        %177 = sbr.rel (%p175) target = $region32
      $region31: #{_lambda_.10} parent=5 // pred_region
        // Predicated region
        $region33: #{_lambda_.10} parent=31 // pred_check
          %p178 = pneg %p31
        $region34: #{_lambda_.10} parent=31 // pred_check_branch
          %180 = sbr.rel (%p178) target = $region36
        $region35: #{_lambda_.10} parent=31 // pred_region
          %s181 = smul.u32 64, %s11
          %s182 = ssub.s32 273, %s181
          %p183 = scmp.lt.s32.totalorder %s182, 64
          %s184 = scalar_select %p183, %s182, 64
          %s185 = smul.u32 4, %s184
          %p186 = scmp.lt.s32.totalorder %s181, 272
          %s187 = scalar_select %p186, %s181, 272
          %s188 = smul.addr %s187, 4
          %s189 = scalar_lea.vmem %s0, %s188
          %s190 = smul.u32 64, %s11
          %s191 = ssub.s32 273, %s190
          %p192 = scmp.lt.s32.totalorder %s191, 64
          %s193 = scalar_select %p192, %s191, 64
          %s194 = smul.u32 4, %s193
        $region36: #{_lambda_.10} parent=31 // pred_fallthru
          _
      $region32: #{_lambda_.10} parent=5 // pred_fallthru
        _
      %p195 = scmp.le.s32.totalorder 1, %s11
      %p196 = scmp.lt.s32.totalorder %s11, 6
      %p197 = pnand %p195, %p196
      %p198 = pneg %p197
      // Predicated region
      $region37: #{_lambda_.10} parent=5 // pred_check
        _
      $region38: #{_lambda_.10} parent=5 // pred_check_branch
        %200 = sbr.rel (%p197) target = $region40
      $region39: #{_lambda_.10} parent=5 // pred_region
        %s201 = ssub.s32 %s11, 1
        %s202 = smul.u32 64, %s16
        %s203 = ssub.s32 273, %s202
        %p204 = scmp.lt.s32.totalorder %s203, 64
        %s205 = scalar_select %p204, %s203, 64
        %s206 = smul.u32 4, %s205
        %p207 = scmp.lt.s32.totalorder %s202, 272
        %s208 = scalar_select %p207, %s202, 272
        %s209 = smul.addr %s208, 4
        %s210 = scalar_lea.vmem %s0, %s209
        %p211 = pneg %p37
        %p212 = pneg %p34
        %p213 = pneg %p58
        %p214 = pneg %p55
        %p215 = pneg %p79
        %p216 = pneg %p76
        %p217 = pneg %p100
        %p218 = pneg %p97
        %p219 = pneg %p121
        %p220 = pneg %p118
        %p221 = pneg %p147
        %p222 = pneg %p144
        %s223 = sand.u32 %s134, 1
        %s224 = sand.u32 %s134, 1
        %s225 = smul.addr %s224, 256
        %s226 = scalar_lea.vmem [#allocation2], %s225
        %s227 = smul.u32 64, %s16
        %s228 = ssub.s32 273, %s227
        %p229 = scmp.lt.s32.totalorder %s228, 64
        %s230 = scalar_select %p229, %s228, 64
        %s231 = smul.u32 4, %s230
        %p232 = scmp.lt.s32.totalorder %s227, 272
        %s233 = scalar_select %p232, %s227, 272
        %s234 = smul.addr %s233, 4
        %s235 = scalar_lea.vmem %s0, %s234
        %s236 = smul.u32 64, %s16
        %s237 = ssub.s32 273, %s236
        %p238 = scmp.lt.s32.totalorder %s237, 64
        %s239 = scalar_select %p238, %s237, 64
        %s240 = smul.u32 4, %s239
        %s241 = smul.u32 64, %s16
        %s242 = ssub.s32 273, %s241
        %p243 = scmp.lt.s32.totalorder %s242, 64
        %s244 = scalar_select %p243, %s242, 64
        %s245 = smul.u32 4, %s244
        %v247 = vld [vmem:[%s235] sm:$0xf]
        %v248 = vld [vmem:[%s235 + $0x4] sm:$0xf]
        %v249 = vld [vmem:[%s235 + $0x8] sm:$0xf]
        %v250 = vld [vmem:[%s235 + $0xc] sm:$0xf]
        %v251 = vld [vmem:[%s235 + $0x10] sm:$0xf]
        %v252 = vld [vmem:[%s235 + $0x14] sm:$0xf]
        %v253 = vld [vmem:[%s235 + $0x18] sm:$0xf]
        %v254 = vld [vmem:[%s235 + $0x1c] sm:$0xf]
        %v255 = vld [vmem:[%s235 + $0x20] sm:$0xf]
        %v256 = vld [vmem:[%s235 + $0x24] sm:$0xf]
        %v257 = vld [vmem:[%s235 + $0x28] sm:$0xf]
        %v258 = vld [vmem:[%s235 + $0x2c] sm:$0xf]
        %v259 = vld [vmem:[%s235 + $0x30] sm:$0xf]
        %v260 = vld [vmem:[%s235 + $0x34] sm:$0xf]
        %v261 = vld [vmem:[%s235 + $0x38] sm:$0xf]
        %v262 = vld [vmem:[%s235 + $0x3c] sm:$0xf]
        %v263 = vld [vmem:[%s235 + $0x40] sm:$0xf]
        %v264 = vld [vmem:[%s235 + $0x44] sm:$0xf]
        %v265 = vld [vmem:[%s235 + $0x48] sm:$0xf]
        %v266 = vld [vmem:[%s235 + $0x4c] sm:$0xf]
        %v267 = vld [vmem:[%s235 + $0x50] sm:$0xf]
        %v268 = vld [vmem:[%s235 + $0x54] sm:$0xf]
        %v269 = vld [vmem:[%s235 + $0x58] sm:$0xf]
        %v270 = vld [vmem:[%s235 + $0x5c] sm:$0xf]
        %v271 = vld [vmem:[%s235 + $0x60] sm:$0xf]
        %v272 = vld [vmem:[%s235 + $0x64] sm:$0xf]
        %v273 = vld [vmem:[%s235 + $0x68] sm:$0xf]
        %v274 = vld [vmem:[%s235 + $0x6c] sm:$0xf]
        %v275 = vld [vmem:[%s235 + $0x70] sm:$0xf]
        %v276 = vld [vmem:[%s235 + $0x74] sm:$0xf]
        %v277 = vld [vmem:[%s235 + $0x78] sm:$0xf]
        %v278 = vld [vmem:[%s235 + $0x7c] sm:$0xf]
        %v279 = vld [vmem:[%s235 + $0x80] sm:$0xf]
        %v280 = vld [vmem:[%s235 + $0x84] sm:$0xf]
        %v281 = vld [vmem:[%s235 + $0x88] sm:$0xf]
        %v282 = vld [vmem:[%s235 + $0x8c] sm:$0xf]
        %v283 = vld [vmem:[%s235 + $0x90] sm:$0xf]
        %v284 = vld [vmem:[%s235 + $0x94] sm:$0xf]
        %v285 = vld [vmem:[%s235 + $0x98] sm:$0xf]
        %v286 = vld [vmem:[%s235 + $0x9c] sm:$0xf]
        %v287 = vld [vmem:[%s235 + $0xa0] sm:$0xf]
        %v288 = vld [vmem:[%s235 + $0xa4] sm:$0xf]
        %v289 = vld [vmem:[%s235 + $0xa8] sm:$0xf]
        %v290 = vld [vmem:[%s235 + $0xac] sm:$0xf]
        %v291 = vld [vmem:[%s235 + $0xb0] sm:$0xf]
        %v292 = vld [vmem:[%s235 + $0xb4] sm:$0xf]
        %v293 = vld [vmem:[%s235 + $0xb8] sm:$0xf]
        %v294 = vld [vmem:[%s235 + $0xbc] sm:$0xf]
        %v295 = vld [vmem:[%s235 + $0xc0] sm:$0xf]
        %v296 = vld [vmem:[%s235 + $0xc4] sm:$0xf]
        %v297 = vld [vmem:[%s235 + $0xc8] sm:$0xf]
        %v298 = vld [vmem:[%s235 + $0xcc] sm:$0xf]
        %v299 = vld [vmem:[%s235 + $0xd0] sm:$0xf]
        %v300 = vld [vmem:[%s235 + $0xd4] sm:$0xf]
        %v301 = vld [vmem:[%s235 + $0xd8] sm:$0xf]
        %v302 = vld [vmem:[%s235 + $0xdc] sm:$0xf]
        %v303 = vld [vmem:[%s235 + $0xe0] sm:$0xf]
        %v304 = vld [vmem:[%s235 + $0xe4] sm:$0xf]
        %v305 = vld [vmem:[%s235 + $0xe8] sm:$0xf]
        %v306 = vld [vmem:[%s235 + $0xec] sm:$0xf]
        %v307 = vld [vmem:[%s235 + $0xf0] sm:$0xf]
        %v308 = vld [vmem:[%s235 + $0xf4] sm:$0xf]
        %v309 = vld [vmem:[%s235 + $0xf8] sm:$0xf]
        %v310 = vld [vmem:[%s235 + $0xfc] sm:$0xf]
        %v311 = vld [vmem:[%s1] sm:$0xf]
        %v312 = vld [vmem:[%s1 + $0x4] sm:$0xf]
        %v313 = vld [vmem:[%s1 + $0x8] sm:$0xf]
        %v314 = vld [vmem:[%s1 + $0xc] sm:$0xf]
        %v315 = vld [vmem:[%s1 + $0x10] sm:$0xf]
        %v316 = vld [vmem:[%s1 + $0x14] sm:$0xf]
        %v317 = vld [vmem:[%s1 + $0x18] sm:$0xf]
        %v318 = vld [vmem:[%s1 + $0x1c] sm:$0xf]
        %v319 = vld [vmem:[%s1 + $0x20] sm:$0xf]
        %v320 = vld [vmem:[%s1 + $0x24] sm:$0x3]
        %v321 = vld [vmem:[%s2] sm:$0x1]
        %v323 = vperm.slane %v321, 0
        %v389 = vunpack.c.l.b16 %v247
        %v390 = vunpack.c.l.b16 %v248
        %v391 = vunpack.c.l.b16 %v249
        %v392 = vunpack.c.l.b16 %v250
        %v393 = vunpack.c.l.b16 %v251
        %v394 = vunpack.c.l.b16 %v252
        %v395 = vunpack.c.l.b16 %v253
        %v396 = vunpack.c.l.b16 %v254
        %v397 = vunpack.c.l.b16 %v255
        %v398 = vunpack.c.l.b16 %v256
        %v399 = vunpack.c.l.b16 %v257
        %v400 = vunpack.c.l.b16 %v258
        %v401 = vunpack.c.l.b16 %v259
        %v402 = vunpack.c.l.b16 %v260
        %v403 = vunpack.c.l.b16 %v261
        %v404 = vunpack.c.l.b16 %v262
        %v405 = vunpack.c.l.b16 %v263
        %v406 = vunpack.c.l.b16 %v264
        %v407 = vunpack.c.l.b16 %v265
        %v408 = vunpack.c.l.b16 %v266
        %v409 = vunpack.c.l.b16 %v267
        %v410 = vunpack.c.l.b16 %v268
        %v411 = vunpack.c.l.b16 %v269
        %v412 = vunpack.c.l.b16 %v270
        %v413 = vunpack.c.l.b16 %v271
        %v414 = vunpack.c.l.b16 %v272
        %v415 = vunpack.c.l.b16 %v273
        %v416 = vunpack.c.l.b16 %v274
        %v417 = vunpack.c.l.b16 %v275
        %v418 = vunpack.c.l.b16 %v276
        %v419 = vunpack.c.l.b16 %v277
        %v420 = vunpack.c.l.b16 %v278
        %v421 = vunpack.c.l.b16 %v279
        %v422 = vunpack.c.l.b16 %v280
        %v423 = vunpack.c.l.b16 %v281
        %v424 = vunpack.c.l.b16 %v282
        %v425 = vunpack.c.l.b16 %v283
        %v426 = vunpack.c.l.b16 %v284
        %v427 = vunpack.c.l.b16 %v285
        %v428 = vunpack.c.l.b16 %v286
        %v429 = vunpack.c.l.b16 %v287
        %v430 = vunpack.c.l.b16 %v288
        %v431 = vunpack.c.l.b16 %v289
        %v432 = vunpack.c.l.b16 %v290
        %v433 = vunpack.c.l.b16 %v291
        %v434 = vunpack.c.l.b16 %v292
        %v435 = vunpack.c.l.b16 %v293
        %v436 = vunpack.c.l.b16 %v294
        %v437 = vunpack.c.l.b16 %v295
        %v438 = vunpack.c.l.b16 %v296
        %v439 = vunpack.c.l.b16 %v297
        %v440 = vunpack.c.l.b16 %v298
        %v441 = vunpack.c.l.b16 %v299
        %v442 = vunpack.c.l.b16 %v300
        %v443 = vunpack.c.l.b16 %v301
        %v444 = vunpack.c.l.b16 %v302
        %v445 = vunpack.c.l.b16 %v303
        %v446 = vunpack.c.l.b16 %v304
        %v447 = vunpack.c.l.b16 %v305
        %v448 = vunpack.c.l.b16 %v306
        %v449 = vunpack.c.l.b16 %v307
        %v450 = vunpack.c.l.b16 %v308
        %v451 = vunpack.c.l.b16 %v309
        %v452 = vunpack.c.l.b16 %v310
        %v453 = vpack.c.b16 %v390, %v389
        %v454 = vpack.c.b16 %v392, %v391
        %v455 = vpack.c.b16 %v394, %v393
        %v456 = vpack.c.b16 %v396, %v395
        %v457 = vpack.c.b16 %v398, %v397
        %v458 = vpack.c.b16 %v400, %v399
        %v459 = vpack.c.b16 %v402, %v401
        %v460 = vpack.c.b16 %v404, %v403
        %v461 = vpack.c.b16 %v406, %v405
        %v462 = vpack.c.b16 %v408, %v407
        %v463 = vpack.c.b16 %v410, %v409
        %v464 = vpack.c.b16 %v412, %v411
        %v465 = vpack.c.b16 %v414, %v413
        %v466 = vpack.c.b16 %v416, %v415
        %v467 = vpack.c.b16 %v418, %v417
        %v468 = vpack.c.b16 %v420, %v419
        %v469 = vpack.c.b16 %v422, %v421
        %v470 = vpack.c.b16 %v424, %v423
        %v471 = vpack.c.b16 %v426, %v425
        %v472 = vpack.c.b16 %v428, %v427
        %v473 = vpack.c.b16 %v430, %v429
        %v474 = vpack.c.b16 %v432, %v431
        %v475 = vpack.c.b16 %v434, %v433
        %v476 = vpack.c.b16 %v436, %v435
        %v477 = vpack.c.b16 %v438, %v437
        %v478 = vpack.c.b16 %v440, %v439
        %v479 = vpack.c.b16 %v442, %v441
        %v480 = vpack.c.b16 %v444, %v443
        %v481 = vpack.c.b16 %v446, %v445
        %v482 = vpack.c.b16 %v448, %v447
        %v483 = vpack.c.b16 %v450, %v449
        %v484 = vpack.c.b16 %v452, %v451
        %v495 = vunpack.c.l.b16 %v311
        %v496 = vunpack.c.l.b16 %v312
        %v497 = vunpack.c.l.b16 %v313
        %v498 = vunpack.c.l.b16 %v314
        %v499 = vunpack.c.l.b16 %v315
        %v500 = vunpack.c.l.b16 %v316
        %v501 = vunpack.c.l.b16 %v317
        %v502 = vunpack.c.l.b16 %v318
        %v503 = vunpack.c.l.b16 %v319
        %v504 = vunpack.c.l.b16 %v320
        %v505 = vpack.c.b16 %v496, %v495
        %v506 = vpack.c.b16 %v498, %v497
        %v507 = vpack.c.b16 %v500, %v499
        %v508 = vpack.c.b16 %v502, %v501
        %v509 = vpack.c.b16 %v504, %v503
        %vm514 = vcmask 613376
        %v516 = vsel %vm514, %v453, 0
        %v519 = vsel %vm514, %v454, 0
        %v522 = vsel %vm514, %v455, 0
        %v525 = vsel %vm514, %v456, 0
        %v528 = vsel %vm514, %v457, 0
        %v531 = vsel %vm514, %v458, 0
        %v534 = vsel %vm514, %v459, 0
        %v537 = vsel %vm514, %v460, 0
        %v540 = vsel %vm514, %v461, 0
        %v543 = vsel %vm514, %v462, 0
        %v546 = vsel %vm514, %v463, 0
        %v549 = vsel %vm514, %v464, 0
        %v552 = vsel %vm514, %v465, 0
        %v555 = vsel %vm514, %v466, 0
        %v558 = vsel %vm514, %v467, 0
        %v561 = vsel %vm514, %v468, 0
        %v564 = vsel %vm514, %v469, 0
        %v567 = vsel %vm514, %v470, 0
        %v570 = vsel %vm514, %v471, 0
        %v573 = vsel %vm514, %v472, 0
        %v576 = vsel %vm514, %v473, 0
        %v579 = vsel %vm514, %v474, 0
        %v582 = vsel %vm514, %v475, 0
        %v585 = vsel %vm514, %v476, 0
        %v588 = vsel %vm514, %v477, 0
        %v591 = vsel %vm514, %v478, 0
        %v594 = vsel %vm514, %v479, 0
        %v597 = vsel %vm514, %v480, 0
        %v600 = vsel %vm514, %v481, 0
        %v603 = vsel %vm514, %v482, 0
        %v606 = vsel %vm514, %v483, 0
        %v609 = vsel %vm514, %v484, 0
        %vm611 = vcmask 1044480
        %vm612 = vcmask 1045504
        %v613 = vsel %vm611, 4294967295, 65535
        %v614 = vsel %vm612, %v613, 0
        %v616 = vand.u32 %v509, %v614
        %618 = vmatpush.bf16.msra.mxu0 0
        %619 = vmatpush.bf16.msra.mxu0 0
        %620 = vmatpush.bf16.msra.mxu0 0
        %621 = vmatpush.bf16.msra.mxu0 %v616
        %622 = vmatpush.bf16.msra.mxu0 %v508
        %623 = vmatpush.bf16.msra.mxu0 %v507
        %624 = vmatpush.bf16.msra.mxu0 %v506
        %625 = vmatpush.bf16.msra.mxu0 %v505
        %626 = vmatmul.bf16.gmra.mxu0 %v516
        %v627 = vpop.f32.mrf.mxu0
        %v628 = vadd.f32 %v323, %v627
        %v629 = vpop.f32.mrf.mxu0
        %v630 = vadd.f32 %v323, %v629
        %631 = vmatmul.bf16.gmra.mxu0 %v519
        %v632 = vpop.f32.mrf.mxu0
        %v633 = vadd.f32 %v323, %v632
        %v634 = vpop.f32.mrf.mxu0
        %v635 = vadd.f32 %v323, %v634
        %636 = vmatmul.bf16.gmra.mxu0 %v522
        %v637 = vpop.f32.mrf.mxu0
        %v638 = vadd.f32 %v323, %v637
        %v639 = vpop.f32.mrf.mxu0
        %v640 = vadd.f32 %v323, %v639
        %641 = vmatmul.bf16.gmra.mxu0 %v525
        %v642 = vpop.f32.mrf.mxu0
        %v643 = vadd.f32 %v323, %v642
        %v644 = vpop.f32.mrf.mxu0
        %v645 = vadd.f32 %v323, %v644
        %646 = vmatmul.bf16.gmra.mxu0 %v528
        %v647 = vpop.f32.mrf.mxu0
        %v648 = vadd.f32 %v323, %v647
        %v649 = vpop.f32.mrf.mxu0
        %v650 = vadd.f32 %v323, %v649
        %651 = vmatmul.bf16.gmra.mxu0 %v531
        %v652 = vpop.f32.mrf.mxu0
        %v653 = vadd.f32 %v323, %v652
        %v654 = vpop.f32.mrf.mxu0
        %v655 = vadd.f32 %v323, %v654
        %656 = vmatmul.bf16.gmra.mxu0 %v534
        %v657 = vpop.f32.mrf.mxu0
        %v658 = vadd.f32 %v323, %v657
        %v659 = vpop.f32.mrf.mxu0
        %v660 = vadd.f32 %v323, %v659
        %661 = vmatmul.bf16.gmra.mxu0 %v537
        %v662 = vpop.f32.mrf.mxu0
        %v663 = vadd.f32 %v323, %v662
        %v664 = vpop.f32.mrf.mxu0
        %v665 = vadd.f32 %v323, %v664
        %666 = vmatmul.bf16.gmra.mxu0 %v540
        %v667 = vpop.f32.mrf.mxu0
        %v668 = vadd.f32 %v323, %v667
        %v669 = vpop.f32.mrf.mxu0
        %v670 = vadd.f32 %v323, %v669
        %671 = vmatmul.bf16.gmra.mxu0 %v543
        %v672 = vpop.f32.mrf.mxu0
        %v673 = vadd.f32 %v323, %v672
        %v674 = vpop.f32.mrf.mxu0
        %v675 = vadd.f32 %v323, %v674
        %676 = vmatmul.bf16.gmra.mxu0 %v546
        %v677 = vpop.f32.mrf.mxu0
        %v678 = vadd.f32 %v323, %v677
        %v679 = vpop.f32.mrf.mxu0
        %v680 = vadd.f32 %v323, %v679
        %681 = vmatmul.bf16.gmra.mxu0 %v549
        %v682 = vpop.f32.mrf.mxu0
        %v683 = vadd.f32 %v323, %v682
        %v684 = vpop.f32.mrf.mxu0
        %v685 = vadd.f32 %v323, %v684
        %686 = vmatmul.bf16.gmra.mxu0 %v552
        %v687 = vpop.f32.mrf.mxu0
        %v688 = vadd.f32 %v323, %v687
        %v689 = vpop.f32.mrf.mxu0
        %v690 = vadd.f32 %v323, %v689
        %691 = vmatmul.bf16.gmra.mxu0 %v555
        %v692 = vpop.f32.mrf.mxu0
        %v693 = vadd.f32 %v323, %v692
        %v694 = vpop.f32.mrf.mxu0
        %v695 = vadd.f32 %v323, %v694
        %696 = vmatmul.bf16.gmra.mxu0 %v558
        %v697 = vpop.f32.mrf.mxu0
        %v698 = vadd.f32 %v323, %v697
        %v699 = vpop.f32.mrf.mxu0
        %v700 = vadd.f32 %v323, %v699
        %701 = vmatmul.bf16.gmra.mxu0 %v561
        %v702 = vpop.f32.mrf.mxu0
        %v703 = vadd.f32 %v323, %v702
        %v704 = vpop.f32.mrf.mxu0
        %v705 = vadd.f32 %v323, %v704
        %706 = vmatmul.bf16.gmra.mxu0 %v564
        %v707 = vpop.f32.mrf.mxu0
        %v708 = vadd.f32 %v323, %v707
        %v709 = vpop.f32.mrf.mxu0
        %v710 = vadd.f32 %v323, %v709
        %711 = vmatmul.bf16.gmra.mxu0 %v567
        %v712 = vpop.f32.mrf.mxu0
        %v713 = vadd.f32 %v323, %v712
        %v714 = vpop.f32.mrf.mxu0
        %v715 = vadd.f32 %v323, %v714
        %716 = vmatmul.bf16.gmra.mxu0 %v570
        %v717 = vpop.f32.mrf.mxu0
        %v718 = vadd.f32 %v323, %v717
        %v719 = vpop.f32.mrf.mxu0
        %v720 = vadd.f32 %v323, %v719
        %721 = vmatmul.bf16.gmra.mxu0 %v573
        %v722 = vpop.f32.mrf.mxu0
        %v723 = vadd.f32 %v323, %v722
        %v724 = vpop.f32.mrf.mxu0
        %v725 = vadd.f32 %v323, %v724
        %726 = vmatmul.bf16.gmra.mxu0 %v576
        %v727 = vpop.f32.mrf.mxu0
        %v728 = vadd.f32 %v323, %v727
        %v729 = vpop.f32.mrf.mxu0
        %v730 = vadd.f32 %v323, %v729
        %731 = vmatmul.bf16.gmra.mxu0 %v579
        %v732 = vpop.f32.mrf.mxu0
        %v733 = vadd.f32 %v323, %v732
        %v734 = vpop.f32.mrf.mxu0
        %v735 = vadd.f32 %v323, %v734
        %736 = vmatmul.bf16.gmra.mxu0 %v582
        %v737 = vpop.f32.mrf.mxu0
        %v738 = vadd.f32 %v323, %v737
        %v739 = vpop.f32.mrf.mxu0
        %v740 = vadd.f32 %v323, %v739
        %741 = vmatmul.bf16.gmra.mxu0 %v585
        %v742 = vpop.f32.mrf.mxu0
        %v743 = vadd.f32 %v323, %v742
        %v744 = vpop.f32.mrf.mxu0
        %v745 = vadd.f32 %v323, %v744
        %746 = vmatmul.bf16.gmra.mxu0 %v588
        %v747 = vpop.f32.mrf.mxu0
        %v748 = vadd.f32 %v323, %v747
        %v749 = vpop.f32.mrf.mxu0
        %v750 = vadd.f32 %v323, %v749
        %751 = vmatmul.bf16.gmra.mxu0 %v591
        %v752 = vpop.f32.mrf.mxu0
        %v753 = vadd.f32 %v323, %v752
        %v754 = vpop.f32.mrf.mxu0
        %v755 = vadd.f32 %v323, %v754
        %756 = vmatmul.bf16.gmra.mxu0 %v594
        %v757 = vpop.f32.mrf.mxu0
        %v758 = vadd.f32 %v323, %v757
        %v759 = vpop.f32.mrf.mxu0
        %v760 = vadd.f32 %v323, %v759
        %761 = vmatmul.bf16.gmra.mxu0 %v597
        %v762 = vpop.f32.mrf.mxu0
        %v763 = vadd.f32 %v323, %v762
        %v764 = vpop.f32.mrf.mxu0
        %v765 = vadd.f32 %v323, %v764
        %766 = vmatmul.bf16.gmra.mxu0 %v600
        %v767 = vpop.f32.mrf.mxu0
        %v768 = vadd.f32 %v323, %v767
        %v769 = vpop.f32.mrf.mxu0
        %v770 = vadd.f32 %v323, %v769
        %771 = vmatmul.bf16.gmra.mxu0 %v603
        %v772 = vpop.f32.mrf.mxu0
        %v773 = vadd.f32 %v323, %v772
        %v774 = vpop.f32.mrf.mxu0
        %v775 = vadd.f32 %v323, %v774
        %776 = vmatmul.bf16.gmra.mxu0 %v606
        %v777 = vpop.f32.mrf.mxu0
        %v778 = vadd.f32 %v323, %v777
        %v779 = vpop.f32.mrf.mxu0
        %v780 = vadd.f32 %v323, %v779
        %781 = vmatmul.bf16.gmra.mxu0 %v609
        %v782 = vpop.f32.mrf.mxu0
        %v783 = vadd.f32 %v323, %v782
        %v784 = vpop.f32.mrf.mxu0
        %v785 = vadd.f32 %v323, %v784
        %786 = vdwg.mxu0
        %vm787 = vcmp.gt.f32.partialorder %v628, 0.0
        %vm788 = vcmp.gt.f32.partialorder %v630, 0.0
        %vm789 = vcmp.gt.f32.partialorder %v633, 0.0
        %vm790 = vcmp.gt.f32.partialorder %v635, 0.0
        %vm791 = vcmp.gt.f32.partialorder %v638, 0.0
        %vm792 = vcmp.gt.f32.partialorder %v640, 0.0
        %vm793 = vcmp.gt.f32.partialorder %v643, 0.0
        %vm794 = vcmp.gt.f32.partialorder %v645, 0.0
        %vm795 = vcmp.gt.f32.partialorder %v648, 0.0
        %vm796 = vcmp.gt.f32.partialorder %v650, 0.0
        %vm797 = vcmp.gt.f32.partialorder %v653, 0.0
        %vm798 = vcmp.gt.f32.partialorder %v655, 0.0
        %vm799 = vcmp.gt.f32.partialorder %v658, 0.0
        %vm800 = vcmp.gt.f32.partialorder %v660, 0.0
        %vm801 = vcmp.gt.f32.partialorder %v663, 0.0
        %vm802 = vcmp.gt.f32.partialorder %v665, 0.0
        %vm803 = vcmp.gt.f32.partialorder %v668, 0.0
        %vm804 = vcmp.gt.f32.partialorder %v670, 0.0
        %vm805 = vcmp.gt.f32.partialorder %v673, 0.0
        %vm806 = vcmp.gt.f32.partialorder %v675, 0.0
        %vm807 = vcmp.gt.f32.partialorder %v678, 0.0
        %vm808 = vcmp.gt.f32.partialorder %v680, 0.0
        %vm809 = vcmp.gt.f32.partialorder %v683, 0.0
        %vm810 = vcmp.gt.f32.partialorder %v685, 0.0
        %vm811 = vcmp.gt.f32.partialorder %v688, 0.0
        %vm812 = vcmp.gt.f32.partialorder %v690, 0.0
        %vm813 = vcmp.gt.f32.partialorder %v693, 0.0
        %vm814 = vcmp.gt.f32.partialorder %v695, 0.0
        %vm815 = vcmp.gt.f32.partialorder %v698, 0.0
        %vm816 = vcmp.gt.f32.partialorder %v700, 0.0
        %vm817 = vcmp.gt.f32.partialorder %v703, 0.0
        %vm818 = vcmp.gt.f32.partialorder %v705, 0.0
        %vm819 = vcmp.gt.f32.partialorder %v708, 0.0
        %vm820 = vcmp.gt.f32.partialorder %v710, 0.0
        %vm821 = vcmp.gt.f32.partialorder %v713, 0.0
        %vm822 = vcmp.gt.f32.partialorder %v715, 0.0
        %vm823 = vcmp.gt.f32.partialorder %v718, 0.0
        %vm824 = vcmp.gt.f32.partialorder %v720, 0.0
        %vm825 = vcmp.gt.f32.partialorder %v723, 0.0
        %vm826 = vcmp.gt.f32.partialorder %v725, 0.0
        %vm827 = vcmp.gt.f32.partialorder %v728, 0.0
        %vm828 = vcmp.gt.f32.partialorder %v730, 0.0
        %vm829 = vcmp.gt.f32.partialorder %v733, 0.0
        %vm830 = vcmp.gt.f32.partialorder %v735, 0.0
        %vm831 = vcmp.gt.f32.partialorder %v738, 0.0
        %vm832 = vcmp.gt.f32.partialorder %v740, 0.0
        %vm833 = vcmp.gt.f32.partialorder %v743, 0.0
        %vm834 = vcmp.gt.f32.partialorder %v745, 0.0
        %vm835 = vcmp.gt.f32.partialorder %v748, 0.0
        %vm836 = vcmp.gt.f32.partialorder %v750, 0.0
        %vm837 = vcmp.gt.f32.partialorder %v753, 0.0
        %vm838 = vcmp.gt.f32.partialorder %v755, 0.0
        %vm839 = vcmp.gt.f32.partialorder %v758, 0.0
        %vm840 = vcmp.gt.f32.partialorder %v760, 0.0
        %vm841 = vcmp.gt.f32.partialorder %v763, 0.0
        %vm842 = vcmp.gt.f32.partialorder %v765, 0.0
        %vm843 = vcmp.gt.f32.partialorder %v768, 0.0
        %vm844 = vcmp.gt.f32.partialorder %v770, 0.0
        %vm845 = vcmp.gt.f32.partialorder %v773, 0.0
        %vm846 = vcmp.gt.f32.partialorder %v775, 0.0
        %vm847 = vcmp.gt.f32.partialorder %v778, 0.0
        %vm848 = vcmp.gt.f32.partialorder %v780, 0.0
        %vm849 = vcmp.gt.f32.partialorder %v783, 0.0
        %vm850 = vcmp.gt.f32.partialorder %v785, 0.0
        %v851 = vmul.f32 %v628, 0.01
        %v852 = vmul.f32 %v630, 0.01
        %v853 = vmul.f32 %v633, 0.01
        %v854 = vmul.f32 %v635, 0.01
        %v855 = vmul.f32 %v638, 0.01
        %v856 = vmul.f32 %v640, 0.01
        %v857 = vmul.f32 %v643, 0.01
        %v858 = vmul.f32 %v645, 0.01
        %v859 = vmul.f32 %v648, 0.01
        %v860 = vmul.f32 %v650, 0.01
        %v861 = vmul.f32 %v653, 0.01
        %v862 = vmul.f32 %v655, 0.01
        %v863 = vmul.f32 %v658, 0.01
        %v864 = vmul.f32 %v660, 0.01
        %v865 = vmul.f32 %v663, 0.01
        %v866 = vmul.f32 %v665, 0.01
        %v867 = vmul.f32 %v668, 0.01
        %v868 = vmul.f32 %v670, 0.01
        %v869 = vmul.f32 %v673, 0.01
        %v870 = vmul.f32 %v675, 0.01
        %v871 = vmul.f32 %v678, 0.01
        %v872 = vmul.f32 %v680, 0.01
        %v873 = vmul.f32 %v683, 0.01
        %v874 = vmul.f32 %v685, 0.01
        %v875 = vmul.f32 %v688, 0.01
        %v876 = vmul.f32 %v690, 0.01
        %v877 = vmul.f32 %v693, 0.01
        %v878 = vmul.f32 %v695, 0.01
        %v879 = vmul.f32 %v698, 0.01
        %v880 = vmul.f32 %v700, 0.01
        %v881 = vmul.f32 %v703, 0.01
        %v882 = vmul.f32 %v705, 0.01
        %v883 = vmul.f32 %v708, 0.01
        %v884 = vmul.f32 %v710, 0.01
        %v885 = vmul.f32 %v713, 0.01
        %v886 = vmul.f32 %v715, 0.01
        %v887 = vmul.f32 %v718, 0.01
        %v888 = vmul.f32 %v720, 0.01
        %v889 = vmul.f32 %v723, 0.01
        %v890 = vmul.f32 %v725, 0.01
        %v891 = vmul.f32 %v728, 0.01
        %v892 = vmul.f32 %v730, 0.01
        %v893 = vmul.f32 %v733, 0.01
        %v894 = vmul.f32 %v735, 0.01
        %v895 = vmul.f32 %v738, 0.01
        %v896 = vmul.f32 %v740, 0.01
        %v897 = vmul.f32 %v743, 0.01
        %v898 = vmul.f32 %v745, 0.01
        %v899 = vmul.f32 %v748, 0.01
        %v900 = vmul.f32 %v750, 0.01
        %v901 = vmul.f32 %v753, 0.01
        %v902 = vmul.f32 %v755, 0.01
        %v903 = vmul.f32 %v758, 0.01
        %v904 = vmul.f32 %v760, 0.01
        %v905 = vmul.f32 %v763, 0.01
        %v906 = vmul.f32 %v765, 0.01
        %v907 = vmul.f32 %v768, 0.01
        %v908 = vmul.f32 %v770, 0.01
        %v909 = vmul.f32 %v773, 0.01
        %v910 = vmul.f32 %v775, 0.01
        %v911 = vmul.f32 %v778, 0.01
        %v912 = vmul.f32 %v780, 0.01
        %v913 = vmul.f32 %v783, 0.01
        %v914 = vmul.f32 %v785, 0.01
        %v915 = vsel %vm787, %v628, %v851
        %v916 = vsel %vm788, %v630, %v852
        %v917 = vsel %vm789, %v633, %v853
        %v918 = vsel %vm790, %v635, %v854
        %v919 = vsel %vm791, %v638, %v855
        %v920 = vsel %vm792, %v640, %v856
        %v921 = vsel %vm793, %v643, %v857
        %v922 = vsel %vm794, %v645, %v858
        %v923 = vsel %vm795, %v648, %v859
        %v924 = vsel %vm796, %v650, %v860
        %v925 = vsel %vm797, %v653, %v861
        %v926 = vsel %vm798, %v655, %v862
        %v927 = vsel %vm799, %v658, %v863
        %v928 = vsel %vm800, %v660, %v864
        %v929 = vsel %vm801, %v663, %v865
        %v930 = vsel %vm802, %v665, %v866
        %v931 = vsel %vm803, %v668, %v867
        %v932 = vsel %vm804, %v670, %v868
        %v933 = vsel %vm805, %v673, %v869
        %v934 = vsel %vm806, %v675, %v870
        %v935 = vsel %vm807, %v678, %v871
        %v936 = vsel %vm808, %v680, %v872
        %v937 = vsel %vm809, %v683, %v873
        %v938 = vsel %vm810, %v685, %v874
        %v939 = vsel %vm811, %v688, %v875
        %v940 = vsel %vm812, %v690, %v876
        %v941 = vsel %vm813, %v693, %v877
        %v942 = vsel %vm814, %v695, %v878
        %v943 = vsel %vm815, %v698, %v879
        %v944 = vsel %vm816, %v700, %v880
        %v945 = vsel %vm817, %v703, %v881
        %v946 = vsel %vm818, %v705, %v882
        %v947 = vsel %vm819, %v708, %v883
        %v948 = vsel %vm820, %v710, %v884
        %v949 = vsel %vm821, %v713, %v885
        %v950 = vsel %vm822, %v715, %v886
        %v951 = vsel %vm823, %v718, %v887
        %v952 = vsel %vm824, %v720, %v888
        %v953 = vsel %vm825, %v723, %v889
        %v954 = vsel %vm826, %v725, %v890
        %v955 = vsel %vm827, %v728, %v891
        %v956 = vsel %vm828, %v730, %v892
        %v957 = vsel %vm829, %v733, %v893
        %v958 = vsel %vm830, %v735, %v894
        %v959 = vsel %vm831, %v738, %v895
        %v960 = vsel %vm832, %v740, %v896
        %v961 = vsel %vm833, %v743, %v897
        %v962 = vsel %vm834, %v745, %v898
        %v963 = vsel %vm835, %v748, %v899
        %v964 = vsel %vm836, %v750, %v900
        %v965 = vsel %vm837, %v753, %v901
        %v966 = vsel %vm838, %v755, %v902
        %v967 = vsel %vm839, %v758, %v903
        %v968 = vsel %vm840, %v760, %v904
        %v969 = vsel %vm841, %v763, %v905
        %v970 = vsel %vm842, %v765, %v906
        %v971 = vsel %vm843, %v768, %v907
        %v972 = vsel %vm844, %v770, %v908
        %v973 = vsel %vm845, %v773, %v909
        %v974 = vsel %vm846, %v775, %v910
        %v975 = vsel %vm847, %v778, %v911
        %v976 = vsel %vm848, %v780, %v912
        %v977 = vsel %vm849, %v783, %v913
        %v978 = vsel %vm850, %v785, %v914
        %v979 = vld [vmem:[%s3] sm:$0x1]
        %v981 = vperm.slane %v979, 0
        %v983 = vmul.f32 %v915, %v981
        %v984 = vmul.f32 %v916, %v981
        %v985 = vmul.f32 %v917, %v981
        %v986 = vmul.f32 %v918, %v981
        %v987 = vmul.f32 %v919, %v981
        %v988 = vmul.f32 %v920, %v981
        %v989 = vmul.f32 %v921, %v981
        %v990 = vmul.f32 %v922, %v981
        %v991 = vmul.f32 %v923, %v981
        %v992 = vmul.f32 %v924, %v981
        %v993 = vmul.f32 %v925, %v981
        %v994 = vmul.f32 %v926, %v981
        %v995 = vmul.f32 %v927, %v981
        %v996 = vmul.f32 %v928, %v981
        %v997 = vmul.f32 %v929, %v981
        %v998 = vmul.f32 %v930, %v981
        %v999 = vmul.f32 %v931, %v981
        %v1000 = vmul.f32 %v932, %v981
        %v1001 = vmul.f32 %v933, %v981
        %v1002 = vmul.f32 %v934, %v981
        %v1003 = vmul.f32 %v935, %v981
        %v1004 = vmul.f32 %v936, %v981
        %v1005 = vmul.f32 %v937, %v981
        %v1006 = vmul.f32 %v938, %v981
        %v1007 = vmul.f32 %v939, %v981
        %v1008 = vmul.f32 %v940, %v981
        %v1009 = vmul.f32 %v941, %v981
        %v1010 = vmul.f32 %v942, %v981
        %v1011 = vmul.f32 %v943, %v981
        %v1012 = vmul.f32 %v944, %v981
        %v1013 = vmul.f32 %v945, %v981
        %v1014 = vmul.f32 %v946, %v981
        %v1015 = vmul.f32 %v947, %v981
        %v1016 = vmul.f32 %v948, %v981
        %v1017 = vmul.f32 %v949, %v981
        %v1018 = vmul.f32 %v950, %v981
        %v1019 = vmul.f32 %v951, %v981
        %v1020 = vmul.f32 %v952, %v981
        %v1021 = vmul.f32 %v953, %v981
        %v1022 = vmul.f32 %v954, %v981
        %v1023 = vmul.f32 %v955, %v981
        %v1024 = vmul.f32 %v956, %v981
        %v1025 = vmul.f32 %v957, %v981
        %v1026 = vmul.f32 %v958, %v981
        %v1027 = vmul.f32 %v959, %v981
        %v1028 = vmul.f32 %v960, %v981
        %v1029 = vmul.f32 %v961, %v981
        %v1030 = vmul.f32 %v962, %v981
        %v1031 = vmul.f32 %v963, %v981
        %v1032 = vmul.f32 %v964, %v981
        %v1033 = vmul.f32 %v965, %v981
        %v1034 = vmul.f32 %v966, %v981
        %v1035 = vmul.f32 %v967, %v981
        %v1036 = vmul.f32 %v968, %v981
        %v1037 = vmul.f32 %v969, %v981
        %v1038 = vmul.f32 %v970, %v981
        %v1039 = vmul.f32 %v971, %v981
        %v1040 = vmul.f32 %v972, %v981
        %v1041 = vmul.f32 %v973, %v981
        %v1042 = vmul.f32 %v974, %v981
        %v1043 = vmul.f32 %v975, %v981
        %v1044 = vmul.f32 %v976, %v981
        %v1045 = vmul.f32 %v977, %v981
        %v1046 = vmul.f32 %v978, %v981
        %v1047 = vld [vmem:[%s4] sm:$0x1]
        %v1049 = vperm.slane %v1047, 0
        %v1051 = vadd.f32 %v983, %v1049
        %v1052 = vadd.f32 %v984, %v1049
        %v1053 = vadd.f32 %v985, %v1049
        %v1054 = vadd.f32 %v986, %v1049
        %v1055 = vadd.f32 %v987, %v1049
        %v1056 = vadd.f32 %v988, %v1049
        %v1057 = vadd.f32 %v989, %v1049
        %v1058 = vadd.f32 %v990, %v1049
        %v1059 = vadd.f32 %v991, %v1049
        %v1060 = vadd.f32 %v992, %v1049
        %v1061 = vadd.f32 %v993, %v1049
        %v1062 = vadd.f32 %v994, %v1049
        %v1063 = vadd.f32 %v995, %v1049
        %v1064 = vadd.f32 %v996, %v1049
        %v1065 = vadd.f32 %v997, %v1049
        %v1066 = vadd.f32 %v998, %v1049
        %v1067 = vadd.f32 %v999, %v1049
        %v1068 = vadd.f32 %v1000, %v1049
        %v1069 = vadd.f32 %v1001, %v1049
        %v1070 = vadd.f32 %v1002, %v1049
        %v1071 = vadd.f32 %v1003, %v1049
        %v1072 = vadd.f32 %v1004, %v1049
        %v1073 = vadd.f32 %v1005, %v1049
        %v1074 = vadd.f32 %v1006, %v1049
        %v1075 = vadd.f32 %v1007, %v1049
        %v1076 = vadd.f32 %v1008, %v1049
        %v1077 = vadd.f32 %v1009, %v1049
        %v1078 = vadd.f32 %v1010, %v1049
        %v1079 = vadd.f32 %v1011, %v1049
        %v1080 = vadd.f32 %v1012, %v1049
        %v1081 = vadd.f32 %v1013, %v1049
        %v1082 = vadd.f32 %v1014, %v1049
        %v1083 = vadd.f32 %v1015, %v1049
        %v1084 = vadd.f32 %v1016, %v1049
        %v1085 = vadd.f32 %v1017, %v1049
        %v1086 = vadd.f32 %v1018, %v1049
        %v1087 = vadd.f32 %v1019, %v1049
        %v1088 = vadd.f32 %v1020, %v1049
        %v1089 = vadd.f32 %v1021, %v1049
        %v1090 = vadd.f32 %v1022, %v1049
        %v1091 = vadd.f32 %v1023, %v1049
        %v1092 = vadd.f32 %v1024, %v1049
        %v1093 = vadd.f32 %v1025, %v1049
        %v1094 = vadd.f32 %v1026, %v1049
        %v1095 = vadd.f32 %v1027, %v1049
        %v1096 = vadd.f32 %v1028, %v1049
        %v1097 = vadd.f32 %v1029, %v1049
        %v1098 = vadd.f32 %v1030, %v1049
        %v1099 = vadd.f32 %v1031, %v1049
        %v1100 = vadd.f32 %v1032, %v1049
        %v1101 = vadd.f32 %v1033, %v1049
        %v1102 = vadd.f32 %v1034, %v1049
        %v1103 = vadd.f32 %v1035, %v1049
        %v1104 = vadd.f32 %v1036, %v1049
        %v1105 = vadd.f32 %v1037, %v1049
        %v1106 = vadd.f32 %v1038, %v1049
        %v1107 = vadd.f32 %v1039, %v1049
        %v1108 = vadd.f32 %v1040, %v1049
        %v1109 = vadd.f32 %v1041, %v1049
        %v1110 = vadd.f32 %v1042, %v1049
        %v1111 = vadd.f32 %v1043, %v1049
        %v1112 = vadd.f32 %v1044, %v1049
        %v1113 = vadd.f32 %v1045, %v1049
        %v1114 = vadd.f32 %v1046, %v1049
        %v1115 = vpack.c.bf16 %v1051, %v1051
        %v1116 = vpack.c.bf16 %v1052, %v1052
        %v1117 = vpack.c.bf16 %v1053, %v1053
        %v1118 = vpack.c.bf16 %v1054, %v1054
        %v1119 = vpack.c.bf16 %v1055, %v1055
        %v1120 = vpack.c.bf16 %v1056, %v1056
        %v1121 = vpack.c.bf16 %v1057, %v1057
        %v1122 = vpack.c.bf16 %v1058, %v1058
        %v1123 = vpack.c.bf16 %v1059, %v1059
        %v1124 = vpack.c.bf16 %v1060, %v1060
        %v1125 = vpack.c.bf16 %v1061, %v1061
        %v1126 = vpack.c.bf16 %v1062, %v1062
        %v1127 = vpack.c.bf16 %v1063, %v1063
        %v1128 = vpack.c.bf16 %v1064, %v1064
        %v1129 = vpack.c.bf16 %v1065, %v1065
        %v1130 = vpack.c.bf16 %v1066, %v1066
        %v1131 = vpack.c.bf16 %v1067, %v1067
        %v1132 = vpack.c.bf16 %v1068, %v1068
        %v1133 = vpack.c.bf16 %v1069, %v1069
        %v1134 = vpack.c.bf16 %v1070, %v1070
        %v1135 = vpack.c.bf16 %v1071, %v1071
        %v1136 = vpack.c.bf16 %v1072, %v1072
        %v1137 = vpack.c.bf16 %v1073, %v1073
        %v1138 = vpack.c.bf16 %v1074, %v1074
        %v1139 = vpack.c.bf16 %v1075, %v1075
        %v1140 = vpack.c.bf16 %v1076, %v1076
        %v1141 = vpack.c.bf16 %v1077, %v1077
        %v1142 = vpack.c.bf16 %v1078, %v1078
        %v1143 = vpack.c.bf16 %v1079, %v1079
        %v1144 = vpack.c.bf16 %v1080, %v1080
        %v1145 = vpack.c.bf16 %v1081, %v1081
        %v1146 = vpack.c.bf16 %v1082, %v1082
        %v1147 = vpack.c.bf16 %v1083, %v1083
        %v1148 = vpack.c.bf16 %v1084, %v1084
        %v1149 = vpack.c.bf16 %v1085, %v1085
        %v1150 = vpack.c.bf16 %v1086, %v1086
        %v1151 = vpack.c.bf16 %v1087, %v1087
        %v1152 = vpack.c.bf16 %v1088, %v1088
        %v1153 = vpack.c.bf16 %v1089, %v1089
        %v1154 = vpack.c.bf16 %v1090, %v1090
        %v1155 = vpack.c.bf16 %v1091, %v1091
        %v1156 = vpack.c.bf16 %v1092, %v1092
        %v1157 = vpack.c.bf16 %v1093, %v1093
        %v1158 = vpack.c.bf16 %v1094, %v1094
        %v1159 = vpack.c.bf16 %v1095, %v1095
        %v1160 = vpack.c.bf16 %v1096, %v1096
        %v1161 = vpack.c.bf16 %v1097, %v1097
        %v1162 = vpack.c.bf16 %v1098, %v1098
        %v1163 = vpack.c.bf16 %v1099, %v1099
        %v1164 = vpack.c.bf16 %v1100, %v1100
        %v1165 = vpack.c.bf16 %v1101, %v1101
        %v1166 = vpack.c.bf16 %v1102, %v1102
        %v1167 = vpack.c.bf16 %v1103, %v1103
        %v1168 = vpack.c.bf16 %v1104, %v1104
        %v1169 = vpack.c.bf16 %v1105, %v1105
        %v1170 = vpack.c.bf16 %v1106, %v1106
        %v1171 = vpack.c.bf16 %v1107, %v1107
        %v1172 = vpack.c.bf16 %v1108, %v1108
        %v1173 = vpack.c.bf16 %v1109, %v1109
        %v1174 = vpack.c.bf16 %v1110, %v1110
        %v1175 = vpack.c.bf16 %v1111, %v1111
        %v1176 = vpack.c.bf16 %v1112, %v1112
        %v1177 = vpack.c.bf16 %v1113, %v1113
        %v1178 = vpack.c.bf16 %v1114, %v1114
        %vm1179 = vcmask 125952
        %1180 = vst.msk [vmem:[%s226] sm:$0xf] %vm1179, %v1115
        %1181 = vst.msk [vmem:[%s226 + $0x4] sm:$0xf] %vm1179, %v1116
        %1182 = vst.msk [vmem:[%s226 + $0x8] sm:$0xf] %vm1179, %v1117
        %1183 = vst.msk [vmem:[%s226 + $0xc] sm:$0xf] %vm1179, %v1118
        %1184 = vst.msk [vmem:[%s226 + $0x10] sm:$0xf] %vm1179, %v1119
        %1185 = vst.msk [vmem:[%s226 + $0x14] sm:$0xf] %vm1179, %v1120
        %1186 = vst.msk [vmem:[%s226 + $0x18] sm:$0xf] %vm1179, %v1121
        %1187 = vst.msk [vmem:[%s226 + $0x1c] sm:$0xf] %vm1179, %v1122
        %1188 = vst.msk [vmem:[%s226 + $0x20] sm:$0xf] %vm1179, %v1123
        %1189 = vst.msk [vmem:[%s226 + $0x24] sm:$0xf] %vm1179, %v1124
        %1190 = vst.msk [vmem:[%s226 + $0x28] sm:$0xf] %vm1179, %v1125
        %1191 = vst.msk [vmem:[%s226 + $0x2c] sm:$0xf] %vm1179, %v1126
        %1192 = vst.msk [vmem:[%s226 + $0x30] sm:$0xf] %vm1179, %v1127
        %1193 = vst.msk [vmem:[%s226 + $0x34] sm:$0xf] %vm1179, %v1128
        %1194 = vst.msk [vmem:[%s226 + $0x38] sm:$0xf] %vm1179, %v1129
        %1195 = vst.msk [vmem:[%s226 + $0x3c] sm:$0xf] %vm1179, %v1130
        %1196 = vst.msk [vmem:[%s226 + $0x40] sm:$0xf] %vm1179, %v1131
        %1197 = vst.msk [vmem:[%s226 + $0x44] sm:$0xf] %vm1179, %v1132
        %1198 = vst.msk [vmem:[%s226 + $0x48] sm:$0xf] %vm1179, %v1133
        %1199 = vst.msk [vmem:[%s226 + $0x4c] sm:$0xf] %vm1179, %v1134
        %1200 = vst.msk [vmem:[%s226 + $0x50] sm:$0xf] %vm1179, %v1135
        %1201 = vst.msk [vmem:[%s226 + $0x54] sm:$0xf] %vm1179, %v1136
        %1202 = vst.msk [vmem:[%s226 + $0x58] sm:$0xf] %vm1179, %v1137
        %1203 = vst.msk [vmem:[%s226 + $0x5c] sm:$0xf] %vm1179, %v1138
        %1204 = vst.msk [vmem:[%s226 + $0x60] sm:$0xf] %vm1179, %v1139
        %1205 = vst.msk [vmem:[%s226 + $0x64] sm:$0xf] %vm1179, %v1140
        %1206 = vst.msk [vmem:[%s226 + $0x68] sm:$0xf] %vm1179, %v1141
        %1207 = vst.msk [vmem:[%s226 + $0x6c] sm:$0xf] %vm1179, %v1142
        %1208 = vst.msk [vmem:[%s226 + $0x70] sm:$0xf] %vm1179, %v1143
        %1209 = vst.msk [vmem:[%s226 + $0x74] sm:$0xf] %vm1179, %v1144
        %1210 = vst.msk [vmem:[%s226 + $0x78] sm:$0xf] %vm1179, %v1145
        %1211 = vst.msk [vmem:[%s226 + $0x7c] sm:$0xf] %vm1179, %v1146
        %1212 = vst.msk [vmem:[%s226 + $0x80] sm:$0xf] %vm1179, %v1147
        %1213 = vst.msk [vmem:[%s226 + $0x84] sm:$0xf] %vm1179, %v1148
        %1214 = vst.msk [vmem:[%s226 + $0x88] sm:$0xf] %vm1179, %v1149
        %1215 = vst.msk [vmem:[%s226 + $0x8c] sm:$0xf] %vm1179, %v1150
        %1216 = vst.msk [vmem:[%s226 + $0x90] sm:$0xf] %vm1179, %v1151
        %1217 = vst.msk [vmem:[%s226 + $0x94] sm:$0xf] %vm1179, %v1152
        %1218 = vst.msk [vmem:[%s226 + $0x98] sm:$0xf] %vm1179, %v1153
        %1219 = vst.msk [vmem:[%s226 + $0x9c] sm:$0xf] %vm1179, %v1154
        %1220 = vst.msk [vmem:[%s226 + $0xa0] sm:$0xf] %vm1179, %v1155
        %1221 = vst.msk [vmem:[%s226 + $0xa4] sm:$0xf] %vm1179, %v1156
        %1222 = vst.msk [vmem:[%s226 + $0xa8] sm:$0xf] %vm1179, %v1157
        %1223 = vst.msk [vmem:[%s226 + $0xac] sm:$0xf] %vm1179, %v1158
        %1224 = vst.msk [vmem:[%s226 + $0xb0] sm:$0xf] %vm1179, %v1159
        %1225 = vst.msk [vmem:[%s226 + $0xb4] sm:$0xf] %vm1179, %v1160
        %1226 = vst.msk [vmem:[%s226 + $0xb8] sm:$0xf] %vm1179, %v1161
        %1227 = vst.msk [vmem:[%s226 + $0xbc] sm:$0xf] %vm1179, %v1162
        %1228 = vst.msk [vmem:[%s226 + $0xc0] sm:$0xf] %vm1179, %v1163
        %1229 = vst.msk [vmem:[%s226 + $0xc4] sm:$0xf] %vm1179, %v1164
        %1230 = vst.msk [vmem:[%s226 + $0xc8] sm:$0xf] %vm1179, %v1165
        %1231 = vst.msk [vmem:[%s226 + $0xcc] sm:$0xf] %vm1179, %v1166
        %1232 = vst.msk [vmem:[%s226 + $0xd0] sm:$0xf] %vm1179, %v1167
        %1233 = vst.msk [vmem:[%s226 + $0xd4] sm:$0xf] %vm1179, %v1168
        %1234 = vst.msk [vmem:[%s226 + $0xd8] sm:$0xf] %vm1179, %v1169
        %1235 = vst.msk [vmem:[%s226 + $0xdc] sm:$0xf] %vm1179, %v1170
        %1236 = vst.msk [vmem:[%s226 + $0xe0] sm:$0xf] %vm1179, %v1171
        %1237 = vst.msk [vmem:[%s226 + $0xe4] sm:$0xf] %vm1179, %v1172
        %1238 = vst.msk [vmem:[%s226 + $0xe8] sm:$0xf] %vm1179, %v1173
        %1239 = vst.msk [vmem:[%s226 + $0xec] sm:$0xf] %vm1179, %v1174
        %1240 = vst.msk [vmem:[%s226 + $0xf0] sm:$0xf] %vm1179, %v1175
        %1241 = vst.msk [vmem:[%s226 + $0xf4] sm:$0xf] %vm1179, %v1176
        %1242 = vst.msk [vmem:[%s226 + $0xf8] sm:$0xf] %vm1179, %v1177
        %1243 = vst.msk [vmem:[%s226 + $0xfc] sm:$0xf] %vm1179, %v1178
        %s1244 = sand.u32 %s134, 1
        %s1245 = sand.u32 %s134, 1
        %s1246 = smul.addr %s1245, 256
        %s1247 = scalar_lea.vmem [#allocation2], %s1246
        // Predicated region
        $region41: #{_lambda_.10} parent=39 // pred_check
          %p1248 = pneg %p144
        $region42: #{_lambda_.10} parent=39 // pred_check_branch
          %1250 = sbr.rel (%p1248) target = $region44
        $region43: #{_lambda_.10} parent=39 // pred_region
          %s1251 = smul.u32 64, %s16
          %s1252 = ssub.s32 273, %s1251
          %p1253 = scmp.lt.s32.totalorder %s1252, 64
          %s1254 = scalar_select %p1253, %s1252, 64
          %s1255 = smul.u32 4, %s1254
          %p1256 = scmp.ne.s32.totalorder 0, %s1255
          %s1257 = smul.addr %s1251, 4
          %s1258 = scalar_lea.vmem %s5, %s1257
          // Predicated region
          $region45: #{_lambda_.10} parent=43 // pred_check
            %p1259 = pneg %p1256
          $region46: #{_lambda_.10} parent=43 // pred_check_branch
            %1261 = sbr.rel (%p1259) target = $region48
          $region47: #{_lambda_.10} parent=43 // pred_region
            // Predicated region
            $region49: #{_lambda_.10} parent=47 // pred_check
              _
            $region50: #{_lambda_.10} parent=47 // pred_check_branch
              %1263 = sbr.rel target = $region52
            $region51: #{_lambda_.10} parent=47 // pred_region
              // Predicated region
              $region71: #{_lambda_.10} parent=51 // pred_check
                _
              $region72: #{_lambda_.10} parent=51 // pred_check_branch
                %1375 = sbr.rel (0) target = $region74
              $region73: #{_lambda_.10} parent=51 // pred_region
                %s1377 = ssub.s32 16, 1
                %s1378 = sshrl.u32 %s1254, 5
                // While loop
                $region75: #{_lambda_.10} parent=73 // loop_pre_header
                  _
                $region76: #{_lambda_.10} parent=73 // loop_header
                  %s1380 = sphi 0, %s1382
                  %p1381 = scmp.ge.s32.totalorder %s1380, %s1378
                  %s1385 = sphi 0, %s1454
                  %s1386 = sphi %s1247, %s1457
                  %s1387 = sphi %s1258, %s1458
                $region77: #{_lambda_.10} parent=73 // loop_header_branch
                  %1384 = sbr.rel (%p1381) target = $region81
                $region78: #{_lambda_.10} parent=73 // loop_body
                  %v1388 = vld [vmem:[%s1386] sm:%s1377]
                  %1389 = vst [vmem:[%s1387] sm:%s1377] %v1388
                  %v1390 = vld [vmem:[%s1386 + $0x4] sm:%s1377]
                  %1391 = vst [vmem:[%s1387 + $0x4] sm:%s1377] %v1390
                  %v1392 = vld [vmem:[%s1386 + $0x8] sm:%s1377]
                  %1393 = vst [vmem:[%s1387 + $0x8] sm:%s1377] %v1392
                  %v1394 = vld [vmem:[%s1386 + $0xc] sm:%s1377]
                  %1395 = vst [vmem:[%s1387 + $0xc] sm:%s1377] %v1394
                  %v1396 = vld [vmem:[%s1386 + $0x10] sm:%s1377]
                  %1397 = vst [vmem:[%s1387 + $0x10] sm:%s1377] %v1396
                  %v1398 = vld [vmem:[%s1386 + $0x14] sm:%s1377]
                  %1399 = vst [vmem:[%s1387 + $0x14] sm:%s1377] %v1398
                  %v1400 = vld [vmem:[%s1386 + $0x18] sm:%s1377]
                  %1401 = vst [vmem:[%s1387 + $0x18] sm:%s1377] %v1400
                  %v1402 = vld [vmem:[%s1386 + $0x1c] sm:%s1377]
                  %1403 = vst [vmem:[%s1387 + $0x1c] sm:%s1377] %v1402
                  %v1404 = vld [vmem:[%s1386 + $0x20] sm:%s1377]
                  %1405 = vst [vmem:[%s1387 + $0x20] sm:%s1377] %v1404
                  %v1406 = vld [vmem:[%s1386 + $0x24] sm:%s1377]
                  %1407 = vst [vmem:[%s1387 + $0x24] sm:%s1377] %v1406
                  %v1408 = vld [vmem:[%s1386 + $0x28] sm:%s1377]
                  %1409 = vst [vmem:[%s1387 + $0x28] sm:%s1377] %v1408
                  %v1410 = vld [vmem:[%s1386 + $0x2c] sm:%s1377]
                  %1411 = vst [vmem:[%s1387 + $0x2c] sm:%s1377] %v1410
                  %v1412 = vld [vmem:[%s1386 + $0x30] sm:%s1377]
                  %1413 = vst [vmem:[%s1387 + $0x30] sm:%s1377] %v1412
                  %v1414 = vld [vmem:[%s1386 + $0x34] sm:%s1377]
                  %1415 = vst [vmem:[%s1387 + $0x34] sm:%s1377] %v1414
                  %v1416 = vld [vmem:[%s1386 + $0x38] sm:%s1377]
                  %1417 = vst [vmem:[%s1387 + $0x38] sm:%s1377] %v1416
                  %v1418 = vld [vmem:[%s1386 + $0x3c] sm:%s1377]
                  %1419 = vst [vmem:[%s1387 + $0x3c] sm:%s1377] %v1418
                  %v1420 = vld [vmem:[%s1386 + $0x40] sm:%s1377]
                  %1421 = vst [vmem:[%s1387 + $0x40] sm:%s1377] %v1420
                  %v1422 = vld [vmem:[%s1386 + $0x44] sm:%s1377]
                  %1423 = vst [vmem:[%s1387 + $0x44] sm:%s1377] %v1422
                  %v1424 = vld [vmem:[%s1386 + $0x48] sm:%s1377]
                  %1425 = vst [vmem:[%s1387 + $0x48] sm:%s1377] %v1424
                  %v1426 = vld [vmem:[%s1386 + $0x4c] sm:%s1377]
                  %1427 = vst [vmem:[%s1387 + $0x4c] sm:%s1377] %v1426
                  %v1428 = vld [vmem:[%s1386 + $0x50] sm:%s1377]
                  %1429 = vst [vmem:[%s1387 + $0x50] sm:%s1377] %v1428
                  %v1430 = vld [vmem:[%s1386 + $0x54] sm:%s1377]
                  %1431 = vst [vmem:[%s1387 + $0x54] sm:%s1377] %v1430
                  %v1432 = vld [vmem:[%s1386 + $0x58] sm:%s1377]
                  %1433 = vst [vmem:[%s1387 + $0x58] sm:%s1377] %v1432
                  %v1434 = vld [vmem:[%s1386 + $0x5c] sm:%s1377]
                  %1435 = vst [vmem:[%s1387 + $0x5c] sm:%s1377] %v1434
                  %v1436 = vld [vmem:[%s1386 + $0x60] sm:%s1377]
                  %1437 = vst [vmem:[%s1387 + $0x60] sm:%s1377] %v1436
                  %v1438 = vld [vmem:[%s1386 + $0x64] sm:%s1377]
                  %1439 = vst [vmem:[%s1387 + $0x64] sm:%s1377] %v1438
                  %v1440 = vld [vmem:[%s1386 + $0x68] sm:%s1377]
                  %1441 = vst [vmem:[%s1387 + $0x68] sm:%s1377] %v1440
                  %v1442 = vld [vmem:[%s1386 + $0x6c] sm:%s1377]
                  %1443 = vst [vmem:[%s1387 + $0x6c] sm:%s1377] %v1442
                  %v1444 = vld [vmem:[%s1386 + $0x70] sm:%s1377]
                  %1445 = vst [vmem:[%s1387 + $0x70] sm:%s1377] %v1444
                  %v1446 = vld [vmem:[%s1386 + $0x74] sm:%s1377]
                  %1447 = vst [vmem:[%s1387 + $0x74] sm:%s1377] %v1446
                  %v1448 = vld [vmem:[%s1386 + $0x78] sm:%s1377]
                  %1449 = vst [vmem:[%s1387 + $0x78] sm:%s1377] %v1448
                  %v1450 = vld [vmem:[%s1386 + $0x7c] sm:%s1377]
                  %1451 = vst [vmem:[%s1387 + $0x7c] sm:%s1377] %v1450
                  %s1452 = sadd.s32 1, %s1385
                  %p1453 = scmp.ge.s32.totalorder %s1452, %s1378
                  %s1454 = scalar_select %p1453, 0, %s1452
                  %s1455 = smul.u32 %s1454, 128
                  %s1456 = smul.u32 %s1454, 128
                  %s1457 = scalar_lea.vmem %s1247, %s1455 [#allocation2]
                  %s1458 = scalar_lea.vmem %s1258, %s1456
                $region79: #{_lambda_.10} parent=73 // loop_footer
                  %s1382 = sadd.s32 %s1380, 1
                $region80: #{_lambda_.10} parent=73 // loop_footer_branch
                  %1379 = sbr.rel target = $region76
                $region81: #{_lambda_.10} parent=73 // loop_exit
                  _
                %s1459 = sshrl.u32 %s1254, 5
                %s1460 = sand.u32 %s1254, 31
                %s1461 = smul.u32 %s1459, 32
                %s1462 = smul.u32 4, %s1461
                %s1463 = scalar_lea.vmem %s1247, %s1462 [#allocation2]
                %s1464 = smul.u32 4, %s1461
                %s1465 = scalar_lea.vmem %s1258, %s1464
                // While loop
                $region82: #{_lambda_.10} parent=73 // loop_pre_header
                  _
                $region83: #{_lambda_.10} parent=73 // loop_header
                  %s1467 = sphi 0, %s1469
                  %p1468 = scmp.ge.s32.totalorder %s1467, %s1460
                  %s1472 = sphi 0, %s1479
                  %s1473 = sphi %s1463, %s1482
                  %s1474 = sphi %s1465, %s1483
                $region84: #{_lambda_.10} parent=73 // loop_header_branch
                  %1471 = sbr.rel (%p1468) target = $region88
                $region85: #{_lambda_.10} parent=73 // loop_body
                  %v1475 = vld [vmem:[%s1473] sm:%s1377]
                  %1476 = vst [vmem:[%s1474] sm:%s1377] %v1475
                  %s1477 = sadd.s32 1, %s1472
                  %p1478 = scmp.ge.s32.totalorder %s1477, %s1460
                  %s1479 = scalar_select %p1478, 0, %s1477
                  %s1480 = smul.u32 %s1479, 4
                  %s1481 = smul.u32 %s1479, 4
                  %s1482 = scalar_lea.vmem %s1463, %s1480 [#allocation2]
                  %s1483 = scalar_lea.vmem %s1465, %s1481
                $region86: #{_lambda_.10} parent=73 // loop_footer
                  %s1469 = sadd.s32 %s1467, 1
                $region87: #{_lambda_.10} parent=73 // loop_footer_branch
                  %1466 = sbr.rel target = $region83
                $region88: #{_lambda_.10} parent=73 // loop_exit
                  _
              $region74: #{_lambda_.10} parent=51 // pred_fallthru
                _
            $region52: #{_lambda_.10} parent=47 // pred_fallthru
              _
            // Predicated region
            $region53: #{_lambda_.10} parent=47 // pred_check
              _
            $region54: #{_lambda_.10} parent=47 // pred_check_branch
              %1265 = sbr.rel (0) target = $region56
            $region55: #{_lambda_.10} parent=47 // pred_region
              %s1267 = ssub.s32 16, 1
              %s1268 = sshrl.u32 %s1254, 5
              // While loop
              $region57: #{_lambda_.10} parent=55 // loop_pre_header
                _
              $region58: #{_lambda_.10} parent=55 // loop_header
                %s1270 = sphi 0, %s1272
                %p1271 = scmp.ge.s32.totalorder %s1270, %s1268
                %s1275 = sphi 0, %s1344
                %s1276 = sphi %s1247, %s1347
                %s1277 = sphi %s1258, %s1348
              $region59: #{_lambda_.10} parent=55 // loop_header_branch
                %1274 = sbr.rel (%p1271) target = $region63
              $region60: #{_lambda_.10} parent=55 // loop_body
                %v1278 = vld [vmem:[%s1276] sm:%s1267]
                %1279 = vst [vmem:[%s1277] sm:%s1267] %v1278
                %v1280 = vld [vmem:[%s1276 + $0x4] sm:%s1267]
                %1281 = vst [vmem:[%s1277 + $0x4] sm:%s1267] %v1280
                %v1282 = vld [vmem:[%s1276 + $0x8] sm:%s1267]
                %1283 = vst [vmem:[%s1277 + $0x8] sm:%s1267] %v1282
                %v1284 = vld [vmem:[%s1276 + $0xc] sm:%s1267]
                %1285 = vst [vmem:[%s1277 + $0xc] sm:%s1267] %v1284
                %v1286 = vld [vmem:[%s1276 + $0x10] sm:%s1267]
                %1287 = vst [vmem:[%s1277 + $0x10] sm:%s1267] %v1286
                %v1288 = vld [vmem:[%s1276 + $0x14] sm:%s1267]
                %1289 = vst [vmem:[%s1277 + $0x14] sm:%s1267] %v1288
                %v1290 = vld [vmem:[%s1276 + $0x18] sm:%s1267]
                %1291 = vst [vmem:[%s1277 + $0x18] sm:%s1267] %v1290
                %v1292 = vld [vmem:[%s1276 + $0x1c] sm:%s1267]
                %1293 = vst [vmem:[%s1277 + $0x1c] sm:%s1267] %v1292
                %v1294 = vld [vmem:[%s1276 + $0x20] sm:%s1267]
                %1295 = vst [vmem:[%s1277 + $0x20] sm:%s1267] %v1294
                %v1296 = vld [vmem:[%s1276 + $0x24] sm:%s1267]
                %1297 = vst [vmem:[%s1277 + $0x24] sm:%s1267] %v1296
                %v1298 = vld [vmem:[%s1276 + $0x28] sm:%s1267]
                %1299 = vst [vmem:[%s1277 + $0x28] sm:%s1267] %v1298
                %v1300 = vld [vmem:[%s1276 + $0x2c] sm:%s1267]
                %1301 = vst [vmem:[%s1277 + $0x2c] sm:%s1267] %v1300
                %v1302 = vld [vmem:[%s1276 + $0x30] sm:%s1267]
                %1303 = vst [vmem:[%s1277 + $0x30] sm:%s1267] %v1302
                %v1304 = vld [vmem:[%s1276 + $0x34] sm:%s1267]
                %1305 = vst [vmem:[%s1277 + $0x34] sm:%s1267] %v1304
                %v1306 = vld [vmem:[%s1276 + $0x38] sm:%s1267]
                %1307 = vst [vmem:[%s1277 + $0x38] sm:%s1267] %v1306
                %v1308 = vld [vmem:[%s1276 + $0x3c] sm:%s1267]
                %1309 = vst [vmem:[%s1277 + $0x3c] sm:%s1267] %v1308
                %v1310 = vld [vmem:[%s1276 + $0x40] sm:%s1267]
                %1311 = vst [vmem:[%s1277 + $0x40] sm:%s1267] %v1310
                %v1312 = vld [vmem:[%s1276 + $0x44] sm:%s1267]
                %1313 = vst [vmem:[%s1277 + $0x44] sm:%s1267] %v1312
                %v1314 = vld [vmem:[%s1276 + $0x48] sm:%s1267]
                %1315 = vst [vmem:[%s1277 + $0x48] sm:%s1267] %v1314
                %v1316 = vld [vmem:[%s1276 + $0x4c] sm:%s1267]
                %1317 = vst [vmem:[%s1277 + $0x4c] sm:%s1267] %v1316
                %v1318 = vld [vmem:[%s1276 + $0x50] sm:%s1267]
                %1319 = vst [vmem:[%s1277 + $0x50] sm:%s1267] %v1318
                %v1320 = vld [vmem:[%s1276 + $0x54] sm:%s1267]
                %1321 = vst [vmem:[%s1277 + $0x54] sm:%s1267] %v1320
                %v1322 = vld [vmem:[%s1276 + $0x58] sm:%s1267]
                %1323 = vst [vmem:[%s1277 + $0x58] sm:%s1267] %v1322
                %v1324 = vld [vmem:[%s1276 + $0x5c] sm:%s1267]
                %1325 = vst [vmem:[%s1277 + $0x5c] sm:%s1267] %v1324
                %v1326 = vld [vmem:[%s1276 + $0x60] sm:%s1267]
                %1327 = vst [vmem:[%s1277 + $0x60] sm:%s1267] %v1326
                %v1328 = vld [vmem:[%s1276 + $0x64] sm:%s1267]
                %1329 = vst [vmem:[%s1277 + $0x64] sm:%s1267] %v1328
                %v1330 = vld [vmem:[%s1276 + $0x68] sm:%s1267]
                %1331 = vst [vmem:[%s1277 + $0x68] sm:%s1267] %v1330
                %v1332 = vld [vmem:[%s1276 + $0x6c] sm:%s1267]
                %1333 = vst [vmem:[%s1277 + $0x6c] sm:%s1267] %v1332
                %v1334 = vld [vmem:[%s1276 + $0x70] sm:%s1267]
                %1335 = vst [vmem:[%s1277 + $0x70] sm:%s1267] %v1334
                %v1336 = vld [vmem:[%s1276 + $0x74] sm:%s1267]
                %1337 = vst [vmem:[%s1277 + $0x74] sm:%s1267] %v1336
                %v1338 = vld [vmem:[%s1276 + $0x78] sm:%s1267]
                %1339 = vst [vmem:[%s1277 + $0x78] sm:%s1267] %v1338
                %v1340 = vld [vmem:[%s1276 + $0x7c] sm:%s1267]
                %1341 = vst [vmem:[%s1277 + $0x7c] sm:%s1267] %v1340
                %s1342 = sadd.s32 1, %s1275
                %p1343 = scmp.ge.s32.totalorder %s1342, %s1268
                %s1344 = scalar_select %p1343, 0, %s1342
                %s1345 = smul.u32 %s1344, 128
                %s1346 = smul.u32 %s1344, 128
                %s1347 = scalar_lea.vmem %s1247, %s1345 [#allocation2]
                %s1348 = scalar_lea.vmem %s1258, %s1346
              $region61: #{_lambda_.10} parent=55 // loop_footer
                %s1272 = sadd.s32 %s1270, 1
              $region62: #{_lambda_.10} parent=55 // loop_footer_branch
                %1269 = sbr.rel target = $region58
              $region63: #{_lambda_.10} parent=55 // loop_exit
                _
              %s1349 = sshrl.u32 %s1254, 5
              %s1350 = sand.u32 %s1254, 31
              %s1351 = smul.u32 %s1349, 32
              %s1352 = smul.u32 4, %s1351
              %s1353 = scalar_lea.vmem %s1247, %s1352 [#allocation2]
              %s1354 = smul.u32 4, %s1351
              %s1355 = scalar_lea.vmem %s1258, %s1354
              // While loop
              $region64: #{_lambda_.10} parent=55 // loop_pre_header
                _
              $region65: #{_lambda_.10} parent=55 // loop_header
                %s1357 = sphi 0, %s1359
                %p1358 = scmp.ge.s32.totalorder %s1357, %s1350
                %s1362 = sphi 0, %s1369
                %s1363 = sphi %s1353, %s1372
                %s1364 = sphi %s1355, %s1373
              $region66: #{_lambda_.10} parent=55 // loop_header_branch
                %1361 = sbr.rel (%p1358) target = $region70
              $region67: #{_lambda_.10} parent=55 // loop_body
                %v1365 = vld [vmem:[%s1363] sm:%s1267]
                %1366 = vst [vmem:[%s1364] sm:%s1267] %v1365
                %s1367 = sadd.s32 1, %s1362
                %p1368 = scmp.ge.s32.totalorder %s1367, %s1350
                %s1369 = scalar_select %p1368, 0, %s1367
                %s1370 = smul.u32 %s1369, 4
                %s1371 = smul.u32 %s1369, 4
                %s1372 = scalar_lea.vmem %s1353, %s1370 [#allocation2]
                %s1373 = scalar_lea.vmem %s1355, %s1371
              $region68: #{_lambda_.10} parent=55 // loop_footer
                %s1359 = sadd.s32 %s1357, 1
              $region69: #{_lambda_.10} parent=55 // loop_footer_branch
                %1356 = sbr.rel target = $region65
              $region70: #{_lambda_.10} parent=55 // loop_exit
                _
            $region56: #{_lambda_.10} parent=47 // pred_fallthru
              _
          $region48: #{_lambda_.10} parent=43 // pred_fallthru
            _
          %1484 = vnop
        $region44: #{_lambda_.10} parent=39 // pred_fallthru
          _
      $region40: #{_lambda_.10} parent=5 // pred_fallthru
        _
      %p1485 = scmp.le.s32.totalorder 2, %s11
      // Predicated region
      $region89: #{_lambda_.10} parent=5 // pred_check
        %p1486 = pneg %p1485
      $region90: #{_lambda_.10} parent=5 // pred_check_branch
        %1488 = sbr.rel (%p1486) target = $region92
      $region91: #{_lambda_.10} parent=5 // pred_region
        %s1489 = ssub.s32 %s11, 2
        // Predicated region
        $region93: #{_lambda_.10} parent=91 // pred_check
          %p1490 = pneg %p150
        $region94: #{_lambda_.10} parent=91 // pred_check_branch
          %1492 = sbr.rel (%p1490) target = $region96
        $region95: #{_lambda_.10} parent=91 // pred_region
          %s1493 = sand.u32 %s135, 1
          %s1494 = sand.u32 %s135, 1
          %s1495 = smul.addr %s1494, 256
          %s1496 = scalar_lea.vmem [#allocation2], %s1495
        $region96: #{_lambda_.10} parent=91 // pred_fallthru
          _
      $region92: #{_lambda_.10} parent=5 // pred_fallthru
        _
    $region6: #{_lambda_.10} parent=1 // loop_footer
      %s15 = sadd.s32 1, %s11
    $region7: #{_lambda_.10} parent=1 // loop_footer_branch
      %10 = sbr.rel target = $region3
    $region8: #{_lambda_.10} parent=1 // loop_exit
      _

// kernel: _lambda_.11
$region0: #{_lambda_.11}
  #allocation0 [shape = 'u32[]', space=smem, size = 0x4, offset = 0x4, fixed_abs, tag = 'smem constant byte address 0x4 - core index']
  #allocation1 [shape = 'u32[72,128]{1,0:T(1,128)}', space=vmem, size = 0x9000, scoped, tag = 'internal scratch']
  %s0 = inlined_call_operand.vmem [shape: bf16[1922,144], index: 0, kind: input, shape index: {}]
  %s1 = inlined_call_operand.vmem [shape: bf16[144,32], index: 1, kind: input, shape index: {}]
  %s2 = inlined_call_operand.vmem [shape: f32[1,32], index: 2, kind: input, shape index: {}]
  %s3 = inlined_call_operand.vmem [shape: f32[1,32], index: 3, kind: input, shape index: {}]
  %s4 = inlined_call_operand.vmem [shape: f32[1,32], index: 4, kind: input, shape index: {}]
  %s5 = inlined_call_operand.vmem [shape: bf16[1922,32], index: 5, kind: output, shape index: {}]
  %s6 = sld [smem:[#allocation0]]
  $region97: #{_lambda_.11} parent=0
    _
  %s8 = ssub.s32 1, %s6
  %s9 = scalar_select 0, %s8, %s6
  $region1: #{_lambda_.11} parent=0
    #allocation2 [shape = 'u8[262144]{0}', space=vmem, size = 0x40000, scoped, tag = 'output window, operand 0']
    loop: start=0, step=1, limit=6
    $region2: #{_lambda_.11} parent=1 // loop_pre_header
      _
    $region3: #{_lambda_.11} parent=1 // loop_header
      %s11 = sphi 0, %s15
      %p12 = scmp.ge.s32.totalorder %s11, 6
      %s21 = sphi 0, %s23
      %s24 = sphi 0, %s21
      %s25 = sphi 0, %s24
      %s41 = sphi 0, %s25
      %s45 = sphi 0, %s45
      %s47 = sphi 0, %s45
      %s48 = sphi 0, %s47
      %s62 = sphi 0, %s48
      %s66 = sphi 0, %s66
      %s68 = sphi 0, %s66
      %s69 = sphi 0, %s68
      %s83 = sphi 0, %s69
      %s87 = sphi 0, %s87
      %s89 = sphi 0, %s87
      %s90 = sphi 0, %s89
      %s104 = sphi 0, %s90
      %s108 = sphi 0, %s108
      %s110 = sphi 0, %s108
      %s111 = sphi 0, %s110
      %s125 = sphi 0, %s111
      %s131 = sphi 0, %s133
      %s134 = sphi 0, %s131
      %s135 = sphi 0, %s134
      %s151 = sphi 0, %s135
    $region4: #{_lambda_.11} parent=1 // loop_header_branch
      %14 = sbr.rel (%p12) target = $region8
    $region5: #{_lambda_.11} parent=1 // loop_body
      %s16 = ssub.s32 %s11, 1
      %s17 = ssub.s32 %s11, 2
      %s18 = sadd.s32 %s11, 1
      %s19 = ssub.s32 %s11, %s18
      %p20 = scmp.eq.s32.totalorder %s19, 0
      %s22 = sadd.s32 %s21, 1
      %s23 = scalar_select %p20, %s21, %s22
      %p26 = pneg %p20
      %p27 = scmp.eq.s32.totalorder %s11, 3
      %p28 = por %p26, %p27
      %p29 = scmp.ne.s32.totalorder %s21, %s24
      %p30 = scmp.eq.s32.totalorder %s11, 0
      %p31 = por %p29, %p30
      %p32 = scmp.ne.s32.totalorder %s21, %s24
      %p33 = scmp.eq.s32.totalorder %s16, 3
      %p34 = por %p32, %p33
      %p35 = scmp.ne.s32.totalorder %s24, %s25
      %p36 = scmp.eq.s32.totalorder %s16, 0
      %p37 = por %p35, %p36
      %p38 = scmp.ne.s32.totalorder %s24, %s25
      %p39 = scmp.eq.s32.totalorder %s17, 3
      %p40 = por %p38, %p39
      %p42 = scmp.ne.s32.totalorder %s25, %s41
      %p43 = scmp.eq.s32.totalorder %s17, 0
      %p44 = por %p42, %p43
      %s46 = sadd.s32 %s45, 1
      %p49 = scmp.eq.s32.totalorder %s11, 3
      %p50 = scmp.ne.s32.totalorder %s45, %s47
      %p51 = scmp.eq.s32.totalorder %s11, 0
      %p52 = por %p50, %p51
      %p53 = scmp.ne.s32.totalorder %s45, %s47
      %p54 = scmp.eq.s32.totalorder %s16, 3
      %p55 = por %p53, %p54
      %p56 = scmp.ne.s32.totalorder %s47, %s48
      %p57 = scmp.eq.s32.totalorder %s16, 0
      %p58 = por %p56, %p57
      %p59 = scmp.ne.s32.totalorder %s47, %s48
      %p60 = scmp.eq.s32.totalorder %s17, 3
      %p61 = por %p59, %p60
      %p63 = scmp.ne.s32.totalorder %s48, %s62
      %p64 = scmp.eq.s32.totalorder %s17, 0
      %p65 = por %p63, %p64
      %s67 = sadd.s32 %s66, 1
      %p70 = scmp.eq.s32.totalorder %s11, 3
      %p71 = scmp.ne.s32.totalorder %s66, %s68
      %p72 = scmp.eq.s32.totalorder %s11, 0
      %p73 = por %p71, %p72
      %p74 = scmp.ne.s32.totalorder %s66, %s68
      %p75 = scmp.eq.s32.totalorder %s16, 3
      %p76 = por %p74, %p75
      %p77 = scmp.ne.s32.totalorder %s68, %s69
      %p78 = scmp.eq.s32.totalorder %s16, 0
      %p79 = por %p77, %p78
      %p80 = scmp.ne.s32.totalorder %s68, %s69
      %p81 = scmp.eq.s32.totalorder %s17, 3
      %p82 = por %p80, %p81
      %p84 = scmp.ne.s32.totalorder %s69, %s83
      %p85 = scmp.eq.s32.totalorder %s17, 0
      %p86 = por %p84, %p85
      %s88 = sadd.s32 %s87, 1
      %p91 = scmp.eq.s32.totalorder %s11, 3
      %p92 = scmp.ne.s32.totalorder %s87, %s89
      %p93 = scmp.eq.s32.totalorder %s11, 0
      %p94 = por %p92, %p93
      %p95 = scmp.ne.s32.totalorder %s87, %s89
      %p96 = scmp.eq.s32.totalorder %s16, 3
      %p97 = por %p95, %p96
      %p98 = scmp.ne.s32.totalorder %s89, %s90
      %p99 = scmp.eq.s32.totalorder %s16, 0
      %p100 = por %p98, %p99
      %p101 = scmp.ne.s32.totalorder %s89, %s90
      %p102 = scmp.eq.s32.totalorder %s17, 3
      %p103 = por %p101, %p102
      %p105 = scmp.ne.s32.totalorder %s90, %s104
      %p106 = scmp.eq.s32.totalorder %s17, 0
      %p107 = por %p105, %p106
      %s109 = sadd.s32 %s108, 1
      %p112 = scmp.eq.s32.totalorder %s11, 3
      %p113 = scmp.ne.s32.totalorder %s108, %s110
      %p114 = scmp.eq.s32.totalorder %s11, 0
      %p115 = por %p113, %p114
      %p116 = scmp.ne.s32.totalorder %s108, %s110
      %p117 = scmp.eq.s32.totalorder %s16, 3
      %p118 = por %p116, %p117
      %p119 = scmp.ne.s32.totalorder %s110, %s111
      %p120 = scmp.eq.s32.totalorder %s16, 0
      %p121 = por %p119, %p120
      %p122 = scmp.ne.s32.totalorder %s110, %s111
      %p123 = scmp.eq.s32.totalorder %s17, 3
      %p124 = por %p122, %p123
      %p126 = scmp.ne.s32.totalorder %s111, %s125
      %p127 = scmp.eq.s32.totalorder %s17, 0
      %p128 = por %p126, %p127
      %s129 = ssub.s32 %s11, %s18
      %p130 = scmp.eq.s32.totalorder %s129, 0
      %s132 = sadd.s32 %s131, 1
      %s133 = scalar_select %p130, %s131, %s132
      %p136 = pneg %p130
      %p137 = scmp.eq.s32.totalorder %s11, 3
      %p138 = por %p136, %p137
      %p139 = scmp.ne.s32.totalorder %s131, %s134
      %p140 = scmp.eq.s32.totalorder %s11, 0
      %p141 = por %p139, %p140
      %p142 = scmp.ne.s32.totalorder %s131, %s134
      %p143 = scmp.eq.s32.totalorder %s16, 3
      %p144 = por %p142, %p143
      %p145 = scmp.ne.s32.totalorder %s134, %s135
      %p146 = scmp.eq.s32.totalorder %s16, 0
      %p147 = por %p145, %p146
      %p148 = scmp.ne.s32.totalorder %s134, %s135
      %p149 = scmp.eq.s32.totalorder %s17, 3
      %p150 = por %p148, %p149
      %p152 = scmp.ne.s32.totalorder %s135, %s151
      %p153 = scmp.eq.s32.totalorder %s17, 0
      %p154 = por %p152, %p153
      %p155 = scmp.le.s32.totalorder 1, %s11
      %p156 = scmp.lt.s32.totalorder %s11, 5
      %p157 = pnand %p155, %p156
      %p158 = pneg %p157
      // Predicated region
      $region9: #{_lambda_.11} parent=5 // pred_check
        _
      $region10: #{_lambda_.11} parent=5 // pred_check_branch
        %160 = sbr.rel (%p157) target = $region12
      $region11: #{_lambda_.11} parent=5 // pred_region
        %s161 = ssub.s32 %s11, 1
        // Predicated region
        $region13: #{_lambda_.11} parent=11 // pred_check
          %p162 = pneg %p58
        $region14: #{_lambda_.11} parent=11 // pred_check_branch
          %164 = sbr.rel (%p162) target = $region16
        $region15: #{_lambda_.11} parent=11 // pred_region
          _
        $region16: #{_lambda_.11} parent=11 // pred_fallthru
          _
        // Predicated region
        $region17: #{_lambda_.11} parent=11 // pred_check
          %p165 = pneg %p79
        $region18: #{_lambda_.11} parent=11 // pred_check_branch
          %167 = sbr.rel (%p165) target = $region20
        $region19: #{_lambda_.11} parent=11 // pred_region
          _
        $region20: #{_lambda_.11} parent=11 // pred_fallthru
          _
        // Predicated region
        $region21: #{_lambda_.11} parent=11 // pred_check
          %p168 = pneg %p100
        $region22: #{_lambda_.11} parent=11 // pred_check_branch
          %170 = sbr.rel (%p168) target = $region24
        $region23: #{_lambda_.11} parent=11 // pred_region
          _
        $region24: #{_lambda_.11} parent=11 // pred_fallthru
          _
        // Predicated region
        $region25: #{_lambda_.11} parent=11 // pred_check
          %p171 = pneg %p121
        $region26: #{_lambda_.11} parent=11 // pred_check_branch
          %173 = sbr.rel (%p171) target = $region28
        $region27: #{_lambda_.11} parent=11 // pred_region
          _
        $region28: #{_lambda_.11} parent=11 // pred_fallthru
          _
      $region12: #{_lambda_.11} parent=5 // pred_fallthru
        _
      %p174 = scmp.lt.s32.totalorder %s11, 4
      // Predicated region
      $region29: #{_lambda_.11} parent=5 // pred_check
        %p175 = pneg %p174
      $region30: #{_lambda_.11} parent=5 // pred_check_branch
        %177 = sbr.rel (%p175) target = $region32
      $region31: #{_lambda_.11} parent=5 // pred_region
        // Predicated region
        $region33: #{_lambda_.11} parent=31 // pred_check
          %p178 = pneg %p31
        $region34: #{_lambda_.11} parent=31 // pred_check_branch
          %180 = sbr.rel (%p178) target = $region36
        $region35: #{_lambda_.11} parent=31 // pred_region
          %s181 = smul.u32 64, %s11
          %s182 = ssub.s32 241, %s181
          %p183 = scmp.lt.s32.totalorder %s182, 64
          %s184 = scalar_select %p183, %s182, 64
          %s185 = smul.u32 4, %s184
          %s186 = smul.u32 %s185, 2
          %p187 = scmp.lt.s32.totalorder %s181, 240
          %s188 = scalar_select %p187, %s181, 240
          %s189 = smul.addr %s188, 2
          %s190 = smul.addr %s189, 4
          %s191 = scalar_lea.vmem %s0, %s190
          %s192 = smul.u32 64, %s11
          %s193 = ssub.s32 241, %s192
          %p194 = scmp.lt.s32.totalorder %s193, 64
          %s195 = scalar_select %p194, %s193, 64
          %s196 = smul.u32 4, %s195
          %s197 = smul.u32 %s196, 2
        $region36: #{_lambda_.11} parent=31 // pred_fallthru
          _
      $region32: #{_lambda_.11} parent=5 // pred_fallthru
        _
      %p198 = scmp.le.s32.totalorder 1, %s11
      %p199 = scmp.lt.s32.totalorder %s11, 5
      %p200 = pnand %p198, %p199
      %p201 = pneg %p200
      // Predicated region
      $region37: #{_lambda_.11} parent=5 // pred_check
        _
      $region38: #{_lambda_.11} parent=5 // pred_check_branch
        %203 = sbr.rel (%p200) target = $region40
      $region39: #{_lambda_.11} parent=5 // pred_region
        %s204 = ssub.s32 %s11, 1
        %s205 = smul.u32 64, %s16
        %s206 = ssub.s32 241, %s205
        %p207 = scmp.lt.s32.totalorder %s206, 64
        %s208 = scalar_select %p207, %s206, 64
        %s209 = smul.u32 4, %s208
        %s210 = smul.u32 %s209, 2
        %p211 = scmp.lt.s32.totalorder %s205, 240
        %s212 = scalar_select %p211, %s205, 240
        %s213 = smul.addr %s212, 2
        %s214 = smul.addr %s213, 4
        %s215 = scalar_lea.vmem %s0, %s214
        %p216 = pneg %p37
        %p217 = pneg %p34
        %p218 = pneg %p58
        %p219 = pneg %p55
        %p220 = pneg %p79
        %p221 = pneg %p76
        %p222 = pneg %p100
        %p223 = pneg %p97
        %p224 = pneg %p121
        %p225 = pneg %p118
        %p226 = pneg %p147
        %p227 = pneg %p144
        %s228 = sand.u32 %s134, 1
        %s229 = sand.u32 %s134, 1
        %s230 = smul.addr %s229, 256
        %s231 = scalar_lea.vmem [#allocation2], %s230
        %s232 = smul.u32 64, %s16
        %s233 = ssub.s32 241, %s232
        %p234 = scmp.lt.s32.totalorder %s233, 64
        %s235 = scalar_select %p234, %s233, 64
        %s236 = smul.u32 4, %s235
        %s237 = smul.u32 %s236, 2
        %p238 = scmp.lt.s32.totalorder %s232, 240
        %s239 = scalar_select %p238, %s232, 240
        %s240 = smul.addr %s239, 2
        %s241 = smul.addr %s240, 4
        %s242 = scalar_lea.vmem %s0, %s241
        %s243 = smul.u32 64, %s16
        %s244 = ssub.s32 241, %s243
        %p245 = scmp.lt.s32.totalorder %s244, 64
        %s246 = scalar_select %p245, %s244, 64
        %s247 = smul.u32 4, %s246
        %s248 = smul.u32 %s247, 2
        %s249 = smul.u32 64, %s16
        %s250 = ssub.s32 241, %s249
        %p251 = scmp.lt.s32.totalorder %s250, 64
        %s252 = scalar_select %p251, %s250, 64
        %s253 = smul.u32 4, %s252
        %v255 = vld [vmem:[%s242] sm:$0xff]
        %v256 = vld [vmem:[%s242 + $0x8] sm:$0xff]
        %v257 = vld [vmem:[%s242 + $0x10] sm:$0xff]
        %v258 = vld [vmem:[%s242 + $0x18] sm:$0xff]
        %v259 = vld [vmem:[%s242 + $0x20] sm:$0xff]
        %v260 = vld [vmem:[%s242 + $0x28] sm:$0xff]
        %v261 = vld [vmem:[%s242 + $0x30] sm:$0xff]
        %v262 = vld [vmem:[%s242 + $0x38] sm:$0xff]
        %v263 = vld [vmem:[%s242 + $0x40] sm:$0xff]
        %v264 = vld [vmem:[%s242 + $0x48] sm:$0xff]
        %v265 = vld [vmem:[%s242 + $0x50] sm:$0xff]
        %v266 = vld [vmem:[%s242 + $0x58] sm:$0xff]
        %v267 = vld [vmem:[%s242 + $0x60] sm:$0xff]
        %v268 = vld [vmem:[%s242 + $0x68] sm:$0xff]
        %v269 = vld [vmem:[%s242 + $0x70] sm:$0xff]
        %v270 = vld [vmem:[%s242 + $0x78] sm:$0xff]
        %v271 = vld [vmem:[%s242 + $0x80] sm:$0xff]
        %v272 = vld [vmem:[%s242 + $0x88] sm:$0xff]
        %v273 = vld [vmem:[%s242 + $0x90] sm:$0xff]
        %v274 = vld [vmem:[%s242 + $0x98] sm:$0xff]
        %v275 = vld [vmem:[%s242 + $0xa0] sm:$0xff]
        %v276 = vld [vmem:[%s242 + $0xa8] sm:$0xff]
        %v277 = vld [vmem:[%s242 + $0xb0] sm:$0xff]
        %v278 = vld [vmem:[%s242 + $0xb8] sm:$0xff]
        %v279 = vld [vmem:[%s242 + $0xc0] sm:$0xff]
        %v280 = vld [vmem:[%s242 + $0xc8] sm:$0xff]
        %v281 = vld [vmem:[%s242 + $0xd0] sm:$0xff]
        %v282 = vld [vmem:[%s242 + $0xd8] sm:$0xff]
        %v283 = vld [vmem:[%s242 + $0xe0] sm:$0xff]
        %v284 = vld [vmem:[%s242 + $0xe8] sm:$0xff]
        %v285 = vld [vmem:[%s242 + $0xf0] sm:$0xff]
        %v286 = vld [vmem:[%s242 + $0xf8] sm:$0xff]
        %v287 = vld [vmem:[%s242 + $0x100] sm:$0xff]
        %v288 = vld [vmem:[%s242 + $0x108] sm:$0xff]
        %v289 = vld [vmem:[%s242 + $0x110] sm:$0xff]
        %v290 = vld [vmem:[%s242 + $0x118] sm:$0xff]
        %v291 = vld [vmem:[%s242 + $0x120] sm:$0xff]
        %v292 = vld [vmem:[%s242 + $0x128] sm:$0xff]
        %v293 = vld [vmem:[%s242 + $0x130] sm:$0xff]
        %v294 = vld [vmem:[%s242 + $0x138] sm:$0xff]
        %v295 = vld [vmem:[%s242 + $0x140] sm:$0xff]
        %v296 = vld [vmem:[%s242 + $0x148] sm:$0xff]
        %v297 = vld [vmem:[%s242 + $0x150] sm:$0xff]
        %v298 = vld [vmem:[%s242 + $0x158] sm:$0xff]
        %v299 = vld [vmem:[%s242 + $0x160] sm:$0xff]
        %v300 = vld [vmem:[%s242 + $0x168] sm:$0xff]
        %v301 = vld [vmem:[%s242 + $0x170] sm:$0xff]
        %v302 = vld [vmem:[%s242 + $0x178] sm:$0xff]
        %v303 = vld [vmem:[%s242 + $0x180] sm:$0xff]
        %v304 = vld [vmem:[%s242 + $0x188] sm:$0xff]
        %v305 = vld [vmem:[%s242 + $0x190] sm:$0xff]
        %v306 = vld [vmem:[%s242 + $0x198] sm:$0xff]
        %v307 = vld [vmem:[%s242 + $0x1a0] sm:$0xff]
        %v308 = vld [vmem:[%s242 + $0x1a8] sm:$0xff]
        %v309 = vld [vmem:[%s242 + $0x1b0] sm:$0xff]
        %v310 = vld [vmem:[%s242 + $0x1b8] sm:$0xff]
        %v311 = vld [vmem:[%s242 + $0x1c0] sm:$0xff]
        %v312 = vld [vmem:[%s242 + $0x1c8] sm:$0xff]
        %v313 = vld [vmem:[%s242 + $0x1d0] sm:$0xff]
        %v314 = vld [vmem:[%s242 + $0x1d8] sm:$0xff]
        %v315 = vld [vmem:[%s242 + $0x1e0] sm:$0xff]
        %v316 = vld [vmem:[%s242 + $0x1e8] sm:$0xff]
        %v317 = vld [vmem:[%s242 + $0x1f0] sm:$0xff]
        %v318 = vld [vmem:[%s242 + $0x1f8] sm:$0xff]
        %v319 = vld [vmem:[%s1] sm:$0xf]
        %v320 = vld [vmem:[%s1 + $0x4] sm:$0xf]
        %v321 = vld [vmem:[%s1 + $0x8] sm:$0xf]
        %v322 = vld [vmem:[%s1 + $0xc] sm:$0xf]
        %v323 = vld [vmem:[%s1 + $0x10] sm:$0xf]
        %v324 = vld [vmem:[%s1 + $0x14] sm:$0xf]
        %v325 = vld [vmem:[%s1 + $0x18] sm:$0xf]
        %v326 = vld [vmem:[%s1 + $0x1c] sm:$0xf]
        %v327 = vld [vmem:[%s1 + $0x20] sm:$0xf]
        %v328 = vld [vmem:[%s1 + $0x24] sm:$0xf]
        %v329 = vld [vmem:[%s1 + $0x28] sm:$0xf]
        %v330 = vld [vmem:[%s1 + $0x2c] sm:$0xf]
        %v331 = vld [vmem:[%s1 + $0x30] sm:$0xf]
        %v332 = vld [vmem:[%s1 + $0x34] sm:$0xf]
        %v333 = vld [vmem:[%s1 + $0x38] sm:$0xf]
        %v334 = vld [vmem:[%s1 + $0x3c] sm:$0xf]
        %v335 = vld [vmem:[%s1 + $0x40] sm:$0xf]
        %v336 = vld [vmem:[%s1 + $0x44] sm:$0xf]
        %v337 = vld [vmem:[%s2] sm:$0x1]
        %v339 = vperm.slane %v337, 0
        %v405 = vunpack.c.l.b16 %v255
        %v406 = vunpack.c.h.b16 %v255
        %v407 = vunpack.c.l.b16 %v256
        %v408 = vunpack.c.h.b16 %v256
        %v409 = vunpack.c.l.b16 %v257
        %v410 = vunpack.c.h.b16 %v257
        %v411 = vunpack.c.l.b16 %v258
        %v412 = vunpack.c.h.b16 %v258
        %v413 = vunpack.c.l.b16 %v259
        %v414 = vunpack.c.h.b16 %v259
        %v415 = vunpack.c.l.b16 %v260
        %v416 = vunpack.c.h.b16 %v260
        %v417 = vunpack.c.l.b16 %v261
        %v418 = vunpack.c.h.b16 %v261
        %v419 = vunpack.c.l.b16 %v262
        %v420 = vunpack.c.h.b16 %v262
        %v421 = vunpack.c.l.b16 %v263
        %v422 = vunpack.c.h.b16 %v263
        %v423 = vunpack.c.l.b16 %v264
        %v424 = vunpack.c.h.b16 %v264
        %v425 = vunpack.c.l.b16 %v265
        %v426 = vunpack.c.h.b16 %v265
        %v427 = vunpack.c.l.b16 %v266
        %v428 = vunpack.c.h.b16 %v266
        %v429 = vunpack.c.l.b16 %v267
        %v430 = vunpack.c.h.b16 %v267
        %v431 = vunpack.c.l.b16 %v268
        %v432 = vunpack.c.h.b16 %v268
        %v433 = vunpack.c.l.b16 %v269
        %v434 = vunpack.c.h.b16 %v269
        %v435 = vunpack.c.l.b16 %v270
        %v436 = vunpack.c.h.b16 %v270
        %v437 = vunpack.c.l.b16 %v271
        %v438 = vunpack.c.h.b16 %v271
        %v439 = vunpack.c.l.b16 %v272
        %v440 = vunpack.c.h.b16 %v272
        %v441 = vunpack.c.l.b16 %v273
        %v442 = vunpack.c.h.b16 %v273
        %v443 = vunpack.c.l.b16 %v274
        %v444 = vunpack.c.h.b16 %v274
        %v445 = vunpack.c.l.b16 %v275
        %v446 = vunpack.c.h.b16 %v275
        %v447 = vunpack.c.l.b16 %v276
        %v448 = vunpack.c.h.b16 %v276
        %v449 = vunpack.c.l.b16 %v277
        %v450 = vunpack.c.h.b16 %v277
        %v451 = vunpack.c.l.b16 %v278
        %v452 = vunpack.c.h.b16 %v278
        %v453 = vunpack.c.l.b16 %v279
        %v454 = vunpack.c.h.b16 %v279
        %v455 = vunpack.c.l.b16 %v280
        %v456 = vunpack.c.h.b16 %v280
        %v457 = vunpack.c.l.b16 %v281
        %v458 = vunpack.c.h.b16 %v281
        %v459 = vunpack.c.l.b16 %v282
        %v460 = vunpack.c.h.b16 %v282
        %v461 = vunpack.c.l.b16 %v283
        %v462 = vunpack.c.h.b16 %v283
        %v463 = vunpack.c.l.b16 %v284
        %v464 = vunpack.c.h.b16 %v284
        %v465 = vunpack.c.l.b16 %v285
        %v466 = vunpack.c.h.b16 %v285
        %v467 = vunpack.c.l.b16 %v286
        %v468 = vunpack.c.h.b16 %v286
        %v469 = vunpack.c.l.b16 %v287
        %v470 = vunpack.c.h.b16 %v287
        %v471 = vunpack.c.l.b16 %v288
        %v472 = vunpack.c.h.b16 %v288
        %v473 = vunpack.c.l.b16 %v289
        %v474 = vunpack.c.h.b16 %v289
        %v475 = vunpack.c.l.b16 %v290
        %v476 = vunpack.c.h.b16 %v290
        %v477 = vunpack.c.l.b16 %v291
        %v478 = vunpack.c.h.b16 %v291
        %v479 = vunpack.c.l.b16 %v292
        %v480 = vunpack.c.h.b16 %v292
        %v481 = vunpack.c.l.b16 %v293
        %v482 = vunpack.c.h.b16 %v293
        %v483 = vunpack.c.l.b16 %v294
        %v484 = vunpack.c.h.b16 %v294
        %v485 = vunpack.c.l.b16 %v295
        %v486 = vunpack.c.h.b16 %v295
        %v487 = vunpack.c.l.b16 %v296
        %v488 = vunpack.c.h.b16 %v296
        %v489 = vunpack.c.l.b16 %v297
        %v490 = vunpack.c.h.b16 %v297
        %v491 = vunpack.c.l.b16 %v298
        %v492 = vunpack.c.h.b16 %v298
        %v493 = vunpack.c.l.b16 %v299
        %v494 = vunpack.c.h.b16 %v299
        %v495 = vunpack.c.l.b16 %v300
        %v496 = vunpack.c.h.b16 %v300
        %v497 = vunpack.c.l.b16 %v301
        %v498 = vunpack.c.h.b16 %v301
        %v499 = vunpack.c.l.b16 %v302
        %v500 = vunpack.c.h.b16 %v302
        %v501 = vunpack.c.l.b16 %v303
        %v502 = vunpack.c.h.b16 %v303
        %v503 = vunpack.c.l.b16 %v304
        %v504 = vunpack.c.h.b16 %v304
        %v505 = vunpack.c.l.b16 %v305
        %v506 = vunpack.c.h.b16 %v305
        %v507 = vunpack.c.l.b16 %v306
        %v508 = vunpack.c.h.b16 %v306
        %v509 = vunpack.c.l.b16 %v307
        %v510 = vunpack.c.h.b16 %v307
        %v511 = vunpack.c.l.b16 %v308
        %v512 = vunpack.c.h.b16 %v308
        %v513 = vunpack.c.l.b16 %v309
        %v514 = vunpack.c.h.b16 %v309
        %v515 = vunpack.c.l.b16 %v310
        %v516 = vunpack.c.h.b16 %v310
        %v517 = vunpack.c.l.b16 %v311
        %v518 = vunpack.c.h.b16 %v311
        %v519 = vunpack.c.l.b16 %v312
        %v520 = vunpack.c.h.b16 %v312
        %v521 = vunpack.c.l.b16 %v313
        %v522 = vunpack.c.h.b16 %v313
        %v523 = vunpack.c.l.b16 %v314
        %v524 = vunpack.c.h.b16 %v314
        %v525 = vunpack.c.l.b16 %v315
        %v526 = vunpack.c.h.b16 %v315
        %v527 = vunpack.c.l.b16 %v316
        %v528 = vunpack.c.h.b16 %v316
        %v529 = vunpack.c.l.b16 %v317
        %v530 = vunpack.c.h.b16 %v317
        %v531 = vunpack.c.l.b16 %v318
        %v532 = vunpack.c.h.b16 %v318
        %v533 = vpack.c.b16 %v407, %v405
        %v534 = vpack.c.b16 %v408, %v406
        %v535 = vpack.c.b16 %v411, %v409
        %v536 = vpack.c.b16 %v412, %v410
        %v537 = vpack.c.b16 %v415, %v413
        %v538 = vpack.c.b16 %v416, %v414
        %v539 = vpack.c.b16 %v419, %v417
        %v540 = vpack.c.b16 %v420, %v418
        %v541 = vpack.c.b16 %v423, %v421
        %v542 = vpack.c.b16 %v424, %v422
        %v543 = vpack.c.b16 %v427, %v425
        %v544 = vpack.c.b16 %v428, %v426
        %v545 = vpack.c.b16 %v431, %v429
        %v546 = vpack.c.b16 %v432, %v430
        %v547 = vpack.c.b16 %v435, %v433
        %v548 = vpack.c.b16 %v436, %v434
        %v549 = vpack.c.b16 %v439, %v437
        %v550 = vpack.c.b16 %v440, %v438
        %v551 = vpack.c.b16 %v443, %v441
        %v552 = vpack.c.b16 %v444, %v442
        %v553 = vpack.c.b16 %v447, %v445
        %v554 = vpack.c.b16 %v448, %v446
        %v555 = vpack.c.b16 %v451, %v449
        %v556 = vpack.c.b16 %v452, %v450
        %v557 = vpack.c.b16 %v455, %v453
        %v558 = vpack.c.b16 %v456, %v454
        %v559 = vpack.c.b16 %v459, %v457
        %v560 = vpack.c.b16 %v460, %v458
        %v561 = vpack.c.b16 %v463, %v461
        %v562 = vpack.c.b16 %v464, %v462
        %v563 = vpack.c.b16 %v467, %v465
        %v564 = vpack.c.b16 %v468, %v466
        %v565 = vpack.c.b16 %v471, %v469
        %v566 = vpack.c.b16 %v472, %v470
        %v567 = vpack.c.b16 %v475, %v473
        %v568 = vpack.c.b16 %v476, %v474
        %v569 = vpack.c.b16 %v479, %v477
        %v570 = vpack.c.b16 %v480, %v478
        %v571 = vpack.c.b16 %v483, %v481
        %v572 = vpack.c.b16 %v484, %v482
        %v573 = vpack.c.b16 %v487, %v485
        %v574 = vpack.c.b16 %v488, %v486
        %v575 = vpack.c.b16 %v491, %v489
        %v576 = vpack.c.b16 %v492, %v490
        %v577 = vpack.c.b16 %v495, %v493
        %v578 = vpack.c.b16 %v496, %v494
        %v579 = vpack.c.b16 %v499, %v497
        %v580 = vpack.c.b16 %v500, %v498
        %v581 = vpack.c.b16 %v503, %v501
        %v582 = vpack.c.b16 %v504, %v502
        %v583 = vpack.c.b16 %v507, %v505
        %v584 = vpack.c.b16 %v508, %v506
        %v585 = vpack.c.b16 %v511, %v509
        %v586 = vpack.c.b16 %v512, %v510
        %v587 = vpack.c.b16 %v515, %v513
        %v588 = vpack.c.b16 %v516, %v514
        %v589 = vpack.c.b16 %v519, %v517
        %v590 = vpack.c.b16 %v520, %v518
        %v591 = vpack.c.b16 %v523, %v521
        %v592 = vpack.c.b16 %v524, %v522
        %v593 = vpack.c.b16 %v527, %v525
        %v594 = vpack.c.b16 %v528, %v526
        %v595 = vpack.c.b16 %v531, %v529
        %v596 = vpack.c.b16 %v532, %v530
        %v647 = vunpack.c.l.b16 %v319
        %v648 = vunpack.c.l.b16 %v320
        %v649 = vunpack.c.l.b16 %v321
        %v650 = vunpack.c.l.b16 %v322
        %v651 = vunpack.c.l.b16 %v323
        %v652 = vunpack.c.l.b16 %v324
        %v653 = vunpack.c.l.b16 %v325
        %v654 = vunpack.c.l.b16 %v326
        %v655 = vunpack.c.l.b16 %v327
        %v656 = vunpack.c.l.b16 %v328
        %v657 = vunpack.c.l.b16 %v329
        %v658 = vunpack.c.l.b16 %v330
        %v659 = vunpack.c.l.b16 %v331
        %v660 = vunpack.c.l.b16 %v332
        %v661 = vunpack.c.l.b16 %v333
        %v662 = vunpack.c.l.b16 %v334
        %v663 = vunpack.c.l.b16 %v335
        %v664 = vunpack.c.l.b16 %v336
        %v665 = vpack.c.b16 %v648, %v647
        %v666 = vpack.c.b16 %v650, %v649
        %v667 = vpack.c.b16 %v652, %v651
        %v668 = vpack.c.b16 %v654, %v653
        %v669 = vpack.c.b16 %v656, %v655
        %v670 = vpack.c.b16 %v658, %v657
        %v671 = vpack.c.b16 %v660, %v659
        %v672 = vpack.c.b16 %v662, %v661
        %v673 = vpack.c.b16 %v664, %v663
        %vm683 = vcmask 130048
        %v685 = vsel %vm683, %v534, 0
        %v688 = vsel %vm683, %v536, 0
        %v691 = vsel %vm683, %v538, 0
        %v694 = vsel %vm683, %v540, 0
        %v697 = vsel %vm683, %v542, 0
        %v700 = vsel %vm683, %v544, 0
        %v703 = vsel %vm683, %v546, 0
        %v706 = vsel %vm683, %v548, 0
        %v709 = vsel %vm683, %v550, 0
        %v712 = vsel %vm683, %v552, 0
        %v715 = vsel %vm683, %v554, 0
        %v718 = vsel %vm683, %v556, 0
        %v721 = vsel %vm683, %v558, 0
        %v724 = vsel %vm683, %v560, 0
        %v727 = vsel %vm683, %v562, 0
        %v730 = vsel %vm683, %v564, 0
        %v733 = vsel %vm683, %v566, 0
        %v736 = vsel %vm683, %v568, 0
        %v739 = vsel %vm683, %v570, 0
        %v742 = vsel %vm683, %v572, 0
        %v745 = vsel %vm683, %v574, 0
        %v748 = vsel %vm683, %v576, 0
        %v751 = vsel %vm683, %v578, 0
        %v754 = vsel %vm683, %v580, 0
        %v757 = vsel %vm683, %v582, 0
        %v760 = vsel %vm683, %v584, 0
        %v763 = vsel %vm683, %v586, 0
        %v766 = vsel %vm683, %v588, 0
        %v769 = vsel %vm683, %v590, 0
        %v772 = vsel %vm683, %v592, 0
        %v775 = vsel %vm683, %v594, 0
        %v778 = vsel %vm683, %v596, 0
        %780 = vmatpush.bf16.msra.mxu0 %v672
        %781 = vmatpush.bf16.msra.mxu0 %v671
        %782 = vmatpush.bf16.msra.mxu0 %v670
        %783 = vmatpush.bf16.msra.mxu0 %v669
        %784 = vmatpush.bf16.msra.mxu0 %v668
        %785 = vmatpush.bf16.msra.mxu0 %v667
        %786 = vmatpush.bf16.msra.mxu0 %v666
        %787 = vmatpush.bf16.msra.mxu0 %v665
        %788 = vmatmul.bf16.gmra.mxu0 %v533
        %v789 = vpop.f32.mrf.mxu0
        %v790 = vadd.f32 %v339, %v789
        %v791 = vpop.f32.mrf.mxu0
        %v792 = vadd.f32 %v339, %v791
        %793 = vmatmul.bf16.gmra.mxu0 %v535
        %v794 = vpop.f32.mrf.mxu0
        %v795 = vadd.f32 %v339, %v794
        %v796 = vpop.f32.mrf.mxu0
        %v797 = vadd.f32 %v339, %v796
        %798 = vmatmul.bf16.gmra.mxu0 %v537
        %v799 = vpop.f32.mrf.mxu0
        %v800 = vadd.f32 %v339, %v799
        %v801 = vpop.f32.mrf.mxu0
        %v802 = vadd.f32 %v339, %v801
        %803 = vmatmul.bf16.gmra.mxu0 %v539
        %v804 = vpop.f32.mrf.mxu0
        %v805 = vadd.f32 %v339, %v804
        %v806 = vpop.f32.mrf.mxu0
        %v807 = vadd.f32 %v339, %v806
        %808 = vmatmul.bf16.gmra.mxu0 %v541
        %v809 = vpop.f32.mrf.mxu0
        %v810 = vadd.f32 %v339, %v809
        %v811 = vpop.f32.mrf.mxu0
        %v812 = vadd.f32 %v339, %v811
        %813 = vmatmul.bf16.gmra.mxu0 %v543
        %v814 = vpop.f32.mrf.mxu0
        %v815 = vadd.f32 %v339, %v814
        %v816 = vpop.f32.mrf.mxu0
        %v817 = vadd.f32 %v339, %v816
        %818 = vmatmul.bf16.gmra.mxu0 %v545
        %v819 = vpop.f32.mrf.mxu0
        %v820 = vadd.f32 %v339, %v819
        %v821 = vpop.f32.mrf.mxu0
        %v822 = vadd.f32 %v339, %v821
        %823 = vmatmul.bf16.gmra.mxu0 %v547
        %v824 = vpop.f32.mrf.mxu0
        %v825 = vadd.f32 %v339, %v824
        %v826 = vpop.f32.mrf.mxu0
        %v827 = vadd.f32 %v339, %v826
        %828 = vmatmul.bf16.gmra.mxu0 %v549
        %v829 = vpop.f32.mrf.mxu0
        %v830 = vadd.f32 %v339, %v829
        %v831 = vpop.f32.mrf.mxu0
        %v832 = vadd.f32 %v339, %v831
        %833 = vmatmul.bf16.gmra.mxu0 %v551
        %v834 = vpop.f32.mrf.mxu0
        %v835 = vadd.f32 %v339, %v834
        %v836 = vpop.f32.mrf.mxu0
        %v837 = vadd.f32 %v339, %v836
        %838 = vmatmul.bf16.gmra.mxu0 %v553
        %v839 = vpop.f32.mrf.mxu0
        %v840 = vadd.f32 %v339, %v839
        %v841 = vpop.f32.mrf.mxu0
        %v842 = vadd.f32 %v339, %v841
        %843 = vmatmul.bf16.gmra.mxu0 %v555
        %v844 = vpop.f32.mrf.mxu0
        %v845 = vadd.f32 %v339, %v844
        %v846 = vpop.f32.mrf.mxu0
        %v847 = vadd.f32 %v339, %v846
        %848 = vmatmul.bf16.gmra.mxu0 %v557
        %v849 = vpop.f32.mrf.mxu0
        %v850 = vadd.f32 %v339, %v849
        %v851 = vpop.f32.mrf.mxu0
        %v852 = vadd.f32 %v339, %v851
        %853 = vmatmul.bf16.gmra.mxu0 %v559
        %v854 = vpop.f32.mrf.mxu0
        %v855 = vadd.f32 %v339, %v854
        %v856 = vpop.f32.mrf.mxu0
        %v857 = vadd.f32 %v339, %v856
        %858 = vmatmul.bf16.gmra.mxu0 %v561
        %v859 = vpop.f32.mrf.mxu0
        %v860 = vadd.f32 %v339, %v859
        %v861 = vpop.f32.mrf.mxu0
        %v862 = vadd.f32 %v339, %v861
        %863 = vmatmul.bf16.gmra.mxu0 %v563
        %v864 = vpop.f32.mrf.mxu0
        %v865 = vadd.f32 %v339, %v864
        %v866 = vpop.f32.mrf.mxu0
        %v867 = vadd.f32 %v339, %v866
        %868 = vmatmul.bf16.gmra.mxu0 %v565
        %v869 = vpop.f32.mrf.mxu0
        %v870 = vadd.f32 %v339, %v869
        %v871 = vpop.f32.mrf.mxu0
        %v872 = vadd.f32 %v339, %v871
        %873 = vmatmul.bf16.gmra.mxu0 %v567
        %v874 = vpop.f32.mrf.mxu0
        %v875 = vadd.f32 %v339, %v874
        %v876 = vpop.f32.mrf.mxu0
        %v877 = vadd.f32 %v339, %v876
        %878 = vmatmul.bf16.gmra.mxu0 %v569
        %v879 = vpop.f32.mrf.mxu0
        %v880 = vadd.f32 %v339, %v879
        %v881 = vpop.f32.mrf.mxu0
        %v882 = vadd.f32 %v339, %v881
        %883 = vmatmul.bf16.gmra.mxu0 %v571
        %v884 = vpop.f32.mrf.mxu0
        %v885 = vadd.f32 %v339, %v884
        %v886 = vpop.f32.mrf.mxu0
        %v887 = vadd.f32 %v339, %v886
        %888 = vmatmul.bf16.gmra.mxu0 %v573
        %v889 = vpop.f32.mrf.mxu0
        %v890 = vadd.f32 %v339, %v889
        %v891 = vpop.f32.mrf.mxu0
        %v892 = vadd.f32 %v339, %v891
        %893 = vmatmul.bf16.gmra.mxu0 %v575
        %v894 = vpop.f32.mrf.mxu0
        %v895 = vadd.f32 %v339, %v894
        %v896 = vpop.f32.mrf.mxu0
        %v897 = vadd.f32 %v339, %v896
        %898 = vmatmul.bf16.gmra.mxu0 %v577
        %v899 = vpop.f32.mrf.mxu0
        %v900 = vadd.f32 %v339, %v899
        %v901 = vpop.f32.mrf.mxu0
        %v902 = vadd.f32 %v339, %v901
        %903 = vmatmul.bf16.gmra.mxu0 %v579
        %v904 = vpop.f32.mrf.mxu0
        %v905 = vadd.f32 %v339, %v904
        %v906 = vpop.f32.mrf.mxu0
        %v907 = vadd.f32 %v339, %v906
        %908 = vmatmul.bf16.gmra.mxu0 %v581
        %v909 = vpop.f32.mrf.mxu0
        %v910 = vadd.f32 %v339, %v909
        %v911 = vpop.f32.mrf.mxu0
        %v912 = vadd.f32 %v339, %v911
        %913 = vmatmul.bf16.gmra.mxu0 %v583
        %v914 = vpop.f32.mrf.mxu0
        %v915 = vadd.f32 %v339, %v914
        %v916 = vpop.f32.mrf.mxu0
        %v917 = vadd.f32 %v339, %v916
        %918 = vmatmul.bf16.gmra.mxu0 %v585
        %v919 = vpop.f32.mrf.mxu0
        %v920 = vadd.f32 %v339, %v919
        %v921 = vpop.f32.mrf.mxu0
        %v922 = vadd.f32 %v339, %v921
        %923 = vmatmul.bf16.gmra.mxu0 %v587
        %v924 = vpop.f32.mrf.mxu0
        %v925 = vadd.f32 %v339, %v924
        %v926 = vpop.f32.mrf.mxu0
        %v927 = vadd.f32 %v339, %v926
        %928 = vmatmul.bf16.gmra.mxu0 %v589
        %v929 = vpop.f32.mrf.mxu0
        %v930 = vadd.f32 %v339, %v929
        %v931 = vpop.f32.mrf.mxu0
        %v932 = vadd.f32 %v339, %v931
        %933 = vmatmul.bf16.gmra.mxu0 %v591
        %v934 = vpop.f32.mrf.mxu0
        %v935 = vadd.f32 %v339, %v934
        %v936 = vpop.f32.mrf.mxu0
        %v937 = vadd.f32 %v339, %v936
        %938 = vmatmul.bf16.gmra.mxu0 %v593
        %v939 = vpop.f32.mrf.mxu0
        %v940 = vadd.f32 %v339, %v939
        %v941 = vpop.f32.mrf.mxu0
        %v942 = vadd.f32 %v339, %v941
        %943 = vmatmul.bf16.gmra.mxu0 %v595
        %v944 = vpop.f32.mrf.mxu0
        %v945 = vadd.f32 %v339, %v944
        %v946 = vpop.f32.mrf.mxu0
        %v947 = vadd.f32 %v339, %v946
        %948 = vdwg.mxu0
        %949 = vmatpush.bf16.msra.mxu0 0
        %950 = vmatpush.bf16.msra.mxu0 0
        %951 = vmatpush.bf16.msra.mxu0 0
        %952 = vmatpush.bf16.msra.mxu0 0
        %953 = vmatpush.bf16.msra.mxu0 0
        %954 = vmatpush.bf16.msra.mxu0 0
        %955 = vmatpush.bf16.msra.mxu0 0
        %956 = vmatpush.bf16.msra.mxu0 %v673
        %957 = vmatmul.bf16.gmra.mxu0 %v685
        %v958 = vpop.f32.mrf.mxu0
        %v959 = vadd.f32 %v790, %v958
        %v960 = vpop.f32.mrf.mxu0
        %v961 = vadd.f32 %v792, %v960
        %962 = vmatmul.bf16.gmra.mxu0 %v688
        %v963 = vpop.f32.mrf.mxu0
        %v964 = vadd.f32 %v795, %v963
        %v965 = vpop.f32.mrf.mxu0
        %v966 = vadd.f32 %v797, %v965
        %967 = vmatmul.bf16.gmra.mxu0 %v691
        %v968 = vpop.f32.mrf.mxu0
        %v969 = vadd.f32 %v800, %v968
        %v970 = vpop.f32.mrf.mxu0
        %v971 = vadd.f32 %v802, %v970
        %972 = vmatmul.bf16.gmra.mxu0 %v694
        %v973 = vpop.f32.mrf.mxu0
        %v974 = vadd.f32 %v805, %v973
        %v975 = vpop.f32.mrf.mxu0
        %v976 = vadd.f32 %v807, %v975
        %977 = vmatmul.bf16.gmra.mxu0 %v697
        %v978 = vpop.f32.mrf.mxu0
        %v979 = vadd.f32 %v810, %v978
        %v980 = vpop.f32.mrf.mxu0
        %v981 = vadd.f32 %v812, %v980
        %982 = vmatmul.bf16.gmra.mxu0 %v700
        %v983 = vpop.f32.mrf.mxu0
        %v984 = vadd.f32 %v815, %v983
        %v985 = vpop.f32.mrf.mxu0
        %v986 = vadd.f32 %v817, %v985
        %987 = vmatmul.bf16.gmra.mxu0 %v703
        %v988 = vpop.f32.mrf.mxu0
        %v989 = vadd.f32 %v820, %v988
        %v990 = vpop.f32.mrf.mxu0
        %v991 = vadd.f32 %v822, %v990
        %992 = vmatmul.bf16.gmra.mxu0 %v706
        %v993 = vpop.f32.mrf.mxu0
        %v994 = vadd.f32 %v825, %v993
        %v995 = vpop.f32.mrf.mxu0
        %v996 = vadd.f32 %v827, %v995
        %997 = vmatmul.bf16.gmra.mxu0 %v709
        %v998 = vpop.f32.mrf.mxu0
        %v999 = vadd.f32 %v830, %v998
        %v1000 = vpop.f32.mrf.mxu0
        %v1001 = vadd.f32 %v832, %v1000
        %1002 = vmatmul.bf16.gmra.mxu0 %v712
        %v1003 = vpop.f32.mrf.mxu0
        %v1004 = vadd.f32 %v835, %v1003
        %v1005 = vpop.f32.mrf.mxu0
        %v1006 = vadd.f32 %v837, %v1005
        %1007 = vmatmul.bf16.gmra.mxu0 %v715
        %v1008 = vpop.f32.mrf.mxu0
        %v1009 = vadd.f32 %v840, %v1008
        %v1010 = vpop.f32.mrf.mxu0
        %v1011 = vadd.f32 %v842, %v1010
        %1012 = vmatmul.bf16.gmra.mxu0 %v718
        %v1013 = vpop.f32.mrf.mxu0
        %v1014 = vadd.f32 %v845, %v1013
        %v1015 = vpop.f32.mrf.mxu0
        %v1016 = vadd.f32 %v847, %v1015
        %1017 = vmatmul.bf16.gmra.mxu0 %v721
        %v1018 = vpop.f32.mrf.mxu0
        %v1019 = vadd.f32 %v850, %v1018
        %v1020 = vpop.f32.mrf.mxu0
        %v1021 = vadd.f32 %v852, %v1020
        %1022 = vmatmul.bf16.gmra.mxu0 %v724
        %v1023 = vpop.f32.mrf.mxu0
        %v1024 = vadd.f32 %v855, %v1023
        %v1025 = vpop.f32.mrf.mxu0
        %v1026 = vadd.f32 %v857, %v1025
        %1027 = vmatmul.bf16.gmra.mxu0 %v727
        %v1028 = vpop.f32.mrf.mxu0
        %v1029 = vadd.f32 %v860, %v1028
        %v1030 = vpop.f32.mrf.mxu0
        %v1031 = vadd.f32 %v862, %v1030
        %1032 = vmatmul.bf16.gmra.mxu0 %v730
        %v1033 = vpop.f32.mrf.mxu0
        %v1034 = vadd.f32 %v865, %v1033
        %v1035 = vpop.f32.mrf.mxu0
        %v1036 = vadd.f32 %v867, %v1035
        %1037 = vmatmul.bf16.gmra.mxu0 %v733
        %v1038 = vpop.f32.mrf.mxu0
        %v1039 = vadd.f32 %v870, %v1038
        %v1040 = vpop.f32.mrf.mxu0
        %v1041 = vadd.f32 %v872, %v1040
        %1042 = vmatmul.bf16.gmra.mxu0 %v736
        %v1043 = vpop.f32.mrf.mxu0
        %v1044 = vadd.f32 %v875, %v1043
        %v1045 = vpop.f32.mrf.mxu0
        %v1046 = vadd.f32 %v877, %v1045
        %1047 = vmatmul.bf16.gmra.mxu0 %v739
        %v1048 = vpop.f32.mrf.mxu0
        %v1049 = vadd.f32 %v880, %v1048
        %v1050 = vpop.f32.mrf.mxu0
        %v1051 = vadd.f32 %v882, %v1050
        %1052 = vmatmul.bf16.gmra.mxu0 %v742
        %v1053 = vpop.f32.mrf.mxu0
        %v1054 = vadd.f32 %v885, %v1053
        %v1055 = vpop.f32.mrf.mxu0
        %v1056 = vadd.f32 %v887, %v1055
        %1057 = vmatmul.bf16.gmra.mxu0 %v745
        %v1058 = vpop.f32.mrf.mxu0
        %v1059 = vadd.f32 %v890, %v1058
        %v1060 = vpop.f32.mrf.mxu0
        %v1061 = vadd.f32 %v892, %v1060
        %1062 = vmatmul.bf16.gmra.mxu0 %v748
        %v1063 = vpop.f32.mrf.mxu0
        %v1064 = vadd.f32 %v895, %v1063
        %v1065 = vpop.f32.mrf.mxu0
        %v1066 = vadd.f32 %v897, %v1065
        %1067 = vmatmul.bf16.gmra.mxu0 %v751
        %v1068 = vpop.f32.mrf.mxu0
        %v1069 = vadd.f32 %v900, %v1068
        %v1070 = vpop.f32.mrf.mxu0
        %v1071 = vadd.f32 %v902, %v1070
        %1072 = vmatmul.bf16.gmra.mxu0 %v754
        %v1073 = vpop.f32.mrf.mxu0
        %v1074 = vadd.f32 %v905, %v1073
        %v1075 = vpop.f32.mrf.mxu0
        %v1076 = vadd.f32 %v907, %v1075
        %1077 = vmatmul.bf16.gmra.mxu0 %v757
        %v1078 = vpop.f32.mrf.mxu0
        %v1079 = vadd.f32 %v910, %v1078
        %v1080 = vpop.f32.mrf.mxu0
        %v1081 = vadd.f32 %v912, %v1080
        %1082 = vmatmul.bf16.gmra.mxu0 %v760
        %v1083 = vpop.f32.mrf.mxu0
        %v1084 = vadd.f32 %v915, %v1083
        %v1085 = vpop.f32.mrf.mxu0
        %v1086 = vadd.f32 %v917, %v1085
        %1087 = vmatmul.bf16.gmra.mxu0 %v763
        %v1088 = vpop.f32.mrf.mxu0
        %v1089 = vadd.f32 %v920, %v1088
        %v1090 = vpop.f32.mrf.mxu0
        %v1091 = vadd.f32 %v922, %v1090
        %1092 = vmatmul.bf16.gmra.mxu0 %v766
        %v1093 = vpop.f32.mrf.mxu0
        %v1094 = vadd.f32 %v925, %v1093
        %v1095 = vpop.f32.mrf.mxu0
        %v1096 = vadd.f32 %v927, %v1095
        %1097 = vmatmul.bf16.gmra.mxu0 %v769
        %v1098 = vpop.f32.mrf.mxu0
        %v1099 = vadd.f32 %v930, %v1098
        %v1100 = vpop.f32.mrf.mxu0
        %v1101 = vadd.f32 %v932, %v1100
        %1102 = vmatmul.bf16.gmra.mxu0 %v772
        %v1103 = vpop.f32.mrf.mxu0
        %v1104 = vadd.f32 %v935, %v1103
        %v1105 = vpop.f32.mrf.mxu0
        %v1106 = vadd.f32 %v937, %v1105
        %1107 = vmatmul.bf16.gmra.mxu0 %v775
        %v1108 = vpop.f32.mrf.mxu0
        %v1109 = vadd.f32 %v940, %v1108
        %v1110 = vpop.f32.mrf.mxu0
        %v1111 = vadd.f32 %v942, %v1110
        %1112 = vmatmul.bf16.gmra.mxu0 %v778
        %v1113 = vpop.f32.mrf.mxu0
        %v1114 = vadd.f32 %v945, %v1113
        %v1115 = vpop.f32.mrf.mxu0
        %v1116 = vadd.f32 %v947, %v1115
        %1117 = vdwg.mxu0
        %vm1118 = vcmp.gt.f32.partialorder %v959, 0.0
        %vm1119 = vcmp.gt.f32.partialorder %v961, 0.0
        %vm1120 = vcmp.gt.f32.partialorder %v964, 0.0
        %vm1121 = vcmp.gt.f32.partialorder %v966, 0.0
        %vm1122 = vcmp.gt.f32.partialorder %v969, 0.0
        %vm1123 = vcmp.gt.f32.partialorder %v971, 0.0
        %vm1124 = vcmp.gt.f32.partialorder %v974, 0.0
        %vm1125 = vcmp.gt.f32.partialorder %v976, 0.0
        %vm1126 = vcmp.gt.f32.partialorder %v979, 0.0
        %vm1127 = vcmp.gt.f32.partialorder %v981, 0.0
        %vm1128 = vcmp.gt.f32.partialorder %v984, 0.0
        %vm1129 = vcmp.gt.f32.partialorder %v986, 0.0
        %vm1130 = vcmp.gt.f32.partialorder %v989, 0.0
        %vm1131 = vcmp.gt.f32.partialorder %v991, 0.0
        %vm1132 = vcmp.gt.f32.partialorder %v994, 0.0
        %vm1133 = vcmp.gt.f32.partialorder %v996, 0.0
        %vm1134 = vcmp.gt.f32.partialorder %v999, 0.0
        %vm1135 = vcmp.gt.f32.partialorder %v1001, 0.0
        %vm1136 = vcmp.gt.f32.partialorder %v1004, 0.0
        %vm1137 = vcmp.gt.f32.partialorder %v1006, 0.0
        %vm1138 = vcmp.gt.f32.partialorder %v1009, 0.0
        %vm1139 = vcmp.gt.f32.partialorder %v1011, 0.0
        %vm1140 = vcmp.gt.f32.partialorder %v1014, 0.0
        %vm1141 = vcmp.gt.f32.partialorder %v1016, 0.0
        %vm1142 = vcmp.gt.f32.partialorder %v1019, 0.0
        %vm1143 = vcmp.gt.f32.partialorder %v1021, 0.0
        %vm1144 = vcmp.gt.f32.partialorder %v1024, 0.0
        %vm1145 = vcmp.gt.f32.partialorder %v1026, 0.0
        %vm1146 = vcmp.gt.f32.partialorder %v1029, 0.0
        %vm1147 = vcmp.gt.f32.partialorder %v1031, 0.0
        %vm1148 = vcmp.gt.f32.partialorder %v1034, 0.0
        %vm1149 = vcmp.gt.f32.partialorder %v1036, 0.0
        %vm1150 = vcmp.gt.f32.partialorder %v1039, 0.0
        %vm1151 = vcmp.gt.f32.partialorder %v1041, 0.0
        %vm1152 = vcmp.gt.f32.partialorder %v1044, 0.0
        %vm1153 = vcmp.gt.f32.partialorder %v1046, 0.0
        %vm1154 = vcmp.gt.f32.partialorder %v1049, 0.0
        %vm1155 = vcmp.gt.f32.partialorder %v1051, 0.0
        %vm1156 = vcmp.gt.f32.partialorder %v1054, 0.0
        %vm1157 = vcmp.gt.f32.partialorder %v1056, 0.0
        %vm1158 = vcmp.gt.f32.partialorder %v1059, 0.0
        %vm1159 = vcmp.gt.f32.partialorder %v1061, 0.0
        %vm1160 = vcmp.gt.f32.partialorder %v1064, 0.0
        %vm1161 = vcmp.gt.f32.partialorder %v1066, 0.0
        %vm1162 = vcmp.gt.f32.partialorder %v1069, 0.0
        %vm1163 = vcmp.gt.f32.partialorder %v1071, 0.0
        %vm1164 = vcmp.gt.f32.partialorder %v1074, 0.0
        %vm1165 = vcmp.gt.f32.partialorder %v1076, 0.0
        %vm1166 = vcmp.gt.f32.partialorder %v1079, 0.0
        %vm1167 = vcmp.gt.f32.partialorder %v1081, 0.0
        %vm1168 = vcmp.gt.f32.partialorder %v1084, 0.0
        %vm1169 = vcmp.gt.f32.partialorder %v1086, 0.0
        %vm1170 = vcmp.gt.f32.partialorder %v1089, 0.0
        %vm1171 = vcmp.gt.f32.partialorder %v1091, 0.0
        %vm1172 = vcmp.gt.f32.partialorder %v1094, 0.0
        %vm1173 = vcmp.gt.f32.partialorder %v1096, 0.0
        %vm1174 = vcmp.gt.f32.partialorder %v1099, 0.0
        %vm1175 = vcmp.gt.f32.partialorder %v1101, 0.0
        %vm1176 = vcmp.gt.f32.partialorder %v1104, 0.0
        %vm1177 = vcmp.gt.f32.partialorder %v1106, 0.0
        %vm1178 = vcmp.gt.f32.partialorder %v1109, 0.0
        %vm1179 = vcmp.gt.f32.partialorder %v1111, 0.0
        %vm1180 = vcmp.gt.f32.partialorder %v1114, 0.0
        %vm1181 = vcmp.gt.f32.partialorder %v1116, 0.0
        %v1182 = vmul.f32 %v959, 0.01
        %v1183 = vmul.f32 %v961, 0.01
        %v1184 = vmul.f32 %v964, 0.01
        %v1185 = vmul.f32 %v966, 0.01
        %v1186 = vmul.f32 %v969, 0.01
        %v1187 = vmul.f32 %v971, 0.01
        %v1188 = vmul.f32 %v974, 0.01
        %v1189 = vmul.f32 %v976, 0.01
        %v1190 = vmul.f32 %v979, 0.01
        %v1191 = vmul.f32 %v981, 0.01
        %v1192 = vmul.f32 %v984, 0.01
        %v1193 = vmul.f32 %v986, 0.01
        %v1194 = vmul.f32 %v989, 0.01
        %v1195 = vmul.f32 %v991, 0.01
        %v1196 = vmul.f32 %v994, 0.01
        %v1197 = vmul.f32 %v996, 0.01
        %v1198 = vmul.f32 %v999, 0.01
        %v1199 = vmul.f32 %v1001, 0.01
        %v1200 = vmul.f32 %v1004, 0.01
        %v1201 = vmul.f32 %v1006, 0.01
        %v1202 = vmul.f32 %v1009, 0.01
        %v1203 = vmul.f32 %v1011, 0.01
        %v1204 = vmul.f32 %v1014, 0.01
        %v1205 = vmul.f32 %v1016, 0.01
        %v1206 = vmul.f32 %v1019, 0.01
        %v1207 = vmul.f32 %v1021, 0.01
        %v1208 = vmul.f32 %v1024, 0.01
        %v1209 = vmul.f32 %v1026, 0.01
        %v1210 = vmul.f32 %v1029, 0.01
        %v1211 = vmul.f32 %v1031, 0.01
        %v1212 = vmul.f32 %v1034, 0.01
        %v1213 = vmul.f32 %v1036, 0.01
        %v1214 = vmul.f32 %v1039, 0.01
        %v1215 = vmul.f32 %v1041, 0.01
        %v1216 = vmul.f32 %v1044, 0.01
        %v1217 = vmul.f32 %v1046, 0.01
        %v1218 = vmul.f32 %v1049, 0.01
        %v1219 = vmul.f32 %v1051, 0.01
        %v1220 = vmul.f32 %v1054, 0.01
        %v1221 = vmul.f32 %v1056, 0.01
        %v1222 = vmul.f32 %v1059, 0.01
        %v1223 = vmul.f32 %v1061, 0.01
        %v1224 = vmul.f32 %v1064, 0.01
        %v1225 = vmul.f32 %v1066, 0.01
        %v1226 = vmul.f32 %v1069, 0.01
        %v1227 = vmul.f32 %v1071, 0.01
        %v1228 = vmul.f32 %v1074, 0.01
        %v1229 = vmul.f32 %v1076, 0.01
        %v1230 = vmul.f32 %v1079, 0.01
        %v1231 = vmul.f32 %v1081, 0.01
        %v1232 = vmul.f32 %v1084, 0.01
        %v1233 = vmul.f32 %v1086, 0.01
        %v1234 = vmul.f32 %v1089, 0.01
        %v1235 = vmul.f32 %v1091, 0.01
        %v1236 = vmul.f32 %v1094, 0.01
        %v1237 = vmul.f32 %v1096, 0.01
        %v1238 = vmul.f32 %v1099, 0.01
        %v1239 = vmul.f32 %v1101, 0.01
        %v1240 = vmul.f32 %v1104, 0.01
        %v1241 = vmul.f32 %v1106, 0.01
        %v1242 = vmul.f32 %v1109, 0.01
        %v1243 = vmul.f32 %v1111, 0.01
        %v1244 = vmul.f32 %v1114, 0.01
        %v1245 = vmul.f32 %v1116, 0.01
        %v1246 = vsel %vm1118, %v959, %v1182
        %v1247 = vsel %vm1119, %v961, %v1183
        %v1248 = vsel %vm1120, %v964, %v1184
        %v1249 = vsel %vm1121, %v966, %v1185
        %v1250 = vsel %vm1122, %v969, %v1186
        %v1251 = vsel %vm1123, %v971, %v1187
        %v1252 = vsel %vm1124, %v974, %v1188
        %v1253 = vsel %vm1125, %v976, %v1189
        %v1254 = vsel %vm1126, %v979, %v1190
        %v1255 = vsel %vm1127, %v981, %v1191
        %v1256 = vsel %vm1128, %v984, %v1192
        %v1257 = vsel %vm1129, %v986, %v1193
        %v1258 = vsel %vm1130, %v989, %v1194
        %v1259 = vsel %vm1131, %v991, %v1195
        %v1260 = vsel %vm1132, %v994, %v1196
        %v1261 = vsel %vm1133, %v996, %v1197
        %v1262 = vsel %vm1134, %v999, %v1198
        %v1263 = vsel %vm1135, %v1001, %v1199
        %v1264 = vsel %vm1136, %v1004, %v1200
        %v1265 = vsel %vm1137, %v1006, %v1201
        %v1266 = vsel %vm1138, %v1009, %v1202
        %v1267 = vsel %vm1139, %v1011, %v1203
        %v1268 = vsel %vm1140, %v1014, %v1204
        %v1269 = vsel %vm1141, %v1016, %v1205
        %v1270 = vsel %vm1142, %v1019, %v1206
        %v1271 = vsel %vm1143, %v1021, %v1207
        %v1272 = vsel %vm1144, %v1024, %v1208
        %v1273 = vsel %vm1145, %v1026, %v1209
        %v1274 = vsel %vm1146, %v1029, %v1210
        %v1275 = vsel %vm1147, %v1031, %v1211
        %v1276 = vsel %vm1148, %v1034, %v1212
        %v1277 = vsel %vm1149, %v1036, %v1213
        %v1278 = vsel %vm1150, %v1039, %v1214
        %v1279 = vsel %vm1151, %v1041, %v1215
        %v1280 = vsel %vm1152, %v1044, %v1216
        %v1281 = vsel %vm1153, %v1046, %v1217
        %v1282 = vsel %vm1154, %v1049, %v1218
        %v1283 = vsel %vm1155, %v1051, %v1219
        %v1284 = vsel %vm1156, %v1054, %v1220
        %v1285 = vsel %vm1157, %v1056, %v1221
        %v1286 = vsel %vm1158, %v1059, %v1222
        %v1287 = vsel %vm1159, %v1061, %v1223
        %v1288 = vsel %vm1160, %v1064, %v1224
        %v1289 = vsel %vm1161, %v1066, %v1225
        %v1290 = vsel %vm1162, %v1069, %v1226
        %v1291 = vsel %vm1163, %v1071, %v1227
        %v1292 = vsel %vm1164, %v1074, %v1228
        %v1293 = vsel %vm1165, %v1076, %v1229
        %v1294 = vsel %vm1166, %v1079, %v1230
        %v1295 = vsel %vm1167, %v1081, %v1231
        %v1296 = vsel %vm1168, %v1084, %v1232
        %v1297 = vsel %vm1169, %v1086, %v1233
        %v1298 = vsel %vm1170, %v1089, %v1234
        %v1299 = vsel %vm1171, %v1091, %v1235
        %v1300 = vsel %vm1172, %v1094, %v1236
        %v1301 = vsel %vm1173, %v1096, %v1237
        %v1302 = vsel %vm1174, %v1099, %v1238
        %v1303 = vsel %vm1175, %v1101, %v1239
        %v1304 = vsel %vm1176, %v1104, %v1240
        %v1305 = vsel %vm1177, %v1106, %v1241
        %v1306 = vsel %vm1178, %v1109, %v1242
        %v1307 = vsel %vm1179, %v1111, %v1243
        %v1308 = vsel %vm1180, %v1114, %v1244
        %v1309 = vsel %vm1181, %v1116, %v1245
        %v1310 = vld [vmem:[%s3] sm:$0x1]
        %v1312 = vperm.slane %v1310, 0
        %v1314 = vmul.f32 %v1246, %v1312
        %v1315 = vmul.f32 %v1247, %v1312
        %v1316 = vmul.f32 %v1248, %v1312
        %v1317 = vmul.f32 %v1249, %v1312
        %v1318 = vmul.f32 %v1250, %v1312
        %v1319 = vmul.f32 %v1251, %v1312
        %v1320 = vmul.f32 %v1252, %v1312
        %v1321 = vmul.f32 %v1253, %v1312
        %v1322 = vmul.f32 %v1254, %v1312
        %v1323 = vmul.f32 %v1255, %v1312
        %v1324 = vmul.f32 %v1256, %v1312
        %v1325 = vmul.f32 %v1257, %v1312
        %v1326 = vmul.f32 %v1258, %v1312
        %v1327 = vmul.f32 %v1259, %v1312
        %v1328 = vmul.f32 %v1260, %v1312
        %v1329 = vmul.f32 %v1261, %v1312
        %v1330 = vmul.f32 %v1262, %v1312
        %v1331 = vmul.f32 %v1263, %v1312
        %v1332 = vmul.f32 %v1264, %v1312
        %v1333 = vmul.f32 %v1265, %v1312
        %v1334 = vmul.f32 %v1266, %v1312
        %v1335 = vmul.f32 %v1267, %v1312
        %v1336 = vmul.f32 %v1268, %v1312
        %v1337 = vmul.f32 %v1269, %v1312
        %v1338 = vmul.f32 %v1270, %v1312
        %v1339 = vmul.f32 %v1271, %v1312
        %v1340 = vmul.f32 %v1272, %v1312
        %v1341 = vmul.f32 %v1273, %v1312
        %v1342 = vmul.f32 %v1274, %v1312
        %v1343 = vmul.f32 %v1275, %v1312
        %v1344 = vmul.f32 %v1276, %v1312
        %v1345 = vmul.f32 %v1277, %v1312
        %v1346 = vmul.f32 %v1278, %v1312
        %v1347 = vmul.f32 %v1279, %v1312
        %v1348 = vmul.f32 %v1280, %v1312
        %v1349 = vmul.f32 %v1281, %v1312
        %v1350 = vmul.f32 %v1282, %v1312
        %v1351 = vmul.f32 %v1283, %v1312
        %v1352 = vmul.f32 %v1284, %v1312
        %v1353 = vmul.f32 %v1285, %v1312
        %v1354 = vmul.f32 %v1286, %v1312
        %v1355 = vmul.f32 %v1287, %v1312
        %v1356 = vmul.f32 %v1288, %v1312
        %v1357 = vmul.f32 %v1289, %v1312
        %v1358 = vmul.f32 %v1290, %v1312
        %v1359 = vmul.f32 %v1291, %v1312
        %v1360 = vmul.f32 %v1292, %v1312
        %v1361 = vmul.f32 %v1293, %v1312
        %v1362 = vmul.f32 %v1294, %v1312
        %v1363 = vmul.f32 %v1295, %v1312
        %v1364 = vmul.f32 %v1296, %v1312
        %v1365 = vmul.f32 %v1297, %v1312
        %v1366 = vmul.f32 %v1298, %v1312
        %v1367 = vmul.f32 %v1299, %v1312
        %v1368 = vmul.f32 %v1300, %v1312
        %v1369 = vmul.f32 %v1301, %v1312
        %v1370 = vmul.f32 %v1302, %v1312
        %v1371 = vmul.f32 %v1303, %v1312
        %v1372 = vmul.f32 %v1304, %v1312
        %v1373 = vmul.f32 %v1305, %v1312
        %v1374 = vmul.f32 %v1306, %v1312
        %v1375 = vmul.f32 %v1307, %v1312
        %v1376 = vmul.f32 %v1308, %v1312
        %v1377 = vmul.f32 %v1309, %v1312
        %v1378 = vld [vmem:[%s4] sm:$0x1]
        %v1380 = vperm.slane %v1378, 0
        %v1382 = vadd.f32 %v1314, %v1380
        %v1383 = vadd.f32 %v1315, %v1380
        %v1384 = vadd.f32 %v1316, %v1380
        %v1385 = vadd.f32 %v1317, %v1380
        %v1386 = vadd.f32 %v1318, %v1380
        %v1387 = vadd.f32 %v1319, %v1380
        %v1388 = vadd.f32 %v1320, %v1380
        %v1389 = vadd.f32 %v1321, %v1380
        %v1390 = vadd.f32 %v1322, %v1380
        %v1391 = vadd.f32 %v1323, %v1380
        %v1392 = vadd.f32 %v1324, %v1380
        %v1393 = vadd.f32 %v1325, %v1380
        %v1394 = vadd.f32 %v1326, %v1380
        %v1395 = vadd.f32 %v1327, %v1380
        %v1396 = vadd.f32 %v1328, %v1380
        %v1397 = vadd.f32 %v1329, %v1380
        %v1398 = vadd.f32 %v1330, %v1380
        %v1399 = vadd.f32 %v1331, %v1380
        %v1400 = vadd.f32 %v1332, %v1380
        %v1401 = vadd.f32 %v1333, %v1380
        %v1402 = vadd.f32 %v1334, %v1380
        %v1403 = vadd.f32 %v1335, %v1380
        %v1404 = vadd.f32 %v1336, %v1380
        %v1405 = vadd.f32 %v1337, %v1380
        %v1406 = vadd.f32 %v1338, %v1380
        %v1407 = vadd.f32 %v1339, %v1380
        %v1408 = vadd.f32 %v1340, %v1380
        %v1409 = vadd.f32 %v1341, %v1380
        %v1410 = vadd.f32 %v1342, %v1380
        %v1411 = vadd.f32 %v1343, %v1380
        %v1412 = vadd.f32 %v1344, %v1380
        %v1413 = vadd.f32 %v1345, %v1380
        %v1414 = vadd.f32 %v1346, %v1380
        %v1415 = vadd.f32 %v1347, %v1380
        %v1416 = vadd.f32 %v1348, %v1380
        %v1417 = vadd.f32 %v1349, %v1380
        %v1418 = vadd.f32 %v1350, %v1380
        %v1419 = vadd.f32 %v1351, %v1380
        %v1420 = vadd.f32 %v1352, %v1380
        %v1421 = vadd.f32 %v1353, %v1380
        %v1422 = vadd.f32 %v1354, %v1380
        %v1423 = vadd.f32 %v1355, %v1380
        %v1424 = vadd.f32 %v1356, %v1380
        %v1425 = vadd.f32 %v1357, %v1380
        %v1426 = vadd.f32 %v1358, %v1380
        %v1427 = vadd.f32 %v1359, %v1380
        %v1428 = vadd.f32 %v1360, %v1380
        %v1429 = vadd.f32 %v1361, %v1380
        %v1430 = vadd.f32 %v1362, %v1380
        %v1431 = vadd.f32 %v1363, %v1380
        %v1432 = vadd.f32 %v1364, %v1380
        %v1433 = vadd.f32 %v1365, %v1380
        %v1434 = vadd.f32 %v1366, %v1380
        %v1435 = vadd.f32 %v1367, %v1380
        %v1436 = vadd.f32 %v1368, %v1380
        %v1437 = vadd.f32 %v1369, %v1380
        %v1438 = vadd.f32 %v1370, %v1380
        %v1439 = vadd.f32 %v1371, %v1380
        %v1440 = vadd.f32 %v1372, %v1380
        %v1441 = vadd.f32 %v1373, %v1380
        %v1442 = vadd.f32 %v1374, %v1380
        %v1443 = vadd.f32 %v1375, %v1380
        %v1444 = vadd.f32 %v1376, %v1380
        %v1445 = vadd.f32 %v1377, %v1380
        %v1446 = vpack.c.bf16 %v1382, %v1382
        %v1447 = vpack.c.bf16 %v1383, %v1383
        %v1448 = vpack.c.bf16 %v1384, %v1384
        %v1449 = vpack.c.bf16 %v1385, %v1385
        %v1450 = vpack.c.bf16 %v1386, %v1386
        %v1451 = vpack.c.bf16 %v1387, %v1387
        %v1452 = vpack.c.bf16 %v1388, %v1388
        %v1453 = vpack.c.bf16 %v1389, %v1389
        %v1454 = vpack.c.bf16 %v1390, %v1390
        %v1455 = vpack.c.bf16 %v1391, %v1391
        %v1456 = vpack.c.bf16 %v1392, %v1392
        %v1457 = vpack.c.bf16 %v1393, %v1393
        %v1458 = vpack.c.bf16 %v1394, %v1394
        %v1459 = vpack.c.bf16 %v1395, %v1395
        %v1460 = vpack.c.bf16 %v1396, %v1396
        %v1461 = vpack.c.bf16 %v1397, %v1397
        %v1462 = vpack.c.bf16 %v1398, %v1398
        %v1463 = vpack.c.bf16 %v1399, %v1399
        %v1464 = vpack.c.bf16 %v1400, %v1400
        %v1465 = vpack.c.bf16 %v1401, %v1401
        %v1466 = vpack.c.bf16 %v1402, %v1402
        %v1467 = vpack.c.bf16 %v1403, %v1403
        %v1468 = vpack.c.bf16 %v1404, %v1404
        %v1469 = vpack.c.bf16 %v1405, %v1405
        %v1470 = vpack.c.bf16 %v1406, %v1406
        %v1471 = vpack.c.bf16 %v1407, %v1407
        %v1472 = vpack.c.bf16 %v1408, %v1408
        %v1473 = vpack.c.bf16 %v1409, %v1409
        %v1474 = vpack.c.bf16 %v1410, %v1410
        %v1475 = vpack.c.bf16 %v1411, %v1411
        %v1476 = vpack.c.bf16 %v1412, %v1412
        %v1477 = vpack.c.bf16 %v1413, %v1413
        %v1478 = vpack.c.bf16 %v1414, %v1414
        %v1479 = vpack.c.bf16 %v1415, %v1415
        %v1480 = vpack.c.bf16 %v1416, %v1416
        %v1481 = vpack.c.bf16 %v1417, %v1417
        %v1482 = vpack.c.bf16 %v1418, %v1418
        %v1483 = vpack.c.bf16 %v1419, %v1419
        %v1484 = vpack.c.bf16 %v1420, %v1420
        %v1485 = vpack.c.bf16 %v1421, %v1421
        %v1486 = vpack.c.bf16 %v1422, %v1422
        %v1487 = vpack.c.bf16 %v1423, %v1423
        %v1488 = vpack.c.bf16 %v1424, %v1424
        %v1489 = vpack.c.bf16 %v1425, %v1425
        %v1490 = vpack.c.bf16 %v1426, %v1426
        %v1491 = vpack.c.bf16 %v1427, %v1427
        %v1492 = vpack.c.bf16 %v1428, %v1428
        %v1493 = vpack.c.bf16 %v1429, %v1429
        %v1494 = vpack.c.bf16 %v1430, %v1430
        %v1495 = vpack.c.bf16 %v1431, %v1431
        %v1496 = vpack.c.bf16 %v1432, %v1432
        %v1497 = vpack.c.bf16 %v1433, %v1433
        %v1498 = vpack.c.bf16 %v1434, %v1434
        %v1499 = vpack.c.bf16 %v1435, %v1435
        %v1500 = vpack.c.bf16 %v1436, %v1436
        %v1501 = vpack.c.bf16 %v1437, %v1437
        %v1502 = vpack.c.bf16 %v1438, %v1438
        %v1503 = vpack.c.bf16 %v1439, %v1439
        %v1504 = vpack.c.bf16 %v1440, %v1440
        %v1505 = vpack.c.bf16 %v1441, %v1441
        %v1506 = vpack.c.bf16 %v1442, %v1442
        %v1507 = vpack.c.bf16 %v1443, %v1443
        %v1508 = vpack.c.bf16 %v1444, %v1444
        %v1509 = vpack.c.bf16 %v1445, %v1445
        %vm1510 = vcmask 257024
        %1511 = vst.msk [vmem:[%s231] sm:$0xf] %vm1510, %v1446
        %1512 = vst.msk [vmem:[%s231 + $0x4] sm:$0xf] %vm1510, %v1447
        %1513 = vst.msk [vmem:[%s231 + $0x8] sm:$0xf] %vm1510, %v1448
        %1514 = vst.msk [vmem:[%s231 + $0xc] sm:$0xf] %vm1510, %v1449
        %1515 = vst.msk [vmem:[%s231 + $0x10] sm:$0xf] %vm1510, %v1450
        %1516 = vst.msk [vmem:[%s231 + $0x14] sm:$0xf] %vm1510, %v1451
        %1517 = vst.msk [vmem:[%s231 + $0x18] sm:$0xf] %vm1510, %v1452
        %1518 = vst.msk [vmem:[%s231 + $0x1c] sm:$0xf] %vm1510, %v1453
        %1519 = vst.msk [vmem:[%s231 + $0x20] sm:$0xf] %vm1510, %v1454
        %1520 = vst.msk [vmem:[%s231 + $0x24] sm:$0xf] %vm1510, %v1455
        %1521 = vst.msk [vmem:[%s231 + $0x28] sm:$0xf] %vm1510, %v1456
        %1522 = vst.msk [vmem:[%s231 + $0x2c] sm:$0xf] %vm1510, %v1457
        %1523 = vst.msk [vmem:[%s231 + $0x30] sm:$0xf] %vm1510, %v1458
        %1524 = vst.msk [vmem:[%s231 + $0x34] sm:$0xf] %vm1510, %v1459
        %1525 = vst.msk [vmem:[%s231 + $0x38] sm:$0xf] %vm1510, %v1460
        %1526 = vst.msk [vmem:[%s231 + $0x3c] sm:$0xf] %vm1510, %v1461
        %1527 = vst.msk [vmem:[%s231 + $0x40] sm:$0xf] %vm1510, %v1462
        %1528 = vst.msk [vmem:[%s231 + $0x44] sm:$0xf] %vm1510, %v1463
        %1529 = vst.msk [vmem:[%s231 + $0x48] sm:$0xf] %vm1510, %v1464
        %1530 = vst.msk [vmem:[%s231 + $0x4c] sm:$0xf] %vm1510, %v1465
        %1531 = vst.msk [vmem:[%s231 + $0x50] sm:$0xf] %vm1510, %v1466
        %1532 = vst.msk [vmem:[%s231 + $0x54] sm:$0xf] %vm1510, %v1467
        %1533 = vst.msk [vmem:[%s231 + $0x58] sm:$0xf] %vm1510, %v1468
        %1534 = vst.msk [vmem:[%s231 + $0x5c] sm:$0xf] %vm1510, %v1469
        %1535 = vst.msk [vmem:[%s231 + $0x60] sm:$0xf] %vm1510, %v1470
        %1536 = vst.msk [vmem:[%s231 + $0x64] sm:$0xf] %vm1510, %v1471
        %1537 = vst.msk [vmem:[%s231 + $0x68] sm:$0xf] %vm1510, %v1472
        %1538 = vst.msk [vmem:[%s231 + $0x6c] sm:$0xf] %vm1510, %v1473
        %1539 = vst.msk [vmem:[%s231 + $0x70] sm:$0xf] %vm1510, %v1474
        %1540 = vst.msk [vmem:[%s231 + $0x74] sm:$0xf] %vm1510, %v1475
        %1541 = vst.msk [vmem:[%s231 + $0x78] sm:$0xf] %vm1510, %v1476
        %1542 = vst.msk [vmem:[%s231 + $0x7c] sm:$0xf] %vm1510, %v1477
        %1543 = vst.msk [vmem:[%s231 + $0x80] sm:$0xf] %vm1510, %v1478
        %1544 = vst.msk [vmem:[%s231 + $0x84] sm:$0xf] %vm1510, %v1479
        %1545 = vst.msk [vmem:[%s231 + $0x88] sm:$0xf] %vm1510, %v1480
        %1546 = vst.msk [vmem:[%s231 + $0x8c] sm:$0xf] %vm1510, %v1481
        %1547 = vst.msk [vmem:[%s231 + $0x90] sm:$0xf] %vm1510, %v1482
        %1548 = vst.msk [vmem:[%s231 + $0x94] sm:$0xf] %vm1510, %v1483
        %1549 = vst.msk [vmem:[%s231 + $0x98] sm:$0xf] %vm1510, %v1484
        %1550 = vst.msk [vmem:[%s231 + $0x9c] sm:$0xf] %vm1510, %v1485
        %1551 = vst.msk [vmem:[%s231 + $0xa0] sm:$0xf] %vm1510, %v1486
        %1552 = vst.msk [vmem:[%s231 + $0xa4] sm:$0xf] %vm1510, %v1487
        %1553 = vst.msk [vmem:[%s231 + $0xa8] sm:$0xf] %vm1510, %v1488
        %1554 = vst.msk [vmem:[%s231 + $0xac] sm:$0xf] %vm1510, %v1489
        %1555 = vst.msk [vmem:[%s231 + $0xb0] sm:$0xf] %vm1510, %v1490
        %1556 = vst.msk [vmem:[%s231 + $0xb4] sm:$0xf] %vm1510, %v1491
        %1557 = vst.msk [vmem:[%s231 + $0xb8] sm:$0xf] %vm1510, %v1492
        %1558 = vst.msk [vmem:[%s231 + $0xbc] sm:$0xf] %vm1510, %v1493
        %1559 = vst.msk [vmem:[%s231 + $0xc0] sm:$0xf] %vm1510, %v1494
        %1560 = vst.msk [vmem:[%s231 + $0xc4] sm:$0xf] %vm1510, %v1495
        %1561 = vst.msk [vmem:[%s231 + $0xc8] sm:$0xf] %vm1510, %v1496
        %1562 = vst.msk [vmem:[%s231 + $0xcc] sm:$0xf] %vm1510, %v1497
        %1563 = vst.msk [vmem:[%s231 + $0xd0] sm:$0xf] %vm1510, %v1498
        %1564 = vst.msk [vmem:[%s231 + $0xd4] sm:$0xf] %vm1510, %v1499
        %1565 = vst.msk [vmem:[%s231 + $0xd8] sm:$0xf] %vm1510, %v1500
        %1566 = vst.msk [vmem:[%s231 + $0xdc] sm:$0xf] %vm1510, %v1501
        %1567 = vst.msk [vmem:[%s231 + $0xe0] sm:$0xf] %vm1510, %v1502
        %1568 = vst.msk [vmem:[%s231 + $0xe4] sm:$0xf] %vm1510, %v1503
        %1569 = vst.msk [vmem:[%s231 + $0xe8] sm:$0xf] %vm1510, %v1504
        %1570 = vst.msk [vmem:[%s231 + $0xec] sm:$0xf] %vm1510, %v1505
        %1571 = vst.msk [vmem:[%s231 + $0xf0] sm:$0xf] %vm1510, %v1506
        %1572 = vst.msk [vmem:[%s231 + $0xf4] sm:$0xf] %vm1510, %v1507
        %1573 = vst.msk [vmem:[%s231 + $0xf8] sm:$0xf] %vm1510, %v1508
        %1574 = vst.msk [vmem:[%s231 + $0xfc] sm:$0xf] %vm1510, %v1509
        %s1575 = sand.u32 %s134, 1
        %s1576 = sand.u32 %s134, 1
        %s1577 = smul.addr %s1576, 256
        %s1578 = scalar_lea.vmem [#allocation2], %s1577
        // Predicated region
        $region41: #{_lambda_.11} parent=39 // pred_check
          %p1579 = pneg %p144
        $region42: #{_lambda_.11} parent=39 // pred_check_branch
          %1581 = sbr.rel (%p1579) target = $region44
        $region43: #{_lambda_.11} parent=39 // pred_region
          %s1582 = smul.u32 64, %s16
          %s1583 = ssub.s32 241, %s1582
          %p1584 = scmp.lt.s32.totalorder %s1583, 64
          %s1585 = scalar_select %p1584, %s1583, 64
          %s1586 = smul.u32 4, %s1585
          %p1587 = scmp.ne.s32.totalorder 0, %s1586
          %s1588 = smul.addr %s1582, 4
          %s1589 = scalar_lea.vmem %s5, %s1588
          // Predicated region
          $region45: #{_lambda_.11} parent=43 // pred_check
            %p1590 = pneg %p1587
          $region46: #{_lambda_.11} parent=43 // pred_check_branch
            %1592 = sbr.rel (%p1590) target = $region48
          $region47: #{_lambda_.11} parent=43 // pred_region
            // Predicated region
            $region49: #{_lambda_.11} parent=47 // pred_check
              _
            $region50: #{_lambda_.11} parent=47 // pred_check_branch
              %1594 = sbr.rel target = $region52
            $region51: #{_lambda_.11} parent=47 // pred_region
              // Predicated region
              $region71: #{_lambda_.11} parent=51 // pred_check
                _
              $region72: #{_lambda_.11} parent=51 // pred_check_branch
                %1706 = sbr.rel (0) target = $region74
              $region73: #{_lambda_.11} parent=51 // pred_region
                %s1708 = ssub.s32 16, 1
                %s1709 = sshrl.u32 %s1585, 5
                // While loop
                $region75: #{_lambda_.11} parent=73 // loop_pre_header
                  _
                $region76: #{_lambda_.11} parent=73 // loop_header
                  %s1711 = sphi 0, %s1713
                  %p1712 = scmp.ge.s32.totalorder %s1711, %s1709
                  %s1716 = sphi 0, %s1785
                  %s1717 = sphi %s1578, %s1788
                  %s1718 = sphi %s1589, %s1789
                $region77: #{_lambda_.11} parent=73 // loop_header_branch
                  %1715 = sbr.rel (%p1712) target = $region81
                $region78: #{_lambda_.11} parent=73 // loop_body
                  %v1719 = vld [vmem:[%s1717] sm:%s1708]
                  %1720 = vst [vmem:[%s1718] sm:%s1708] %v1719
                  %v1721 = vld [vmem:[%s1717 + $0x4] sm:%s1708]
                  %1722 = vst [vmem:[%s1718 + $0x4] sm:%s1708] %v1721
                  %v1723 = vld [vmem:[%s1717 + $0x8] sm:%s1708]
                  %1724 = vst [vmem:[%s1718 + $0x8] sm:%s1708] %v1723
                  %v1725 = vld [vmem:[%s1717 + $0xc] sm:%s1708]
                  %1726 = vst [vmem:[%s1718 + $0xc] sm:%s1708] %v1725
                  %v1727 = vld [vmem:[%s1717 + $0x10] sm:%s1708]
                  %1728 = vst [vmem:[%s1718 + $0x10] sm:%s1708] %v1727
                  %v1729 = vld [vmem:[%s1717 + $0x14] sm:%s1708]
                  %1730 = vst [vmem:[%s1718 + $0x14] sm:%s1708] %v1729
                  %v1731 = vld [vmem:[%s1717 + $0x18] sm:%s1708]
                  %1732 = vst [vmem:[%s1718 + $0x18] sm:%s1708] %v1731
                  %v1733 = vld [vmem:[%s1717 + $0x1c] sm:%s1708]
                  %1734 = vst [vmem:[%s1718 + $0x1c] sm:%s1708] %v1733
                  %v1735 = vld [vmem:[%s1717 + $0x20] sm:%s1708]
                  %1736 = vst [vmem:[%s1718 + $0x20] sm:%s1708] %v1735
                  %v1737 = vld [vmem:[%s1717 + $0x24] sm:%s1708]
                  %1738 = vst [vmem:[%s1718 + $0x24] sm:%s1708] %v1737
                  %v1739 = vld [vmem:[%s1717 + $0x28] sm:%s1708]
                  %1740 = vst [vmem:[%s1718 + $0x28] sm:%s1708] %v1739
                  %v1741 = vld [vmem:[%s1717 + $0x2c] sm:%s1708]
                  %1742 = vst [vmem:[%s1718 + $0x2c] sm:%s1708] %v1741
                  %v1743 = vld [vmem:[%s1717 + $0x30] sm:%s1708]
                  %1744 = vst [vmem:[%s1718 + $0x30] sm:%s1708] %v1743
                  %v1745 = vld [vmem:[%s1717 + $0x34] sm:%s1708]
                  %1746 = vst [vmem:[%s1718 + $0x34] sm:%s1708] %v1745
                  %v1747 = vld [vmem:[%s1717 + $0x38] sm:%s1708]
                  %1748 = vst [vmem:[%s1718 + $0x38] sm:%s1708] %v1747
                  %v1749 = vld [vmem:[%s1717 + $0x3c] sm:%s1708]
                  %1750 = vst [vmem:[%s1718 + $0x3c] sm:%s1708] %v1749
                  %v1751 = vld [vmem:[%s1717 + $0x40] sm:%s1708]
                  %1752 = vst [vmem:[%s1718 + $0x40] sm:%s1708] %v1751
                  %v1753 = vld [vmem:[%s1717 + $0x44] sm:%s1708]
                  %1754 = vst [vmem:[%s1718 + $0x44] sm:%s1708] %v1753
                  %v1755 = vld [vmem:[%s1717 + $0x48] sm:%s1708]
                  %1756 = vst [vmem:[%s1718 + $0x48] sm:%s1708] %v1755
                  %v1757 = vld [vmem:[%s1717 + $0x4c] sm:%s1708]
                  %1758 = vst [vmem:[%s1718 + $0x4c] sm:%s1708] %v1757
                  %v1759 = vld [vmem:[%s1717 + $0x50] sm:%s1708]
                  %1760 = vst [vmem:[%s1718 + $0x50] sm:%s1708] %v1759
                  %v1761 = vld [vmem:[%s1717 + $0x54] sm:%s1708]
                  %1762 = vst [vmem:[%s1718 + $0x54] sm:%s1708] %v1761
                  %v1763 = vld [vmem:[%s1717 + $0x58] sm:%s1708]
                  %1764 = vst [vmem:[%s1718 + $0x58] sm:%s1708] %v1763
                  %v1765 = vld [vmem:[%s1717 + $0x5c] sm:%s1708]
                  %1766 = vst [vmem:[%s1718 + $0x5c] sm:%s1708] %v1765
                  %v1767 = vld [vmem:[%s1717 + $0x60] sm:%s1708]
                  %1768 = vst [vmem:[%s1718 + $0x60] sm:%s1708] %v1767
                  %v1769 = vld [vmem:[%s1717 + $0x64] sm:%s1708]
                  %1770 = vst [vmem:[%s1718 + $0x64] sm:%s1708] %v1769
                  %v1771 = vld [vmem:[%s1717 + $0x68] sm:%s1708]
                  %1772 = vst [vmem:[%s1718 + $0x68] sm:%s1708] %v1771
                  %v1773 = vld [vmem:[%s1717 + $0x6c] sm:%s1708]
                  %1774 = vst [vmem:[%s1718 + $0x6c] sm:%s1708] %v1773
                  %v1775 = vld [vmem:[%s1717 + $0x70] sm:%s1708]
                  %1776 = vst [vmem:[%s1718 + $0x70] sm:%s1708] %v1775
                  %v1777 = vld [vmem:[%s1717 + $0x74] sm:%s1708]
                  %1778 = vst [vmem:[%s1718 + $0x74] sm:%s1708] %v1777
                  %v1779 = vld [vmem:[%s1717 + $0x78] sm:%s1708]
                  %1780 = vst [vmem:[%s1718 + $0x78] sm:%s1708] %v1779
                  %v1781 = vld [vmem:[%s1717 + $0x7c] sm:%s1708]
                  %1782 = vst [vmem:[%s1718 + $0x7c] sm:%s1708] %v1781
                  %s1783 = sadd.s32 1, %s1716
                  %p1784 = scmp.ge.s32.totalorder %s1783, %s1709
                  %s1785 = scalar_select %p1784, 0, %s1783
                  %s1786 = smul.u32 %s1785, 128
                  %s1787 = smul.u32 %s1785, 128
                  %s1788 = scalar_lea.vmem %s1578, %s1786 [#allocation2]
                  %s1789 = scalar_lea.vmem %s1589, %s1787
                $region79: #{_lambda_.11} parent=73 // loop_footer
                  %s1713 = sadd.s32 %s1711, 1
                $region80: #{_lambda_.11} parent=73 // loop_footer_branch
                  %1710 = sbr.rel target = $region76
                $region81: #{_lambda_.11} parent=73 // loop_exit
                  _
                %s1790 = sshrl.u32 %s1585, 5
                %s1791 = sand.u32 %s1585, 31
                %s1792 = smul.u32 %s1790, 32
                %s1793 = smul.u32 4, %s1792
                %s1794 = scalar_lea.vmem %s1578, %s1793 [#allocation2]
                %s1795 = smul.u32 4, %s1792
                %s1796 = scalar_lea.vmem %s1589, %s1795
                // While loop
                $region82: #{_lambda_.11} parent=73 // loop_pre_header
                  _
                $region83: #{_lambda_.11} parent=73 // loop_header
                  %s1798 = sphi 0, %s1800
                  %p1799 = scmp.ge.s32.totalorder %s1798, %s1791
                  %s1803 = sphi 0, %s1810
                  %s1804 = sphi %s1794, %s1813
                  %s1805 = sphi %s1796, %s1814
                $region84: #{_lambda_.11} parent=73 // loop_header_branch
                  %1802 = sbr.rel (%p1799) target = $region88
                $region85: #{_lambda_.11} parent=73 // loop_body
                  %v1806 = vld [vmem:[%s1804] sm:%s1708]
                  %1807 = vst [vmem:[%s1805] sm:%s1708] %v1806
                  %s1808 = sadd.s32 1, %s1803
                  %p1809 = scmp.ge.s32.totalorder %s1808, %s1791
                  %s1810 = scalar_select %p1809, 0, %s1808
                  %s1811 = smul.u32 %s1810, 4
                  %s1812 = smul.u32 %s1810, 4
                  %s1813 = scalar_lea.vmem %s1794, %s1811 [#allocation2]
                  %s1814 = scalar_lea.vmem %s1796, %s1812
                $region86: #{_lambda_.11} parent=73 // loop_footer
                  %s1800 = sadd.s32 %s1798, 1
                $region87: #{_lambda_.11} parent=73 // loop_footer_branch
                  %1797 = sbr.rel target = $region83
                $region88: #{_lambda_.11} parent=73 // loop_exit
                  _
              $region74: #{_lambda_.11} parent=51 // pred_fallthru
                _
            $region52: #{_lambda_.11} parent=47 // pred_fallthru
              _
            // Predicated region
            $region53: #{_lambda_.11} parent=47 // pred_check
              _
            $region54: #{_lambda_.11} parent=47 // pred_check_branch
              %1596 = sbr.rel (0) target = $region56
            $region55: #{_lambda_.11} parent=47 // pred_region
              %s1598 = ssub.s32 16, 1
              %s1599 = sshrl.u32 %s1585, 5
              // While loop
              $region57: #{_lambda_.11} parent=55 // loop_pre_header
                _
              $region58: #{_lambda_.11} parent=55 // loop_header
                %s1601 = sphi 0, %s1603
                %p1602 = scmp.ge.s32.totalorder %s1601, %s1599
                %s1606 = sphi 0, %s1675
                %s1607 = sphi %s1578, %s1678
                %s1608 = sphi %s1589, %s1679
              $region59: #{_lambda_.11} parent=55 // loop_header_branch
                %1605 = sbr.rel (%p1602) target = $region63
              $region60: #{_lambda_.11} parent=55 // loop_body
                %v1609 = vld [vmem:[%s1607] sm:%s1598]
                %1610 = vst [vmem:[%s1608] sm:%s1598] %v1609
                %v1611 = vld [vmem:[%s1607 + $0x4] sm:%s1598]
                %1612 = vst [vmem:[%s1608 + $0x4] sm:%s1598] %v1611
                %v1613 = vld [vmem:[%s1607 + $0x8] sm:%s1598]
                %1614 = vst [vmem:[%s1608 + $0x8] sm:%s1598] %v1613
                %v1615 = vld [vmem:[%s1607 + $0xc] sm:%s1598]
                %1616 = vst [vmem:[%s1608 + $0xc] sm:%s1598] %v1615
                %v1617 = vld [vmem:[%s1607 + $0x10] sm:%s1598]
                %1618 = vst [vmem:[%s1608 + $0x10] sm:%s1598] %v1617
                %v1619 = vld [vmem:[%s1607 + $0x14] sm:%s1598]
                %1620 = vst [vmem:[%s1608 + $0x14] sm:%s1598] %v1619
                %v1621 = vld [vmem:[%s1607 + $0x18] sm:%s1598]
                %1622 = vst [vmem:[%s1608 + $0x18] sm:%s1598] %v1621
                %v1623 = vld [vmem:[%s1607 + $0x1c] sm:%s1598]
                %1624 = vst [vmem:[%s1608 + $0x1c] sm:%s1598] %v1623
                %v1625 = vld [vmem:[%s1607 + $0x20] sm:%s1598]
                %1626 = vst [vmem:[%s1608 + $0x20] sm:%s1598] %v1625
                %v1627 = vld [vmem:[%s1607 + $0x24] sm:%s1598]
                %1628 = vst [vmem:[%s1608 + $0x24] sm:%s1598] %v1627
                %v1629 = vld [vmem:[%s1607 + $0x28] sm:%s1598]
                %1630 = vst [vmem:[%s1608 + $0x28] sm:%s1598] %v1629
                %v1631 = vld [vmem:[%s1607 + $0x2c] sm:%s1598]
                %1632 = vst [vmem:[%s1608 + $0x2c] sm:%s1598] %v1631
                %v1633 = vld [vmem:[%s1607 + $0x30] sm:%s1598]
                %1634 = vst [vmem:[%s1608 + $0x30] sm:%s1598] %v1633
                %v1635 = vld [vmem:[%s1607 + $0x34] sm:%s1598]
                %1636 = vst [vmem:[%s1608 + $0x34] sm:%s1598] %v1635
                %v1637 = vld [vmem:[%s1607 + $0x38] sm:%s1598]
                %1638 = vst [vmem:[%s1608 + $0x38] sm:%s1598] %v1637
                %v1639 = vld [vmem:[%s1607 + $0x3c] sm:%s1598]
                %1640 = vst [vmem:[%s1608 + $0x3c] sm:%s1598] %v1639
                %v1641 = vld [vmem:[%s1607 + $0x40] sm:%s1598]
                %1642 = vst [vmem:[%s1608 + $0x40] sm:%s1598] %v1641
                %v1643 = vld [vmem:[%s1607 + $0x44] sm:%s1598]
                %1644 = vst [vmem:[%s1608 + $0x44] sm:%s1598] %v1643
                %v1645 = vld [vmem:[%s1607 + $0x48] sm:%s1598]
                %1646 = vst [vmem:[%s1608 + $0x48] sm:%s1598] %v1645
                %v1647 = vld [vmem:[%s1607 + $0x4c] sm:%s1598]
                %1648 = vst [vmem:[%s1608 + $0x4c] sm:%s1598] %v1647
                %v1649 = vld [vmem:[%s1607 + $0x50] sm:%s1598]
                %1650 = vst [vmem:[%s1608 + $0x50] sm:%s1598] %v1649
                %v1651 = vld [vmem:[%s1607 + $0x54] sm:%s1598]
                %1652 = vst [vmem:[%s1608 + $0x54] sm:%s1598] %v1651
                %v1653 = vld [vmem:[%s1607 + $0x58] sm:%s1598]
                %1654 = vst [vmem:[%s1608 + $0x58] sm:%s1598] %v1653
                %v1655 = vld [vmem:[%s1607 + $0x5c] sm:%s1598]
                %1656 = vst [vmem:[%s1608 + $0x5c] sm:%s1598] %v1655
                %v1657 = vld [vmem:[%s1607 + $0x60] sm:%s1598]
                %1658 = vst [vmem:[%s1608 + $0x60] sm:%s1598] %v1657
                %v1659 = vld [vmem:[%s1607 + $0x64] sm:%s1598]
                %1660 = vst [vmem:[%s1608 + $0x64] sm:%s1598] %v1659
                %v1661 = vld [vmem:[%s1607 + $0x68] sm:%s1598]
                %1662 = vst [vmem:[%s1608 + $0x68] sm:%s1598] %v1661
                %v1663 = vld [vmem:[%s1607 + $0x6c] sm:%s1598]
                %1664 = vst [vmem:[%s1608 + $0x6c] sm:%s1598] %v1663
                %v1665 = vld [vmem:[%s1607 + $0x70] sm:%s1598]
                %1666 = vst [vmem:[%s1608 + $0x70] sm:%s1598] %v1665
                %v1667 = vld [vmem:[%s1607 + $0x74] sm:%s1598]
                %1668 = vst [vmem:[%s1608 + $0x74] sm:%s1598] %v1667
                %v1669 = vld [vmem:[%s1607 + $0x78] sm:%s1598]
                %1670 = vst [vmem:[%s1608 + $0x78] sm:%s1598] %v1669
                %v1671 = vld [vmem:[%s1607 + $0x7c] sm:%s1598]
                %1672 = vst [vmem:[%s1608 + $0x7c] sm:%s1598] %v1671
                %s1673 = sadd.s32 1, %s1606
                %p1674 = scmp.ge.s32.totalorder %s1673, %s1599
                %s1675 = scalar_select %p1674, 0, %s1673
                %s1676 = smul.u32 %s1675, 128
                %s1677 = smul.u32 %s1675, 128
                %s1678 = scalar_lea.vmem %s1578, %s1676 [#allocation2]
                %s1679 = scalar_lea.vmem %s1589, %s1677
              $region61: #{_lambda_.11} parent=55 // loop_footer
                %s1603 = sadd.s32 %s1601, 1
              $region62: #{_lambda_.11} parent=55 // loop_footer_branch
                %1600 = sbr.rel target = $region58
              $region63: #{_lambda_.11} parent=55 // loop_exit
                _
              %s1680 = sshrl.u32 %s1585, 5
              %s1681 = sand.u32 %s1585, 31
              %s1682 = smul.u32 %s1680, 32
              %s1683 = smul.u32 4, %s1682
              %s1684 = scalar_lea.vmem %s1578, %s1683 [#allocation2]
              %s1685 = smul.u32 4, %s1682
              %s1686 = scalar_lea.vmem %s1589, %s1685
              // While loop
              $region64: #{_lambda_.11} parent=55 // loop_pre_header
                _
              $region65: #{_lambda_.11} parent=55 // loop_header
                %s1688 = sphi 0, %s1690
                %p1689 = scmp.ge.s32.totalorder %s1688, %s1681
                %s1693 = sphi 0, %s1700
                %s1694 = sphi %s1684, %s1703
                %s1695 = sphi %s1686, %s1704
              $region66: #{_lambda_.11} parent=55 // loop_header_branch
                %1692 = sbr.rel (%p1689) target = $region70
              $region67: #{_lambda_.11} parent=55 // loop_body
                %v1696 = vld [vmem:[%s1694] sm:%s1598]
                %1697 = vst [vmem:[%s1695] sm:%s1598] %v1696
                %s1698 = sadd.s32 1, %s1693
                %p1699 = scmp.ge.s32.totalorder %s1698, %s1681
                %s1700 = scalar_select %p1699, 0, %s1698
                %s1701 = smul.u32 %s1700, 4
                %s1702 = smul.u32 %s1700, 4
                %s1703 = scalar_lea.vmem %s1684, %s1701 [#allocation2]
                %s1704 = scalar_lea.vmem %s1686, %s1702
              $region68: #{_lambda_.11} parent=55 // loop_footer
                %s1690 = sadd.s32 %s1688, 1
              $region69: #{_lambda_.11} parent=55 // loop_footer_branch
                %1687 = sbr.rel target = $region65
              $region70: #{_lambda_.11} parent=55 // loop_exit
                _
            $region56: #{_lambda_.11} parent=47 // pred_fallthru
              _
          $region48: #{_lambda_.11} parent=43 // pred_fallthru
            _
          %1815 = vnop
        $region44: #{_lambda_.11} parent=39 // pred_fallthru
          _
      $region40: #{_lambda_.11} parent=5 // pred_fallthru
        _
      %p1816 = scmp.le.s32.totalorder 2, %s11
      // Predicated region
      $region89: #{_lambda_.11} parent=5 // pred_check
        %p1817 = pneg %p1816
      $region90: #{_lambda_.11} parent=5 // pred_check_branch
        %1819 = sbr.rel (%p1817) target = $region92
      $region91: #{_lambda_.11} parent=5 // pred_region
        %s1820 = ssub.s32 %s11, 2
        // Predicated region
        $region93: #{_lambda_.11} parent=91 // pred_check
          %p1821 = pneg %p150
        $region94: #{_lambda_.11} parent=91 // pred_check_branch
          %1823 = sbr.rel (%p1821) target = $region96
        $region95: #{_lambda_.11} parent=91 // pred_region
          %s1824 = sand.u32 %s135, 1
          %s1825 = sand.u32 %s135, 1
          %s1826 = smul.addr %s1825, 256
          %s1827 = scalar_lea.vmem [#allocation2], %s1826
        $region96: #{_lambda_.11} parent=91 // pred_fallthru
          _
      $region92: #{_lambda_.11} parent=5 // pred_fallthru
        _
    $region6: #{_lambda_.11} parent=1 // loop_footer
      %s15 = sadd.s32 1, %s11
    $region7: #{_lambda_.11} parent=1 // loop_footer_branch
      %10 = sbr.rel target = $region3
    $region8: #{_lambda_.11} parent=1 // loop_exit
      _

// kernel: _lambda_.12
$region0: #{_lambda_.12}
  #allocation0 [shape = 'u32[]', space=smem, size = 0x4, offset = 0x4, fixed_abs, tag = 'smem constant byte address 0x4 - core index']
  #allocation1 [shape = 'u32[72,128]{1,0:T(1,128)}', space=vmem, size = 0x9000, scoped, tag = 'internal scratch']
  %s0 = inlined_call_operand.vmem [shape: bf16[1922,288], index: 0, kind: input, shape index: {}]
  %s1 = inlined_call_operand.vmem [shape: bf16[288,64], index: 1, kind: input, shape index: {}]
  %s2 = inlined_call_operand.vmem [shape: f32[1,64], index: 2, kind: input, shape index: {}]
  %s3 = inlined_call_operand.vmem [shape: f32[1,64], index: 3, kind: input, shape index: {}]
  %s4 = inlined_call_operand.vmem [shape: f32[1,64], index: 4, kind: input, shape index: {}]
  %s5 = inlined_call_operand.vmem [shape: bf16[1922,64], index: 5, kind: output, shape index: {}]
  %s6 = sld [smem:[#allocation0]]
  $region97: #{_lambda_.12} parent=0
    _
  %s8 = ssub.s32 1, %s6
  %s9 = scalar_select 0, %s8, %s6
  $region1: #{_lambda_.12} parent=0
    #allocation2 [shape = 'u8[262144]{0}', space=vmem, size = 0x40000, scoped, tag = 'output window, operand 0']
    loop: start=0, step=1, limit=6
    $region2: #{_lambda_.12} parent=1 // loop_pre_header
      _
    $region3: #{_lambda_.12} parent=1 // loop_header
      %s11 = sphi 0, %s15
      %p12 = scmp.ge.s32.totalorder %s11, 6
      %s21 = sphi 0, %s23
      %s24 = sphi 0, %s21
      %s25 = sphi 0, %s24
      %s41 = sphi 0, %s25
      %s45 = sphi 0, %s45
      %s47 = sphi 0, %s45
      %s48 = sphi 0, %s47
      %s62 = sphi 0, %s48
      %s66 = sphi 0, %s66
      %s68 = sphi 0, %s66
      %s69 = sphi 0, %s68
      %s83 = sphi 0, %s69
      %s87 = sphi 0, %s87
      %s89 = sphi 0, %s87
      %s90 = sphi 0, %s89
      %s104 = sphi 0, %s90
      %s108 = sphi 0, %s108
      %s110 = sphi 0, %s108
      %s111 = sphi 0, %s110
      %s125 = sphi 0, %s111
      %s131 = sphi 0, %s133
      %s134 = sphi 0, %s131
      %s135 = sphi 0, %s134
      %s151 = sphi 0, %s135
    $region4: #{_lambda_.12} parent=1 // loop_header_branch
      %14 = sbr.rel (%p12) target = $region8
    $region5: #{_lambda_.12} parent=1 // loop_body
      %s16 = ssub.s32 %s11, 1
      %s17 = ssub.s32 %s11, 2
      %s18 = sadd.s32 %s11, 1
      %s19 = ssub.s32 %s11, %s18
      %p20 = scmp.eq.s32.totalorder %s19, 0
      %s22 = sadd.s32 %s21, 1
      %s23 = scalar_select %p20, %s21, %s22
      %p26 = pneg %p20
      %p27 = scmp.eq.s32.totalorder %s11, 3
      %p28 = por %p26, %p27
      %p29 = scmp.ne.s32.totalorder %s21, %s24
      %p30 = scmp.eq.s32.totalorder %s11, 0
      %p31 = por %p29, %p30
      %p32 = scmp.ne.s32.totalorder %s21, %s24
      %p33 = scmp.eq.s32.totalorder %s16, 3
      %p34 = por %p32, %p33
      %p35 = scmp.ne.s32.totalorder %s24, %s25
      %p36 = scmp.eq.s32.totalorder %s16, 0
      %p37 = por %p35, %p36
      %p38 = scmp.ne.s32.totalorder %s24, %s25
      %p39 = scmp.eq.s32.totalorder %s17, 3
      %p40 = por %p38, %p39
      %p42 = scmp.ne.s32.totalorder %s25, %s41
      %p43 = scmp.eq.s32.totalorder %s17, 0
      %p44 = por %p42, %p43
      %s46 = sadd.s32 %s45, 1
      %p49 = scmp.eq.s32.totalorder %s11, 3
      %p50 = scmp.ne.s32.totalorder %s45, %s47
      %p51 = scmp.eq.s32.totalorder %s11, 0
      %p52 = por %p50, %p51
      %p53 = scmp.ne.s32.totalorder %s45, %s47
      %p54 = scmp.eq.s32.totalorder %s16, 3
      %p55 = por %p53, %p54
      %p56 = scmp.ne.s32.totalorder %s47, %s48
      %p57 = scmp.eq.s32.totalorder %s16, 0
      %p58 = por %p56, %p57
      %p59 = scmp.ne.s32.totalorder %s47, %s48
      %p60 = scmp.eq.s32.totalorder %s17, 3
      %p61 = por %p59, %p60
      %p63 = scmp.ne.s32.totalorder %s48, %s62
      %p64 = scmp.eq.s32.totalorder %s17, 0
      %p65 = por %p63, %p64
      %s67 = sadd.s32 %s66, 1
      %p70 = scmp.eq.s32.totalorder %s11, 3
      %p71 = scmp.ne.s32.totalorder %s66, %s68
      %p72 = scmp.eq.s32.totalorder %s11, 0
      %p73 = por %p71, %p72
      %p74 = scmp.ne.s32.totalorder %s66, %s68
      %p75 = scmp.eq.s32.totalorder %s16, 3
      %p76 = por %p74, %p75
      %p77 = scmp.ne.s32.totalorder %s68, %s69
      %p78 = scmp.eq.s32.totalorder %s16, 0
      %p79 = por %p77, %p78
      %p80 = scmp.ne.s32.totalorder %s68, %s69
      %p81 = scmp.eq.s32.totalorder %s17, 3
      %p82 = por %p80, %p81
      %p84 = scmp.ne.s32.totalorder %s69, %s83
      %p85 = scmp.eq.s32.totalorder %s17, 0
      %p86 = por %p84, %p85
      %s88 = sadd.s32 %s87, 1
      %p91 = scmp.eq.s32.totalorder %s11, 3
      %p92 = scmp.ne.s32.totalorder %s87, %s89
      %p93 = scmp.eq.s32.totalorder %s11, 0
      %p94 = por %p92, %p93
      %p95 = scmp.ne.s32.totalorder %s87, %s89
      %p96 = scmp.eq.s32.totalorder %s16, 3
      %p97 = por %p95, %p96
      %p98 = scmp.ne.s32.totalorder %s89, %s90
      %p99 = scmp.eq.s32.totalorder %s16, 0
      %p100 = por %p98, %p99
      %p101 = scmp.ne.s32.totalorder %s89, %s90
      %p102 = scmp.eq.s32.totalorder %s17, 3
      %p103 = por %p101, %p102
      %p105 = scmp.ne.s32.totalorder %s90, %s104
      %p106 = scmp.eq.s32.totalorder %s17, 0
      %p107 = por %p105, %p106
      %s109 = sadd.s32 %s108, 1
      %p112 = scmp.eq.s32.totalorder %s11, 3
      %p113 = scmp.ne.s32.totalorder %s108, %s110
      %p114 = scmp.eq.s32.totalorder %s11, 0
      %p115 = por %p113, %p114
      %p116 = scmp.ne.s32.totalorder %s108, %s110
      %p117 = scmp.eq.s32.totalorder %s16, 3
      %p118 = por %p116, %p117
      %p119 = scmp.ne.s32.totalorder %s110, %s111
      %p120 = scmp.eq.s32.totalorder %s16, 0
      %p121 = por %p119, %p120
      %p122 = scmp.ne.s32.totalorder %s110, %s111
      %p123 = scmp.eq.s32.totalorder %s17, 3
      %p124 = por %p122, %p123
      %p126 = scmp.ne.s32.totalorder %s111, %s125
      %p127 = scmp.eq.s32.totalorder %s17, 0
      %p128 = por %p126, %p127
      %s129 = ssub.s32 %s11, %s18
      %p130 = scmp.eq.s32.totalorder %s129, 0
      %s132 = sadd.s32 %s131, 1
      %s133 = scalar_select %p130, %s131, %s132
      %p136 = pneg %p130
      %p137 = scmp.eq.s32.totalorder %s11, 3
      %p138 = por %p136, %p137
      %p139 = scmp.ne.s32.totalorder %s131, %s134
      %p140 = scmp.eq.s32.totalorder %s11, 0
      %p141 = por %p139, %p140
      %p142 = scmp.ne.s32.totalorder %s131, %s134
      %p143 = scmp.eq.s32.totalorder %s16, 3
      %p144 = por %p142, %p143
      %p145 = scmp.ne.s32.totalorder %s134, %s135
      %p146 = scmp.eq.s32.totalorder %s16, 0
      %p147 = por %p145, %p146
      %p148 = scmp.ne.s32.totalorder %s134, %s135
      %p149 = scmp.eq.s32.totalorder %s17, 3
      %p150 = por %p148, %p149
      %p152 = scmp.ne.s32.totalorder %s135, %s151
      %p153 = scmp.eq.s32.totalorder %s17, 0
      %p154 = por %p152, %p153
      %p155 = scmp.le.s32.totalorder 1, %s11
      %p156 = scmp.lt.s32.totalorder %s11, 5
      %p157 = pnand %p155, %p156
      %p158 = pneg %p157
      // Predicated region
      $region9: #{_lambda_.12} parent=5 // pred_check
        _
      $region10: #{_lambda_.12} parent=5 // pred_check_branch
        %160 = sbr.rel (%p157) target = $region12
      $region11: #{_lambda_.12} parent=5 // pred_region
        %s161 = ssub.s32 %s11, 1
        // Predicated region
        $region13: #{_lambda_.12} parent=11 // pred_check
          %p162 = pneg %p58
        $region14: #{_lambda_.12} parent=11 // pred_check_branch
          %164 = sbr.rel (%p162) target = $region16
        $region15: #{_lambda_.12} parent=11 // pred_region
          _
        $region16: #{_lambda_.12} parent=11 // pred_fallthru
          _
        // Predicated region
        $region17: #{_lambda_.12} parent=11 // pred_check
          %p165 = pneg %p79
        $region18: #{_lambda_.12} parent=11 // pred_check_branch
          %167 = sbr.rel (%p165) target = $region20
        $region19: #{_lambda_.12} parent=11 // pred_region
          _
        $region20: #{_lambda_.12} parent=11 // pred_fallthru
          _
        // Predicated region
        $region21: #{_lambda_.12} parent=11 // pred_check
          %p168 = pneg %p100
        $region22: #{_lambda_.12} parent=11 // pred_check_branch
          %170 = sbr.rel (%p168) target = $region24
        $region23: #{_lambda_.12} parent=11 // pred_region
          _
        $region24: #{_lambda_.12} parent=11 // pred_fallthru
          _
        // Predicated region
        $region25: #{_lambda_.12} parent=11 // pred_check
          %p171 = pneg %p121
        $region26: #{_lambda_.12} parent=11 // pred_check_branch
          %173 = sbr.rel (%p171) target = $region28
        $region27: #{_lambda_.12} parent=11 // pred_region
          _
        $region28: #{_lambda_.12} parent=11 // pred_fallthru
          _
      $region12: #{_lambda_.12} parent=5 // pred_fallthru
        _
      %p174 = scmp.lt.s32.totalorder %s11, 4
      // Predicated region
      $region29: #{_lambda_.12} parent=5 // pred_check
        %p175 = pneg %p174
      $region30: #{_lambda_.12} parent=5 // pred_check_branch
        %177 = sbr.rel (%p175) target = $region32
      $region31: #{_lambda_.12} parent=5 // pred_region
        // Predicated region
        $region33: #{_lambda_.12} parent=31 // pred_check
          %p178 = pneg %p31
        $region34: #{_lambda_.12} parent=31 // pred_check_branch
          %180 = sbr.rel (%p178) target = $region36
        $region35: #{_lambda_.12} parent=31 // pred_region
          %s181 = smul.u32 64, %s11
          %s182 = ssub.s32 241, %s181
          %p183 = scmp.lt.s32.totalorder %s182, 64
          %s184 = scalar_select %p183, %s182, 64
          %s185 = smul.u32 4, %s184
          %s186 = smul.u32 %s185, 3
          %p187 = scmp.lt.s32.totalorder %s181, 240
          %s188 = scalar_select %p187, %s181, 240
          %s189 = smul.addr %s188, 3
          %s190 = smul.addr %s189, 4
          %s191 = scalar_lea.vmem %s0, %s190
          %s192 = smul.u32 64, %s11
          %s193 = ssub.s32 241, %s192
          %p194 = scmp.lt.s32.totalorder %s193, 64
          %s195 = scalar_select %p194, %s193, 64
          %s196 = smul.u32 4, %s195
          %s197 = smul.u32 %s196, 3
        $region36: #{_lambda_.12} parent=31 // pred_fallthru
          _
      $region32: #{_lambda_.12} parent=5 // pred_fallthru
        _
      %p198 = scmp.le.s32.totalorder 1, %s11
      %p199 = scmp.lt.s32.totalorder %s11, 5
      %p200 = pnand %p198, %p199
      %p201 = pneg %p200
      // Predicated region
      $region37: #{_lambda_.12} parent=5 // pred_check
        _
      $region38: #{_lambda_.12} parent=5 // pred_check_branch
        %203 = sbr.rel (%p200) target = $region40
      $region39: #{_lambda_.12} parent=5 // pred_region
        %s204 = ssub.s32 %s11, 1
        %s205 = smul.u32 64, %s16
        %s206 = ssub.s32 241, %s205
        %p207 = scmp.lt.s32.totalorder %s206, 64
        %s208 = scalar_select %p207, %s206, 64
        %s209 = smul.u32 4, %s208
        %s210 = smul.u32 %s209, 3
        %p211 = scmp.lt.s32.totalorder %s205, 240
        %s212 = scalar_select %p211, %s205, 240
        %s213 = smul.addr %s212, 3
        %s214 = smul.addr %s213, 4
        %s215 = scalar_lea.vmem %s0, %s214
        %p216 = pneg %p37
        %p217 = pneg %p34
        %p218 = pneg %p58
        %p219 = pneg %p55
        %p220 = pneg %p79
        %p221 = pneg %p76
        %p222 = pneg %p100
        %p223 = pneg %p97
        %p224 = pneg %p121
        %p225 = pneg %p118
        %p226 = pneg %p147
        %p227 = pneg %p144
        %s228 = sand.u32 %s134, 1
        %s229 = sand.u32 %s134, 1
        %s230 = smul.addr %s229, 256
        %s231 = scalar_lea.vmem [#allocation2], %s230
        %s232 = smul.u32 64, %s16
        %s233 = ssub.s32 241, %s232
        %p234 = scmp.lt.s32.totalorder %s233, 64
        %s235 = scalar_select %p234, %s233, 64
        %s236 = smul.u32 4, %s235
        %s237 = smul.u32 %s236, 3
        %p238 = scmp.lt.s32.totalorder %s232, 240
        %s239 = scalar_select %p238, %s232, 240
        %s240 = smul.addr %s239, 3
        %s241 = smul.addr %s240, 4
        %s242 = scalar_lea.vmem %s0, %s241
        %s243 = smul.u32 64, %s16
        %s244 = ssub.s32 241, %s243
        %p245 = scmp.lt.s32.totalorder %s244, 64
        %s246 = scalar_select %p245, %s244, 64
        %s247 = smul.u32 4, %s246
        %s248 = smul.u32 %s247, 3
        %s249 = smul.u32 64, %s16
        %s250 = ssub.s32 241, %s249
        %p251 = scmp.lt.s32.totalorder %s250, 64
        %s252 = scalar_select %p251, %s250, 64
        %s253 = smul.u32 4, %s252
        %v255 = vld [vmem:[%s242] sm:$0xff]
        %v256 = vld [vmem:[%s242 + $0x8] sm:$0xf]
        %v257 = vld [vmem:[%s242 + $0xc] sm:$0xff]
        %v258 = vld [vmem:[%s242 + $0x14] sm:$0xf]
        %v259 = vld [vmem:[%s242 + $0x18] sm:$0xff]
        %v260 = vld [vmem:[%s242 + $0x20] sm:$0xf]
        %v261 = vld [vmem:[%s242 + $0x24] sm:$0xff]
        %v262 = vld [vmem:[%s242 + $0x2c] sm:$0xf]
        %v263 = vld [vmem:[%s242 + $0x30] sm:$0xff]
        %v264 = vld [vmem:[%s242 + $0x38] sm:$0xf]
        %v265 = vld [vmem:[%s242 + $0x3c] sm:$0xff]
        %v266 = vld [vmem:[%s242 + $0x44] sm:$0xf]
        %v267 = vld [vmem:[%s242 + $0x48] sm:$0xff]
        %v268 = vld [vmem:[%s242 + $0x50] sm:$0xf]
        %v269 = vld [vmem:[%s242 + $0x54] sm:$0xff]
        %v270 = vld [vmem:[%s242 + $0x5c] sm:$0xf]
        %v271 = vld [vmem:[%s242 + $0x60] sm:$0xff]
        %v272 = vld [vmem:[%s242 + $0x68] sm:$0xf]
        %v273 = vld [vmem:[%s242 + $0x6c] sm:$0xff]
        %v274 = vld [vmem:[%s242 + $0x74] sm:$0xf]
        %v275 = vld [vmem:[%s242 + $0x78] sm:$0xff]
        %v276 = vld [vmem:[%s242 + $0x80] sm:$0xf]
        %v277 = vld [vmem:[%s242 + $0x84] sm:$0xff]
        %v278 = vld [vmem:[%s242 + $0x8c] sm:$0xf]
        %v279 = vld [vmem:[%s242 + $0x90] sm:$0xff]
        %v280 = vld [vmem:[%s242 + $0x98] sm:$0xf]
        %v281 = vld [vmem:[%s242 + $0x9c] sm:$0xff]
        %v282 = vld [vmem:[%s242 + $0xa4] sm:$0xf]
        %v283 = vld [vmem:[%s242 + $0xa8] sm:$0xff]
        %v284 = vld [vmem:[%s242 + $0xb0] sm:$0xf]
        %v285 = vld [vmem:[%s242 + $0xb4] sm:$0xff]
        %v286 = vld [vmem:[%s242 + $0xbc] sm:$0xf]
        %v287 = vld [vmem:[%s242 + $0xc0] sm:$0xff]
        %v288 = vld [vmem:[%s242 + $0xc8] sm:$0xf]
        %v289 = vld [vmem:[%s242 + $0xcc] sm:$0xff]
        %v290 = vld [vmem:[%s242 + $0xd4] sm:$0xf]
        %v291 = vld [vmem:[%s242 + $0xd8] sm:$0xff]
        %v292 = vld [vmem:[%s242 + $0xe0] sm:$0xf]
        %v293 = vld [vmem:[%s242 + $0xe4] sm:$0xff]
        %v294 = vld [vmem:[%s242 + $0xec] sm:$0xf]
        %v295 = vld [vmem:[%s242 + $0xf0] sm:$0xff]
        %v296 = vld [vmem:[%s242 + $0xf8] sm:$0xf]
        %v297 = vld [vmem:[%s242 + $0xfc] sm:$0xff]
        %v298 = vld [vmem:[%s242 + $0x104] sm:$0xf]
        %v299 = vld [vmem:[%s242 + $0x108] sm:$0xff]
        %v300 = vld [vmem:[%s242 + $0x110] sm:$0xf]
        %v301 = vld [vmem:[%s242 + $0x114] sm:$0xff]
        %v302 = vld [vmem:[%s242 + $0x11c] sm:$0xf]
        %v303 = vld [vmem:[%s242 + $0x120] sm:$0xff]
        %v304 = vld [vmem:[%s242 + $0x128] sm:$0xf]
        %v305 = vld [vmem:[%s242 + $0x12c] sm:$0xff]
        %v306 = vld [vmem:[%s242 + $0x134] sm:$0xf]
        %v307 = vld [vmem:[%s242 + $0x138] sm:$0xff]
        %v308 = vld [vmem:[%s242 + $0x140] sm:$0xf]
        %v309 = vld [vmem:[%s242 + $0x144] sm:$0xff]
        %v310 = vld [vmem:[%s242 + $0x14c] sm:$0xf]
        %v311 = vld [vmem:[%s242 + $0x150] sm:$0xff]
        %v312 = vld [vmem:[%s242 + $0x158] sm:$0xf]
        %v313 = vld [vmem:[%s242 + $0x15c] sm:$0xff]
        %v314 = vld [vmem:[%s242 + $0x164] sm:$0xf]
        %v315 = vld [vmem:[%s242 + $0x168] sm:$0xff]
        %v316 = vld [vmem:[%s242 + $0x170] sm:$0xf]
        %v317 = vld [vmem:[%s242 + $0x174] sm:$0xff]
        %v318 = vld [vmem:[%s242 + $0x17c] sm:$0xf]
        %v319 = vld [vmem:[%s242 + $0x180] sm:$0xff]
        %v320 = vld [vmem:[%s242 + $0x188] sm:$0xf]
        %v321 = vld [vmem:[%s242 + $0x18c] sm:$0xff]
        %v322 = vld [vmem:[%s242 + $0x194] sm:$0xf]
        %v323 = vld [vmem:[%s242 + $0x198] sm:$0xff]
        %v324 = vld [vmem:[%s242 + $0x1a0] sm:$0xf]
        %v325 = vld [vmem:[%s242 + $0x1a4] sm:$0xff]
        %v326 = vld [vmem:[%s242 + $0x1ac] sm:$0xf]
        %v327 = vld [vmem:[%s242 + $0x1b0] sm:$0xff]
        %v328 = vld [vmem:[%s242 + $0x1b8] sm:$0xf]
        %v329 = vld [vmem:[%s242 + $0x1bc] sm:$0xff]
        %v330 = vld [vmem:[%s242 + $0x1c4] sm:$0xf]
        %v331 = vld [vmem:[%s242 + $0x1c8] sm:$0xff]
        %v332 = vld [vmem:[%s242 + $0x1d0] sm:$0xf]
        %v333 = vld [vmem:[%s242 + $0x1d4] sm:$0xff]
        %v334 = vld [vmem:[%s242 + $0x1dc] sm:$0xf]
        %v335 = vld [vmem:[%s242 + $0x1e0] sm:$0xff]
        %v336 = vld [vmem:[%s242 + $0x1e8] sm:$0xf]
        %v337 = vld [vmem:[%s242 + $0x1ec] sm:$0xff]
        %v338 = vld [vmem:[%s242 + $0x1f4] sm:$0xf]
        %v339 = vld [vmem:[%s242 + $0x1f8] sm:$0xff]
        %v340 = vld [vmem:[%s242 + $0x200] sm:$0xf]
        %v341 = vld [vmem:[%s242 + $0x204] sm:$0xff]
        %v342 = vld [vmem:[%s242 + $0x20c] sm:$0xf]
        %v343 = vld [vmem:[%s242 + $0x210] sm:$0xff]
        %v344 = vld [vmem:[%s242 + $0x218] sm:$0xf]
        %v345 = vld [vmem:[%s242 + $0x21c] sm:$0xff]
        %v346 = vld [vmem:[%s242 + $0x224] sm:$0xf]
        %v347 = vld [vmem:[%s242 + $0x228] sm:$0xff]
        %v348 = vld [vmem:[%s242 + $0x230] sm:$0xf]
        %v349 = vld [vmem:[%s242 + $0x234] sm:$0xff]
        %v350 = vld [vmem:[%s242 + $0x23c] sm:$0xf]
        %v351 = vld [vmem:[%s242 + $0x240] sm:$0xff]
        %v352 = vld [vmem:[%s242 + $0x248] sm:$0xf]
        %v353 = vld [vmem:[%s242 + $0x24c] sm:$0xff]
        %v354 = vld [vmem:[%s242 + $0x254] sm:$0xf]
        %v355 = vld [vmem:[%s242 + $0x258] sm:$0xff]
        %v356 = vld [vmem:[%s242 + $0x260] sm:$0xf]
        %v357 = vld [vmem:[%s242 + $0x264] sm:$0xff]
        %v358 = vld [vmem:[%s242 + $0x26c] sm:$0xf]
        %v359 = vld [vmem:[%s242 + $0x270] sm:$0xff]
        %v360 = vld [vmem:[%s242 + $0x278] sm:$0xf]
        %v361 = vld [vmem:[%s242 + $0x27c] sm:$0xff]
        %v362 = vld [vmem:[%s242 + $0x284] sm:$0xf]
        %v363 = vld [vmem:[%s242 + $0x288] sm:$0xff]
        %v364 = vld [vmem:[%s242 + $0x290] sm:$0xf]
        %v365 = vld [vmem:[%s242 + $0x294] sm:$0xff]
        %v366 = vld [vmem:[%s242 + $0x29c] sm:$0xf]
        %v367 = vld [vmem:[%s242 + $0x2a0] sm:$0xff]
        %v368 = vld [vmem:[%s242 + $0x2a8] sm:$0xf]
        %v369 = vld [vmem:[%s242 + $0x2ac] sm:$0xff]
        %v370 = vld [vmem:[%s242 + $0x2b4] sm:$0xf]
        %v371 = vld [vmem:[%s242 + $0x2b8] sm:$0xff]
        %v372 = vld [vmem:[%s242 + $0x2c0] sm:$0xf]
        %v373 = vld [vmem:[%s242 + $0x2c4] sm:$0xff]
        %v374 = vld [vmem:[%s242 + $0x2cc] sm:$0xf]
        %v375 = vld [vmem:[%s242 + $0x2d0] sm:$0xff]
        %v376 = vld [vmem:[%s242 + $0x2d8] sm:$0xf]
        %v377 = vld [vmem:[%s242 + $0x2dc] sm:$0xff]
        %v378 = vld [vmem:[%s242 + $0x2e4] sm:$0xf]
        %v379 = vld [vmem:[%s242 + $0x2e8] sm:$0xff]
        %v380 = vld [vmem:[%s242 + $0x2f0] sm:$0xf]
        %v381 = vld [vmem:[%s242 + $0x2f4] sm:$0xff]
        %v382 = vld [vmem:[%s242 + $0x2fc] sm:$0xf]
        %v383 = vld [vmem:[%s1] sm:$0xf]
        %v384 = vld [vmem:[%s1 + $0x4] sm:$0xf]
        %v385 = vld [vmem:[%s1 + $0x8] sm:$0xf]
        %v386 = vld [vmem:[%s1 + $0xc] sm:$0xf]
        %v387 = vld [vmem:[%s1 + $0x10] sm:$0xf]
        %v388 = vld [vmem:[%s1 + $0x14] sm:$0xf]
        %v389 = vld [vmem:[%s1 + $0x18] sm:$0xf]
        %v390 = vld [vmem:[%s1 + $0x1c] sm:$0xf]
        %v391 = vld [vmem:[%s1 + $0x20] sm:$0xf]
        %v392 = vld [vmem:[%s1 + $0x24] sm:$0xf]
        %v393 = vld [vmem:[%s1 + $0x28] sm:$0xf]
        %v394 = vld [vmem:[%s1 + $0x2c] sm:$0xf]
        %v395 = vld [vmem:[%s1 + $0x30] sm:$0xf]
        %v396 = vld [vmem:[%s1 + $0x34] sm:$0xf]
        %v397 = vld [vmem:[%s1 + $0x38] sm:$0xf]
        %v398 = vld [vmem:[%s1 + $0x3c] sm:$0xf]
        %v399 = vld [vmem:[%s1 + $0x40] sm:$0xf]
        %v400 = vld [vmem:[%s1 + $0x44] sm:$0xf]
        %v401 = vld [vmem:[%s1 + $0x48] sm:$0xf]
        %v402 = vld [vmem:[%s1 + $0x4c] sm:$0xf]
        %v403 = vld [vmem:[%s1 + $0x50] sm:$0xf]
        %v404 = vld [vmem:[%s1 + $0x54] sm:$0xf]
        %v405 = vld [vmem:[%s1 + $0x58] sm:$0xf]
        %v406 = vld [vmem:[%s1 + $0x5c] sm:$0xf]
        %v407 = vld [vmem:[%s1 + $0x60] sm:$0xf]
        %v408 = vld [vmem:[%s1 + $0x64] sm:$0xf]
        %v409 = vld [vmem:[%s1 + $0x68] sm:$0xf]
        %v410 = vld [vmem:[%s1 + $0x6c] sm:$0xf]
        %v411 = vld [vmem:[%s1 + $0x70] sm:$0xf]
        %v412 = vld [vmem:[%s1 + $0x74] sm:$0xf]
        %v413 = vld [vmem:[%s1 + $0x78] sm:$0xf]
        %v414 = vld [vmem:[%s1 + $0x7c] sm:$0xf]
        %v415 = vld [vmem:[%s1 + $0x80] sm:$0xf]
        %v416 = vld [vmem:[%s1 + $0x84] sm:$0xf]
        %v417 = vld [vmem:[%s1 + $0x88] sm:$0xf]
        %v418 = vld [vmem:[%s1 + $0x8c] sm:$0xf]
        %v419 = vld [vmem:[%s2] sm:$0x1]
        %v421 = vperm.slane %v419, 0
        %v551 = vunpack.c.l.b16 %v255
        %v552 = vunpack.c.h.b16 %v255
        %v553 = vunpack.c.l.b16 %v256
        %v554 = vunpack.c.l.b16 %v257
        %v555 = vunpack.c.h.b16 %v257
        %v556 = vunpack.c.l.b16 %v258
        %v557 = vunpack.c.l.b16 %v259
        %v558 = vunpack.c.h.b16 %v259
        %v559 = vunpack.c.l.b16 %v260
        %v560 = vunpack.c.l.b16 %v261
        %v561 = vunpack.c.h.b16 %v261
        %v562 = vunpack.c.l.b16 %v262
        %v563 = vunpack.c.l.b16 %v263
        %v564 = vunpack.c.h.b16 %v263
        %v565 = vunpack.c.l.b16 %v264
        %v566 = vunpack.c.l.b16 %v265
        %v567 = vunpack.c.h.b16 %v265
        %v568 = vunpack.c.l.b16 %v266
        %v569 = vunpack.c.l.b16 %v267
        %v570 = vunpack.c.h.b16 %v267
        %v571 = vunpack.c.l.b16 %v268
        %v572 = vunpack.c.l.b16 %v269
        %v573 = vunpack.c.h.b16 %v269
        %v574 = vunpack.c.l.b16 %v270
        %v575 = vunpack.c.l.b16 %v271
        %v576 = vunpack.c.h.b16 %v271
        %v577 = vunpack.c.l.b16 %v272
        %v578 = vunpack.c.l.b16 %v273
        %v579 = vunpack.c.h.b16 %v273
        %v580 = vunpack.c.l.b16 %v274
        %v581 = vunpack.c.l.b16 %v275
        %v582 = vunpack.c.h.b16 %v275
        %v583 = vunpack.c.l.b16 %v276
        %v584 = vunpack.c.l.b16 %v277
        %v585 = vunpack.c.h.b16 %v277
        %v586 = vunpack.c.l.b16 %v278
        %v587 = vunpack.c.l.b16 %v279
        %v588 = vunpack.c.h.b16 %v279
        %v589 = vunpack.c.l.b16 %v280
        %v590 = vunpack.c.l.b16 %v281
        %v591 = vunpack.c.h.b16 %v281
        %v592 = vunpack.c.l.b16 %v282
        %v593 = vunpack.c.l.b16 %v283
        %v594 = vunpack.c.h.b16 %v283
        %v595 = vunpack.c.l.b16 %v284
        %v596 = vunpack.c.l.b16 %v285
        %v597 = vunpack.c.h.b16 %v285
        %v598 = vunpack.c.l.b16 %v286
        %v599 = vunpack.c.l.b16 %v287
        %v600 = vunpack.c.h.b16 %v287
        %v601 = vunpack.c.l.b16 %v288
        %v602 = vunpack.c.l.b16 %v289
        %v603 = vunpack.c.h.b16 %v289
        %v604 = vunpack.c.l.b16 %v290
        %v605 = vunpack.c.l.b16 %v291
        %v606 = vunpack.c.h.b16 %v291
        %v607 = vunpack.c.l.b16 %v292
        %v608 = vunpack.c.l.b16 %v293
        %v609 = vunpack.c.h.b16 %v293
        %v610 = vunpack.c.l.b16 %v294
        %v611 = vunpack.c.l.b16 %v295
        %v612 = vunpack.c.h.b16 %v295
        %v613 = vunpack.c.l.b16 %v296
        %v614 = vunpack.c.l.b16 %v297
        %v615 = vunpack.c.h.b16 %v297
        %v616 = vunpack.c.l.b16 %v298
        %v617 = vunpack.c.l.b16 %v299
        %v618 = vunpack.c.h.b16 %v299
        %v619 = vunpack.c.l.b16 %v300
        %v620 = vunpack.c.l.b16 %v301
        %v621 = vunpack.c.h.b16 %v301
        %v622 = vunpack.c.l.b16 %v302
        %v623 = vunpack.c.l.b16 %v303
        %v624 = vunpack.c.h.b16 %v303
        %v625 = vunpack.c.l.b16 %v304
        %v626 = vunpack.c.l.b16 %v305
        %v627 = vunpack.c.h.b16 %v305
        %v628 = vunpack.c.l.b16 %v306
        %v629 = vunpack.c.l.b16 %v307
        %v630 = vunpack.c.h.b16 %v307
        %v631 = vunpack.c.l.b16 %v308
        %v632 = vunpack.c.l.b16 %v309
        %v633 = vunpack.c.h.b16 %v309
        %v634 = vunpack.c.l.b16 %v310
        %v635 = vunpack.c.l.b16 %v311
        %v636 = vunpack.c.h.b16 %v311
        %v637 = vunpack.c.l.b16 %v312
        %v638 = vunpack.c.l.b16 %v313
        %v639 = vunpack.c.h.b16 %v313
        %v640 = vunpack.c.l.b16 %v314
        %v641 = vunpack.c.l.b16 %v315
        %v642 = vunpack.c.h.b16 %v315
        %v643 = vunpack.c.l.b16 %v316
        %v644 = vunpack.c.l.b16 %v317
        %v645 = vunpack.c.h.b16 %v317
        %v646 = vunpack.c.l.b16 %v318
        %v647 = vunpack.c.l.b16 %v319
        %v648 = vunpack.c.h.b16 %v319
        %v649 = vunpack.c.l.b16 %v320
        %v650 = vunpack.c.l.b16 %v321
        %v651 = vunpack.c.h.b16 %v321
        %v652 = vunpack.c.l.b16 %v322
        %v653 = vunpack.c.l.b16 %v323
        %v654 = vunpack.c.h.b16 %v323
        %v655 = vunpack.c.l.b16 %v324
        %v656 = vunpack.c.l.b16 %v325
        %v657 = vunpack.c.h.b16 %v325
        %v658 = vunpack.c.l.b16 %v326
        %v659 = vunpack.c.l.b16 %v327
        %v660 = vunpack.c.h.b16 %v327
        %v661 = vunpack.c.l.b16 %v328
        %v662 = vunpack.c.l.b16 %v329
        %v663 = vunpack.c.h.b16 %v329
        %v664 = vunpack.c.l.b16 %v330
        %v665 = vunpack.c.l.b16 %v331
        %v666 = vunpack.c.h.b16 %v331
        %v667 = vunpack.c.l.b16 %v332
        %v668 = vunpack.c.l.b16 %v333
        %v669 = vunpack.c.h.b16 %v333
        %v670 = vunpack.c.l.b16 %v334
        %v671 = vunpack.c.l.b16 %v335
        %v672 = vunpack.c.h.b16 %v335
        %v673 = vunpack.c.l.b16 %v336
        %v674 = vunpack.c.l.b16 %v337
        %v675 = vunpack.c.h.b16 %v337
        %v676 = vunpack.c.l.b16 %v338
        %v677 = vunpack.c.l.b16 %v339
        %v678 = vunpack.c.h.b16 %v339
        %v679 = vunpack.c.l.b16 %v340
        %v680 = vunpack.c.l.b16 %v341
        %v681 = vunpack.c.h.b16 %v341
        %v682 = vunpack.c.l.b16 %v342
        %v683 = vunpack.c.l.b16 %v343
        %v684 = vunpack.c.h.b16 %v343
        %v685 = vunpack.c.l.b16 %v344
        %v686 = vunpack.c.l.b16 %v345
        %v687 = vunpack.c.h.b16 %v345
        %v688 = vunpack.c.l.b16 %v346
        %v689 = vunpack.c.l.b16 %v347
        %v690 = vunpack.c.h.b16 %v347
        %v691 = vunpack.c.l.b16 %v348
        %v692 = vunpack.c.l.b16 %v349
        %v693 = vunpack.c.h.b16 %v349
        %v694 = vunpack.c.l.b16 %v350
        %v695 = vunpack.c.l.b16 %v351
        %v696 = vunpack.c.h.b16 %v351
        %v697 = vunpack.c.l.b16 %v352
        %v698 = vunpack.c.l.b16 %v353
        %v699 = vunpack.c.h.b16 %v353
        %v700 = vunpack.c.l.b16 %v354
        %v701 = vunpack.c.l.b16 %v355
        %v702 = vunpack.c.h.b16 %v355
        %v703 = vunpack.c.l.b16 %v356
        %v704 = vunpack.c.l.b16 %v357
        %v705 = vunpack.c.h.b16 %v357
        %v706 = vunpack.c.l.b16 %v358
        %v707 = vunpack.c.l.b16 %v359
        %v708 = vunpack.c.h.b16 %v359
        %v709 = vunpack.c.l.b16 %v360
        %v710 = vunpack.c.l.b16 %v361
        %v711 = vunpack.c.h.b16 %v361
        %v712 = vunpack.c.l.b16 %v362
        %v713 = vunpack.c.l.b16 %v363
        %v714 = vunpack.c.h.b16 %v363
        %v715 = vunpack.c.l.b16 %v364
        %v716 = vunpack.c.l.b16 %v365
        %v717 = vunpack.c.h.b16 %v365
        %v718 = vunpack.c.l.b16 %v366
        %v719 = vunpack.c.l.b16 %v367
        %v720 = vunpack.c.h.b16 %v367
        %v721 = vunpack.c.l.b16 %v368
        %v722 = vunpack.c.l.b16 %v369
        %v723 = vunpack.c.h.b16 %v369
        %v724 = vunpack.c.l.b16 %v370
        %v725 = vunpack.c.l.b16 %v371
        %v726 = vunpack.c.h.b16 %v371
        %v727 = vunpack.c.l.b16 %v372
        %v728 = vunpack.c.l.b16 %v373
        %v729 = vunpack.c.h.b16 %v373
        %v730 = vunpack.c.l.b16 %v374
        %v731 = vunpack.c.l.b16 %v375
        %v732 = vunpack.c.h.b16 %v375
        %v733 = vunpack.c.l.b16 %v376
        %v734 = vunpack.c.l.b16 %v377
        %v735 = vunpack.c.h.b16 %v377
        %v736 = vunpack.c.l.b16 %v378
        %v737 = vunpack.c.l.b16 %v379
        %v738 = vunpack.c.h.b16 %v379
        %v739 = vunpack.c.l.b16 %v380
        %v740 = vunpack.c.l.b16 %v381
        %v741 = vunpack.c.h.b16 %v381
        %v742 = vunpack.c.l.b16 %v382
        %v743 = vpack.c.b16 %v554, %v551
        %v744 = vpack.c.b16 %v555, %v552
        %v745 = vpack.c.b16 %v556, %v553
        %v746 = vpack.c.b16 %v560, %v557
        %v747 = vpack.c.b16 %v561, %v558
        %v748 = vpack.c.b16 %v562, %v559
        %v749 = vpack.c.b16 %v566, %v563
        %v750 = vpack.c.b16 %v567, %v564
        %v751 = vpack.c.b16 %v568, %v565
        %v752 = vpack.c.b16 %v572, %v569
        %v753 = vpack.c.b16 %v573, %v570
        %v754 = vpack.c.b16 %v574, %v571
        %v755 = vpack.c.b16 %v578, %v575
        %v756 = vpack.c.b16 %v579, %v576
        %v757 = vpack.c.b16 %v580, %v577
        %v758 = vpack.c.b16 %v584, %v581
        %v759 = vpack.c.b16 %v585, %v582
        %v760 = vpack.c.b16 %v586, %v583
        %v761 = vpack.c.b16 %v590, %v587
        %v762 = vpack.c.b16 %v591, %v588
        %v763 = vpack.c.b16 %v592, %v589
        %v764 = vpack.c.b16 %v596, %v593
        %v765 = vpack.c.b16 %v597, %v594
        %v766 = vpack.c.b16 %v598, %v595
        %v767 = vpack.c.b16 %v602, %v599
        %v768 = vpack.c.b16 %v603, %v600
        %v769 = vpack.c.b16 %v604, %v601
        %v770 = vpack.c.b16 %v608, %v605
        %v771 = vpack.c.b16 %v609, %v606
        %v772 = vpack.c.b16 %v610, %v607
        %v773 = vpack.c.b16 %v614, %v611
        %v774 = vpack.c.b16 %v615, %v612
        %v775 = vpack.c.b16 %v616, %v613
        %v776 = vpack.c.b16 %v620, %v617
        %v777 = vpack.c.b16 %v621, %v618
        %v778 = vpack.c.b16 %v622, %v619
        %v779 = vpack.c.b16 %v626, %v623
        %v780 = vpack.c.b16 %v627, %v624
        %v781 = vpack.c.b16 %v628, %v625
        %v782 = vpack.c.b16 %v632, %v629
        %v783 = vpack.c.b16 %v633, %v630
        %v784 = vpack.c.b16 %v634, %v631
        %v785 = vpack.c.b16 %v638, %v635
        %v786 = vpack.c.b16 %v639, %v636
        %v787 = vpack.c.b16 %v640, %v637
        %v788 = vpack.c.b16 %v644, %v641
        %v789 = vpack.c.b16 %v645, %v642
        %v790 = vpack.c.b16 %v646, %v643
        %v791 = vpack.c.b16 %v650, %v647
        %v792 = vpack.c.b16 %v651, %v648
        %v793 = vpack.c.b16 %v652, %v649
        %v794 = vpack.c.b16 %v656, %v653
        %v795 = vpack.c.b16 %v657, %v654
        %v796 = vpack.c.b16 %v658, %v655
        %v797 = vpack.c.b16 %v662, %v659
        %v798 = vpack.c.b16 %v663, %v660
        %v799 = vpack.c.b16 %v664, %v661
        %v800 = vpack.c.b16 %v668, %v665
        %v801 = vpack.c.b16 %v669, %v666
        %v802 = vpack.c.b16 %v670, %v667
        %v803 = vpack.c.b16 %v674, %v671
        %v804 = vpack.c.b16 %v675, %v672
        %v805 = vpack.c.b16 %v676, %v673
        %v806 = vpack.c.b16 %v680, %v677
        %v807 = vpack.c.b16 %v681, %v678
        %v808 = vpack.c.b16 %v682, %v679
        %v809 = vpack.c.b16 %v686, %v683
        %v810 = vpack.c.b16 %v687, %v684
        %v811 = vpack.c.b16 %v688, %v685
        %v812 = vpack.c.b16 %v692, %v689
        %v813 = vpack.c.b16 %v693, %v690
        %v814 = vpack.c.b16 %v694, %v691
        %v815 = vpack.c.b16 %v698, %v695
        %v816 = vpack.c.b16 %v699, %v696
        %v817 = vpack.c.b16 %v700, %v697
        %v818 = vpack.c.b16 %v704, %v701
        %v819 = vpack.c.b16 %v705, %v702
        %v820 = vpack.c.b16 %v706, %v703
        %v821 = vpack.c.b16 %v710, %v707
        %v822 = vpack.c.b16 %v711, %v708
        %v823 = vpack.c.b16 %v712, %v709
        %v824 = vpack.c.b16 %v716, %v713
        %v825 = vpack.c.b16 %v717, %v714
        %v826 = vpack.c.b16 %v718, %v715
        %v827 = vpack.c.b16 %v722, %v719
        %v828 = vpack.c.b16 %v723, %v720
        %v829 = vpack.c.b16 %v724, %v721
        %v830 = vpack.c.b16 %v728, %v725
        %v831 = vpack.c.b16 %v729, %v726
        %v832 = vpack.c.b16 %v730, %v727
        %v833 = vpack.c.b16 %v734, %v731
        %v834 = vpack.c.b16 %v735, %v732
        %v835 = vpack.c.b16 %v736, %v733
        %v836 = vpack.c.b16 %v740, %v737
        %v837 = vpack.c.b16 %v741, %v738
        %v838 = vpack.c.b16 %v742, %v739
        %v939 = vunpack.c.l.b16 %v383
        %v940 = vunpack.c.l.b16 %v384
        %v941 = vunpack.c.l.b16 %v385
        %v942 = vunpack.c.l.b16 %v386
        %v943 = vunpack.c.l.b16 %v387
        %v944 = vunpack.c.l.b16 %v388
        %v945 = vunpack.c.l.b16 %v389
        %v946 = vunpack.c.l.b16 %v390
        %v947 = vunpack.c.l.b16 %v391
        %v948 = vunpack.c.l.b16 %v392
        %v949 = vunpack.c.l.b16 %v393
        %v950 = vunpack.c.l.b16 %v394
        %v951 = vunpack.c.l.b16 %v395
        %v952 = vunpack.c.l.b16 %v396
        %v953 = vunpack.c.l.b16 %v397
        %v954 = vunpack.c.l.b16 %v398
        %v955 = vunpack.c.l.b16 %v399
        %v956 = vunpack.c.l.b16 %v400
        %v957 = vunpack.c.l.b16 %v401
        %v958 = vunpack.c.l.b16 %v402
        %v959 = vunpack.c.l.b16 %v403
        %v960 = vunpack.c.l.b16 %v404
        %v961 = vunpack.c.l.b16 %v405
        %v962 = vunpack.c.l.b16 %v406
        %v963 = vunpack.c.l.b16 %v407
        %v964 = vunpack.c.l.b16 %v408
        %v965 = vunpack.c.l.b16 %v409
        %v966 = vunpack.c.l.b16 %v410
        %v967 = vunpack.c.l.b16 %v411
        %v968 = vunpack.c.l.b16 %v412
        %v969 = vunpack.c.l.b16 %v413
        %v970 = vunpack.c.l.b16 %v414
        %v971 = vunpack.c.l.b16 %v415
        %v972 = vunpack.c.l.b16 %v416
        %v973 = vunpack.c.l.b16 %v417
        %v974 = vunpack.c.l.b16 %v418
        %v975 = vpack.c.b16 %v940, %v939
        %v976 = vpack.c.b16 %v942, %v941
        %v977 = vpack.c.b16 %v944, %v943
        %v978 = vpack.c.b16 %v946, %v945
        %v979 = vpack.c.b16 %v948, %v947
        %v980 = vpack.c.b16 %v950, %v949
        %v981 = vpack.c.b16 %v952, %v951
        %v982 = vpack.c.b16 %v954, %v953
        %v983 = vpack.c.b16 %v956, %v955
        %v984 = vpack.c.b16 %v958, %v957
        %v985 = vpack.c.b16 %v960, %v959
        %v986 = vpack.c.b16 %v962, %v961
        %v987 = vpack.c.b16 %v964, %v963
        %v988 = vpack.c.b16 %v966, %v965
        %v989 = vpack.c.b16 %v968, %v967
        %v990 = vpack.c.b16 %v970, %v969
        %v991 = vpack.c.b16 %v972, %v971
        %v992 = vpack.c.b16 %v974, %v973
        %vm1011 = vcmask 261120
        %v1013 = vsel %vm1011, %v745, 0
        %v1016 = vsel %vm1011, %v748, 0
        %v1019 = vsel %vm1011, %v751, 0
        %v1022 = vsel %vm1011, %v754, 0
        %v1025 = vsel %vm1011, %v757, 0
        %v1028 = vsel %vm1011, %v760, 0
        %v1031 = vsel %vm1011, %v763, 0
        %v1034 = vsel %vm1011, %v766, 0
        %v1037 = vsel %vm1011, %v769, 0
        %v1040 = vsel %vm1011, %v772, 0
        %v1043 = vsel %vm1011, %v775, 0
        %v1046 = vsel %vm1011, %v778, 0
        %v1049 = vsel %vm1011, %v781, 0
        %v1052 = vsel %vm1011, %v784, 0
        %v1055 = vsel %vm1011, %v787, 0
        %v1058 = vsel %vm1011, %v790, 0
        %v1061 = vsel %vm1011, %v793, 0
        %v1064 = vsel %vm1011, %v796, 0
        %v1067 = vsel %vm1011, %v799, 0
        %v1070 = vsel %vm1011, %v802, 0
        %v1073 = vsel %vm1011, %v805, 0
        %v1076 = vsel %vm1011, %v808, 0
        %v1079 = vsel %vm1011, %v811, 0
        %v1082 = vsel %vm1011, %v814, 0
        %v1085 = vsel %vm1011, %v817, 0
        %v1088 = vsel %vm1011, %v820, 0
        %v1091 = vsel %vm1011, %v823, 0
        %v1094 = vsel %vm1011, %v826, 0
        %v1097 = vsel %vm1011, %v829, 0
        %v1100 = vsel %vm1011, %v832, 0
        %v1103 = vsel %vm1011, %v835, 0
        %v1106 = vsel %vm1011, %v838, 0
        %1108 = vmatpush.bf16.msra.mxu0 %v982
        %1109 = vmatpush.bf16.msra.mxu0 %v981
        %1110 = vmatpush.bf16.msra.mxu0 %v980
        %1111 = vmatpush.bf16.msra.mxu0 %v979
        %1112 = vmatpush.bf16.msra.mxu0 %v978
        %1113 = vmatpush.bf16.msra.mxu0 %v977
        %1114 = vmatpush.bf16.msra.mxu0 %v976
        %1115 = vmatpush.bf16.msra.mxu0 %v975
        %1116 = vmatmul.bf16.gmra.mxu0 %v743
        %v1117 = vpop.f32.mrf.mxu0
        %v1118 = vadd.f32 %v421, %v1117
        %v1119 = vpop.f32.mrf.mxu0
        %v1120 = vadd.f32 %v421, %v1119
        %1121 = vmatmul.bf16.gmra.mxu0 %v746
        %v1122 = vpop.f32.mrf.mxu0
        %v1123 = vadd.f32 %v421, %v1122
        %v1124 = vpop.f32.mrf.mxu0
        %v1125 = vadd.f32 %v421, %v1124
        %1126 = vmatmul.bf16.gmra.mxu0 %v749
        %v1127 = vpop.f32.mrf.mxu0
        %v1128 = vadd.f32 %v421, %v1127
        %v1129 = vpop.f32.mrf.mxu0
        %v1130 = vadd.f32 %v421, %v1129
        %1131 = vmatmul.bf16.gmra.mxu0 %v752
        %v1132 = vpop.f32.mrf.mxu0
        %v1133 = vadd.f32 %v421, %v1132
        %v1134 = vpop.f32.mrf.mxu0
        %v1135 = vadd.f32 %v421, %v1134
        %1136 = vmatmul.bf16.gmra.mxu0 %v755
        %v1137 = vpop.f32.mrf.mxu0
        %v1138 = vadd.f32 %v421, %v1137
        %v1139 = vpop.f32.mrf.mxu0
        %v1140 = vadd.f32 %v421, %v1139
        %1141 = vmatmul.bf16.gmra.mxu0 %v758
        %v1142 = vpop.f32.mrf.mxu0
        %v1143 = vadd.f32 %v421, %v1142
        %v1144 = vpop.f32.mrf.mxu0
        %v1145 = vadd.f32 %v421, %v1144
        %1146 = vmatmul.bf16.gmra.mxu0 %v761
        %v1147 = vpop.f32.mrf.mxu0
        %v1148 = vadd.f32 %v421, %v1147
        %v1149 = vpop.f32.mrf.mxu0
        %v1150 = vadd.f32 %v421, %v1149
        %1151 = vmatmul.bf16.gmra.mxu0 %v764
        %v1152 = vpop.f32.mrf.mxu0
        %v1153 = vadd.f32 %v421, %v1152
        %v1154 = vpop.f32.mrf.mxu0
        %v1155 = vadd.f32 %v421, %v1154
        %1156 = vmatmul.bf16.gmra.mxu0 %v767
        %v1157 = vpop.f32.mrf.mxu0
        %v1158 = vadd.f32 %v421, %v1157
        %v1159 = vpop.f32.mrf.mxu0
        %v1160 = vadd.f32 %v421, %v1159
        %1161 = vmatmul.bf16.gmra.mxu0 %v770
        %v1162 = vpop.f32.mrf.mxu0
        %v1163 = vadd.f32 %v421, %v1162
        %v1164 = vpop.f32.mrf.mxu0
        %v1165 = vadd.f32 %v421, %v1164
        %1166 = vmatmul.bf16.gmra.mxu0 %v773
        %v1167 = vpop.f32.mrf.mxu0
        %v1168 = vadd.f32 %v421, %v1167
        %v1169 = vpop.f32.mrf.mxu0
        %v1170 = vadd.f32 %v421, %v1169
        %1171 = vmatmul.bf16.gmra.mxu0 %v776
        %v1172 = vpop.f32.mrf.mxu0
        %v1173 = vadd.f32 %v421, %v1172
        %v1174 = vpop.f32.mrf.mxu0
        %v1175 = vadd.f32 %v421, %v1174
        %1176 = vmatmul.bf16.gmra.mxu0 %v779
        %v1177 = vpop.f32.mrf.mxu0
        %v1178 = vadd.f32 %v421, %v1177
        %v1179 = vpop.f32.mrf.mxu0
        %v1180 = vadd.f32 %v421, %v1179
        %1181 = vmatmul.bf16.gmra.mxu0 %v782
        %v1182 = vpop.f32.mrf.mxu0
        %v1183 = vadd.f32 %v421, %v1182
        %v1184 = vpop.f32.mrf.mxu0
        %v1185 = vadd.f32 %v421, %v1184
        %1186 = vmatmul.bf16.gmra.mxu0 %v785
        %v1187 = vpop.f32.mrf.mxu0
        %v1188 = vadd.f32 %v421, %v1187
        %v1189 = vpop.f32.mrf.mxu0
        %v1190 = vadd.f32 %v421, %v1189
        %1191 = vmatmul.bf16.gmra.mxu0 %v788
        %v1192 = vpop.f32.mrf.mxu0
        %v1193 = vadd.f32 %v421, %v1192
        %v1194 = vpop.f32.mrf.mxu0
        %v1195 = vadd.f32 %v421, %v1194
        %1196 = vmatmul.bf16.gmra.mxu0 %v791
        %v1197 = vpop.f32.mrf.mxu0
        %v1198 = vadd.f32 %v421, %v1197
        %v1199 = vpop.f32.mrf.mxu0
        %v1200 = vadd.f32 %v421, %v1199
        %1201 = vmatmul.bf16.gmra.mxu0 %v794
        %v1202 = vpop.f32.mrf.mxu0
        %v1203 = vadd.f32 %v421, %v1202
        %v1204 = vpop.f32.mrf.mxu0
        %v1205 = vadd.f32 %v421, %v1204
        %1206 = vmatmul.bf16.gmra.mxu0 %v797
        %v1207 = vpop.f32.mrf.mxu0
        %v1208 = vadd.f32 %v421, %v1207
        %v1209 = vpop.f32.mrf.mxu0
        %v1210 = vadd.f32 %v421, %v1209
        %1211 = vmatmul.bf16.gmra.mxu0 %v800
        %v1212 = vpop.f32.mrf.mxu0
        %v1213 = vadd.f32 %v421, %v1212
        %v1214 = vpop.f32.mrf.mxu0
        %v1215 = vadd.f32 %v421, %v1214
        %1216 = vmatmul.bf16.gmra.mxu0 %v803
        %v1217 = vpop.f32.mrf.mxu0
        %v1218 = vadd.f32 %v421, %v1217
        %v1219 = vpop.f32.mrf.mxu0
        %v1220 = vadd.f32 %v421, %v1219
        %1221 = vmatmul.bf16.gmra.mxu0 %v806
        %v1222 = vpop.f32.mrf.mxu0
        %v1223 = vadd.f32 %v421, %v1222
        %v1224 = vpop.f32.mrf.mxu0
        %v1225 = vadd.f32 %v421, %v1224
        %1226 = vmatmul.bf16.gmra.mxu0 %v809
        %v1227 = vpop.f32.mrf.mxu0
        %v1228 = vadd.f32 %v421, %v1227
        %v1229 = vpop.f32.mrf.mxu0
        %v1230 = vadd.f32 %v421, %v1229
        %1231 = vmatmul.bf16.gmra.mxu0 %v812
        %v1232 = vpop.f32.mrf.mxu0
        %v1233 = vadd.f32 %v421, %v1232
        %v1234 = vpop.f32.mrf.mxu0
        %v1235 = vadd.f32 %v421, %v1234
        %1236 = vmatmul.bf16.gmra.mxu0 %v815
        %v1237 = vpop.f32.mrf.mxu0
        %v1238 = vadd.f32 %v421, %v1237
        %v1239 = vpop.f32.mrf.mxu0
        %v1240 = vadd.f32 %v421, %v1239
        %1241 = vmatmul.bf16.gmra.mxu0 %v818
        %v1242 = vpop.f32.mrf.mxu0
        %v1243 = vadd.f32 %v421, %v1242
        %v1244 = vpop.f32.mrf.mxu0
        %v1245 = vadd.f32 %v421, %v1244
        %1246 = vmatmul.bf16.gmra.mxu0 %v821
        %v1247 = vpop.f32.mrf.mxu0
        %v1248 = vadd.f32 %v421, %v1247
        %v1249 = vpop.f32.mrf.mxu0
        %v1250 = vadd.f32 %v421, %v1249
        %1251 = vmatmul.bf16.gmra.mxu0 %v824
        %v1252 = vpop.f32.mrf.mxu0
        %v1253 = vadd.f32 %v421, %v1252
        %v1254 = vpop.f32.mrf.mxu0
        %v1255 = vadd.f32 %v421, %v1254
        %1256 = vmatmul.bf16.gmra.mxu0 %v827
        %v1257 = vpop.f32.mrf.mxu0
        %v1258 = vadd.f32 %v421, %v1257
        %v1259 = vpop.f32.mrf.mxu0
        %v1260 = vadd.f32 %v421, %v1259
        %1261 = vmatmul.bf16.gmra.mxu0 %v830
        %v1262 = vpop.f32.mrf.mxu0
        %v1263 = vadd.f32 %v421, %v1262
        %v1264 = vpop.f32.mrf.mxu0
        %v1265 = vadd.f32 %v421, %v1264
        %1266 = vmatmul.bf16.gmra.mxu0 %v833
        %v1267 = vpop.f32.mrf.mxu0
        %v1268 = vadd.f32 %v421, %v1267
        %v1269 = vpop.f32.mrf.mxu0
        %v1270 = vadd.f32 %v421, %v1269
        %1271 = vmatmul.bf16.gmra.mxu0 %v836
        %v1272 = vpop.f32.mrf.mxu0
        %v1273 = vadd.f32 %v421, %v1272
        %v1274 = vpop.f32.mrf.mxu0
        %v1275 = vadd.f32 %v421, %v1274
        %1276 = vdwg.mxu0
        %1277 = vmatpush.bf16.msra.mxu0 %v990
        %1278 = vmatpush.bf16.msra.mxu0 %v989
        %1279 = vmatpush.bf16.msra.mxu0 %v988
        %1280 = vmatpush.bf16.msra.mxu0 %v987
        %1281 = vmatpush.bf16.msra.mxu0 %v986
        %1282 = vmatpush.bf16.msra.mxu0 %v985
        %1283 = vmatpush.bf16.msra.mxu0 %v984
        %1284 = vmatpush.bf16.msra.mxu0 %v983
        %1285 = vmatmul.bf16.gmra.mxu0 %v744
        %v1286 = vpop.f32.mrf.mxu0
        %v1287 = vadd.f32 %v1118, %v1286
        %v1288 = vpop.f32.mrf.mxu0
        %v1289 = vadd.f32 %v1120, %v1288
        %1290 = vmatmul.bf16.gmra.mxu0 %v747
        %v1291 = vpop.f32.mrf.mxu0
        %v1292 = vadd.f32 %v1123, %v1291
        %v1293 = vpop.f32.mrf.mxu0
        %v1294 = vadd.f32 %v1125, %v1293
        %1295 = vmatmul.bf16.gmra.mxu0 %v750
        %v1296 = vpop.f32.mrf.mxu0
        %v1297 = vadd.f32 %v1128, %v1296
        %v1298 = vpop.f32.mrf.mxu0
        %v1299 = vadd.f32 %v1130, %v1298
        %1300 = vmatmul.bf16.gmra.mxu0 %v753
        %v1301 = vpop.f32.mrf.mxu0
        %v1302 = vadd.f32 %v1133, %v1301
        %v1303 = vpop.f32.mrf.mxu0
        %v1304 = vadd.f32 %v1135, %v1303
        %1305 = vmatmul.bf16.gmra.mxu0 %v756
        %v1306 = vpop.f32.mrf.mxu0
        %v1307 = vadd.f32 %v1138, %v1306
        %v1308 = vpop.f32.mrf.mxu0
        %v1309 = vadd.f32 %v1140, %v1308
        %1310 = vmatmul.bf16.gmra.mxu0 %v759
        %v1311 = vpop.f32.mrf.mxu0
        %v1312 = vadd.f32 %v1143, %v1311
        %v1313 = vpop.f32.mrf.mxu0
        %v1314 = vadd.f32 %v1145, %v1313
        %1315 = vmatmul.bf16.gmra.mxu0 %v762
        %v1316 = vpop.f32.mrf.mxu0
        %v1317 = vadd.f32 %v1148, %v1316
        %v1318 = vpop.f32.mrf.mxu0
        %v1319 = vadd.f32 %v1150, %v1318
        %1320 = vmatmul.bf16.gmra.mxu0 %v765
        %v1321 = vpop.f32.mrf.mxu0
        %v1322 = vadd.f32 %v1153, %v1321
        %v1323 = vpop.f32.mrf.mxu0
        %v1324 = vadd.f32 %v1155, %v1323
        %1325 = vmatmul.bf16.gmra.mxu0 %v768
        %v1326 = vpop.f32.mrf.mxu0
        %v1327 = vadd.f32 %v1158, %v1326
        %v1328 = vpop.f32.mrf.mxu0
        %v1329 = vadd.f32 %v1160, %v1328
        %1330 = vmatmul.bf16.gmra.mxu0 %v771
        %v1331 = vpop.f32.mrf.mxu0
        %v1332 = vadd.f32 %v1163, %v1331
        %v1333 = vpop.f32.mrf.mxu0
        %v1334 = vadd.f32 %v1165, %v1333
        %1335 = vmatmul.bf16.gmra.mxu0 %v774
        %v1336 = vpop.f32.mrf.mxu0
        %v1337 = vadd.f32 %v1168, %v1336
        %v1338 = vpop.f32.mrf.mxu0
        %v1339 = vadd.f32 %v1170, %v1338
        %1340 = vmatmul.bf16.gmra.mxu0 %v777
        %v1341 = vpop.f32.mrf.mxu0
        %v1342 = vadd.f32 %v1173, %v1341
        %v1343 = vpop.f32.mrf.mxu0
        %v1344 = vadd.f32 %v1175, %v1343
        %1345 = vmatmul.bf16.gmra.mxu0 %v780
        %v1346 = vpop.f32.mrf.mxu0
        %v1347 = vadd.f32 %v1178, %v1346
        %v1348 = vpop.f32.mrf.mxu0
        %v1349 = vadd.f32 %v1180, %v1348
        %1350 = vmatmul.bf16.gmra.mxu0 %v783
        %v1351 = vpop.f32.mrf.mxu0
        %v1352 = vadd.f32 %v1183, %v1351
        %v1353 = vpop.f32.mrf.mxu0
        %v1354 = vadd.f32 %v1185, %v1353
        %1355 = vmatmul.bf16.gmra.mxu0 %v786
        %v1356 = vpop.f32.mrf.mxu0
        %v1357 = vadd.f32 %v1188, %v1356
        %v1358 = vpop.f32.mrf.mxu0
        %v1359 = vadd.f32 %v1190, %v1358
        %1360 = vmatmul.bf16.gmra.mxu0 %v789
        %v1361 = vpop.f32.mrf.mxu0
        %v1362 = vadd.f32 %v1193, %v1361
        %v1363 = vpop.f32.mrf.mxu0
        %v1364 = vadd.f32 %v1195, %v1363
        %1365 = vmatmul.bf16.gmra.mxu0 %v792
        %v1366 = vpop.f32.mrf.mxu0
        %v1367 = vadd.f32 %v1198, %v1366
        %v1368 = vpop.f32.mrf.mxu0
        %v1369 = vadd.f32 %v1200, %v1368
        %1370 = vmatmul.bf16.gmra.mxu0 %v795
        %v1371 = vpop.f32.mrf.mxu0
        %v1372 = vadd.f32 %v1203, %v1371
        %v1373 = vpop.f32.mrf.mxu0
        %v1374 = vadd.f32 %v1205, %v1373
        %1375 = vmatmul.bf16.gmra.mxu0 %v798
        %v1376 = vpop.f32.mrf.mxu0
        %v1377 = vadd.f32 %v1208, %v1376
        %v1378 = vpop.f32.mrf.mxu0
        %v1379 = vadd.f32 %v1210, %v1378
        %1380 = vmatmul.bf16.gmra.mxu0 %v801
        %v1381 = vpop.f32.mrf.mxu0
        %v1382 = vadd.f32 %v1213, %v1381
        %v1383 = vpop.f32.mrf.mxu0
        %v1384 = vadd.f32 %v1215, %v1383
        %1385 = vmatmul.bf16.gmra.mxu0 %v804
        %v1386 = vpop.f32.mrf.mxu0
        %v1387 = vadd.f32 %v1218, %v1386
        %v1388 = vpop.f32.mrf.mxu0
        %v1389 = vadd.f32 %v1220, %v1388
        %1390 = vmatmul.bf16.gmra.mxu0 %v807
        %v1391 = vpop.f32.mrf.mxu0
        %v1392 = vadd.f32 %v1223, %v1391
        %v1393 = vpop.f32.mrf.mxu0
        %v1394 = vadd.f32 %v1225, %v1393
        %1395 = vmatmul.bf16.gmra.mxu0 %v810
        %v1396 = vpop.f32.mrf.mxu0
        %v1397 = vadd.f32 %v1228, %v1396
        %v1398 = vpop.f32.mrf.mxu0
        %v1399 = vadd.f32 %v1230, %v1398
        %1400 = vmatmul.bf16.gmra.mxu0 %v813
        %v1401 = vpop.f32.mrf.mxu0
        %v1402 = vadd.f32 %v1233, %v1401
        %v1403 = vpop.f32.mrf.mxu0
        %v1404 = vadd.f32 %v1235, %v1403
        %1405 = vmatmul.bf16.gmra.mxu0 %v816
        %v1406 = vpop.f32.mrf.mxu0
        %v1407 = vadd.f32 %v1238, %v1406
        %v1408 = vpop.f32.mrf.mxu0
        %v1409 = vadd.f32 %v1240, %v1408
        %1410 = vmatmul.bf16.gmra.mxu0 %v819
        %v1411 = vpop.f32.mrf.mxu0
        %v1412 = vadd.f32 %v1243, %v1411
        %v1413 = vpop.f32.mrf.mxu0
        %v1414 = vadd.f32 %v1245, %v1413
        %1415 = vmatmul.bf16.gmra.mxu0 %v822
        %v1416 = vpop.f32.mrf.mxu0
        %v1417 = vadd.f32 %v1248, %v1416
        %v1418 = vpop.f32.mrf.mxu0
        %v1419 = vadd.f32 %v1250, %v1418
        %1420 = vmatmul.bf16.gmra.mxu0 %v825
        %v1421 = vpop.f32.mrf.mxu0
        %v1422 = vadd.f32 %v1253, %v1421
        %v1423 = vpop.f32.mrf.mxu0
        %v1424 = vadd.f32 %v1255, %v1423
        %1425 = vmatmul.bf16.gmra.mxu0 %v828
        %v1426 = vpop.f32.mrf.mxu0
        %v1427 = vadd.f32 %v1258, %v1426
        %v1428 = vpop.f32.mrf.mxu0
        %v1429 = vadd.f32 %v1260, %v1428
        %1430 = vmatmul.bf16.gmra.mxu0 %v831
        %v1431 = vpop.f32.mrf.mxu0
        %v1432 = vadd.f32 %v1263, %v1431
        %v1433 = vpop.f32.mrf.mxu0
        %v1434 = vadd.f32 %v1265, %v1433
        %1435 = vmatmul.bf16.gmra.mxu0 %v834
        %v1436 = vpop.f32.mrf.mxu0
        %v1437 = vadd.f32 %v1268, %v1436
        %v1438 = vpop.f32.mrf.mxu0
        %v1439 = vadd.f32 %v1270, %v1438
        %1440 = vmatmul.bf16.gmra.mxu0 %v837
        %v1441 = vpop.f32.mrf.mxu0
        %v1442 = vadd.f32 %v1273, %v1441
        %v1443 = vpop.f32.mrf.mxu0
        %v1444 = vadd.f32 %v1275, %v1443
        %1445 = vdwg.mxu0
        %1446 = vmatpush.bf16.msra.mxu0 0
        %1447 = vmatpush.bf16.msra.mxu0 0
        %1448 = vmatpush.bf16.msra.mxu0 0
        %1449 = vmatpush.bf16.msra.mxu0 0
        %1450 = vmatpush.bf16.msra.mxu0 0
        %1451 = vmatpush.bf16.msra.mxu0 0
        %1452 = vmatpush.bf16.msra.mxu0 %v992
        %1453 = vmatpush.bf16.msra.mxu0 %v991
        %1454 = vmatmul.bf16.gmra.mxu0 %v1013
        %v1455 = vpop.f32.mrf.mxu0
        %v1456 = vadd.f32 %v1287, %v1455
        %v1457 = vpop.f32.mrf.mxu0
        %v1458 = vadd.f32 %v1289, %v1457
        %1459 = vmatmul.bf16.gmra.mxu0 %v1016
        %v1460 = vpop.f32.mrf.mxu0
        %v1461 = vadd.f32 %v1292, %v1460
        %v1462 = vpop.f32.mrf.mxu0
        %v1463 = vadd.f32 %v1294, %v1462
        %1464 = vmatmul.bf16.gmra.mxu0 %v1019
        %v1465 = vpop.f32.mrf.mxu0
        %v1466 = vadd.f32 %v1297, %v1465
        %v1467 = vpop.f32.mrf.mxu0
        %v1468 = vadd.f32 %v1299, %v1467
        %1469 = vmatmul.bf16.gmra.mxu0 %v1022
        %v1470 = vpop.f32.mrf.mxu0
        %v1471 = vadd.f32 %v1302, %v1470
        %v1472 = vpop.f32.mrf.mxu0
        %v1473 = vadd.f32 %v1304, %v1472
        %1474 = vmatmul.bf16.gmra.mxu0 %v1025
        %v1475 = vpop.f32.mrf.mxu0
        %v1476 = vadd.f32 %v1307, %v1475
        %v1477 = vpop.f32.mrf.mxu0
        %v1478 = vadd.f32 %v1309, %v1477
        %1479 = vmatmul.bf16.gmra.mxu0 %v1028
        %v1480 = vpop.f32.mrf.mxu0
        %v1481 = vadd.f32 %v1312, %v1480
        %v1482 = vpop.f32.mrf.mxu0
        %v1483 = vadd.f32 %v1314, %v1482
        %1484 = vmatmul.bf16.gmra.mxu0 %v1031
        %v1485 = vpop.f32.mrf.mxu0
        %v1486 = vadd.f32 %v1317, %v1485
        %v1487 = vpop.f32.mrf.mxu0
        %v1488 = vadd.f32 %v1319, %v1487
        %1489 = vmatmul.bf16.gmra.mxu0 %v1034
        %v1490 = vpop.f32.mrf.mxu0
        %v1491 = vadd.f32 %v1322, %v1490
        %v1492 = vpop.f32.mrf.mxu0
        %v1493 = vadd.f32 %v1324, %v1492
        %1494 = vmatmul.bf16.gmra.mxu0 %v1037
        %v1495 = vpop.f32.mrf.mxu0
        %v1496 = vadd.f32 %v1327, %v1495
        %v1497 = vpop.f32.mrf.mxu0
        %v1498 = vadd.f32 %v1329, %v1497
        %1499 = vmatmul.bf16.gmra.mxu0 %v1040
        %v1500 = vpop.f32.mrf.mxu0
        %v1501 = vadd.f32 %v1332, %v1500
        %v1502 = vpop.f32.mrf.mxu0
        %v1503 = vadd.f32 %v1334, %v1502
        %1504 = vmatmul.bf16.gmra.mxu0 %v1043
        %v1505 = vpop.f32.mrf.mxu0
        %v1506 = vadd.f32 %v1337, %v1505
        %v1507 = vpop.f32.mrf.mxu0
        %v1508 = vadd.f32 %v1339, %v1507
        %1509 = vmatmul.bf16.gmra.mxu0 %v1046
        %v1510 = vpop.f32.mrf.mxu0
        %v1511 = vadd.f32 %v1342, %v1510
        %v1512 = vpop.f32.mrf.mxu0
        %v1513 = vadd.f32 %v1344, %v1512
        %1514 = vmatmul.bf16.gmra.mxu0 %v1049
        %v1515 = vpop.f32.mrf.mxu0
        %v1516 = vadd.f32 %v1347, %v1515
        %v1517 = vpop.f32.mrf.mxu0
        %v1518 = vadd.f32 %v1349, %v1517
        %1519 = vmatmul.bf16.gmra.mxu0 %v1052
        %v1520 = vpop.f32.mrf.mxu0
        %v1521 = vadd.f32 %v1352, %v1520
        %v1522 = vpop.f32.mrf.mxu0
        %v1523 = vadd.f32 %v1354, %v1522
        %1524 = vmatmul.bf16.gmra.mxu0 %v1055
        %v1525 = vpop.f32.mrf.mxu0
        %v1526 = vadd.f32 %v1357, %v1525
        %v1527 = vpop.f32.mrf.mxu0
        %v1528 = vadd.f32 %v1359, %v1527
        %1529 = vmatmul.bf16.gmra.mxu0 %v1058
        %v1530 = vpop.f32.mrf.mxu0
        %v1531 = vadd.f32 %v1362, %v1530
        %v1532 = vpop.f32.mrf.mxu0
        %v1533 = vadd.f32 %v1364, %v1532
        %1534 = vmatmul.bf16.gmra.mxu0 %v1061
        %v1535 = vpop.f32.mrf.mxu0
        %v1536 = vadd.f32 %v1367, %v1535
        %v1537 = vpop.f32.mrf.mxu0
        %v1538 = vadd.f32 %v1369, %v1537
        %1539 = vmatmul.bf16.gmra.mxu0 %v1064
        %v1540 = vpop.f32.mrf.mxu0
        %v1541 = vadd.f32 %v1372, %v1540
        %v1542 = vpop.f32.mrf.mxu0
        %v1543 = vadd.f32 %v1374, %v1542
        %1544 = vmatmul.bf16.gmra.mxu0 %v1067
        %v1545 = vpop.f32.mrf.mxu0
        %v1546 = vadd.f32 %v1377, %v1545
        %v1547 = vpop.f32.mrf.mxu0
        %v1548 = vadd.f32 %v1379, %v1547
        %1549 = vmatmul.bf16.gmra.mxu0 %v1070
        %v1550 = vpop.f32.mrf.mxu0
        %v1551 = vadd.f32 %v1382, %v1550
        %v1552 = vpop.f32.mrf.mxu0
        %v1553 = vadd.f32 %v1384, %v1552
        %1554 = vmatmul.bf16.gmra.mxu0 %v1073
        %v1555 = vpop.f32.mrf.mxu0
        %v1556 = vadd.f32 %v1387, %v1555
        %v1557 = vpop.f32.mrf.mxu0
        %v1558 = vadd.f32 %v1389, %v1557
        %1559 = vmatmul.bf16.gmra.mxu0 %v1076
        %v1560 = vpop.f32.mrf.mxu0
        %v1561 = vadd.f32 %v1392, %v1560
        %v1562 = vpop.f32.mrf.mxu0
        %v1563 = vadd.f32 %v1394, %v1562
        %1564 = vmatmul.bf16.gmra.mxu0 %v1079
        %v1565 = vpop.f32.mrf.mxu0
        %v1566 = vadd.f32 %v1397, %v1565
        %v1567 = vpop.f32.mrf.mxu0
        %v1568 = vadd.f32 %v1399, %v1567
        %1569 = vmatmul.bf16.gmra.mxu0 %v1082
        %v1570 = vpop.f32.mrf.mxu0
        %v1571 = vadd.f32 %v1402, %v1570
        %v1572 = vpop.f32.mrf.mxu0
        %v1573 = vadd.f32 %v1404, %v1572
        %1574 = vmatmul.bf16.gmra.mxu0 %v1085
        %v1575 = vpop.f32.mrf.mxu0
        %v1576 = vadd.f32 %v1407, %v1575
        %v1577 = vpop.f32.mrf.mxu0
        %v1578 = vadd.f32 %v1409, %v1577
        %1579 = vmatmul.bf16.gmra.mxu0 %v1088
        %v1580 = vpop.f32.mrf.mxu0
        %v1581 = vadd.f32 %v1412, %v1580
        %v1582 = vpop.f32.mrf.mxu0
        %v1583 = vadd.f32 %v1414, %v1582
        %1584 = vmatmul.bf16.gmra.mxu0 %v1091
        %v1585 = vpop.f32.mrf.mxu0
        %v1586 = vadd.f32 %v1417, %v1585
        %v1587 = vpop.f32.mrf.mxu0
        %v1588 = vadd.f32 %v1419, %v1587
        %1589 = vmatmul.bf16.gmra.mxu0 %v1094
        %v1590 = vpop.f32.mrf.mxu0
        %v1591 = vadd.f32 %v1422, %v1590
        %v1592 = vpop.f32.mrf.mxu0
        %v1593 = vadd.f32 %v1424, %v1592
        %1594 = vmatmul.bf16.gmra.mxu0 %v1097
        %v1595 = vpop.f32.mrf.mxu0
        %v1596 = vadd.f32 %v1427, %v1595
        %v1597 = vpop.f32.mrf.mxu0
        %v1598 = vadd.f32 %v1429, %v1597
        %1599 = vmatmul.bf16.gmra.mxu0 %v1100
        %v1600 = vpop.f32.mrf.mxu0
        %v1601 = vadd.f32 %v1432, %v1600
        %v1602 = vpop.f32.mrf.mxu0
        %v1603 = vadd.f32 %v1434, %v1602
        %1604 = vmatmul.bf16.gmra.mxu0 %v1103
        %v1605 = vpop.f32.mrf.mxu0
        %v1606 = vadd.f32 %v1437, %v1605
        %v1607 = vpop.f32.mrf.mxu0
        %v1608 = vadd.f32 %v1439, %v1607
        %1609 = vmatmul.bf16.gmra.mxu0 %v1106
        %v1610 = vpop.f32.mrf.mxu0
        %v1611 = vadd.f32 %v1442, %v1610
        %v1612 = vpop.f32.mrf.mxu0
        %v1613 = vadd.f32 %v1444, %v1612
        %1614 = vdwg.mxu0
        %v1615 = vpack.c.bf16 %v1456, %v1456
        %v1616 = vpack.c.bf16 %v1458, %v1458
        %v1617 = vpack.c.bf16 %v1461, %v1461
        %v1618 = vpack.c.bf16 %v1463, %v1463
        %v1619 = vpack.c.bf16 %v1466, %v1466
        %v1620 = vpack.c.bf16 %v1468, %v1468
        %v1621 = vpack.c.bf16 %v1471, %v1471
        %v1622 = vpack.c.bf16 %v1473, %v1473
        %v1623 = vpack.c.bf16 %v1476, %v1476
        %v1624 = vpack.c.bf16 %v1478, %v1478
        %v1625 = vpack.c.bf16 %v1481, %v1481
        %v1626 = vpack.c.bf16 %v1483, %v1483
        %v1627 = vpack.c.bf16 %v1486, %v1486
        %v1628 = vpack.c.bf16 %v1488, %v1488
        %v1629 = vpack.c.bf16 %v1491, %v1491
        %v1630 = vpack.c.bf16 %v1493, %v1493
        %v1631 = vpack.c.bf16 %v1496, %v1496
        %v1632 = vpack.c.bf16 %v1498, %v1498
        %v1633 = vpack.c.bf16 %v1501, %v1501
        %v1634 = vpack.c.bf16 %v1503, %v1503
        %v1635 = vpack.c.bf16 %v1506, %v1506
        %v1636 = vpack.c.bf16 %v1508, %v1508
        %v1637 = vpack.c.bf16 %v1511, %v1511
        %v1638 = vpack.c.bf16 %v1513, %v1513
        %v1639 = vpack.c.bf16 %v1516, %v1516
        %v1640 = vpack.c.bf16 %v1518, %v1518
        %v1641 = vpack.c.bf16 %v1521, %v1521
        %v1642 = vpack.c.bf16 %v1523, %v1523
        %v1643 = vpack.c.bf16 %v1526, %v1526
        %v1644 = vpack.c.bf16 %v1528, %v1528
        %v1645 = vpack.c.bf16 %v1531, %v1531
        %v1646 = vpack.c.bf16 %v1533, %v1533
        %v1647 = vpack.c.bf16 %v1536, %v1536
        %v1648 = vpack.c.bf16 %v1538, %v1538
        %v1649 = vpack.c.bf16 %v1541, %v1541
        %v1650 = vpack.c.bf16 %v1543, %v1543
        %v1651 = vpack.c.bf16 %v1546, %v1546
        %v1652 = vpack.c.bf16 %v1548, %v1548
        %v1653 = vpack.c.bf16 %v1551, %v1551
        %v1654 = vpack.c.bf16 %v1553, %v1553
        %v1655 = vpack.c.bf16 %v1556, %v1556
        %v1656 = vpack.c.bf16 %v1558, %v1558
        %v1657 = vpack.c.bf16 %v1561, %v1561
        %v1658 = vpack.c.bf16 %v1563, %v1563
        %v1659 = vpack.c.bf16 %v1566, %v1566
        %v1660 = vpack.c.bf16 %v1568, %v1568
        %v1661 = vpack.c.bf16 %v1571, %v1571
        %v1662 = vpack.c.bf16 %v1573, %v1573
        %v1663 = vpack.c.bf16 %v1576, %v1576
        %v1664 = vpack.c.bf16 %v1578, %v1578
        %v1665 = vpack.c.bf16 %v1581, %v1581
        %v1666 = vpack.c.bf16 %v1583, %v1583
        %v1667 = vpack.c.bf16 %v1586, %v1586
        %v1668 = vpack.c.bf16 %v1588, %v1588
        %v1669 = vpack.c.bf16 %v1591, %v1591
        %v1670 = vpack.c.bf16 %v1593, %v1593
        %v1671 = vpack.c.bf16 %v1596, %v1596
        %v1672 = vpack.c.bf16 %v1598, %v1598
        %v1673 = vpack.c.bf16 %v1601, %v1601
        %v1674 = vpack.c.bf16 %v1603, %v1603
        %v1675 = vpack.c.bf16 %v1606, %v1606
        %v1676 = vpack.c.bf16 %v1608, %v1608
        %v1677 = vpack.c.bf16 %v1611, %v1611
        %v1678 = vpack.c.bf16 %v1613, %v1613
        %vm1679 = vcmask 519168
        %1680 = vst.msk [vmem:[%s231] sm:$0xf] %vm1679, %v1615
        %1681 = vst.msk [vmem:[%s231 + $0x4] sm:$0xf] %vm1679, %v1616
        %1682 = vst.msk [vmem:[%s231 + $0x8] sm:$0xf] %vm1679, %v1617
        %1683 = vst.msk [vmem:[%s231 + $0xc] sm:$0xf] %vm1679, %v1618
        %1684 = vst.msk [vmem:[%s231 + $0x10] sm:$0xf] %vm1679, %v1619
        %1685 = vst.msk [vmem:[%s231 + $0x14] sm:$0xf] %vm1679, %v1620
        %1686 = vst.msk [vmem:[%s231 + $0x18] sm:$0xf] %vm1679, %v1621
        %1687 = vst.msk [vmem:[%s231 + $0x1c] sm:$0xf] %vm1679, %v1622
        %1688 = vst.msk [vmem:[%s231 + $0x20] sm:$0xf] %vm1679, %v1623
        %1689 = vst.msk [vmem:[%s231 + $0x24] sm:$0xf] %vm1679, %v1624
        %1690 = vst.msk [vmem:[%s231 + $0x28] sm:$0xf] %vm1679, %v1625
        %1691 = vst.msk [vmem:[%s231 + $0x2c] sm:$0xf] %vm1679, %v1626
        %1692 = vst.msk [vmem:[%s231 + $0x30] sm:$0xf] %vm1679, %v1627
        %1693 = vst.msk [vmem:[%s231 + $0x34] sm:$0xf] %vm1679, %v1628
        %1694 = vst.msk [vmem:[%s231 + $0x38] sm:$0xf] %vm1679, %v1629
        %1695 = vst.msk [vmem:[%s231 + $0x3c] sm:$0xf] %vm1679, %v1630
        %1696 = vst.msk [vmem:[%s231 + $0x40] sm:$0xf] %vm1679, %v1631
        %1697 = vst.msk [vmem:[%s231 + $0x44] sm:$0xf] %vm1679, %v1632
        %1698 = vst.msk [vmem:[%s231 + $0x48] sm:$0xf] %vm1679, %v1633
        %1699 = vst.msk [vmem:[%s231 + $0x4c] sm:$0xf] %vm1679, %v1634
        %1700 = vst.msk [vmem:[%s231 + $0x50] sm:$0xf] %vm1679, %v1635
        %1701 = vst.msk [vmem:[%s231 + $0x54] sm:$0xf] %vm1679, %v1636
        %1702 = vst.msk [vmem:[%s231 + $0x58] sm:$0xf] %vm1679, %v1637
        %1703 = vst.msk [vmem:[%s231 + $0x5c] sm:$0xf] %vm1679, %v1638
        %1704 = vst.msk [vmem:[%s231 + $0x60] sm:$0xf] %vm1679, %v1639
        %1705 = vst.msk [vmem:[%s231 + $0x64] sm:$0xf] %vm1679, %v1640
        %1706 = vst.msk [vmem:[%s231 + $0x68] sm:$0xf] %vm1679, %v1641
        %1707 = vst.msk [vmem:[%s231 + $0x6c] sm:$0xf] %vm1679, %v1642
        %1708 = vst.msk [vmem:[%s231 + $0x70] sm:$0xf] %vm1679, %v1643
        %1709 = vst.msk [vmem:[%s231 + $0x74] sm:$0xf] %vm1679, %v1644
        %1710 = vst.msk [vmem:[%s231 + $0x78] sm:$0xf] %vm1679, %v1645
        %1711 = vst.msk [vmem:[%s231 + $0x7c] sm:$0xf] %vm1679, %v1646
        %1712 = vst.msk [vmem:[%s231 + $0x80] sm:$0xf] %vm1679, %v1647
        %1713 = vst.msk [vmem:[%s231 + $0x84] sm:$0xf] %vm1679, %v1648
        %1714 = vst.msk [vmem:[%s231 + $0x88] sm:$0xf] %vm1679, %v1649
        %1715 = vst.msk [vmem:[%s231 + $0x8c] sm:$0xf] %vm1679, %v1650
        %1716 = vst.msk [vmem:[%s231 + $0x90] sm:$0xf] %vm1679, %v1651
        %1717 = vst.msk [vmem:[%s231 + $0x94] sm:$0xf] %vm1679, %v1652
        %1718 = vst.msk [vmem:[%s231 + $0x98] sm:$0xf] %vm1679, %v1653
        %1719 = vst.msk [vmem:[%s231 + $0x9c] sm:$0xf] %vm1679, %v1654
        %1720 = vst.msk [vmem:[%s231 + $0xa0] sm:$0xf] %vm1679, %v1655
        %1721 = vst.msk [vmem:[%s231 + $0xa4] sm:$0xf] %vm1679, %v1656
        %1722 = vst.msk [vmem:[%s231 + $0xa8] sm:$0xf] %vm1679, %v1657
        %1723 = vst.msk [vmem:[%s231 + $0xac] sm:$0xf] %vm1679, %v1658
        %1724 = vst.msk [vmem:[%s231 + $0xb0] sm:$0xf] %vm1679, %v1659
        %1725 = vst.msk [vmem:[%s231 + $0xb4] sm:$0xf] %vm1679, %v1660
        %1726 = vst.msk [vmem:[%s231 + $0xb8] sm:$0xf] %vm1679, %v1661
        %1727 = vst.msk [vmem:[%s231 + $0xbc] sm:$0xf] %vm1679, %v1662
        %1728 = vst.msk [vmem:[%s231 + $0xc0] sm:$0xf] %vm1679, %v1663
        %1729 = vst.msk [vmem:[%s231 + $0xc4] sm:$0xf] %vm1679, %v1664
        %1730 = vst.msk [vmem:[%s231 + $0xc8] sm:$0xf] %vm1679, %v1665
        %1731 = vst.msk [vmem:[%s231 + $0xcc] sm:$0xf] %vm1679, %v1666
        %1732 = vst.msk [vmem:[%s231 + $0xd0] sm:$0xf] %vm1679, %v1667
        %1733 = vst.msk [vmem:[%s231 + $0xd4] sm:$0xf] %vm1679, %v1668
        %1734 = vst.msk [vmem:[%s231 + $0xd8] sm:$0xf] %vm1679, %v1669
        %1735 = vst.msk [vmem:[%s231 + $0xdc] sm:$0xf] %vm1679, %v1670
        %1736 = vst.msk [vmem:[%s231 + $0xe0] sm:$0xf] %vm1679, %v1671
        %1737 = vst.msk [vmem:[%s231 + $0xe4] sm:$0xf] %vm1679, %v1672
        %1738 = vst.msk [vmem:[%s231 + $0xe8] sm:$0xf] %vm1679, %v1673
        %1739 = vst.msk [vmem:[%s231 + $0xec] sm:$0xf] %vm1679, %v1674
        %1740 = vst.msk [vmem:[%s231 + $0xf0] sm:$0xf] %vm1679, %v1675
        %1741 = vst.msk [vmem:[%s231 + $0xf4] sm:$0xf] %vm1679, %v1676
        %1742 = vst.msk [vmem:[%s231 + $0xf8] sm:$0xf] %vm1679, %v1677
        %1743 = vst.msk [vmem:[%s231 + $0xfc] sm:$0xf] %vm1679, %v1678
        %s1744 = sand.u32 %s134, 1
        %s1745 = sand.u32 %s134, 1
        %s1746 = smul.addr %s1745, 256
        %s1747 = scalar_lea.vmem [#allocation2], %s1746
        // Predicated region
        $region41: #{_lambda_.12} parent=39 // pred_check
          %p1748 = pneg %p144
        $region42: #{_lambda_.12} parent=39 // pred_check_branch
          %1750 = sbr.rel (%p1748) target = $region44
        $region43: #{_lambda_.12} parent=39 // pred_region
          %s1751 = smul.u32 64, %s16
          %s1752 = ssub.s32 241, %s1751
          %p1753 = scmp.lt.s32.totalorder %s1752, 64
          %s1754 = scalar_select %p1753, %s1752, 64
          %s1755 = smul.u32 4, %s1754
          %p1756 = scmp.ne.s32.totalorder 0, %s1755
          %s1757 = smul.addr %s1751, 4
          %s1758 = scalar_lea.vmem %s5, %s1757
          // Predicated region
          $region45: #{_lambda_.12} parent=43 // pred_check
            %p1759 = pneg %p1756
          $region46: #{_lambda_.12} parent=43 // pred_check_branch
            %1761 = sbr.rel (%p1759) target = $region48
          $region47: #{_lambda_.12} parent=43 // pred_region
            // Predicated region
            $region49: #{_lambda_.12} parent=47 // pred_check
              _
            $region50: #{_lambda_.12} parent=47 // pred_check_branch
              %1763 = sbr.rel target = $region52
            $region51: #{_lambda_.12} parent=47 // pred_region
              // Predicated region
              $region71: #{_lambda_.12} parent=51 // pred_check
                _
              $region72: #{_lambda_.12} parent=51 // pred_check_branch
                %1875 = sbr.rel (0) target = $region74
              $region73: #{_lambda_.12} parent=51 // pred_region
                %s1877 = ssub.s32 16, 1
                %s1878 = sshrl.u32 %s1754, 5
                // While loop
                $region75: #{_lambda_.12} parent=73 // loop_pre_header
                  _
                $region76: #{_lambda_.12} parent=73 // loop_header
                  %s1880 = sphi 0, %s1882
                  %p1881 = scmp.ge.s32.totalorder %s1880, %s1878
                  %s1885 = sphi 0, %s1954
                  %s1886 = sphi %s1747, %s1957
                  %s1887 = sphi %s1758, %s1958
                $region77: #{_lambda_.12} parent=73 // loop_header_branch
                  %1884 = sbr.rel (%p1881) target = $region81
                $region78: #{_lambda_.12} parent=73 // loop_body
                  %v1888 = vld [vmem:[%s1886] sm:%s1877]
                  %1889 = vst [vmem:[%s1887] sm:%s1877] %v1888
                  %v1890 = vld [vmem:[%s1886 + $0x4] sm:%s1877]
                  %1891 = vst [vmem:[%s1887 + $0x4] sm:%s1877] %v1890
                  %v1892 = vld [vmem:[%s1886 + $0x8] sm:%s1877]
                  %1893 = vst [vmem:[%s1887 + $0x8] sm:%s1877] %v1892
                  %v1894 = vld [vmem:[%s1886 + $0xc] sm:%s1877]
                  %1895 = vst [vmem:[%s1887 + $0xc] sm:%s1877] %v1894
                  %v1896 = vld [vmem:[%s1886 + $0x10] sm:%s1877]
                  %1897 = vst [vmem:[%s1887 + $0x10] sm:%s1877] %v1896
                  %v1898 = vld [vmem:[%s1886 + $0x14] sm:%s1877]
                  %1899 = vst [vmem:[%s1887 + $0x14] sm:%s1877] %v1898
                  %v1900 = vld [vmem:[%s1886 + $0x18] sm:%s1877]
                  %1901 = vst [vmem:[%s1887 + $0x18] sm:%s1877] %v1900
                  %v1902 = vld [vmem:[%s1886 + $0x1c] sm:%s1877]
                  %1903 = vst [vmem:[%s1887 + $0x1c] sm:%s1877] %v1902
                  %v1904 = vld [vmem:[%s1886 + $0x20] sm:%s1877]
                  %1905 = vst [vmem:[%s1887 + $0x20] sm:%s1877] %v1904
                  %v1906 = vld [vmem:[%s1886 + $0x24] sm:%s1877]
                  %1907 = vst [vmem:[%s1887 + $0x24] sm:%s1877] %v1906
                  %v1908 = vld [vmem:[%s1886 + $0x28] sm:%s1877]
                  %1909 = vst [vmem:[%s1887 + $0x28] sm:%s1877] %v1908
                  %v1910 = vld [vmem:[%s1886 + $0x2c] sm:%s1877]
                  %1911 = vst [vmem:[%s1887 + $0x2c] sm:%s1877] %v1910
                  %v1912 = vld [vmem:[%s1886 + $0x30] sm:%s1877]
                  %1913 = vst [vmem:[%s1887 + $0x30] sm:%s1877] %v1912
                  %v1914 = vld [vmem:[%s1886 + $0x34] sm:%s1877]
                  %1915 = vst [vmem:[%s1887 + $0x34] sm:%s1877] %v1914
                  %v1916 = vld [vmem:[%s1886 + $0x38] sm:%s1877]
                  %1917 = vst [vmem:[%s1887 + $0x38] sm:%s1877] %v1916
                  %v1918 = vld [vmem:[%s1886 + $0x3c] sm:%s1877]
                  %1919 = vst [vmem:[%s1887 + $0x3c] sm:%s1877] %v1918
                  %v1920 = vld [vmem:[%s1886 + $0x40] sm:%s1877]
                  %1921 = vst [vmem:[%s1887 + $0x40] sm:%s1877] %v1920
                  %v1922 = vld [vmem:[%s1886 + $0x44] sm:%s1877]
                  %1923 = vst [vmem:[%s1887 + $0x44] sm:%s1877] %v1922
                  %v1924 = vld [vmem:[%s1886 + $0x48] sm:%s1877]
                  %1925 = vst [vmem:[%s1887 + $0x48] sm:%s1877] %v1924
                  %v1926 = vld [vmem:[%s1886 + $0x4c] sm:%s1877]
                  %1927 = vst [vmem:[%s1887 + $0x4c] sm:%s1877] %v1926
                  %v1928 = vld [vmem:[%s1886 + $0x50] sm:%s1877]
                  %1929 = vst [vmem:[%s1887 + $0x50] sm:%s1877] %v1928
                  %v1930 = vld [vmem:[%s1886 + $0x54] sm:%s1877]
                  %1931 = vst [vmem:[%s1887 + $0x54] sm:%s1877] %v1930
                  %v1932 = vld [vmem:[%s1886 + $0x58] sm:%s1877]
                  %1933 = vst [vmem:[%s1887 + $0x58] sm:%s1877] %v1932
                  %v1934 = vld [vmem:[%s1886 + $0x5c] sm:%s1877]
                  %1935 = vst [vmem:[%s1887 + $0x5c] sm:%s1877] %v1934
                  %v1936 = vld [vmem:[%s1886 + $0x60] sm:%s1877]
                  %1937 = vst [vmem:[%s1887 + $0x60] sm:%s1877] %v1936
                  %v1938 = vld [vmem:[%s1886 + $0x64] sm:%s1877]
                  %1939 = vst [vmem:[%s1887 + $0x64] sm:%s1877] %v1938
                  %v1940 = vld [vmem:[%s1886 + $0x68] sm:%s1877]
                  %1941 = vst [vmem:[%s1887 + $0x68] sm:%s1877] %v1940
                  %v1942 = vld [vmem:[%s1886 + $0x6c] sm:%s1877]
                  %1943 = vst [vmem:[%s1887 + $0x6c] sm:%s1877] %v1942
                  %v1944 = vld [vmem:[%s1886 + $0x70] sm:%s1877]
                  %1945 = vst [vmem:[%s1887 + $0x70] sm:%s1877] %v1944
                  %v1946 = vld [vmem:[%s1886 + $0x74] sm:%s1877]
                  %1947 = vst [vmem:[%s1887 + $0x74] sm:%s1877] %v1946
                  %v1948 = vld [vmem:[%s1886 + $0x78] sm:%s1877]
                  %1949 = vst [vmem:[%s1887 + $0x78] sm:%s1877] %v1948
                  %v1950 = vld [vmem:[%s1886 + $0x7c] sm:%s1877]
                  %1951 = vst [vmem:[%s1887 + $0x7c] sm:%s1877] %v1950
                  %s1952 = sadd.s32 1, %s1885
                  %p1953 = scmp.ge.s32.totalorder %s1952, %s1878
                  %s1954 = scalar_select %p1953, 0, %s1952
                  %s1955 = smul.u32 %s1954, 128
                  %s1956 = smul.u32 %s1954, 128
                  %s1957 = scalar_lea.vmem %s1747, %s1955 [#allocation2]
                  %s1958 = scalar_lea.vmem %s1758, %s1956
                $region79: #{_lambda_.12} parent=73 // loop_footer
                  %s1882 = sadd.s32 %s1880, 1
                $region80: #{_lambda_.12} parent=73 // loop_footer_branch
                  %1879 = sbr.rel target = $region76
                $region81: #{_lambda_.12} parent=73 // loop_exit
                  _
                %s1959 = sshrl.u32 %s1754, 5
                %s1960 = sand.u32 %s1754, 31
                %s1961 = smul.u32 %s1959, 32
                %s1962 = smul.u32 4, %s1961
                %s1963 = scalar_lea.vmem %s1747, %s1962 [#allocation2]
                %s1964 = smul.u32 4, %s1961
                %s1965 = scalar_lea.vmem %s1758, %s1964
                // While loop
                $region82: #{_lambda_.12} parent=73 // loop_pre_header
                  _
                $region83: #{_lambda_.12} parent=73 // loop_header
                  %s1967 = sphi 0, %s1969
                  %p1968 = scmp.ge.s32.totalorder %s1967, %s1960
                  %s1972 = sphi 0, %s1979
                  %s1973 = sphi %s1963, %s1982
                  %s1974 = sphi %s1965, %s1983
                $region84: #{_lambda_.12} parent=73 // loop_header_branch
                  %1971 = sbr.rel (%p1968) target = $region88
                $region85: #{_lambda_.12} parent=73 // loop_body
                  %v1975 = vld [vmem:[%s1973] sm:%s1877]
                  %1976 = vst [vmem:[%s1974] sm:%s1877] %v1975
                  %s1977 = sadd.s32 1, %s1972
                  %p1978 = scmp.ge.s32.totalorder %s1977, %s1960
                  %s1979 = scalar_select %p1978, 0, %s1977
                  %s1980 = smul.u32 %s1979, 4
                  %s1981 = smul.u32 %s1979, 4
                  %s1982 = scalar_lea.vmem %s1963, %s1980 [#allocation2]
                  %s1983 = scalar_lea.vmem %s1965, %s1981
                $region86: #{_lambda_.12} parent=73 // loop_footer
                  %s1969 = sadd.s32 %s1967, 1
                $region87: #{_lambda_.12} parent=73 // loop_footer_branch
                  %1966 = sbr.rel target = $region83
                $region88: #{_lambda_.12} parent=73 // loop_exit
                  _
              $region74: #{_lambda_.12} parent=51 // pred_fallthru
                _
            $region52: #{_lambda_.12} parent=47 // pred_fallthru
              _
            // Predicated region
            $region53: #{_lambda_.12} parent=47 // pred_check
              _
            $region54: #{_lambda_.12} parent=47 // pred_check_branch
              %1765 = sbr.rel (0) target = $region56
            $region55: #{_lambda_.12} parent=47 // pred_region
              %s1767 = ssub.s32 16, 1
              %s1768 = sshrl.u32 %s1754, 5
              // While loop
              $region57: #{_lambda_.12} parent=55 // loop_pre_header
                _
              $region58: #{_lambda_.12} parent=55 // loop_header
                %s1770 = sphi 0, %s1772
                %p1771 = scmp.ge.s32.totalorder %s1770, %s1768
                %s1775 = sphi 0, %s1844
                %s1776 = sphi %s1747, %s1847
                %s1777 = sphi %s1758, %s1848
              $region59: #{_lambda_.12} parent=55 // loop_header_branch
                %1774 = sbr.rel (%p1771) target = $region63
              $region60: #{_lambda_.12} parent=55 // loop_body
                %v1778 = vld [vmem:[%s1776] sm:%s1767]
                %1779 = vst [vmem:[%s1777] sm:%s1767] %v1778
                %v1780 = vld [vmem:[%s1776 + $0x4] sm:%s1767]
                %1781 = vst [vmem:[%s1777 + $0x4] sm:%s1767] %v1780
                %v1782 = vld [vmem:[%s1776 + $0x8] sm:%s1767]
                %1783 = vst [vmem:[%s1777 + $0x8] sm:%s1767] %v1782
                %v1784 = vld [vmem:[%s1776 + $0xc] sm:%s1767]
                %1785 = vst [vmem:[%s1777 + $0xc] sm:%s1767] %v1784
                %v1786 = vld [vmem:[%s1776 + $0x10] sm:%s1767]
                %1787 = vst [vmem:[%s1777 + $0x10] sm:%s1767] %v1786
                %v1788 = vld [vmem:[%s1776 + $0x14] sm:%s1767]
                %1789 = vst [vmem:[%s1777 + $0x14] sm:%s1767] %v1788
                %v1790 = vld [vmem:[%s1776 + $0x18] sm:%s1767]
                %1791 = vst [vmem:[%s1777 + $0x18] sm:%s1767] %v1790
                %v1792 = vld [vmem:[%s1776 + $0x1c] sm:%s1767]
                %1793 = vst [vmem:[%s1777 + $0x1c] sm:%s1767] %v1792
                %v1794 = vld [vmem:[%s1776 + $0x20] sm:%s1767]
                %1795 = vst [vmem:[%s1777 + $0x20] sm:%s1767] %v1794
                %v1796 = vld [vmem:[%s1776 + $0x24] sm:%s1767]
                %1797 = vst [vmem:[%s1777 + $0x24] sm:%s1767] %v1796
                %v1798 = vld [vmem:[%s1776 + $0x28] sm:%s1767]
                %1799 = vst [vmem:[%s1777 + $0x28] sm:%s1767] %v1798
                %v1800 = vld [vmem:[%s1776 + $0x2c] sm:%s1767]
                %1801 = vst [vmem:[%s1777 + $0x2c] sm:%s1767] %v1800
                %v1802 = vld [vmem:[%s1776 + $0x30] sm:%s1767]
                %1803 = vst [vmem:[%s1777 + $0x30] sm:%s1767] %v1802
                %v1804 = vld [vmem:[%s1776 + $0x34] sm:%s1767]
                %1805 = vst [vmem:[%s1777 + $0x34] sm:%s1767] %v1804
                %v1806 = vld [vmem:[%s1776 + $0x38] sm:%s1767]
                %1807 = vst [vmem:[%s1777 + $0x38] sm:%s1767] %v1806
                %v1808 = vld [vmem:[%s1776 + $0x3c] sm:%s1767]
                %1809 = vst [vmem:[%s1777 + $0x3c] sm:%s1767] %v1808
                %v1810 = vld [vmem:[%s1776 + $0x40] sm:%s1767]
                %1811 = vst [vmem:[%s1777 + $0x40] sm:%s1767] %v1810
                %v1812 = vld [vmem:[%s1776 + $0x44] sm:%s1767]
                %1813 = vst [vmem:[%s1777 + $0x44] sm:%s1767] %v1812
                %v1814 = vld [vmem:[%s1776 + $0x48] sm:%s1767]
                %1815 = vst [vmem:[%s1777 + $0x48] sm:%s1767] %v1814
                %v1816 = vld [vmem:[%s1776 + $0x4c] sm:%s1767]
                %1817 = vst [vmem:[%s1777 + $0x4c] sm:%s1767] %v1816
                %v1818 = vld [vmem:[%s1776 + $0x50] sm:%s1767]
                %1819 = vst [vmem:[%s1777 + $0x50] sm:%s1767] %v1818
                %v1820 = vld [vmem:[%s1776 + $0x54] sm:%s1767]
                %1821 = vst [vmem:[%s1777 + $0x54] sm:%s1767] %v1820
                %v1822 = vld [vmem:[%s1776 + $0x58] sm:%s1767]
                %1823 = vst [vmem:[%s1777 + $0x58] sm:%s1767] %v1822
                %v1824 = vld [vmem:[%s1776 + $0x5c] sm:%s1767]
                %1825 = vst [vmem:[%s1777 + $0x5c] sm:%s1767] %v1824
                %v1826 = vld [vmem:[%s1776 + $0x60] sm:%s1767]
                %1827 = vst [vmem:[%s1777 + $0x60] sm:%s1767] %v1826
                %v1828 = vld [vmem:[%s1776 + $0x64] sm:%s1767]
                %1829 = vst [vmem:[%s1777 + $0x64] sm:%s1767] %v1828
                %v1830 = vld [vmem:[%s1776 + $0x68] sm:%s1767]
                %1831 = vst [vmem:[%s1777 + $0x68] sm:%s1767] %v1830
                %v1832 = vld [vmem:[%s1776 + $0x6c] sm:%s1767]
                %1833 = vst [vmem:[%s1777 + $0x6c] sm:%s1767] %v1832
                %v1834 = vld [vmem:[%s1776 + $0x70] sm:%s1767]
                %1835 = vst [vmem:[%s1777 + $0x70] sm:%s1767] %v1834
                %v1836 = vld [vmem:[%s1776 + $0x74] sm:%s1767]
                %1837 = vst [vmem:[%s1777 + $0x74] sm:%s1767] %v1836
                %v1838 = vld [vmem:[%s1776 + $0x78] sm:%s1767]
                %1839 = vst [vmem:[%s1777 + $0x78] sm:%s1767] %v1838
                %v1840 = vld [vmem:[%s1776 + $0x7c] sm:%s1767]
                %1841 = vst [vmem:[%s1777 + $0x7c] sm:%s1767] %v1840
                %s1842 = sadd.s32 1, %s1775
                %p1843 = scmp.ge.s32.totalorder %s1842, %s1768
                %s1844 = scalar_select %p1843, 0, %s1842
                %s1845 = smul.u32 %s1844, 128
                %s1846 = smul.u32 %s1844, 128
                %s1847 = scalar_lea.vmem %s1747, %s1845 [#allocation2]
                %s1848 = scalar_lea.vmem %s1758, %s1846
              $region61: #{_lambda_.12} parent=55 // loop_footer
                %s1772 = sadd.s32 %s1770, 1
              $region62: #{_lambda_.12} parent=55 // loop_footer_branch
                %1769 = sbr.rel target = $region58
              $region63: #{_lambda_.12} parent=55 // loop_exit
                _
              %s1849 = sshrl.u32 %s1754, 5
              %s1850 = sand.u32 %s1754, 31
              %s1851 = smul.u32 %s1849, 32
              %s1852 = smul.u32 4, %s1851
              %s1853 = scalar_lea.vmem %s1747, %s1852 [#allocation2]
              %s1854 = smul.u32 4, %s1851
              %s1855 = scalar_lea.vmem %s1758, %s1854
              // While loop
              $region64: #{_lambda_.12} parent=55 // loop_pre_header
                _
              $region65: #{_lambda_.12} parent=55 // loop_header
                %s1857 = sphi 0, %s1859
                %p1858 = scmp.ge.s32.totalorder %s1857, %s1850
                %s1862 = sphi 0, %s1869
                %s1863 = sphi %s1853, %s1872
                %s1864 = sphi %s1855, %s1873
              $region66: #{_lambda_.12} parent=55 // loop_header_branch
                %1861 = sbr.rel (%p1858) target = $region70
              $region67: #{_lambda_.12} parent=55 // loop_body
                %v1865 = vld [vmem:[%s1863] sm:%s1767]
                %1866 = vst [vmem:[%s1864] sm:%s1767] %v1865
                %s1867 = sadd.s32 1, %s1862
                %p1868 = scmp.ge.s32.totalorder %s1867, %s1850
                %s1869 = scalar_select %p1868, 0, %s1867
                %s1870 = smul.u32 %s1869, 4
                %s1871 = smul.u32 %s1869, 4
                %s1872 = scalar_lea.vmem %s1853, %s1870 [#allocation2]
                %s1873 = scalar_lea.vmem %s1855, %s1871
              $region68: #{_lambda_.12} parent=55 // loop_footer
                %s1859 = sadd.s32 %s1857, 1
              $region69: #{_lambda_.12} parent=55 // loop_footer_branch
                %1856 = sbr.rel target = $region65
              $region70: #{_lambda_.12} parent=55 // loop_exit
                _
            $region56: #{_lambda_.12} parent=47 // pred_fallthru
              _
          $region48: #{_lambda_.12} parent=43 // pred_fallthru
            _
          %1984 = vnop
        $region44: #{_lambda_.12} parent=39 // pred_fallthru
          _
      $region40: #{_lambda_.12} parent=5 // pred_fallthru
        _
      %p1985 = scmp.le.s32.totalorder 2, %s11
      // Predicated region
      $region89: #{_lambda_.12} parent=5 // pred_check
        %p1986 = pneg %p1985
      $region90: #{_lambda_.12} parent=5 // pred_check_branch
        %1988 = sbr.rel (%p1986) target = $region92
      $region91: #{_lambda_.12} parent=5 // pred_region
        %s1989 = ssub.s32 %s11, 2
        // Predicated region
        $region93: #{_lambda_.12} parent=91 // pred_check
          %p1990 = pneg %p150
        $region94: #{_lambda_.12} parent=91 // pred_check_branch
          %1992 = sbr.rel (%p1990) target = $region96
        $region95: #{_lambda_.12} parent=91 // pred_region
          %s1993 = sand.u32 %s135, 1
          %s1994 = sand.u32 %s135, 1
          %s1995 = smul.addr %s1994, 256
          %s1996 = scalar_lea.vmem [#allocation2], %s1995
        $region96: #{_lambda_.12} parent=91 // pred_fallthru
          _
      $region92: #{_lambda_.12} parent=5 // pred_fallthru
        _
    $region6: #{_lambda_.12} parent=1 // loop_footer
      %s15 = sadd.s32 1, %s11
    $region7: #{_lambda_.12} parent=1 // loop_footer_branch
      %10 = sbr.rel target = $region3
    $region8: #{_lambda_.12} parent=1 // loop_exit
      _

// kernel: _lambda_.13
$region0: #{_lambda_.13}
  #allocation0 [shape = 'u32[]', space=smem, size = 0x4, offset = 0x4, fixed_abs, tag = 'smem constant byte address 0x4 - core index']
  #allocation1 [shape = 'u32[72,128]{1,0:T(1,128)}', space=vmem, size = 0x9000, scoped, tag = 'internal scratch']
  %s0 = inlined_call_operand.vmem [shape: bf16[30,2,15,128], index: 0, kind: input, shape index: {}]
  %s1 = inlined_call_operand.vmem [shape: f32[1,1,64], index: 1, kind: input, shape index: {}]
  %s2 = inlined_call_operand.vmem [shape: f32[1,1,64], index: 2, kind: input, shape index: {}]
  %s3 = inlined_call_operand.vmem [shape: bf16[30,15,64], index: 3, kind: output, shape index: {}]
  %s4 = sld [smem:[#allocation0]]
  $region22: #{_lambda_.13} parent=0
    _
  %s6 = ssub.s32 1, %s4
  %s7 = scalar_select 0, %s6, %s4
  // Predicated region
  $region2: #{_lambda_.13} parent=0 // pred_check
    _
  $region3: #{_lambda_.13} parent=0 // pred_check_branch
    %9 = sbr.rel (0) target = $region5
  $region4: #{_lambda_.13} parent=0 // pred_region
    _
  $region5: #{_lambda_.13} parent=0 // pred_fallthru
    _
  // Predicated region
  $region6: #{_lambda_.13} parent=0 // pred_check
    _
  $region7: #{_lambda_.13} parent=0 // pred_check_branch
    %11 = sbr.rel (0) target = $region9
  $region8: #{_lambda_.13} parent=0 // pred_region
    _
  $region9: #{_lambda_.13} parent=0 // pred_fallthru
    _
  // Predicated region
  $region10: #{_lambda_.13} parent=0 // pred_check
    _
  $region11: #{_lambda_.13} parent=0 // pred_check_branch
    %13 = sbr.rel (0) target = $region13
  $region12: #{_lambda_.13} parent=0 // pred_region
    _
  $region13: #{_lambda_.13} parent=0 // pred_fallthru
    _
  %v14 = vld [vmem:[%s0] sm:$0xf]
  %v15 = vld [vmem:[%s0 + $0x4] sm:$0xf]
  %v16 = vld [vmem:[%s0 + $0x10] sm:$0xf]
  %v17 = vld [vmem:[%s0 + $0x14] sm:$0xf]
  %v18 = vld [vmem:[%s0 + $0x20] sm:$0xf]
  %v19 = vld [vmem:[%s0 + $0x24] sm:$0xf]
  %v20 = vld [vmem:[%s0 + $0x30] sm:$0xf]
  %v21 = vld [vmem:[%s0 + $0x34] sm:$0xf]
  %v22 = vld [vmem:[%s0 + $0x40] sm:$0xf]
  %v23 = vld [vmem:[%s0 + $0x44] sm:$0xf]
  %v24 = vld [vmem:[%s0 + $0x50] sm:$0xf]
  %v25 = vld [vmem:[%s0 + $0x54] sm:$0xf]
  %v26 = vld [vmem:[%s0 + $0x60] sm:$0xf]
  %v27 = vld [vmem:[%s0 + $0x64] sm:$0xf]
  %v28 = vld [vmem:[%s0 + $0x70] sm:$0xf]
  %v29 = vld [vmem:[%s0 + $0x74] sm:$0xf]
  %v30 = vld [vmem:[%s0 + $0x80] sm:$0xf]
  %v31 = vld [vmem:[%s0 + $0x84] sm:$0xf]
  %v32 = vld [vmem:[%s0 + $0x90] sm:$0xf]
  %v33 = vld [vmem:[%s0 + $0x94] sm:$0xf]
  %v34 = vld [vmem:[%s0 + $0xa0] sm:$0xf]
  %v35 = vld [vmem:[%s0 + $0xa4] sm:$0xf]
  %v36 = vld [vmem:[%s0 + $0xb0] sm:$0xf]
  %v37 = vld [vmem:[%s0 + $0xb4] sm:$0xf]
  %v38 = vld [vmem:[%s0 + $0xc0] sm:$0xf]
  %v39 = vld [vmem:[%s0 + $0xc4] sm:$0xf]
  %v40 = vld [vmem:[%s0 + $0xd0] sm:$0xf]
  %v41 = vld [vmem:[%s0 + $0xd4] sm:$0xf]
  %v42 = vld [vmem:[%s0 + $0xe0] sm:$0xf]
  %v43 = vld [vmem:[%s0 + $0xe4] sm:$0xf]
  %v44 = vld [vmem:[%s0 + $0xf0] sm:$0xf]
  %v45 = vld [vmem:[%s0 + $0xf4] sm:$0xf]
  %v46 = vld [vmem:[%s0 + $0x100] sm:$0xf]
  %v47 = vld [vmem:[%s0 + $0x104] sm:$0xf]
  %v48 = vld [vmem:[%s0 + $0x110] sm:$0xf]
  %v49 = vld [vmem:[%s0 + $0x114] sm:$0xf]
  %v50 = vld [vmem:[%s0 + $0x120] sm:$0xf]
  %v51 = vld [vmem:[%s0 + $0x124] sm:$0xf]
  %v52 = vld [vmem:[%s0 + $0x130] sm:$0xf]
  %v53 = vld [vmem:[%s0 + $0x134] sm:$0xf]
  %v54 = vld [vmem:[%s0 + $0x140] sm:$0xf]
  %v55 = vld [vmem:[%s0 + $0x144] sm:$0xf]
  %v56 = vld [vmem:[%s0 + $0x150] sm:$0xf]
  %v57 = vld [vmem:[%s0 + $0x154] sm:$0xf]
  %v58 = vld [vmem:[%s0 + $0x160] sm:$0xf]
  %v59 = vld [vmem:[%s0 + $0x164] sm:$0xf]
  %v60 = vld [vmem:[%s0 + $0x170] sm:$0xf]
  %v61 = vld [vmem:[%s0 + $0x174] sm:$0xf]
  %v62 = vld [vmem:[%s0 + $0x180] sm:$0xf]
  %v63 = vld [vmem:[%s0 + $0x184] sm:$0xf]
  %v64 = vld [vmem:[%s0 + $0x190] sm:$0xf]
  %v65 = vld [vmem:[%s0 + $0x194] sm:$0xf]
  %v66 = vld [vmem:[%s0 + $0x1a0] sm:$0xf]
  %v67 = vld [vmem:[%s0 + $0x1a4] sm:$0xf]
  %v68 = vld [vmem:[%s0 + $0x1b0] sm:$0xf]
  %v69 = vld [vmem:[%s0 + $0x1b4] sm:$0xf]
  %v70 = vld [vmem:[%s0 + $0x1c0] sm:$0xf]
  %v71 = vld [vmem:[%s0 + $0x1c4] sm:$0xf]
  %v72 = vld [vmem:[%s0 + $0x1d0] sm:$0xf]
  %v73 = vld [vmem:[%s0 + $0x1d4] sm:$0xf]
  %v74 = vunpack.c.l.bf16 %v14
  %v75 = vunpack.c.l.bf16 %v15
  %v76 = vunpack.c.l.bf16 %v16
  %v77 = vunpack.c.l.bf16 %v17
  %v78 = vunpack.c.l.bf16 %v18
  %v79 = vunpack.c.l.bf16 %v19
  %v80 = vunpack.c.l.bf16 %v20
  %v81 = vunpack.c.l.bf16 %v21
  %v82 = vunpack.c.l.bf16 %v22
  %v83 = vunpack.c.l.bf16 %v23
  %v84 = vunpack.c.l.bf16 %v24
  %v85 = vunpack.c.l.bf16 %v25
  %v86 = vunpack.c.l.bf16 %v26
  %v87 = vunpack.c.l.bf16 %v27
  %v88 = vunpack.c.l.bf16 %v28
  %v89 = vunpack.c.l.bf16 %v29
  %v90 = vunpack.c.l.bf16 %v30
  %v91 = vunpack.c.l.bf16 %v31
  %v92 = vunpack.c.l.bf16 %v32
  %v93 = vunpack.c.l.bf16 %v33
  %v94 = vunpack.c.l.bf16 %v34
  %v95 = vunpack.c.l.bf16 %v35
  %v96 = vunpack.c.l.bf16 %v36
  %v97 = vunpack.c.l.bf16 %v37
  %v98 = vunpack.c.l.bf16 %v38
  %v99 = vunpack.c.l.bf16 %v39
  %v100 = vunpack.c.l.bf16 %v40
  %v101 = vunpack.c.l.bf16 %v41
  %v102 = vunpack.c.l.bf16 %v42
  %v103 = vunpack.c.l.bf16 %v43
  %v104 = vunpack.c.l.bf16 %v44
  %v105 = vunpack.c.l.bf16 %v45
  %v106 = vunpack.c.l.bf16 %v46
  %v107 = vunpack.c.l.bf16 %v47
  %v108 = vunpack.c.l.bf16 %v48
  %v109 = vunpack.c.l.bf16 %v49
  %v110 = vunpack.c.l.bf16 %v50
  %v111 = vunpack.c.l.bf16 %v51
  %v112 = vunpack.c.l.bf16 %v52
  %v113 = vunpack.c.l.bf16 %v53
  %v114 = vunpack.c.l.bf16 %v54
  %v115 = vunpack.c.l.bf16 %v55
  %v116 = vunpack.c.l.bf16 %v56
  %v117 = vunpack.c.l.bf16 %v57
  %v118 = vunpack.c.l.bf16 %v58
  %v119 = vunpack.c.l.bf16 %v59
  %v120 = vunpack.c.l.bf16 %v60
  %v121 = vunpack.c.l.bf16 %v61
  %v122 = vunpack.c.l.bf16 %v62
  %v123 = vunpack.c.l.bf16 %v63
  %v124 = vunpack.c.l.bf16 %v64
  %v125 = vunpack.c.l.bf16 %v65
  %v126 = vunpack.c.l.bf16 %v66
  %v127 = vunpack.c.l.bf16 %v67
  %v128 = vunpack.c.l.bf16 %v68
  %v129 = vunpack.c.l.bf16 %v69
  %v130 = vunpack.c.l.bf16 %v70
  %v131 = vunpack.c.l.bf16 %v71
  %v132 = vunpack.c.l.bf16 %v72
  %v133 = vunpack.c.l.bf16 %v73
  %s134 = scalar_lea.vmem %s0, 8
  %v135 = vld [vmem:[%s134] sm:$0xf]
  %v136 = vld [vmem:[%s134 + $0x4] sm:$0xf]
  %v137 = vld [vmem:[%s134 + $0x10] sm:$0xf]
  %v138 = vld [vmem:[%s134 + $0x14] sm:$0xf]
  %v139 = vld [vmem:[%s134 + $0x20] sm:$0xf]
  %v140 = vld [vmem:[%s134 + $0x24] sm:$0xf]
  %v141 = vld [vmem:[%s134 + $0x30] sm:$0xf]
  %v142 = vld [vmem:[%s134 + $0x34] sm:$0xf]
  %v143 = vld [vmem:[%s134 + $0x40] sm:$0xf]
  %v144 = vld [vmem:[%s134 + $0x44] sm:$0xf]
  %v145 = vld [vmem:[%s134 + $0x50] sm:$0xf]
  %v146 = vld [vmem:[%s134 + $0x54] sm:$0xf]
  %v147 = vld [vmem:[%s134 + $0x60] sm:$0xf]
  %v148 = vld [vmem:[%s134 + $0x64] sm:$0xf]
  %v149 = vld [vmem:[%s134 + $0x70] sm:$0xf]
  %v150 = vld [vmem:[%s134 + $0x74] sm:$0xf]
  %v151 = vld [vmem:[%s134 + $0x80] sm:$0xf]
  %v152 = vld [vmem:[%s134 + $0x84] sm:$0xf]
  %v153 = vld [vmem:[%s134 + $0x90] sm:$0xf]
  %v154 = vld [vmem:[%s134 + $0x94] sm:$0xf]
  %v155 = vld [vmem:[%s134 + $0xa0] sm:$0xf]
  %v156 = vld [vmem:[%s134 + $0xa4] sm:$0xf]
  %v157 = vld [vmem:[%s134 + $0xb0] sm:$0xf]
  %v158 = vld [vmem:[%s134 + $0xb4] sm:$0xf]
  %v159 = vld [vmem:[%s134 + $0xc0] sm:$0xf]
  %v160 = vld [vmem:[%s134 + $0xc4] sm:$0xf]
  %v161 = vld [vmem:[%s134 + $0xd0] sm:$0xf]
  %v162 = vld [vmem:[%s134 + $0xd4] sm:$0xf]
  %v163 = vld [vmem:[%s134 + $0xe0] sm:$0xf]
  %v164 = vld [vmem:[%s134 + $0xe4] sm:$0xf]
  %v165 = vld [vmem:[%s134 + $0xf0] sm:$0xf]
  %v166 = vld [vmem:[%s134 + $0xf4] sm:$0xf]
  %v167 = vld [vmem:[%s134 + $0x100] sm:$0xf]
  %v168 = vld [vmem:[%s134 + $0x104] sm:$0xf]
  %v169 = vld [vmem:[%s134 + $0x110] sm:$0xf]
  %v170 = vld [vmem:[%s134 + $0x114] sm:$0xf]
  %v171 = vld [vmem:[%s134 + $0x120] sm:$0xf]
  %v172 = vld [vmem:[%s134 + $0x124] sm:$0xf]
  %v173 = vld [vmem:[%s134 + $0x130] sm:$0xf]
  %v174 = vld [vmem:[%s134 + $0x134] sm:$0xf]
  %v175 = vld [vmem:[%s134 + $0x140] sm:$0xf]
  %v176 = vld [vmem:[%s134 + $0x144] sm:$0xf]
  %v177 = vld [vmem:[%s134 + $0x150] sm:$0xf]
  %v178 = vld [vmem:[%s134 + $0x154] sm:$0xf]
  %v179 = vld [vmem:[%s134 + $0x160] sm:$0xf]
  %v180 = vld [vmem:[%s134 + $0x164] sm:$0xf]
  %v181 = vld [vmem:[%s134 + $0x170] sm:$0xf]
  %v182 = vld [vmem:[%s134 + $0x174] sm:$0xf]
  %v183 = vld [vmem:[%s134 + $0x180] sm:$0xf]
  %v184 = vld [vmem:[%s134 + $0x184] sm:$0xf]
  %v185 = vld [vmem:[%s134 + $0x190] sm:$0xf]
  %v186 = vld [vmem:[%s134 + $0x194] sm:$0xf]
  %v187 = vld [vmem:[%s134 + $0x1a0] sm:$0xf]
  %v188 = vld [vmem:[%s134 + $0x1a4] sm:$0xf]
  %v189 = vld [vmem:[%s134 + $0x1b0] sm:$0xf]
  %v190 = vld [vmem:[%s134 + $0x1b4] sm:$0xf]
  %v191 = vld [vmem:[%s134 + $0x1c0] sm:$0xf]
  %v192 = vld [vmem:[%s134 + $0x1c4] sm:$0xf]
  %v193 = vld [vmem:[%s134 + $0x1d0] sm:$0xf]
  %v194 = vld [vmem:[%s134 + $0x1d4] sm:$0xf]
  %v195 = vunpack.c.l.bf16 %v135
  %v196 = vunpack.c.l.bf16 %v136
  %v197 = vunpack.c.l.bf16 %v137
  %v198 = vunpack.c.l.bf16 %v138
  %v199 = vunpack.c.l.bf16 %v139
  %v200 = vunpack.c.l.bf16 %v140
  %v201 = vunpack.c.l.bf16 %v141
  %v202 = vunpack.c.l.bf16 %v142
  %v203 = vunpack.c.l.bf16 %v143
  %v204 = vunpack.c.l.bf16 %v144
  %v205 = vunpack.c.l.bf16 %v145
  %v206 = vunpack.c.l.bf16 %v146
  %v207 = vunpack.c.l.bf16 %v147
  %v208 = vunpack.c.l.bf16 %v148
  %v209 = vunpack.c.l.bf16 %v149
  %v210 = vunpack.c.l.bf16 %v150
  %v211 = vunpack.c.l.bf16 %v151
  %v212 = vunpack.c.l.bf16 %v152
  %v213 = vunpack.c.l.bf16 %v153
  %v214 = vunpack.c.l.bf16 %v154
  %v215 = vunpack.c.l.bf16 %v155
  %v216 = vunpack.c.l.bf16 %v156
  %v217 = vunpack.c.l.bf16 %v157
  %v218 = vunpack.c.l.bf16 %v158
  %v219 = vunpack.c.l.bf16 %v159
  %v220 = vunpack.c.l.bf16 %v160
  %v221 = vunpack.c.l.bf16 %v161
  %v222 = vunpack.c.l.bf16 %v162
  %v223 = vunpack.c.l.bf16 %v163
  %v224 = vunpack.c.l.bf16 %v164
  %v225 = vunpack.c.l.bf16 %v165
  %v226 = vunpack.c.l.bf16 %v166
  %v227 = vunpack.c.l.bf16 %v167
  %v228 = vunpack.c.l.bf16 %v168
  %v229 = vunpack.c.l.bf16 %v169
  %v230 = vunpack.c.l.bf16 %v170
  %v231 = vunpack.c.l.bf16 %v171
  %v232 = vunpack.c.l.bf16 %v172
  %v233 = vunpack.c.l.bf16 %v173
  %v234 = vunpack.c.l.bf16 %v174
  %v235 = vunpack.c.l.bf16 %v175
  %v236 = vunpack.c.l.bf16 %v176
  %v237 = vunpack.c.l.bf16 %v177
  %v238 = vunpack.c.l.bf16 %v178
  %v239 = vunpack.c.l.bf16 %v179
  %v240 = vunpack.c.l.bf16 %v180
  %v241 = vunpack.c.l.bf16 %v181
  %v242 = vunpack.c.l.bf16 %v182
  %v243 = vunpack.c.l.bf16 %v183
  %v244 = vunpack.c.l.bf16 %v184
  %v245 = vunpack.c.l.bf16 %v185
  %v246 = vunpack.c.l.bf16 %v186
  %v247 = vunpack.c.l.bf16 %v187
  %v248 = vunpack.c.l.bf16 %v188
  %v249 = vunpack.c.l.bf16 %v189
  %v250 = vunpack.c.l.bf16 %v190
  %v251 = vunpack.c.l.bf16 %v191
  %v252 = vunpack.c.l.bf16 %v192
  %v253 = vunpack.c.l.bf16 %v193
  %v254 = vunpack.c.l.bf16 %v194
  %v255 = vmax.f32 %v74, %v195
  %v256 = vmax.f32 %v75, %v196
  %v257 = vmax.f32 %v76, %v197
  %v258 = vmax.f32 %v77, %v198
  %v259 = vmax.f32 %v78, %v199
  %v260 = vmax.f32 %v79, %v200
  %v261 = vmax.f32 %v80, %v201
  %v262 = vmax.f32 %v81, %v202
  %v263 = vmax.f32 %v82, %v203
  %v264 = vmax.f32 %v83, %v204
  %v265 = vmax.f32 %v84, %v205
  %v266 = vmax.f32 %v85, %v206
  %v267 = vmax.f32 %v86, %v207
  %v268 = vmax.f32 %v87, %v208
  %v269 = vmax.f32 %v88, %v209
  %v270 = vmax.f32 %v89, %v210
  %v271 = vmax.f32 %v90, %v211
  %v272 = vmax.f32 %v91, %v212
  %v273 = vmax.f32 %v92, %v213
  %v274 = vmax.f32 %v93, %v214
  %v275 = vmax.f32 %v94, %v215
  %v276 = vmax.f32 %v95, %v216
  %v277 = vmax.f32 %v96, %v217
  %v278 = vmax.f32 %v97, %v218
  %v279 = vmax.f32 %v98, %v219
  %v280 = vmax.f32 %v99, %v220
  %v281 = vmax.f32 %v100, %v221
  %v282 = vmax.f32 %v101, %v222
  %v283 = vmax.f32 %v102, %v223
  %v284 = vmax.f32 %v103, %v224
  %v285 = vmax.f32 %v104, %v225
  %v286 = vmax.f32 %v105, %v226
  %v287 = vmax.f32 %v106, %v227
  %v288 = vmax.f32 %v107, %v228
  %v289 = vmax.f32 %v108, %v229
  %v290 = vmax.f32 %v109, %v230
  %v291 = vmax.f32 %v110, %v231
  %v292 = vmax.f32 %v111, %v232
  %v293 = vmax.f32 %v112, %v233
  %v294 = vmax.f32 %v113, %v234
  %v295 = vmax.f32 %v114, %v235
  %v296 = vmax.f32 %v115, %v236
  %v297 = vmax.f32 %v116, %v237
  %v298 = vmax.f32 %v117, %v238
  %v299 = vmax.f32 %v118, %v239
  %v300 = vmax.f32 %v119, %v240
  %v301 = vmax.f32 %v120, %v241
  %v302 = vmax.f32 %v121, %v242
  %v303 = vmax.f32 %v122, %v243
  %v304 = vmax.f32 %v123, %v244
  %v305 = vmax.f32 %v124, %v245
  %v306 = vmax.f32 %v125, %v246
  %v307 = vmax.f32 %v126, %v247
  %v308 = vmax.f32 %v127, %v248
  %v309 = vmax.f32 %v128, %v249
  %v310 = vmax.f32 %v129, %v250
  %v311 = vmax.f32 %v130, %v251
  %v312 = vmax.f32 %v131, %v252
  %v313 = vmax.f32 %v132, %v253
  %v314 = vmax.f32 %v133, %v254
  %375 = vrot.lane.b32.xlu0 %v255, 64
  %v376 = vpop.permute.xlu0 %375
  %377 = vrot.lane.b32.xlu0 %v256, 64
  %v378 = vpop.permute.xlu0 %377
  %379 = vrot.lane.b32.xlu0 %v257, 64
  %v380 = vpop.permute.xlu0 %379
  %381 = vrot.lane.b32.xlu0 %v258, 64
  %v382 = vpop.permute.xlu0 %381
  %383 = vrot.lane.b32.xlu0 %v259, 64
  %v384 = vpop.permute.xlu0 %383
  %385 = vrot.lane.b32.xlu0 %v260, 64
  %v386 = vpop.permute.xlu0 %385
  %387 = vrot.lane.b32.xlu0 %v261, 64
  %v388 = vpop.permute.xlu0 %387
  %389 = vrot.lane.b32.xlu0 %v262, 64
  %v390 = vpop.permute.xlu0 %389
  %391 = vrot.lane.b32.xlu0 %v263, 64
  %v392 = vpop.permute.xlu0 %391
  %393 = vrot.lane.b32.xlu0 %v264, 64
  %v394 = vpop.permute.xlu0 %393
  %395 = vrot.lane.b32.xlu0 %v265, 64
  %v396 = vpop.permute.xlu0 %395
  %397 = vrot.lane.b32.xlu0 %v266, 64
  %v398 = vpop.permute.xlu0 %397
  %399 = vrot.lane.b32.xlu0 %v267, 64
  %v400 = vpop.permute.xlu0 %399
  %401 = vrot.lane.b32.xlu0 %v268, 64
  %v402 = vpop.permute.xlu0 %401
  %403 = vrot.lane.b32.xlu0 %v269, 64
  %v404 = vpop.permute.xlu0 %403
  %405 = vrot.lane.b32.xlu0 %v270, 64
  %v406 = vpop.permute.xlu0 %405
  %407 = vrot.lane.b32.xlu0 %v271, 64
  %v408 = vpop.permute.xlu0 %407
  %409 = vrot.lane.b32.xlu0 %v272, 64
  %v410 = vpop.permute.xlu0 %409
  %411 = vrot.lane.b32.xlu0 %v273, 64
  %v412 = vpop.permute.xlu0 %411
  %413 = vrot.lane.b32.xlu0 %v274, 64
  %v414 = vpop.permute.xlu0 %413
  %415 = vrot.lane.b32.xlu0 %v275, 64
  %v416 = vpop.permute.xlu0 %415
  %417 = vrot.lane.b32.xlu0 %v276, 64
  %v418 = vpop.permute.xlu0 %417
  %419 = vrot.lane.b32.xlu0 %v277, 64
  %v420 = vpop.permute.xlu0 %419
  %421 = vrot.lane.b32.xlu0 %v278, 64
  %v422 = vpop.permute.xlu0 %421
  %423 = vrot.lane.b32.xlu0 %v279, 64
  %v424 = vpop.permute.xlu0 %423
  %425 = vrot.lane.b32.xlu0 %v280, 64
  %v426 = vpop.permute.xlu0 %425
  %427 = vrot.lane.b32.xlu0 %v281, 64
  %v428 = vpop.permute.xlu0 %427
  %429 = vrot.lane.b32.xlu0 %v282, 64
  %v430 = vpop.permute.xlu0 %429
  %431 = vrot.lane.b32.xlu0 %v283, 64
  %v432 = vpop.permute.xlu0 %431
  %433 = vrot.lane.b32.xlu0 %v284, 64
  %v434 = vpop.permute.xlu0 %433
  %435 = vrot.lane.b32.xlu0 %v285, 64
  %v436 = vpop.permute.xlu0 %435
  %437 = vrot.lane.b32.xlu0 %v286, 64
  %v438 = vpop.permute.xlu0 %437
  %439 = vrot.lane.b32.xlu0 %v287, 64
  %v440 = vpop.permute.xlu0 %439
  %441 = vrot.lane.b32.xlu0 %v288, 64
  %v442 = vpop.permute.xlu0 %441
  %443 = vrot.lane.b32.xlu0 %v289, 64
  %v444 = vpop.permute.xlu0 %443
  %445 = vrot.lane.b32.xlu0 %v290, 64
  %v446 = vpop.permute.xlu0 %445
  %447 = vrot.lane.b32.xlu0 %v291, 64
  %v448 = vpop.permute.xlu0 %447
  %449 = vrot.lane.b32.xlu0 %v292, 64
  %v450 = vpop.permute.xlu0 %449
  %451 = vrot.lane.b32.xlu0 %v293, 64
  %v452 = vpop.permute.xlu0 %451
  %453 = vrot.lane.b32.xlu0 %v294, 64
  %v454 = vpop.permute.xlu0 %453
  %455 = vrot.lane.b32.xlu0 %v295, 64
  %v456 = vpop.permute.xlu0 %455
  %457 = vrot.lane.b32.xlu0 %v296, 64
  %v458 = vpop.permute.xlu0 %457
  %459 = vrot.lane.b32.xlu0 %v297, 64
  %v460 = vpop.permute.xlu0 %459
  %461 = vrot.lane.b32.xlu0 %v298, 64
  %v462 = vpop.permute.xlu0 %461
  %463 = vrot.lane.b32.xlu0 %v299, 64
  %v464 = vpop.permute.xlu0 %463
  %465 = vrot.lane.b32.xlu0 %v300, 64
  %v466 = vpop.permute.xlu0 %465
  %467 = vrot.lane.b32.xlu0 %v301, 64
  %v468 = vpop.permute.xlu0 %467
  %469 = vrot.lane.b32.xlu0 %v302, 64
  %v470 = vpop.permute.xlu0 %469
  %471 = vrot.lane.b32.xlu0 %v303, 64
  %v472 = vpop.permute.xlu0 %471
  %473 = vrot.lane.b32.xlu0 %v304, 64
  %v474 = vpop.permute.xlu0 %473
  %475 = vrot.lane.b32.xlu0 %v305, 64
  %v476 = vpop.permute.xlu0 %475
  %477 = vrot.lane.b32.xlu0 %v306, 64
  %v478 = vpop.permute.xlu0 %477
  %479 = vrot.lane.b32.xlu0 %v307, 64
  %v480 = vpop.permute.xlu0 %479
  %481 = vrot.lane.b32.xlu0 %v308, 64
  %v482 = vpop.permute.xlu0 %481
  %483 = vrot.lane.b32.xlu0 %v309, 64
  %v484 = vpop.permute.xlu0 %483
  %485 = vrot.lane.b32.xlu0 %v310, 64
  %v486 = vpop.permute.xlu0 %485
  %487 = vrot.lane.b32.xlu0 %v311, 64
  %v488 = vpop.permute.xlu0 %487
  %489 = vrot.lane.b32.xlu0 %v312, 64
  %v490 = vpop.permute.xlu0 %489
  %491 = vrot.lane.b32.xlu0 %v313, 64
  %v492 = vpop.permute.xlu0 %491
  %493 = vrot.lane.b32.xlu0 %v314, 64
  %v494 = vpop.permute.xlu0 %493
  %v555 = vmax.f32 %v255, %v376
  %v556 = vmax.f32 %v256, %v378
  %v557 = vmax.f32 %v257, %v380
  %v558 = vmax.f32 %v258, %v382
  %v559 = vmax.f32 %v259, %v384
  %v560 = vmax.f32 %v260, %v386
  %v561 = vmax.f32 %v261, %v388
  %v562 = vmax.f32 %v262, %v390
  %v563 = vmax.f32 %v263, %v392
  %v564 = vmax.f32 %v264, %v394
  %v565 = vmax.f32 %v265, %v396
  %v566 = vmax.f32 %v266, %v398
  %v567 = vmax.f32 %v267, %v400
  %v568 = vmax.f32 %v268, %v402
  %v569 = vmax.f32 %v269, %v404
  %v570 = vmax.f32 %v270, %v406
  %v571 = vmax.f32 %v271, %v408
  %v572 = vmax.f32 %v272, %v410
  %v573 = vmax.f32 %v273, %v412
  %v574 = vmax.f32 %v274, %v414
  %v575 = vmax.f32 %v275, %v416
  %v576 = vmax.f32 %v276, %v418
  %v577 = vmax.f32 %v277, %v420
  %v578 = vmax.f32 %v278, %v422
  %v579 = vmax.f32 %v279, %v424
  %v580 = vmax.f32 %v280, %v426
  %v581 = vmax.f32 %v281, %v428
  %v582 = vmax.f32 %v282, %v430
  %v583 = vmax.f32 %v283, %v432
  %v584 = vmax.f32 %v284, %v434
  %v585 = vmax.f32 %v285, %v436
  %v586 = vmax.f32 %v286, %v438
  %v587 = vmax.f32 %v287, %v440
  %v588 = vmax.f32 %v288, %v442
  %v589 = vmax.f32 %v289, %v444
  %v590 = vmax.f32 %v290, %v446
  %v591 = vmax.f32 %v291, %v448
  %v592 = vmax.f32 %v292, %v450
  %v593 = vmax.f32 %v293, %v452
  %v594 = vmax.f32 %v294, %v454
  %v595 = vmax.f32 %v295, %v456
  %v596 = vmax.f32 %v296, %v458
  %v597 = vmax.f32 %v297, %v460
  %v598 = vmax.f32 %v298, %v462
  %v599 = vmax.f32 %v299, %v464
  %v600 = vmax.f32 %v300, %v466
  %v601 = vmax.f32 %v301, %v468
  %v602 = vmax.f32 %v302, %v470
  %v603 = vmax.f32 %v303, %v472
  %v604 = vmax.f32 %v304, %v474
  %v605 = vmax.f32 %v305, %v476
  %v606 = vmax.f32 %v306, %v478
  %v607 = vmax.f32 %v307, %v480
  %v608 = vmax.f32 %v308, %v482
  %v609 = vmax.f32 %v309, %v484
  %v610 = vmax.f32 %v310, %v486
  %v611 = vmax.f32 %v311, %v488
  %v612 = vmax.f32 %v312, %v490
  %v613 = vmax.f32 %v313, %v492
  %v614 = vmax.f32 %v314, %v494
  %vm615 = vcmp.gt.f32.partialorder %v555, 0.0
  %vm616 = vcmp.gt.f32.partialorder %v556, 0.0
  %vm617 = vcmp.gt.f32.partialorder %v557, 0.0
  %vm618 = vcmp.gt.f32.partialorder %v558, 0.0
  %vm619 = vcmp.gt.f32.partialorder %v559, 0.0
  %vm620 = vcmp.gt.f32.partialorder %v560, 0.0
  %vm621 = vcmp.gt.f32.partialorder %v561, 0.0
  %vm622 = vcmp.gt.f32.partialorder %v562, 0.0
  %vm623 = vcmp.gt.f32.partialorder %v563, 0.0
  %vm624 = vcmp.gt.f32.partialorder %v564, 0.0
  %vm625 = vcmp.gt.f32.partialorder %v565, 0.0
  %vm626 = vcmp.gt.f32.partialorder %v566, 0.0
  %vm627 = vcmp.gt.f32.partialorder %v567, 0.0
  %vm628 = vcmp.gt.f32.partialorder %v568, 0.0
  %vm629 = vcmp.gt.f32.partialorder %v569, 0.0
  %vm630 = vcmp.gt.f32.partialorder %v570, 0.0
  %vm631 = vcmp.gt.f32.partialorder %v571, 0.0
  %vm632 = vcmp.gt.f32.partialorder %v572, 0.0
  %vm633 = vcmp.gt.f32.partialorder %v573, 0.0
  %vm634 = vcmp.gt.f32.partialorder %v574, 0.0
  %vm635 = vcmp.gt.f32.partialorder %v575, 0.0
  %vm636 = vcmp.gt.f32.partialorder %v576, 0.0
  %vm637 = vcmp.gt.f32.partialorder %v577, 0.0
  %vm638 = vcmp.gt.f32.partialorder %v578, 0.0
  %vm639 = vcmp.gt.f32.partialorder %v579, 0.0
  %vm640 = vcmp.gt.f32.partialorder %v580, 0.0
  %vm641 = vcmp.gt.f32.partialorder %v581, 0.0
  %vm642 = vcmp.gt.f32.partialorder %v582, 0.0
  %vm643 = vcmp.gt.f32.partialorder %v583, 0.0
  %vm644 = vcmp.gt.f32.partialorder %v584, 0.0
  %vm645 = vcmp.gt.f32.partialorder %v585, 0.0
  %vm646 = vcmp.gt.f32.partialorder %v586, 0.0
  %vm647 = vcmp.gt.f32.partialorder %v587, 0.0
  %vm648 = vcmp.gt.f32.partialorder %v588, 0.0
  %vm649 = vcmp.gt.f32.partialorder %v589, 0.0
  %vm650 = vcmp.gt.f32.partialorder %v590, 0.0
  %vm651 = vcmp.gt.f32.partialorder %v591, 0.0
  %vm652 = vcmp.gt.f32.partialorder %v592, 0.0
  %vm653 = vcmp.gt.f32.partialorder %v593, 0.0
  %vm654 = vcmp.gt.f32.partialorder %v594, 0.0
  %vm655 = vcmp.gt.f32.partialorder %v595, 0.0
  %vm656 = vcmp.gt.f32.partialorder %v596, 0.0
  %vm657 = vcmp.gt.f32.partialorder %v597, 0.0
  %vm658 = vcmp.gt.f32.partialorder %v598, 0.0
  %vm659 = vcmp.gt.f32.partialorder %v599, 0.0
  %vm660 = vcmp.gt.f32.partialorder %v600, 0.0
  %vm661 = vcmp.gt.f32.partialorder %v601, 0.0
  %vm662 = vcmp.gt.f32.partialorder %v602, 0.0
  %vm663 = vcmp.gt.f32.partialorder %v603, 0.0
  %vm664 = vcmp.gt.f32.partialorder %v604, 0.0
  %vm665 = vcmp.gt.f32.partialorder %v605, 0.0
  %vm666 = vcmp.gt.f32.partialorder %v606, 0.0
  %vm667 = vcmp.gt.f32.partialorder %v607, 0.0
  %vm668 = vcmp.gt.f32.partialorder %v608, 0.0
  %vm669 = vcmp.gt.f32.partialorder %v609, 0.0
  %vm670 = vcmp.gt.f32.partialorder %v610, 0.0
  %vm671 = vcmp.gt.f32.partialorder %v611, 0.0
  %vm672 = vcmp.gt.f32.partialorder %v612, 0.0
  %vm673 = vcmp.gt.f32.partialorder %v613, 0.0
  %vm674 = vcmp.gt.f32.partialorder %v614, 0.0
  %v675 = vmul.f32 %v555, 0.01
  %v676 = vmul.f32 %v556, 0.01
  %v677 = vmul.f32 %v557, 0.01
  %v678 = vmul.f32 %v558, 0.01
  %v679 = vmul.f32 %v559, 0.01
  %v680 = vmul.f32 %v560, 0.01
  %v681 = vmul.f32 %v561, 0.01
  %v682 = vmul.f32 %v562, 0.01
  %v683 = vmul.f32 %v563, 0.01
  %v684 = vmul.f32 %v564, 0.01
  %v685 = vmul.f32 %v565, 0.01
  %v686 = vmul.f32 %v566, 0.01
  %v687 = vmul.f32 %v567, 0.01
  %v688 = vmul.f32 %v568, 0.01
  %v689 = vmul.f32 %v569, 0.01
  %v690 = vmul.f32 %v570, 0.01
  %v691 = vmul.f32 %v571, 0.01
  %v692 = vmul.f32 %v572, 0.01
  %v693 = vmul.f32 %v573, 0.01
  %v694 = vmul.f32 %v574, 0.01
  %v695 = vmul.f32 %v575, 0.01
  %v696 = vmul.f32 %v576, 0.01
  %v697 = vmul.f32 %v577, 0.01
  %v698 = vmul.f32 %v578, 0.01
  %v699 = vmul.f32 %v579, 0.01
  %v700 = vmul.f32 %v580, 0.01
  %v701 = vmul.f32 %v581, 0.01
  %v702 = vmul.f32 %v582, 0.01
  %v703 = vmul.f32 %v583, 0.01
  %v704 = vmul.f32 %v584, 0.01
  %v705 = vmul.f32 %v585, 0.01
  %v706 = vmul.f32 %v586, 0.01
  %v707 = vmul.f32 %v587, 0.01
  %v708 = vmul.f32 %v588, 0.01
  %v709 = vmul.f32 %v589, 0.01
  %v710 = vmul.f32 %v590, 0.01
  %v711 = vmul.f32 %v591, 0.01
  %v712 = vmul.f32 %v592, 0.01
  %v713 = vmul.f32 %v593, 0.01
  %v714 = vmul.f32 %v594, 0.01
  %v715 = vmul.f32 %v595, 0.01
  %v716 = vmul.f32 %v596, 0.01
  %v717 = vmul.f32 %v597, 0.01
  %v718 = vmul.f32 %v598, 0.01
  %v719 = vmul.f32 %v599, 0.01
  %v720 = vmul.f32 %v600, 0.01
  %v721 = vmul.f32 %v601, 0.01
  %v722 = vmul.f32 %v602, 0.01
  %v723 = vmul.f32 %v603, 0.01
  %v724 = vmul.f32 %v604, 0.01
  %v725 = vmul.f32 %v605, 0.01
  %v726 = vmul.f32 %v606, 0.01
  %v727 = vmul.f32 %v607, 0.01
  %v728 = vmul.f32 %v608, 0.01
  %v729 = vmul.f32 %v609, 0.01
  %v730 = vmul.f32 %v610, 0.01
  %v731 = vmul.f32 %v611, 0.01
  %v732 = vmul.f32 %v612, 0.01
  %v733 = vmul.f32 %v613, 0.01
  %v734 = vmul.f32 %v614, 0.01
  %v735 = vsel %vm615, %v555, %v675
  %v736 = vsel %vm616, %v556, %v676
  %v737 = vsel %vm617, %v557, %v677
  %v738 = vsel %vm618, %v558, %v678
  %v739 = vsel %vm619, %v559, %v679
  %v740 = vsel %vm620, %v560, %v680
  %v741 = vsel %vm621, %v561, %v681
  %v742 = vsel %vm622, %v562, %v682
  %v743 = vsel %vm623, %v563, %v683
  %v744 = vsel %vm624, %v564, %v684
  %v745 = vsel %vm625, %v565, %v685
  %v746 = vsel %vm626, %v566, %v686
  %v747 = vsel %vm627, %v567, %v687
  %v748 = vsel %vm628, %v568, %v688
  %v749 = vsel %vm629, %v569, %v689
  %v750 = vsel %vm630, %v570, %v690
  %v751 = vsel %vm631, %v571, %v691
  %v752 = vsel %vm632, %v572, %v692
  %v753 = vsel %vm633, %v573, %v693
  %v754 = vsel %vm634, %v574, %v694
  %v755 = vsel %vm635, %v575, %v695
  %v756 = vsel %vm636, %v576, %v696
  %v757 = vsel %vm637, %v577, %v697
  %v758 = vsel %vm638, %v578, %v698
  %v759 = vsel %vm639, %v579, %v699
  %v760 = vsel %vm640, %v580, %v700
  %v761 = vsel %vm641, %v581, %v701
  %v762 = vsel %vm642, %v582, %v702
  %v763 = vsel %vm643, %v583, %v703
  %v764 = vsel %vm644, %v584, %v704
  %v765 = vsel %vm645, %v585, %v705
  %v766 = vsel %vm646, %v586, %v706
  %v767 = vsel %vm647, %v587, %v707
  %v768 = vsel %vm648, %v588, %v708
  %v769 = vsel %vm649, %v589, %v709
  %v770 = vsel %vm650, %v590, %v710
  %v771 = vsel %vm651, %v591, %v711
  %v772 = vsel %vm652, %v592, %v712
  %v773 = vsel %vm653, %v593, %v713
  %v774 = vsel %vm654, %v594, %v714
  %v775 = vsel %vm655, %v595, %v715
  %v776 = vsel %vm656, %v596, %v716
  %v777 = vsel %vm657, %v597, %v717
  %v778 = vsel %vm658, %v598, %v718
  %v779 = vsel %vm659, %v599, %v719
  %v780 = vsel %vm660, %v600, %v720
  %v781 = vsel %vm661, %v601, %v721
  %v782 = vsel %vm662, %v602, %v722
  %v783 = vsel %vm663, %v603, %v723
  %v784 = vsel %vm664, %v604, %v724
  %v785 = vsel %vm665, %v605, %v725
  %v786 = vsel %vm666, %v606, %v726
  %v787 = vsel %vm667, %v607, %v727
  %v788 = vsel %vm668, %v608, %v728
  %v789 = vsel %vm669, %v609, %v729
  %v790 = vsel %vm670, %v610, %v730
  %v791 = vsel %vm671, %v611, %v731
  %v792 = vsel %vm672, %v612, %v732
  %v793 = vsel %vm673, %v613, %v733
  %v794 = vsel %vm674, %v614, %v734
  %v795 = vld [vmem:[%s1] sm:$0x1]
  %v797 = vperm.slane %v795, 0
  %v799 = vmul.f32 %v735, %v797
  %v800 = vmul.f32 %v736, %v797
  %v801 = vmul.f32 %v737, %v797
  %v802 = vmul.f32 %v738, %v797
  %v803 = vmul.f32 %v739, %v797
  %v804 = vmul.f32 %v740, %v797
  %v805 = vmul.f32 %v741, %v797
  %v806 = vmul.f32 %v742, %v797
  %v807 = vmul.f32 %v743, %v797
  %v808 = vmul.f32 %v744, %v797
  %v809 = vmul.f32 %v745, %v797
  %v810 = vmul.f32 %v746, %v797
  %v811 = vmul.f32 %v747, %v797
  %v812 = vmul.f32 %v748, %v797
  %v813 = vmul.f32 %v749, %v797
  %v814 = vmul.f32 %v750, %v797
  %v815 = vmul.f32 %v751, %v797
  %v816 = vmul.f32 %v752, %v797
  %v817 = vmul.f32 %v753, %v797
  %v818 = vmul.f32 %v754, %v797
  %v819 = vmul.f32 %v755, %v797
  %v820 = vmul.f32 %v756, %v797
  %v821 = vmul.f32 %v757, %v797
  %v822 = vmul.f32 %v758, %v797
  %v823 = vmul.f32 %v759, %v797
  %v824 = vmul.f32 %v760, %v797
  %v825 = vmul.f32 %v761, %v797
  %v826 = vmul.f32 %v762, %v797
  %v827 = vmul.f32 %v763, %v797
  %v828 = vmul.f32 %v764, %v797
  %v829 = vmul.f32 %v765, %v797
  %v830 = vmul.f32 %v766, %v797
  %v831 = vmul.f32 %v767, %v797
  %v832 = vmul.f32 %v768, %v797
  %v833 = vmul.f32 %v769, %v797
  %v834 = vmul.f32 %v770, %v797
  %v835 = vmul.f32 %v771, %v797
  %v836 = vmul.f32 %v772, %v797
  %v837 = vmul.f32 %v773, %v797
  %v838 = vmul.f32 %v774, %v797
  %v839 = vmul.f32 %v775, %v797
  %v840 = vmul.f32 %v776, %v797
  %v841 = vmul.f32 %v777, %v797
  %v842 = vmul.f32 %v778, %v797
  %v843 = vmul.f32 %v779, %v797
  %v844 = vmul.f32 %v780, %v797
  %v845 = vmul.f32 %v781, %v797
  %v846 = vmul.f32 %v782, %v797
  %v847 = vmul.f32 %v783, %v797
  %v848 = vmul.f32 %v784, %v797
  %v849 = vmul.f32 %v785, %v797
  %v850 = vmul.f32 %v786, %v797
  %v851 = vmul.f32 %v787, %v797
  %v852 = vmul.f32 %v788, %v797
  %v853 = vmul.f32 %v789, %v797
  %v854 = vmul.f32 %v790, %v797
  %v855 = vmul.f32 %v791, %v797
  %v856 = vmul.f32 %v792, %v797
  %v857 = vmul.f32 %v793, %v797
  %v858 = vmul.f32 %v794, %v797
  %v859 = vld [vmem:[%s2] sm:$0x1]
  %v861 = vperm.slane %v859, 0
  %v863 = vadd.f32 %v799, %v861
  %v864 = vadd.f32 %v800, %v861
  %v865 = vadd.f32 %v801, %v861
  %v866 = vadd.f32 %v802, %v861
  %v867 = vadd.f32 %v803, %v861
  %v868 = vadd.f32 %v804, %v861
  %v869 = vadd.f32 %v805, %v861
  %v870 = vadd.f32 %v806, %v861
  %v871 = vadd.f32 %v807, %v861
  %v872 = vadd.f32 %v808, %v861
  %v873 = vadd.f32 %v809, %v861
  %v874 = vadd.f32 %v810, %v861
  %v875 = vadd.f32 %v811, %v861
  %v876 = vadd.f32 %v812, %v861
  %v877 = vadd.f32 %v813, %v861
  %v878 = vadd.f32 %v814, %v861
  %v879 = vadd.f32 %v815, %v861
  %v880 = vadd.f32 %v816, %v861
  %v881 = vadd.f32 %v817, %v861
  %v882 = vadd.f32 %v818, %v861
  %v883 = vadd.f32 %v819, %v861
  %v884 = vadd.f32 %v820, %v861
  %v885 = vadd.f32 %v821, %v861
  %v886 = vadd.f32 %v822, %v861
  %v887 = vadd.f32 %v823, %v861
  %v888 = vadd.f32 %v824, %v861
  %v889 = vadd.f32 %v825, %v861
  %v890 = vadd.f32 %v826, %v861
  %v891 = vadd.f32 %v827, %v861
  %v892 = vadd.f32 %v828, %v861
  %v893 = vadd.f32 %v829, %v861
  %v894 = vadd.f32 %v830, %v861
  %v895 = vadd.f32 %v831, %v861
  %v896 = vadd.f32 %v832, %v861
  %v897 = vadd.f32 %v833, %v861
  %v898 = vadd.f32 %v834, %v861
  %v899 = vadd.f32 %v835, %v861
  %v900 = vadd.f32 %v836, %v861
  %v901 = vadd.f32 %v837, %v861
  %v902 = vadd.f32 %v838, %v861
  %v903 = vadd.f32 %v839, %v861
  %v904 = vadd.f32 %v840, %v861
  %v905 = vadd.f32 %v841, %v861
  %v906 = vadd.f32 %v842, %v861
  %v907 = vadd.f32 %v843, %v861
  %v908 = vadd.f32 %v844, %v861
  %v909 = vadd.f32 %v845, %v861
  %v910 = vadd.f32 %v846, %v861
  %v911 = vadd.f32 %v847, %v861
  %v912 = vadd.f32 %v848, %v861
  %v913 = vadd.f32 %v849, %v861
  %v914 = vadd.f32 %v850, %v861
  %v915 = vadd.f32 %v851, %v861
  %v916 = vadd.f32 %v852, %v861
  %v917 = vadd.f32 %v853, %v861
  %v918 = vadd.f32 %v854, %v861
  %v919 = vadd.f32 %v855, %v861
  %v920 = vadd.f32 %v856, %v861
  %v921 = vadd.f32 %v857, %v861
  %v922 = vadd.f32 %v858, %v861
  %v923 = vpack.c.bf16 %v863, %v863
  %v924 = vpack.c.bf16 %v864, %v864
  %v925 = vpack.c.bf16 %v865, %v865
  %v926 = vpack.c.bf16 %v866, %v866
  %v927 = vpack.c.bf16 %v867, %v867
  %v928 = vpack.c.bf16 %v868, %v868
  %v929 = vpack.c.bf16 %v869, %v869
  %v930 = vpack.c.bf16 %v870, %v870
  %v931 = vpack.c.bf16 %v871, %v871
  %v932 = vpack.c.bf16 %v872, %v872
  %v933 = vpack.c.bf16 %v873, %v873
  %v934 = vpack.c.bf16 %v874, %v874
  %v935 = vpack.c.bf16 %v875, %v875
  %v936 = vpack.c.bf16 %v876, %v876
  %v937 = vpack.c.bf16 %v877, %v877
  %v938 = vpack.c.bf16 %v878, %v878
  %v939 = vpack.c.bf16 %v879, %v879
  %v940 = vpack.c.bf16 %v880, %v880
  %v941 = vpack.c.bf16 %v881, %v881
  %v942 = vpack.c.bf16 %v882, %v882
  %v943 = vpack.c.bf16 %v883, %v883
  %v944 = vpack.c.bf16 %v884, %v884
  %v945 = vpack.c.bf16 %v885, %v885
  %v946 = vpack.c.bf16 %v886, %v886
  %v947 = vpack.c.bf16 %v887, %v887
  %v948 = vpack.c.bf16 %v888, %v888
  %v949 = vpack.c.bf16 %v889, %v889
  %v950 = vpack.c.bf16 %v890, %v890
  %v951 = vpack.c.bf16 %v891, %v891
  %v952 = vpack.c.bf16 %v892, %v892
  %v953 = vpack.c.bf16 %v893, %v893
  %v954 = vpack.c.bf16 %v894, %v894
  %v955 = vpack.c.bf16 %v895, %v895
  %v956 = vpack.c.bf16 %v896, %v896
  %v957 = vpack.c.bf16 %v897, %v897
  %v958 = vpack.c.bf16 %v898, %v898
  %v959 = vpack.c.bf16 %v899, %v899
  %v960 = vpack.c.bf16 %v900, %v900
  %v961 = vpack.c.bf16 %v901, %v901
  %v962 = vpack.c.bf16 %v902, %v902
  %v963 = vpack.c.bf16 %v903, %v903
  %v964 = vpack.c.bf16 %v904, %v904
  %v965 = vpack.c.bf16 %v905, %v905
  %v966 = vpack.c.bf16 %v906, %v906
  %v967 = vpack.c.bf16 %v907, %v907
  %v968 = vpack.c.bf16 %v908, %v908
  %v969 = vpack.c.bf16 %v909, %v909
  %v970 = vpack.c.bf16 %v910, %v910
  %v971 = vpack.c.bf16 %v911, %v911
  %v972 = vpack.c.bf16 %v912, %v912
  %v973 = vpack.c.bf16 %v913, %v913
  %v974 = vpack.c.bf16 %v914, %v914
  %v975 = vpack.c.bf16 %v915, %v915
  %v976 = vpack.c.bf16 %v916, %v916
  %v977 = vpack.c.bf16 %v917, %v917
  %v978 = vpack.c.bf16 %v918, %v918
  %v979 = vpack.c.bf16 %v919, %v919
  %v980 = vpack.c.bf16 %v920, %v920
  %v981 = vpack.c.bf16 %v921, %v921
  %v982 = vpack.c.bf16 %v922, %v922
  %vm983 = vcmask 519168
  %984 = vst.msk [vmem:[%s3] sm:$0xf] %vm983, %v923
  %vm985 = vcmask 519168
  %vm986 = vsmask.f32 3328
  %vm987 = vmand %vm985, %vm986
  %v988 = vld [vmem:[%s3 + $0x4] sm:$0xf]
  %v989 = vsel %vm987, %v924, %v988
  %990 = vst [vmem:[%s3 + $0x4] sm:$0xf] %v989
  %991 = vst.msk [vmem:[%s3 + $0x8] sm:$0xf] %vm983, %v925
  %v992 = vld [vmem:[%s3 + $0xc] sm:$0xf]
  %v993 = vsel %vm987, %v926, %v992
  %994 = vst [vmem:[%s3 + $0xc] sm:$0xf] %v993
  %995 = vst.msk [vmem:[%s3 + $0x10] sm:$0xf] %vm983, %v927
  %v996 = vld [vmem:[%s3 + $0x14] sm:$0xf]
  %v997 = vsel %vm987, %v928, %v996
  %998 = vst [vmem:[%s3 + $0x14] sm:$0xf] %v997
  %999 = vst.msk [vmem:[%s3 + $0x18] sm:$0xf] %vm983, %v929
  %v1000 = vld [vmem:[%s3 + $0x1c] sm:$0xf]
  %v1001 = vsel %vm987, %v930, %v1000
  %1002 = vst [vmem:[%s3 + $0x1c] sm:$0xf] %v1001
  %1003 = vst.msk [vmem:[%s3 + $0x20] sm:$0xf] %vm983, %v931
  %v1004 = vld [vmem:[%s3 + $0x24] sm:$0xf]
  %v1005 = vsel %vm987, %v932, %v1004
  %1006 = vst [vmem:[%s3 + $0x24] sm:$0xf] %v1005
  %1007 = vst.msk [vmem:[%s3 + $0x28] sm:$0xf] %vm983, %v933
  %v1008 = vld [vmem:[%s3 + $0x2c] sm:$0xf]
  %v1009 = vsel %vm987, %v934, %v1008
  %1010 = vst [vmem:[%s3 + $0x2c] sm:$0xf] %v1009
  %1011 = vst.msk [vmem:[%s3 + $0x30] sm:$0xf] %vm983, %v935
  %v1012 = vld [vmem:[%s3 + $0x34] sm:$0xf]
  %v1013 = vsel %vm987, %v936, %v1012
  %1014 = vst [vmem:[%s3 + $0x34] sm:$0xf] %v1013
  %1015 = vst.msk [vmem:[%s3 + $0x38] sm:$0xf] %vm983, %v937
  %v1016 = vld [vmem:[%s3 + $0x3c] sm:$0xf]
  %v1017 = vsel %vm987, %v938, %v1016
  %1018 = vst [vmem:[%s3 + $0x3c] sm:$0xf] %v1017
  %1019 = vst.msk [vmem:[%s3 + $0x40] sm:$0xf] %vm983, %v939
  %v1020 = vld [vmem:[%s3 + $0x44] sm:$0xf]
  %v1021 = vsel %vm987, %v940, %v1020
  %1022 = vst [vmem:[%s3 + $0x44] sm:$0xf] %v1021
  %1023 = vst.msk [vmem:[%s3 + $0x48] sm:$0xf] %vm983, %v941
  %v1024 = vld [vmem:[%s3 + $0x4c] sm:$0xf]
  %v1025 = vsel %vm987, %v942, %v1024
  %1026 = vst [vmem:[%s3 + $0x4c] sm:$0xf] %v1025
  %1027 = vst.msk [vmem:[%s3 + $0x50] sm:$0xf] %vm983, %v943
  %v1028 = vld [vmem:[%s3 + $0x54] sm:$0xf]
  %v1029 = vsel %vm987, %v944, %v1028
  %1030 = vst [vmem:[%s3 + $0x54] sm:$0xf] %v1029
  %1031 = vst.msk [vmem:[%s3 + $0x58] sm:$0xf] %vm983, %v945
  %v1032 = vld [vmem:[%s3 + $0x5c] sm:$0xf]
  %v1033 = vsel %vm987, %v946, %v1032
  %1034 = vst [vmem:[%s3 + $0x5c] sm:$0xf] %v1033
  %1035 = vst.msk [vmem:[%s3 + $0x60] sm:$0xf] %vm983, %v947
  %v1036 = vld [vmem:[%s3 + $0x64] sm:$0xf]
  %v1037 = vsel %vm987, %v948, %v1036
  %1038 = vst [vmem:[%s3 + $0x64] sm:$0xf] %v1037
  %1039 = vst.msk [vmem:[%s3 + $0x68] sm:$0xf] %vm983, %v949
  %v1040 = vld [vmem:[%s3 + $0x6c] sm:$0xf]
  %v1041 = vsel %vm987, %v950, %v1040
  %1042 = vst [vmem:[%s3 + $0x6c] sm:$0xf] %v1041
  %1043 = vst.msk [vmem:[%s3 + $0x70] sm:$0xf] %vm983, %v951
  %v1044 = vld [vmem:[%s3 + $0x74] sm:$0xf]
  %v1045 = vsel %vm987, %v952, %v1044
  %1046 = vst [vmem:[%s3 + $0x74] sm:$0xf] %v1045
  %1047 = vst.msk [vmem:[%s3 + $0x78] sm:$0xf] %vm983, %v953
  %v1048 = vld [vmem:[%s3 + $0x7c] sm:$0xf]
  %v1049 = vsel %vm987, %v954, %v1048
  %1050 = vst [vmem:[%s3 + $0x7c] sm:$0xf] %v1049
  %1051 = vst.msk [vmem:[%s3 + $0x80] sm:$0xf] %vm983, %v955
  %v1052 = vld [vmem:[%s3 + $0x84] sm:$0xf]
  %v1053 = vsel %vm987, %v956, %v1052
  %1054 = vst [vmem:[%s3 + $0x84] sm:$0xf] %v1053
  %1055 = vst.msk [vmem:[%s3 + $0x88] sm:$0xf] %vm983, %v957
  %v1056 = vld [vmem:[%s3 + $0x8c] sm:$0xf]
  %v1057 = vsel %vm987, %v958, %v1056
  %1058 = vst [vmem:[%s3 + $0x8c] sm:$0xf] %v1057
  %1059 = vst.msk [vmem:[%s3 + $0x90] sm:$0xf] %vm983, %v959
  %v1060 = vld [vmem:[%s3 + $0x94] sm:$0xf]
  %v1061 = vsel %vm987, %v960, %v1060
  %1062 = vst [vmem:[%s3 + $0x94] sm:$0xf] %v1061
  %1063 = vst.msk [vmem:[%s3 + $0x98] sm:$0xf] %vm983, %v961
  %v1064 = vld [vmem:[%s3 + $0x9c] sm:$0xf]
  %v1065 = vsel %vm987, %v962, %v1064
  %1066 = vst [vmem:[%s3 + $0x9c] sm:$0xf] %v1065
  %1067 = vst.msk [vmem:[%s3 + $0xa0] sm:$0xf] %vm983, %v963
  %v1068 = vld [vmem:[%s3 + $0xa4] sm:$0xf]
  %v1069 = vsel %vm987, %v964, %v1068
  %1070 = vst [vmem:[%s3 + $0xa4] sm:$0xf] %v1069
  %1071 = vst.msk [vmem:[%s3 + $0xa8] sm:$0xf] %vm983, %v965
  %v1072 = vld [vmem:[%s3 + $0xac] sm:$0xf]
  %v1073 = vsel %vm987, %v966, %v1072
  %1074 = vst [vmem:[%s3 + $0xac] sm:$0xf] %v1073
  %1075 = vst.msk [vmem:[%s3 + $0xb0] sm:$0xf] %vm983, %v967
  %v1076 = vld [vmem:[%s3 + $0xb4] sm:$0xf]
  %v1077 = vsel %vm987, %v968, %v1076
  %1078 = vst [vmem:[%s3 + $0xb4] sm:$0xf] %v1077
  %1079 = vst.msk [vmem:[%s3 + $0xb8] sm:$0xf] %vm983, %v969
  %v1080 = vld [vmem:[%s3 + $0xbc] sm:$0xf]
  %v1081 = vsel %vm987, %v970, %v1080
  %1082 = vst [vmem:[%s3 + $0xbc] sm:$0xf] %v1081
  %1083 = vst.msk [vmem:[%s3 + $0xc0] sm:$0xf] %vm983, %v971
  %v1084 = vld [vmem:[%s3 + $0xc4] sm:$0xf]
  %v1085 = vsel %vm987, %v972, %v1084
  %1086 = vst [vmem:[%s3 + $0xc4] sm:$0xf] %v1085
  %1087 = vst.msk [vmem:[%s3 + $0xc8] sm:$0xf] %vm983, %v973
  %v1088 = vld [vmem:[%s3 + $0xcc] sm:$0xf]
  %v1089 = vsel %vm987, %v974, %v1088
  %1090 = vst [vmem:[%s3 + $0xcc] sm:$0xf] %v1089
  %1091 = vst.msk [vmem:[%s3 + $0xd0] sm:$0xf] %vm983, %v975
  %v1092 = vld [vmem:[%s3 + $0xd4] sm:$0xf]
  %v1093 = vsel %vm987, %v976, %v1092
  %1094 = vst [vmem:[%s3 + $0xd4] sm:$0xf] %v1093
  %1095 = vst.msk [vmem:[%s3 + $0xd8] sm:$0xf] %vm983, %v977
  %v1096 = vld [vmem:[%s3 + $0xdc] sm:$0xf]
  %v1097 = vsel %vm987, %v978, %v1096
  %1098 = vst [vmem:[%s3 + $0xdc] sm:$0xf] %v1097
  %1099 = vst.msk [vmem:[%s3 + $0xe0] sm:$0xf] %vm983, %v979
  %v1100 = vld [vmem:[%s3 + $0xe4] sm:$0xf]
  %v1101 = vsel %vm987, %v980, %v1100
  %1102 = vst [vmem:[%s3 + $0xe4] sm:$0xf] %v1101
  %1103 = vst.msk [vmem:[%s3 + $0xe8] sm:$0xf] %vm983, %v981
  %v1104 = vld [vmem:[%s3 + $0xec] sm:$0xf]
  %v1105 = vsel %vm987, %v982, %v1104
  %1106 = vst [vmem:[%s3 + $0xec] sm:$0xf] %v1105
  // Predicated region
  $region14: #{_lambda_.13} parent=0 // pred_check
    _
  $region15: #{_lambda_.13} parent=0 // pred_check_branch
    %1108 = sbr.rel (0) target = $region17
  $region16: #{_lambda_.13} parent=0 // pred_region
    _
  $region17: #{_lambda_.13} parent=0 // pred_fallthru
    _
  // Predicated region
  $region18: #{_lambda_.13} parent=0 // pred_check
    _
  $region19: #{_lambda_.13} parent=0 // pred_check_branch
    %1110 = sbr.rel (0) target = $region21
  $region20: #{_lambda_.13} parent=0 // pred_region
    _
  $region21: #{_lambda_.13} parent=0 // pred_fallthru
    _

// kernel: _lambda_.14
$region0: #{_lambda_.14}
  #allocation0 [shape = 'u32[]', space=smem, size = 0x4, offset = 0x4, fixed_abs, tag = 'smem constant byte address 0x4 - core index']
  #allocation1 [shape = 'u32[72,128]{1,0:T(1,128)}', space=vmem, size = 0x9000, scoped, tag = 'internal scratch']
  %s0 = inlined_call_operand.vmem [shape: bf16[450,576], index: 0, kind: input, shape index: {}]
  %s1 = inlined_call_operand.vmem [shape: bf16[576,64], index: 1, kind: input, shape index: {}]
  %s2 = inlined_call_operand.vmem [shape: f32[1,64], index: 2, kind: input, shape index: {}]
  %s3 = inlined_call_operand.vmem [shape: f32[1,64], index: 3, kind: input, shape index: {}]
  %s4 = inlined_call_operand.vmem [shape: f32[1,64], index: 4, kind: input, shape index: {}]
  %s5 = inlined_call_operand.vmem [shape: bf16[450,64], index: 5, kind: output, shape index: {}]
  %s6 = sld [smem:[#allocation0]]
  $region30: #{_lambda_.14} parent=0
    _
  %s8 = ssub.s32 1, %s6
  %s9 = scalar_select 0, %s8, %s6
  // Predicated region
  $region2: #{_lambda_.14} parent=0 // pred_check
    _
  $region3: #{_lambda_.14} parent=0 // pred_check_branch
    %11 = sbr.rel (0) target = $region5
  $region4: #{_lambda_.14} parent=0 // pred_region
    _
  $region5: #{_lambda_.14} parent=0 // pred_fallthru
    _
  // Predicated region
  $region6: #{_lambda_.14} parent=0 // pred_check
    _
  $region7: #{_lambda_.14} parent=0 // pred_check_branch
    %13 = sbr.rel (0) target = $region9
  $region8: #{_lambda_.14} parent=0 // pred_region
    _
  $region9: #{_lambda_.14} parent=0 // pred_fallthru
    _
  // Predicated region
  $region10: #{_lambda_.14} parent=0 // pred_check
    _
  $region11: #{_lambda_.14} parent=0 // pred_check_branch
    %15 = sbr.rel (0) target = $region13
  $region12: #{_lambda_.14} parent=0 // pred_region
    _
  $region13: #{_lambda_.14} parent=0 // pred_fallthru
    _
  // Predicated region
  $region14: #{_lambda_.14} parent=0 // pred_check
    _
  $region15: #{_lambda_.14} parent=0 // pred_check_branch
    %17 = sbr.rel (0) target = $region17
  $region16: #{_lambda_.14} parent=0 // pred_region
    _
  $region17: #{_lambda_.14} parent=0 // pred_fallthru
    _
  // Predicated region
  $region18: #{_lambda_.14} parent=0 // pred_check
    _
  $region19: #{_lambda_.14} parent=0 // pred_check_branch
    %19 = sbr.rel (0) target = $region21
  $region20: #{_lambda_.14} parent=0 // pred_region
    _
  $region21: #{_lambda_.14} parent=0 // pred_fallthru
    _
  %v21 = vld [vmem:[%s0] sm:$0xff]
  %v22 = vld [vmem:[%s0 + $0x8] sm:$0xff]
  %v23 = vld [vmem:[%s0 + $0x10] sm:$0xf]
  %v24 = vld [vmem:[%s0 + $0x14] sm:$0xff]
  %v25 = vld [vmem:[%s0 + $0x1c] sm:$0xff]
  %v26 = vld [vmem:[%s0 + $0x24] sm:$0xf]
  %v27 = vld [vmem:[%s0 + $0x28] sm:$0xff]
  %v28 = vld [vmem:[%s0 + $0x30] sm:$0xff]
  %v29 = vld [vmem:[%s0 + $0x38] sm:$0xf]
  %v30 = vld [vmem:[%s0 + $0x3c] sm:$0xff]
  %v31 = vld [vmem:[%s0 + $0x44] sm:$0xff]
  %v32 = vld [vmem:[%s0 + $0x4c] sm:$0xf]
  %v33 = vld [vmem:[%s0 + $0x50] sm:$0xff]
  %v34 = vld [vmem:[%s0 + $0x58] sm:$0xff]
  %v35 = vld [vmem:[%s0 + $0x60] sm:$0xf]
  %v36 = vld [vmem:[%s0 + $0x64] sm:$0xff]
  %v37 = vld [vmem:[%s0 + $0x6c] sm:$0xff]
  %v38 = vld [vmem:[%s0 + $0x74] sm:$0xf]
  %v39 = vld [vmem:[%s0 + $0x78] sm:$0xff]
  %v40 = vld [vmem:[%s0 + $0x80] sm:$0xff]
  %v41 = vld [vmem:[%s0 + $0x88] sm:$0xf]
  %v42 = vld [vmem:[%s0 + $0x8c] sm:$0xff]
  %v43 = vld [vmem:[%s0 + $0x94] sm:$0xff]
  %v44 = vld [vmem:[%s0 + $0x9c] sm:$0xf]
  %v45 = vld [vmem:[%s0 + $0xa0] sm:$0xff]
  %v46 = vld [vmem:[%s0 + $0xa8] sm:$0xff]
  %v47 = vld [vmem:[%s0 + $0xb0] sm:$0xf]
  %v48 = vld [vmem:[%s0 + $0xb4] sm:$0xff]
  %v49 = vld [vmem:[%s0 + $0xbc] sm:$0xff]
  %v50 = vld [vmem:[%s0 + $0xc4] sm:$0xf]
  %v51 = vld [vmem:[%s0 + $0xc8] sm:$0xff]
  %v52 = vld [vmem:[%s0 + $0xd0] sm:$0xff]
  %v53 = vld [vmem:[%s0 + $0xd8] sm:$0xf]
  %v54 = vld [vmem:[%s0 + $0xdc] sm:$0xff]
  %v55 = vld [vmem:[%s0 + $0xe4] sm:$0xff]
  %v56 = vld [vmem:[%s0 + $0xec] sm:$0xf]
  %v57 = vld [vmem:[%s0 + $0xf0] sm:$0xff]
  %v58 = vld [vmem:[%s0 + $0xf8] sm:$0xff]
  %v59 = vld [vmem:[%s0 + $0x100] sm:$0xf]
  %v60 = vld [vmem:[%s0 + $0x104] sm:$0xff]
  %v61 = vld [vmem:[%s0 + $0x10c] sm:$0xff]
  %v62 = vld [vmem:[%s0 + $0x114] sm:$0xf]
  %v63 = vld [vmem:[%s0 + $0x118] sm:$0xff]
  %v64 = vld [vmem:[%s0 + $0x120] sm:$0xff]
  %v65 = vld [vmem:[%s0 + $0x128] sm:$0xf]
  %v66 = vld [vmem:[%s0 + $0x12c] sm:$0xff]
  %v67 = vld [vmem:[%s0 + $0x134] sm:$0xff]
  %v68 = vld [vmem:[%s0 + $0x13c] sm:$0xf]
  %v69 = vld [vmem:[%s0 + $0x140] sm:$0xff]
  %v70 = vld [vmem:[%s0 + $0x148] sm:$0xff]
  %v71 = vld [vmem:[%s0 + $0x150] sm:$0xf]
  %v72 = vld [vmem:[%s0 + $0x154] sm:$0xff]
  %v73 = vld [vmem:[%s0 + $0x15c] sm:$0xff]
  %v74 = vld [vmem:[%s0 + $0x164] sm:$0xf]
  %v75 = vld [vmem:[%s0 + $0x168] sm:$0xff]
  %v76 = vld [vmem:[%s0 + $0x170] sm:$0xff]
  %v77 = vld [vmem:[%s0 + $0x178] sm:$0xf]
  %v78 = vld [vmem:[%s0 + $0x17c] sm:$0xff]
  %v79 = vld [vmem:[%s0 + $0x184] sm:$0xff]
  %v80 = vld [vmem:[%s0 + $0x18c] sm:$0xf]
  %v81 = vld [vmem:[%s0 + $0x190] sm:$0xff]
  %v82 = vld [vmem:[%s0 + $0x198] sm:$0xff]
  %v83 = vld [vmem:[%s0 + $0x1a0] sm:$0xf]
  %v84 = vld [vmem:[%s0 + $0x1a4] sm:$0xff]
  %v85 = vld [vmem:[%s0 + $0x1ac] sm:$0xff]
  %v86 = vld [vmem:[%s0 + $0x1b4] sm:$0xf]
  %v87 = vld [vmem:[%s0 + $0x1b8] sm:$0xff]
  %v88 = vld [vmem:[%s0 + $0x1c0] sm:$0xff]
  %v89 = vld [vmem:[%s0 + $0x1c8] sm:$0xf]
  %v90 = vld [vmem:[%s0 + $0x1cc] sm:$0xff]
  %v91 = vld [vmem:[%s0 + $0x1d4] sm:$0xff]
  %v92 = vld [vmem:[%s0 + $0x1dc] sm:$0xf]
  %v93 = vld [vmem:[%s0 + $0x1e0] sm:$0xff]
  %v94 = vld [vmem:[%s0 + $0x1e8] sm:$0xff]
  %v95 = vld [vmem:[%s0 + $0x1f0] sm:$0xf]
  %v96 = vld [vmem:[%s0 + $0x1f4] sm:$0xff]
  %v97 = vld [vmem:[%s0 + $0x1fc] sm:$0xff]
  %v98 = vld [vmem:[%s0 + $0x204] sm:$0xf]
  %v99 = vld [vmem:[%s0 + $0x208] sm:$0xff]
  %v100 = vld [vmem:[%s0 + $0x210] sm:$0xff]
  %v101 = vld [vmem:[%s0 + $0x218] sm:$0xf]
  %v102 = vld [vmem:[%s0 + $0x21c] sm:$0xff]
  %v103 = vld [vmem:[%s0 + $0x224] sm:$0xff]
  %v104 = vld [vmem:[%s0 + $0x22c] sm:$0xf]
  %v105 = vld [vmem:[%s0 + $0x230] sm:$0xff]
  %v106 = vld [vmem:[%s0 + $0x238] sm:$0xff]
  %v107 = vld [vmem:[%s0 + $0x240] sm:$0xf]
  %v108 = vld [vmem:[%s0 + $0x244] sm:$0xff]
  %v109 = vld [vmem:[%s0 + $0x24c] sm:$0xff]
  %v110 = vld [vmem:[%s0 + $0x254] sm:$0xf]
  %v111 = vld [vmem:[%s0 + $0x258] sm:$0xff]
  %v112 = vld [vmem:[%s0 + $0x260] sm:$0xff]
  %v113 = vld [vmem:[%s0 + $0x268] sm:$0xf]
  %v114 = vld [vmem:[%s0 + $0x26c] sm:$0xff]
  %v115 = vld [vmem:[%s0 + $0x274] sm:$0xff]
  %v116 = vld [vmem:[%s0 + $0x27c] sm:$0xf]
  %v117 = vld [vmem:[%s0 + $0x280] sm:$0xff]
  %v118 = vld [vmem:[%s0 + $0x288] sm:$0xff]
  %v119 = vld [vmem:[%s0 + $0x290] sm:$0xf]
  %v120 = vld [vmem:[%s0 + $0x294] sm:$0xff]
  %v121 = vld [vmem:[%s0 + $0x29c] sm:$0xff]
  %v122 = vld [vmem:[%s0 + $0x2a4] sm:$0xf]
  %v123 = vld [vmem:[%s0 + $0x2a8] sm:$0xff]
  %v124 = vld [vmem:[%s0 + $0x2b0] sm:$0xff]
  %v125 = vld [vmem:[%s0 + $0x2b8] sm:$0xf]
  %v126 = vld [vmem:[%s0 + $0x2bc] sm:$0xff]
  %v127 = vld [vmem:[%s0 + $0x2c4] sm:$0xff]
  %v128 = vld [vmem:[%s0 + $0x2cc] sm:$0xf]
  %v129 = vld [vmem:[%s0 + $0x2d0] sm:$0xff]
  %v130 = vld [vmem:[%s0 + $0x2d8] sm:$0xff]
  %v131 = vld [vmem:[%s0 + $0x2e0] sm:$0xf]
  %v132 = vld [vmem:[%s0 + $0x2e4] sm:$0xff]
  %v133 = vld [vmem:[%s0 + $0x2ec] sm:$0xff]
  %v134 = vld [vmem:[%s0 + $0x2f4] sm:$0xf]
  %v135 = vld [vmem:[%s0 + $0x2f8] sm:$0xff]
  %v136 = vld [vmem:[%s0 + $0x300] sm:$0xff]
  %v137 = vld [vmem:[%s0 + $0x308] sm:$0xf]
  %v138 = vld [vmem:[%s0 + $0x30c] sm:$0xff]
  %v139 = vld [vmem:[%s0 + $0x314] sm:$0xff]
  %v140 = vld [vmem:[%s0 + $0x31c] sm:$0xf]
  %v141 = vld [vmem:[%s0 + $0x320] sm:$0xff]
  %v142 = vld [vmem:[%s0 + $0x328] sm:$0xff]
  %v143 = vld [vmem:[%s0 + $0x330] sm:$0xf]
  %v144 = vld [vmem:[%s0 + $0x334] sm:$0xff]
  %v145 = vld [vmem:[%s0 + $0x33c] sm:$0xff]
  %v146 = vld [vmem:[%s0 + $0x344] sm:$0xf]
  %v147 = vld [vmem:[%s0 + $0x348] sm:$0xff]
  %v148 = vld [vmem:[%s0 + $0x350] sm:$0xff]
  %v149 = vld [vmem:[%s0 + $0x358] sm:$0xf]
  %v150 = vld [vmem:[%s0 + $0x35c] sm:$0xff]
  %v151 = vld [vmem:[%s0 + $0x364] sm:$0xff]
  %v152 = vld [vmem:[%s0 + $0x36c] sm:$0xf]
  %v153 = vld [vmem:[%s0 + $0x370] sm:$0xff]
  %v154 = vld [vmem:[%s0 + $0x378] sm:$0xff]
  %v155 = vld [vmem:[%s0 + $0x380] sm:$0xf]
  %v156 = vld [vmem:[%s0 + $0x384] sm:$0xff]
  %v157 = vld [vmem:[%s0 + $0x38c] sm:$0xff]
  %v158 = vld [vmem:[%s0 + $0x394] sm:$0xf]
  %v159 = vld [vmem:[%s0 + $0x398] sm:$0xff]
  %v160 = vld [vmem:[%s0 + $0x3a0] sm:$0xff]
  %v161 = vld [vmem:[%s0 + $0x3a8] sm:$0xf]
  %v162 = vld [vmem:[%s0 + $0x3ac] sm:$0xff]
  %v163 = vld [vmem:[%s0 + $0x3b4] sm:$0xff]
  %v164 = vld [vmem:[%s0 + $0x3bc] sm:$0xf]
  %v165 = vld [vmem:[%s0 + $0x3c0] sm:$0xff]
  %v166 = vld [vmem:[%s0 + $0x3c8] sm:$0xff]
  %v167 = vld [vmem:[%s0 + $0x3d0] sm:$0xf]
  %v168 = vld [vmem:[%s0 + $0x3d4] sm:$0xff]
  %v169 = vld [vmem:[%s0 + $0x3dc] sm:$0xff]
  %v170 = vld [vmem:[%s0 + $0x3e4] sm:$0xf]
  %v171 = vld [vmem:[%s0 + $0x3e8] sm:$0xff]
  %v172 = vld [vmem:[%s0 + $0x3f0] sm:$0xff]
  %v173 = vld [vmem:[%s0 + $0x3f8] sm:$0xf]
  %v174 = vld [vmem:[%s0 + $0x3fc] sm:$0xff]
  %v175 = vld [vmem:[%s0 + $0x404] sm:$0xff]
  %v176 = vld [vmem:[%s0 + $0x40c] sm:$0xf]
  %v177 = vld [vmem:[%s0 + $0x410] sm:$0xff]
  %v178 = vld [vmem:[%s0 + $0x418] sm:$0xff]
  %v179 = vld [vmem:[%s0 + $0x420] sm:$0xf]
  %v180 = vld [vmem:[%s0 + $0x424] sm:$0xff]
  %v181 = vld [vmem:[%s0 + $0x42c] sm:$0xff]
  %v182 = vld [vmem:[%s0 + $0x434] sm:$0xf]
  %v183 = vld [vmem:[%s0 + $0x438] sm:$0xff]
  %v184 = vld [vmem:[%s0 + $0x440] sm:$0xff]
  %v185 = vld [vmem:[%s0 + $0x448] sm:$0xf]
  %v186 = vld [vmem:[%s0 + $0x44c] sm:$0xff]
  %v187 = vld [vmem:[%s0 + $0x454] sm:$0xff]
  %v188 = vld [vmem:[%s0 + $0x45c] sm:$0xf]
  %v189 = vld [vmem:[%s0 + $0x460] sm:$0x11]
  %v190 = vld [vmem:[%s0 + $0x468] sm:$0x11]
  %v191 = vld [vmem:[%s0 + $0x470] sm:$0x1]
  %v192 = vld [vmem:[%s1] sm:$0xf]
  %v193 = vld [vmem:[%s1 + $0x4] sm:$0xf]
  %v194 = vld [vmem:[%s1 + $0x8] sm:$0xf]
  %v195 = vld [vmem:[%s1 + $0xc] sm:$0xf]
  %v196 = vld [vmem:[%s1 + $0x10] sm:$0xf]
  %v197 = vld [vmem:[%s1 + $0x14] sm:$0xf]
  %v198 = vld [vmem:[%s1 + $0x18] sm:$0xf]
  %v199 = vld [vmem:[%s1 + $0x1c] sm:$0xf]
  %v200 = vld [vmem:[%s1 + $0x20] sm:$0xf]
  %v201 = vld [vmem:[%s1 + $0x24] sm:$0xf]
  %v202 = vld [vmem:[%s1 + $0x28] sm:$0xf]
  %v203 = vld [vmem:[%s1 + $0x2c] sm:$0xf]
  %v204 = vld [vmem:[%s1 + $0x30] sm:$0xf]
  %v205 = vld [vmem:[%s1 + $0x34] sm:$0xf]
  %v206 = vld [vmem:[%s1 + $0x38] sm:$0xf]
  %v207 = vld [vmem:[%s1 + $0x3c] sm:$0xf]
  %v208 = vld [vmem:[%s1 + $0x40] sm:$0xf]
  %v209 = vld [vmem:[%s1 + $0x44] sm:$0xf]
  %v210 = vld [vmem:[%s1 + $0x48] sm:$0xf]
  %v211 = vld [vmem:[%s1 + $0x4c] sm:$0xf]
  %v212 = vld [vmem:[%s1 + $0x50] sm:$0xf]
  %v213 = vld [vmem:[%s1 + $0x54] sm:$0xf]
  %v214 = vld [vmem:[%s1 + $0x58] sm:$0xf]
  %v215 = vld [vmem:[%s1 + $0x5c] sm:$0xf]
  %v216 = vld [vmem:[%s1 + $0x60] sm:$0xf]
  %v217 = vld [vmem:[%s1 + $0x64] sm:$0xf]
  %v218 = vld [vmem:[%s1 + $0x68] sm:$0xf]
  %v219 = vld [vmem:[%s1 + $0x6c] sm:$0xf]
  %v220 = vld [vmem:[%s1 + $0x70] sm:$0xf]
  %v221 = vld [vmem:[%s1 + $0x74] sm:$0xf]
  %v222 = vld [vmem:[%s1 + $0x78] sm:$0xf]
  %v223 = vld [vmem:[%s1 + $0x7c] sm:$0xf]
  %v224 = vld [vmem:[%s1 + $0x80] sm:$0xf]
  %v225 = vld [vmem:[%s1 + $0x84] sm:$0xf]
  %v226 = vld [vmem:[%s1 + $0x88] sm:$0xf]
  %v227 = vld [vmem:[%s1 + $0x8c] sm:$0xf]
  %v228 = vld [vmem:[%s1 + $0x90] sm:$0xf]
  %v229 = vld [vmem:[%s1 + $0x94] sm:$0xf]
  %v230 = vld [vmem:[%s1 + $0x98] sm:$0xf]
  %v231 = vld [vmem:[%s1 + $0x9c] sm:$0xf]
  %v232 = vld [vmem:[%s1 + $0xa0] sm:$0xf]
  %v233 = vld [vmem:[%s1 + $0xa4] sm:$0xf]
  %v234 = vld [vmem:[%s1 + $0xa8] sm:$0xf]
  %v235 = vld [vmem:[%s1 + $0xac] sm:$0xf]
  %v236 = vld [vmem:[%s1 + $0xb0] sm:$0xf]
  %v237 = vld [vmem:[%s1 + $0xb4] sm:$0xf]
  %v238 = vld [vmem:[%s1 + $0xb8] sm:$0xf]
  %v239 = vld [vmem:[%s1 + $0xbc] sm:$0xf]
  %v240 = vld [vmem:[%s1 + $0xc0] sm:$0xf]
  %v241 = vld [vmem:[%s1 + $0xc4] sm:$0xf]
  %v242 = vld [vmem:[%s1 + $0xc8] sm:$0xf]
  %v243 = vld [vmem:[%s1 + $0xcc] sm:$0xf]
  %v244 = vld [vmem:[%s1 + $0xd0] sm:$0xf]
  %v245 = vld [vmem:[%s1 + $0xd4] sm:$0xf]
  %v246 = vld [vmem:[%s1 + $0xd8] sm:$0xf]
  %v247 = vld [vmem:[%s1 + $0xdc] sm:$0xf]
  %v248 = vld [vmem:[%s1 + $0xe0] sm:$0xf]
  %v249 = vld [vmem:[%s1 + $0xe4] sm:$0xf]
  %v250 = vld [vmem:[%s1 + $0xe8] sm:$0xf]
  %v251 = vld [vmem:[%s1 + $0xec] sm:$0xf]
  %v252 = vld [vmem:[%s1 + $0xf0] sm:$0xf]
  %v253 = vld [vmem:[%s1 + $0xf4] sm:$0xf]
  %v254 = vld [vmem:[%s1 + $0xf8] sm:$0xf]
  %v255 = vld [vmem:[%s1 + $0xfc] sm:$0xf]
  %v256 = vld [vmem:[%s1 + $0x100] sm:$0xf]
  %v257 = vld [vmem:[%s1 + $0x104] sm:$0xf]
  %v258 = vld [vmem:[%s1 + $0x108] sm:$0xf]
  %v259 = vld [vmem:[%s1 + $0x10c] sm:$0xf]
  %v260 = vld [vmem:[%s1 + $0x110] sm:$0xf]
  %v261 = vld [vmem:[%s1 + $0x114] sm:$0xf]
  %v262 = vld [vmem:[%s1 + $0x118] sm:$0xf]
  %v263 = vld [vmem:[%s1 + $0x11c] sm:$0xf]
  %v264 = vld [vmem:[%s2] sm:$0x1]
  %v266 = vperm.slane %v264, 0
  %v439 = vunpack.c.l.b16 %v21
  %v440 = vunpack.c.h.b16 %v21
  %v441 = vunpack.c.l.b16 %v22
  %v442 = vunpack.c.h.b16 %v22
  %v443 = vunpack.c.l.b16 %v23
  %v444 = vunpack.c.l.b16 %v24
  %v445 = vunpack.c.h.b16 %v24
  %v446 = vunpack.c.l.b16 %v25
  %v447 = vunpack.c.h.b16 %v25
  %v448 = vunpack.c.l.b16 %v26
  %v449 = vunpack.c.l.b16 %v27
  %v450 = vunpack.c.h.b16 %v27
  %v451 = vunpack.c.l.b16 %v28
  %v452 = vunpack.c.h.b16 %v28
  %v453 = vunpack.c.l.b16 %v29
  %v454 = vunpack.c.l.b16 %v30
  %v455 = vunpack.c.h.b16 %v30
  %v456 = vunpack.c.l.b16 %v31
  %v457 = vunpack.c.h.b16 %v31
  %v458 = vunpack.c.l.b16 %v32
  %v459 = vunpack.c.l.b16 %v33
  %v460 = vunpack.c.h.b16 %v33
  %v461 = vunpack.c.l.b16 %v34
  %v462 = vunpack.c.h.b16 %v34
  %v463 = vunpack.c.l.b16 %v35
  %v464 = vunpack.c.l.b16 %v36
  %v465 = vunpack.c.h.b16 %v36
  %v466 = vunpack.c.l.b16 %v37
  %v467 = vunpack.c.h.b16 %v37
  %v468 = vunpack.c.l.b16 %v38
  %v469 = vunpack.c.l.b16 %v39
  %v470 = vunpack.c.h.b16 %v39
  %v471 = vunpack.c.l.b16 %v40
  %v472 = vunpack.c.h.b16 %v40
  %v473 = vunpack.c.l.b16 %v41
  %v474 = vunpack.c.l.b16 %v42
  %v475 = vunpack.c.h.b16 %v42
  %v476 = vunpack.c.l.b16 %v43
  %v477 = vunpack.c.h.b16 %v43
  %v478 = vunpack.c.l.b16 %v44
  %v479 = vunpack.c.l.b16 %v45
  %v480 = vunpack.c.h.b16 %v45
  %v481 = vunpack.c.l.b16 %v46
  %v482 = vunpack.c.h.b16 %v46
  %v483 = vunpack.c.l.b16 %v47
  %v484 = vunpack.c.l.b16 %v48
  %v485 = vunpack.c.h.b16 %v48
  %v486 = vunpack.c.l.b16 %v49
  %v487 = vunpack.c.h.b16 %v49
  %v488 = vunpack.c.l.b16 %v50
  %v489 = vunpack.c.l.b16 %v51
  %v490 = vunpack.c.h.b16 %v51
  %v491 = vunpack.c.l.b16 %v52
  %v492 = vunpack.c.h.b16 %v52
  %v493 = vunpack.c.l.b16 %v53
  %v494 = vunpack.c.l.b16 %v54
  %v495 = vunpack.c.h.b16 %v54
  %v496 = vunpack.c.l.b16 %v55
  %v497 = vunpack.c.h.b16 %v55
  %v498 = vunpack.c.l.b16 %v56
  %v499 = vunpack.c.l.b16 %v57
  %v500 = vunpack.c.h.b16 %v57
  %v501 = vunpack.c.l.b16 %v58
  %v502 = vunpack.c.h.b16 %v58
  %v503 = vunpack.c.l.b16 %v59
  %v504 = vunpack.c.l.b16 %v60
  %v505 = vunpack.c.h.b16 %v60
  %v506 = vunpack.c.l.b16 %v61
  %v507 = vunpack.c.h.b16 %v61
  %v508 = vunpack.c.l.b16 %v62
  %v509 = vunpack.c.l.b16 %v63
  %v510 = vunpack.c.h.b16 %v63
  %v511 = vunpack.c.l.b16 %v64
  %v512 = vunpack.c.h.b16 %v64
  %v513 = vunpack.c.l.b16 %v65
  %v514 = vunpack.c.l.b16 %v66
  %v515 = vunpack.c.h.b16 %v66
  %v516 = vunpack.c.l.b16 %v67
  %v517 = vunpack.c.h.b16 %v67
  %v518 = vunpack.c.l.b16 %v68
  %v519 = vunpack.c.l.b16 %v69
  %v520 = vunpack.c.h.b16 %v69
  %v521 = vunpack.c.l.b16 %v70
  %v522 = vunpack.c.h.b16 %v70
  %v523 = vunpack.c.l.b16 %v71
  %v524 = vunpack.c.l.b16 %v72
  %v525 = vunpack.c.h.b16 %v72
  %v526 = vunpack.c.l.b16 %v73
  %v527 = vunpack.c.h.b16 %v73
  %v528 = vunpack.c.l.b16 %v74
  %v529 = vunpack.c.l.b16 %v75
  %v530 = vunpack.c.h.b16 %v75
  %v531 = vunpack.c.l.b16 %v76
  %v532 = vunpack.c.h.b16 %v76
  %v533 = vunpack.c.l.b16 %v77
  %v534 = vunpack.c.l.b16 %v78
  %v535 = vunpack.c.h.b16 %v78
  %v536 = vunpack.c.l.b16 %v79
  %v537 = vunpack.c.h.b16 %v79
  %v538 = vunpack.c.l.b16 %v80
  %v539 = vunpack.c.l.b16 %v81
  %v540 = vunpack.c.h.b16 %v81
  %v541 = vunpack.c.l.b16 %v82
  %v542 = vunpack.c.h.b16 %v82
  %v543 = vunpack.c.l.b16 %v83
  %v544 = vunpack.c.l.b16 %v84
  %v545 = vunpack.c.h.b16 %v84
  %v546 = vunpack.c.l.b16 %v85
  %v547 = vunpack.c.h.b16 %v85
  %v548 = vunpack.c.l.b16 %v86
  %v549 = vunpack.c.l.b16 %v87
  %v550 = vunpack.c.h.b16 %v87
  %v551 = vunpack.c.l.b16 %v88
  %v552 = vunpack.c.h.b16 %v88
  %v553 = vunpack.c.l.b16 %v89
  %v554 = vunpack.c.l.b16 %v90
  %v555 = vunpack.c.h.b16 %v90
  %v556 = vunpack.c.l.b16 %v91
  %v557 = vunpack.c.h.b16 %v91
  %v558 = vunpack.c.l.b16 %v92
  %v559 = vunpack.c.l.b16 %v93
  %v560 = vunpack.c.h.b16 %v93
  %v561 = vunpack.c.l.b16 %v94
  %v562 = vunpack.c.h.b16 %v94
  %v563 = vunpack.c.l.b16 %v95
  %v564 = vunpack.c.l.b16 %v96
  %v565 = vunpack.c.h.b16 %v96
  %v566 = vunpack.c.l.b16 %v97
  %v567 = vunpack.c.h.b16 %v97
  %v568 = vunpack.c.l.b16 %v98
  %v569 = vunpack.c.l.b16 %v99
  %v570 = vunpack.c.h.b16 %v99
  %v571 = vunpack.c.l.b16 %v100
  %v572 = vunpack.c.h.b16 %v100
  %v573 = vunpack.c.l.b16 %v101
  %v574 = vunpack.c.l.b16 %v102
  %v575 = vunpack.c.h.b16 %v102
  %v576 = vunpack.c.l.b16 %v103
  %v577 = vunpack.c.h.b16 %v103
  %v578 = vunpack.c.l.b16 %v104
  %v579 = vunpack.c.l.b16 %v105
  %v580 = vunpack.c.h.b16 %v105
  %v581 = vunpack.c.l.b16 %v106
  %v582 = vunpack.c.h.b16 %v106
  %v583 = vunpack.c.l.b16 %v107
  %v584 = vunpack.c.l.b16 %v108
  %v585 = vunpack.c.h.b16 %v108
  %v586 = vunpack.c.l.b16 %v109
  %v587 = vunpack.c.h.b16 %v109
  %v588 = vunpack.c.l.b16 %v110
  %v589 = vunpack.c.l.b16 %v111
  %v590 = vunpack.c.h.b16 %v111
  %v591 = vunpack.c.l.b16 %v112
  %v592 = vunpack.c.h.b16 %v112
  %v593 = vunpack.c.l.b16 %v113
  %v594 = vunpack.c.l.b16 %v114
  %v595 = vunpack.c.h.b16 %v114
  %v596 = vunpack.c.l.b16 %v115
  %v597 = vunpack.c.h.b16 %v115
  %v598 = vunpack.c.l.b16 %v116
  %v599 = vunpack.c.l.b16 %v117
  %v600 = vunpack.c.h.b16 %v117
  %v601 = vunpack.c.l.b16 %v118
  %v602 = vunpack.c.h.b16 %v118
  %v603 = vunpack.c.l.b16 %v119
  %v604 = vunpack.c.l.b16 %v120
  %v605 = vunpack.c.h.b16 %v120
  %v606 = vunpack.c.l.b16 %v121
  %v607 = vunpack.c.h.b16 %v121
  %v608 = vunpack.c.l.b16 %v122
  %v609 = vunpack.c.l.b16 %v123
  %v610 = vunpack.c.h.b16 %v123
  %v611 = vunpack.c.l.b16 %v124
  %v612 = vunpack.c.h.b16 %v124
  %v613 = vunpack.c.l.b16 %v125
  %v614 = vunpack.c.l.b16 %v126
  %v615 = vunpack.c.h.b16 %v126
  %v616 = vunpack.c.l.b16 %v127
  %v617 = vunpack.c.h.b16 %v127
  %v618 = vunpack.c.l.b16 %v128
  %v619 = vunpack.c.l.b16 %v129
  %v620 = vunpack.c.h.b16 %v129
  %v621 = vunpack.c.l.b16 %v130
  %v622 = vunpack.c.h.b16 %v130
  %v623 = vunpack.c.l.b16 %v131
  %v624 = vunpack.c.l.b16 %v132
  %v625 = vunpack.c.h.b16 %v132
  %v626 = vunpack.c.l.b16 %v133
  %v627 = vunpack.c.h.b16 %v133
  %v628 = vunpack.c.l.b16 %v134
  %v629 = vunpack.c.l.b16 %v135
  %v630 = vunpack.c.h.b16 %v135
  %v631 = vunpack.c.l.b16 %v136
  %v632 = vunpack.c.h.b16 %v136
  %v633 = vunpack.c.l.b16 %v137
  %v634 = vunpack.c.l.b16 %v138
  %v635 = vunpack.c.h.b16 %v138
  %v636 = vunpack.c.l.b16 %v139
  %v637 = vunpack.c.h.b16 %v139
  %v638 = vunpack.c.l.b16 %v140
  %v639 = vunpack.c.l.b16 %v141
  %v640 = vunpack.c.h.b16 %v141
  %v641 = vunpack.c.l.b16 %v142
  %v642 = vunpack.c.h.b16 %v142
  %v643 = vunpack.c.l.b16 %v143
  %v644 = vunpack.c.l.b16 %v144
  %v645 = vunpack.c.h.b16 %v144
  %v646 = vunpack.c.l.b16 %v145
  %v647 = vunpack.c.h.b16 %v145
  %v648 = vunpack.c.l.b16 %v146
  %v649 = vunpack.c.l.b16 %v147
  %v650 = vunpack.c.h.b16 %v147
  %v651 = vunpack.c.l.b16 %v148
  %v652 = vunpack.c.h.b16 %v148
  %v653 = vunpack.c.l.b16 %v149
  %v654 = vunpack.c.l.b16 %v150
  %v655 = vunpack.c.h.b16 %v150
  %v656 = vunpack.c.l.b16 %v151
  %v657 = vunpack.c.h.b16 %v151
  %v658 = vunpack.c.l.b16 %v152
  %v659 = vunpack.c.l.b16 %v153
  %v660 = vunpack.c.h.b16 %v153
  %v661 = vunpack.c.l.b16 %v154
  %v662 = vunpack.c.h.b16 %v154
  %v663 = vunpack.c.l.b16 %v155
  %v664 = vunpack.c.l.b16 %v156
  %v665 = vunpack.c.h.b16 %v156
  %v666 = vunpack.c.l.b16 %v157
  %v667 = vunpack.c.h.b16 %v157
  %v668 = vunpack.c.l.b16 %v158
  %v669 = vunpack.c.l.b16 %v159
  %v670 = vunpack.c.h.b16 %v159
  %v671 = vunpack.c.l.b16 %v160
  %v672 = vunpack.c.h.b16 %v160
  %v673 = vunpack.c.l.b16 %v161
  %v674 = vunpack.c.l.b16 %v162
  %v675 = vunpack.c.h.b16 %v162
  %v676 = vunpack.c.l.b16 %v163
  %v677 = vunpack.c.h.b16 %v163
  %v678 = vunpack.c.l.b16 %v164
  %v679 = vunpack.c.l.b16 %v165
  %v680 = vunpack.c.h.b16 %v165
  %v681 = vunpack.c.l.b16 %v166
  %v682 = vunpack.c.h.b16 %v166
  %v683 = vunpack.c.l.b16 %v167
  %v684 = vunpack.c.l.b16 %v168
  %v685 = vunpack.c.h.b16 %v168
  %v686 = vunpack.c.l.b16 %v169
  %v687 = vunpack.c.h.b16 %v169
  %v688 = vunpack.c.l.b16 %v170
  %v689 = vunpack.c.l.b16 %v171
  %v690 = vunpack.c.h.b16 %v171
  %v691 = vunpack.c.l.b16 %v172
  %v692 = vunpack.c.h.b16 %v172
  %v693 = vunpack.c.l.b16 %v173
  %v694 = vunpack.c.l.b16 %v174
  %v695 = vunpack.c.h.b16 %v174
  %v696 = vunpack.c.l.b16 %v175
  %v697 = vunpack.c.h.b16 %v175
  %v698 = vunpack.c.l.b16 %v176
  %v699 = vunpack.c.l.b16 %v177
  %v700 = vunpack.c.h.b16 %v177
  %v701 = vunpack.c.l.b16 %v178
  %v702 = vunpack.c.h.b16 %v178
  %v703 = vunpack.c.l.b16 %v179
  %v704 = vunpack.c.l.b16 %v180
  %v705 = vunpack.c.h.b16 %v180
  %v706 = vunpack.c.l.b16 %v181
  %v707 = vunpack.c.h.b16 %v181
  %v708 = vunpack.c.l.b16 %v182
  %v709 = vunpack.c.l.b16 %v183
  %v710 = vunpack.c.h.b16 %v183
  %v711 = vunpack.c.l.b16 %v184
  %v712 = vunpack.c.h.b16 %v184
  %v713 = vunpack.c.l.b16 %v185
  %v714 = vunpack.c.l.b16 %v186
  %v715 = vunpack.c.h.b16 %v186
  %v716 = vunpack.c.l.b16 %v187
  %v717 = vunpack.c.h.b16 %v187
  %v718 = vunpack.c.l.b16 %v188
  %v719 = vunpack.c.l.b16 %v189
  %v720 = vunpack.c.h.b16 %v189
  %v721 = vunpack.c.l.b16 %v190
  %v722 = vunpack.c.h.b16 %v190
  %v723 = vunpack.c.l.b16 %v191
  %v724 = vpack.c.b16 %v444, %v439
  %v725 = vpack.c.b16 %v445, %v440
  %v726 = vpack.c.b16 %v446, %v441
  %v727 = vpack.c.b16 %v447, %v442
  %v728 = vpack.c.b16 %v448, %v443
  %v729 = vpack.c.b16 %v454, %v449
  %v730 = vpack.c.b16 %v455, %v450
  %v731 = vpack.c.b16 %v456, %v451
  %v732 = vpack.c.b16 %v457, %v452
  %v733 = vpack.c.b16 %v458, %v453
  %v734 = vpack.c.b16 %v464, %v459
  %v735 = vpack.c.b16 %v465, %v460
  %v736 = vpack.c.b16 %v466, %v461
  %v737 = vpack.c.b16 %v467, %v462
  %v738 = vpack.c.b16 %v468, %v463
  %v739 = vpack.c.b16 %v474, %v469
  %v740 = vpack.c.b16 %v475, %v470
  %v741 = vpack.c.b16 %v476, %v471
  %v742 = vpack.c.b16 %v477, %v472
  %v743 = vpack.c.b16 %v478, %v473
  %v744 = vpack.c.b16 %v484, %v479
  %v745 = vpack.c.b16 %v485, %v480
  %v746 = vpack.c.b16 %v486, %v481
  %v747 = vpack.c.b16 %v487, %v482
  %v748 = vpack.c.b16 %v488, %v483
  %v749 = vpack.c.b16 %v494, %v489
  %v750 = vpack.c.b16 %v495, %v490
  %v751 = vpack.c.b16 %v496, %v491
  %v752 = vpack.c.b16 %v497, %v492
  %v753 = vpack.c.b16 %v498, %v493
  %v754 = vpack.c.b16 %v504, %v499
  %v755 = vpack.c.b16 %v505, %v500
  %v756 = vpack.c.b16 %v506, %v501
  %v757 = vpack.c.b16 %v507, %v502
  %v758 = vpack.c.b16 %v508, %v503
  %v759 = vpack.c.b16 %v514, %v509
  %v760 = vpack.c.b16 %v515, %v510
  %v761 = vpack.c.b16 %v516, %v511
  %v762 = vpack.c.b16 %v517, %v512
  %v763 = vpack.c.b16 %v518, %v513
  %v764 = vpack.c.b16 %v524, %v519
  %v765 = vpack.c.b16 %v525, %v520
  %v766 = vpack.c.b16 %v526, %v521
  %v767 = vpack.c.b16 %v527, %v522
  %v768 = vpack.c.b16 %v528, %v523
  %v769 = vpack.c.b16 %v534, %v529
  %v770 = vpack.c.b16 %v535, %v530
  %v771 = vpack.c.b16 %v536, %v531
  %v772 = vpack.c.b16 %v537, %v532
  %v773 = vpack.c.b16 %v538, %v533
  %v774 = vpack.c.b16 %v544, %v539
  %v775 = vpack.c.b16 %v545, %v540
  %v776 = vpack.c.b16 %v546, %v541
  %v777 = vpack.c.b16 %v547, %v542
  %v778 = vpack.c.b16 %v548, %v543
  %v779 = vpack.c.b16 %v554, %v549
  %v780 = vpack.c.b16 %v555, %v550
  %v781 = vpack.c.b16 %v556, %v551
  %v782 = vpack.c.b16 %v557, %v552
  %v783 = vpack.c.b16 %v558, %v553
  %v784 = vpack.c.b16 %v564, %v559
  %v785 = vpack.c.b16 %v565, %v560
  %v786 = vpack.c.b16 %v566, %v561
  %v787 = vpack.c.b16 %v567, %v562
  %v788 = vpack.c.b16 %v568, %v563
  %v789 = vpack.c.b16 %v574, %v569
  %v790 = vpack.c.b16 %v575, %v570
  %v791 = vpack.c.b16 %v576, %v571
  %v792 = vpack.c.b16 %v577, %v572
  %v793 = vpack.c.b16 %v578, %v573
  %v794 = vpack.c.b16 %v584, %v579
  %v795 = vpack.c.b16 %v585, %v580
  %v796 = vpack.c.b16 %v586, %v581
  %v797 = vpack.c.b16 %v587, %v582
  %v798 = vpack.c.b16 %v588, %v583
  %v799 = vpack.c.b16 %v594, %v589
  %v800 = vpack.c.b16 %v595, %v590
  %v801 = vpack.c.b16 %v596, %v591
  %v802 = vpack.c.b16 %v597, %v592
  %v803 = vpack.c.b16 %v598, %v593
  %v804 = vpack.c.b16 %v604, %v599
  %v805 = vpack.c.b16 %v605, %v600
  %v806 = vpack.c.b16 %v606, %v601
  %v807 = vpack.c.b16 %v607, %v602
  %v808 = vpack.c.b16 %v608, %v603
  %v809 = vpack.c.b16 %v614, %v609
  %v810 = vpack.c.b16 %v615, %v610
  %v811 = vpack.c.b16 %v616, %v611
  %v812 = vpack.c.b16 %v617, %v612
  %v813 = vpack.c.b16 %v618, %v613
  %v814 = vpack.c.b16 %v624, %v619
  %v815 = vpack.c.b16 %v625, %v620
  %v816 = vpack.c.b16 %v626, %v621
  %v817 = vpack.c.b16 %v627, %v622
  %v818 = vpack.c.b16 %v628, %v623
  %v819 = vpack.c.b16 %v634, %v629
  %v820 = vpack.c.b16 %v635, %v630
  %v821 = vpack.c.b16 %v636, %v631
  %v822 = vpack.c.b16 %v637, %v632
  %v823 = vpack.c.b16 %v638, %v633
  %v824 = vpack.c.b16 %v644, %v639
  %v825 = vpack.c.b16 %v645, %v640
  %v826 = vpack.c.b16 %v646, %v641
  %v827 = vpack.c.b16 %v647, %v642
  %v828 = vpack.c.b16 %v648, %v643
  %v829 = vpack.c.b16 %v654, %v649
  %v830 = vpack.c.b16 %v655, %v650
  %v831 = vpack.c.b16 %v656, %v651
  %v832 = vpack.c.b16 %v657, %v652
  %v833 = vpack.c.b16 %v658, %v653
  %v834 = vpack.c.b16 %v664, %v659
  %v835 = vpack.c.b16 %v665, %v660
  %v836 = vpack.c.b16 %v666, %v661
  %v837 = vpack.c.b16 %v667, %v662
  %v838 = vpack.c.b16 %v668, %v663
  %v839 = vpack.c.b16 %v674, %v669
  %v840 = vpack.c.b16 %v675, %v670
  %v841 = vpack.c.b16 %v676, %v671
  %v842 = vpack.c.b16 %v677, %v672
  %v843 = vpack.c.b16 %v678, %v673
  %v844 = vpack.c.b16 %v684, %v679
  %v845 = vpack.c.b16 %v685, %v680
  %v846 = vpack.c.b16 %v686, %v681
  %v847 = vpack.c.b16 %v687, %v682
  %v848 = vpack.c.b16 %v688, %v683
  %v849 = vpack.c.b16 %v694, %v689
  %v850 = vpack.c.b16 %v695, %v690
  %v851 = vpack.c.b16 %v696, %v691
  %v852 = vpack.c.b16 %v697, %v692
  %v853 = vpack.c.b16 %v698, %v693
  %v854 = vpack.c.b16 %v704, %v699
  %v855 = vpack.c.b16 %v705, %v700
  %v856 = vpack.c.b16 %v706, %v701
  %v857 = vpack.c.b16 %v707, %v702
  %v858 = vpack.c.b16 %v708, %v703
  %v859 = vpack.c.b16 %v714, %v709
  %v860 = vpack.c.b16 %v715, %v710
  %v861 = vpack.c.b16 %v716, %v711
  %v862 = vpack.c.b16 %v717, %v712
  %v863 = vpack.c.b16 %v718, %v713
  %v864 = vpack.c.b16 %v719, %v719
  %v865 = vpack.c.b16 %v720, %v720
  %v866 = vpack.c.b16 %v721, %v721
  %v867 = vpack.c.b16 %v722, %v722
  %v868 = vpack.c.b16 %v723, %v723
  %v1057 = vunpack.c.l.b16 %v192
  %v1058 = vunpack.c.l.b16 %v193
  %v1059 = vunpack.c.l.b16 %v194
  %v1060 = vunpack.c.l.b16 %v195
  %v1061 = vunpack.c.l.b16 %v196
  %v1062 = vunpack.c.l.b16 %v197
  %v1063 = vunpack.c.l.b16 %v198
  %v1064 = vunpack.c.l.b16 %v199
  %v1065 = vunpack.c.l.b16 %v200
  %v1066 = vunpack.c.l.b16 %v201
  %v1067 = vunpack.c.l.b16 %v202
  %v1068 = vunpack.c.l.b16 %v203
  %v1069 = vunpack.c.l.b16 %v204
  %v1070 = vunpack.c.l.b16 %v205
  %v1071 = vunpack.c.l.b16 %v206
  %v1072 = vunpack.c.l.b16 %v207
  %v1073 = vunpack.c.l.b16 %v208
  %v1074 = vunpack.c.l.b16 %v209
  %v1075 = vunpack.c.l.b16 %v210
  %v1076 = vunpack.c.l.b16 %v211
  %v1077 = vunpack.c.l.b16 %v212
  %v1078 = vunpack.c.l.b16 %v213
  %v1079 = vunpack.c.l.b16 %v214
  %v1080 = vunpack.c.l.b16 %v215
  %v1081 = vunpack.c.l.b16 %v216
  %v1082 = vunpack.c.l.b16 %v217
  %v1083 = vunpack.c.l.b16 %v218
  %v1084 = vunpack.c.l.b16 %v219
  %v1085 = vunpack.c.l.b16 %v220
  %v1086 = vunpack.c.l.b16 %v221
  %v1087 = vunpack.c.l.b16 %v222
  %v1088 = vunpack.c.l.b16 %v223
  %v1089 = vunpack.c.l.b16 %v224
  %v1090 = vunpack.c.l.b16 %v225
  %v1091 = vunpack.c.l.b16 %v226
  %v1092 = vunpack.c.l.b16 %v227
  %v1093 = vunpack.c.l.b16 %v228
  %v1094 = vunpack.c.l.b16 %v229
  %v1095 = vunpack.c.l.b16 %v230
  %v1096 = vunpack.c.l.b16 %v231
  %v1097 = vunpack.c.l.b16 %v232
  %v1098 = vunpack.c.l.b16 %v233
  %v1099 = vunpack.c.l.b16 %v234
  %v1100 = vunpack.c.l.b16 %v235
  %v1101 = vunpack.c.l.b16 %v236
  %v1102 = vunpack.c.l.b16 %v237
  %v1103 = vunpack.c.l.b16 %v238
  %v1104 = vunpack.c.l.b16 %v239
  %v1105 = vunpack.c.l.b16 %v240
  %v1106 = vunpack.c.l.b16 %v241
  %v1107 = vunpack.c.l.b16 %v242
  %v1108 = vunpack.c.l.b16 %v243
  %v1109 = vunpack.c.l.b16 %v244
  %v1110 = vunpack.c.l.b16 %v245
  %v1111 = vunpack.c.l.b16 %v246
  %v1112 = vunpack.c.l.b16 %v247
  %v1113 = vunpack.c.l.b16 %v248
  %v1114 = vunpack.c.l.b16 %v249
  %v1115 = vunpack.c.l.b16 %v250
  %v1116 = vunpack.c.l.b16 %v251
  %v1117 = vunpack.c.l.b16 %v252
  %v1118 = vunpack.c.l.b16 %v253
  %v1119 = vunpack.c.l.b16 %v254
  %v1120 = vunpack.c.l.b16 %v255
  %v1121 = vunpack.c.l.b16 %v256
  %v1122 = vunpack.c.l.b16 %v257
  %v1123 = vunpack.c.l.b16 %v258
  %v1124 = vunpack.c.l.b16 %v259
  %v1125 = vunpack.c.l.b16 %v260
  %v1126 = vunpack.c.l.b16 %v261
  %v1127 = vunpack.c.l.b16 %v262
  %v1128 = vunpack.c.l.b16 %v263
  %v1129 = vpack.c.b16 %v1058, %v1057
  %v1130 = vpack.c.b16 %v1060, %v1059
  %v1131 = vpack.c.b16 %v1062, %v1061
  %v1132 = vpack.c.b16 %v1064, %v1063
  %v1133 = vpack.c.b16 %v1066, %v1065
  %v1134 = vpack.c.b16 %v1068, %v1067
  %v1135 = vpack.c.b16 %v1070, %v1069
  %v1136 = vpack.c.b16 %v1072, %v1071
  %v1137 = vpack.c.b16 %v1074, %v1073
  %v1138 = vpack.c.b16 %v1076, %v1075
  %v1139 = vpack.c.b16 %v1078, %v1077
  %v1140 = vpack.c.b16 %v1080, %v1079
  %v1141 = vpack.c.b16 %v1082, %v1081
  %v1142 = vpack.c.b16 %v1084, %v1083
  %v1143 = vpack.c.b16 %v1086, %v1085
  %v1144 = vpack.c.b16 %v1088, %v1087
  %v1145 = vpack.c.b16 %v1090, %v1089
  %v1146 = vpack.c.b16 %v1092, %v1091
  %v1147 = vpack.c.b16 %v1094, %v1093
  %v1148 = vpack.c.b16 %v1096, %v1095
  %v1149 = vpack.c.b16 %v1098, %v1097
  %v1150 = vpack.c.b16 %v1100, %v1099
  %v1151 = vpack.c.b16 %v1102, %v1101
  %v1152 = vpack.c.b16 %v1104, %v1103
  %v1153 = vpack.c.b16 %v1106, %v1105
  %v1154 = vpack.c.b16 %v1108, %v1107
  %v1155 = vpack.c.b16 %v1110, %v1109
  %v1156 = vpack.c.b16 %v1112, %v1111
  %v1157 = vpack.c.b16 %v1114, %v1113
  %v1158 = vpack.c.b16 %v1116, %v1115
  %v1159 = vpack.c.b16 %v1118, %v1117
  %v1160 = vpack.c.b16 %v1120, %v1119
  %v1161 = vpack.c.b16 %v1122, %v1121
  %v1162 = vpack.c.b16 %v1124, %v1123
  %v1163 = vpack.c.b16 %v1126, %v1125
  %v1164 = vpack.c.b16 %v1128, %v1127
  %vm1201 = vcmask 523264
  %v1203 = vsel %vm1201, %v728, 0
  %v1206 = vsel %vm1201, %v733, 0
  %v1209 = vsel %vm1201, %v738, 0
  %v1212 = vsel %vm1201, %v743, 0
  %v1215 = vsel %vm1201, %v748, 0
  %v1218 = vsel %vm1201, %v753, 0
  %v1221 = vsel %vm1201, %v758, 0
  %v1224 = vsel %vm1201, %v763, 0
  %v1227 = vsel %vm1201, %v768, 0
  %v1230 = vsel %vm1201, %v773, 0
  %v1233 = vsel %vm1201, %v778, 0
  %v1236 = vsel %vm1201, %v783, 0
  %v1239 = vsel %vm1201, %v788, 0
  %v1242 = vsel %vm1201, %v793, 0
  %v1245 = vsel %vm1201, %v798, 0
  %v1248 = vsel %vm1201, %v803, 0
  %v1251 = vsel %vm1201, %v808, 0
  %v1254 = vsel %vm1201, %v813, 0
  %v1257 = vsel %vm1201, %v818, 0
  %v1260 = vsel %vm1201, %v823, 0
  %v1263 = vsel %vm1201, %v828, 0
  %v1266 = vsel %vm1201, %v833, 0
  %v1269 = vsel %vm1201, %v838, 0
  %v1272 = vsel %vm1201, %v843, 0
  %v1275 = vsel %vm1201, %v848, 0
  %v1278 = vsel %vm1201, %v853, 0
  %v1281 = vsel %vm1201, %v858, 0
  %v1284 = vsel %vm1201, %v863, 0
  %v1287 = vsel %vm1201, %v868, 0
  %1289 = vmatpush.bf16.msra.mxu0 %v1136
  %1290 = vmatpush.bf16.msra.mxu0 %v1135
  %1291 = vmatpush.bf16.msra.mxu0 %v1134
  %1292 = vmatpush.bf16.msra.mxu0 %v1133
  %1293 = vmatpush.bf16.msra.mxu0 %v1132
  %1294 = vmatpush.bf16.msra.mxu0 %v1131
  %1295 = vmatpush.bf16.msra.mxu0 %v1130
  %1296 = vmatpush.bf16.msra.mxu0 %v1129
  %1297 = vmatmul.bf16.gmra.mxu0 %v724
  %v1298 = vpop.f32.mrf.mxu0
  %v1299 = vadd.f32 %v266, %v1298
  %v1300 = vpop.f32.mrf.mxu0
  %v1301 = vadd.f32 %v266, %v1300
  %1302 = vmatmul.bf16.gmra.mxu0 %v729
  %v1303 = vpop.f32.mrf.mxu0
  %v1304 = vadd.f32 %v266, %v1303
  %v1305 = vpop.f32.mrf.mxu0
  %v1306 = vadd.f32 %v266, %v1305
  %1307 = vmatmul.bf16.gmra.mxu0 %v734
  %v1308 = vpop.f32.mrf.mxu0
  %v1309 = vadd.f32 %v266, %v1308
  %v1310 = vpop.f32.mrf.mxu0
  %v1311 = vadd.f32 %v266, %v1310
  %1312 = vmatmul.bf16.gmra.mxu0 %v739
  %v1313 = vpop.f32.mrf.mxu0
  %v1314 = vadd.f32 %v266, %v1313
  %v1315 = vpop.f32.mrf.mxu0
  %v1316 = vadd.f32 %v266, %v1315
  %1317 = vmatmul.bf16.gmra.mxu0 %v744
  %v1318 = vpop.f32.mrf.mxu0
  %v1319 = vadd.f32 %v266, %v1318
  %v1320 = vpop.f32.mrf.mxu0
  %v1321 = vadd.f32 %v266, %v1320
  %1322 = vmatmul.bf16.gmra.mxu0 %v749
  %v1323 = vpop.f32.mrf.mxu0
  %v1324 = vadd.f32 %v266, %v1323
  %v1325 = vpop.f32.mrf.mxu0
  %v1326 = vadd.f32 %v266, %v1325
  %1327 = vmatmul.bf16.gmra.mxu0 %v754
  %v1328 = vpop.f32.mrf.mxu0
  %v1329 = vadd.f32 %v266, %v1328
  %v1330 = vpop.f32.mrf.mxu0
  %v1331 = vadd.f32 %v266, %v1330
  %1332 = vmatmul.bf16.gmra.mxu0 %v759
  %v1333 = vpop.f32.mrf.mxu0
  %v1334 = vadd.f32 %v266, %v1333
  %v1335 = vpop.f32.mrf.mxu0
  %v1336 = vadd.f32 %v266, %v1335
  %1337 = vmatmul.bf16.gmra.mxu0 %v764
  %v1338 = vpop.f32.mrf.mxu0
  %v1339 = vadd.f32 %v266, %v1338
  %v1340 = vpop.f32.mrf.mxu0
  %v1341 = vadd.f32 %v266, %v1340
  %1342 = vmatmul.bf16.gmra.mxu0 %v769
  %v1343 = vpop.f32.mrf.mxu0
  %v1344 = vadd.f32 %v266, %v1343
  %v1345 = vpop.f32.mrf.mxu0
  %v1346 = vadd.f32 %v266, %v1345
  %1347 = vmatmul.bf16.gmra.mxu0 %v774
  %v1348 = vpop.f32.mrf.mxu0
  %v1349 = vadd.f32 %v266, %v1348
  %v1350 = vpop.f32.mrf.mxu0
  %v1351 = vadd.f32 %v266, %v1350
  %1352 = vmatmul.bf16.gmra.mxu0 %v779
  %v1353 = vpop.f32.mrf.mxu0
  %v1354 = vadd.f32 %v266, %v1353
  %v1355 = vpop.f32.mrf.mxu0
  %v1356 = vadd.f32 %v266, %v1355
  %1357 = vmatmul.bf16.gmra.mxu0 %v784
  %v1358 = vpop.f32.mrf.mxu0
  %v1359 = vadd.f32 %v266, %v1358
  %v1360 = vpop.f32.mrf.mxu0
  %v1361 = vadd.f32 %v266, %v1360
  %1362 = vmatmul.bf16.gmra.mxu0 %v789
  %v1363 = vpop.f32.mrf.mxu0
  %v1364 = vadd.f32 %v266, %v1363
  %v1365 = vpop.f32.mrf.mxu0
  %v1366 = vadd.f32 %v266, %v1365
  %1367 = vmatmul.bf16.gmra.mxu0 %v794
  %v1368 = vpop.f32.mrf.mxu0
  %v1369 = vadd.f32 %v266, %v1368
  %v1370 = vpop.f32.mrf.mxu0
  %v1371 = vadd.f32 %v266, %v1370
  %1372 = vmatmul.bf16.gmra.mxu0 %v799
  %v1373 = vpop.f32.mrf.mxu0
  %v1374 = vadd.f32 %v266, %v1373
  %v1375 = vpop.f32.mrf.mxu0
  %v1376 = vadd.f32 %v266, %v1375
  %1377 = vmatmul.bf16.gmra.mxu0 %v804
  %v1378 = vpop.f32.mrf.mxu0
  %v1379 = vadd.f32 %v266, %v1378
  %v1380 = vpop.f32.mrf.mxu0
  %v1381 = vadd.f32 %v266, %v1380
  %1382 = vmatmul.bf16.gmra.mxu0 %v809
  %v1383 = vpop.f32.mrf.mxu0
  %v1384 = vadd.f32 %v266, %v1383
  %v1385 = vpop.f32.mrf.mxu0
  %v1386 = vadd.f32 %v266, %v1385
  %1387 = vmatmul.bf16.gmra.mxu0 %v814
  %v1388 = vpop.f32.mrf.mxu0
  %v1389 = vadd.f32 %v266, %v1388
  %v1390 = vpop.f32.mrf.mxu0
  %v1391 = vadd.f32 %v266, %v1390
  %1392 = vmatmul.bf16.gmra.mxu0 %v819
  %v1393 = vpop.f32.mrf.mxu0
  %v1394 = vadd.f32 %v266, %v1393
  %v1395 = vpop.f32.mrf.mxu0
  %v1396 = vadd.f32 %v266, %v1395
  %1397 = vmatmul.bf16.gmra.mxu0 %v824
  %v1398 = vpop.f32.mrf.mxu0
  %v1399 = vadd.f32 %v266, %v1398
  %v1400 = vpop.f32.mrf.mxu0
  %v1401 = vadd.f32 %v266, %v1400
  %1402 = vmatmul.bf16.gmra.mxu0 %v829
  %v1403 = vpop.f32.mrf.mxu0
  %v1404 = vadd.f32 %v266, %v1403
  %v1405 = vpop.f32.mrf.mxu0
  %v1406 = vadd.f32 %v266, %v1405
  %1407 = vmatmul.bf16.gmra.mxu0 %v834
  %v1408 = vpop.f32.mrf.mxu0
  %v1409 = vadd.f32 %v266, %v1408
  %v1410 = vpop.f32.mrf.mxu0
  %v1411 = vadd.f32 %v266, %v1410
  %1412 = vmatmul.bf16.gmra.mxu0 %v839
  %v1413 = vpop.f32.mrf.mxu0
  %v1414 = vadd.f32 %v266, %v1413
  %v1415 = vpop.f32.mrf.mxu0
  %v1416 = vadd.f32 %v266, %v1415
  %1417 = vmatmul.bf16.gmra.mxu0 %v844
  %v1418 = vpop.f32.mrf.mxu0
  %v1419 = vadd.f32 %v266, %v1418
  %v1420 = vpop.f32.mrf.mxu0
  %v1421 = vadd.f32 %v266, %v1420
  %1422 = vmatmul.bf16.gmra.mxu0 %v849
  %v1423 = vpop.f32.mrf.mxu0
  %v1424 = vadd.f32 %v266, %v1423
  %v1425 = vpop.f32.mrf.mxu0
  %v1426 = vadd.f32 %v266, %v1425
  %1427 = vmatmul.bf16.gmra.mxu0 %v854
  %v1428 = vpop.f32.mrf.mxu0
  %v1429 = vadd.f32 %v266, %v1428
  %v1430 = vpop.f32.mrf.mxu0
  %v1431 = vadd.f32 %v266, %v1430
  %1432 = vmatmul.bf16.gmra.mxu0 %v859
  %v1433 = vpop.f32.mrf.mxu0
  %v1434 = vadd.f32 %v266, %v1433
  %v1435 = vpop.f32.mrf.mxu0
  %v1436 = vadd.f32 %v266, %v1435
  %1437 = vmatmul.bf16.gmra.mxu0 %v864
  %v1438 = vpop.f32.mrf.mxu0
  %v1439 = vadd.f32 %v266, %v1438
  %v1440 = vpop.f32.mrf.mxu0
  %1441 = vdwg.mxu0
  %1442 = vmatpush.bf16.msra.mxu0 %v1144
  %1443 = vmatpush.bf16.msra.mxu0 %v1143
  %1444 = vmatpush.bf16.msra.mxu0 %v1142
  %1445 = vmatpush.bf16.msra.mxu0 %v1141
  %1446 = vmatpush.bf16.msra.mxu0 %v1140
  %1447 = vmatpush.bf16.msra.mxu0 %v1139
  %1448 = vmatpush.bf16.msra.mxu0 %v1138
  %1449 = vmatpush.bf16.msra.mxu0 %v1137
  %1450 = vmatmul.bf16.gmra.mxu0 %v725
  %v1451 = vpop.f32.mrf.mxu0
  %v1452 = vadd.f32 %v1299, %v1451
  %v1453 = vpop.f32.mrf.mxu0
  %v1454 = vadd.f32 %v1301, %v1453
  %1455 = vmatmul.bf16.gmra.mxu0 %v730
  %v1456 = vpop.f32.mrf.mxu0
  %v1457 = vadd.f32 %v1304, %v1456
  %v1458 = vpop.f32.mrf.mxu0
  %v1459 = vadd.f32 %v1306, %v1458
  %1460 = vmatmul.bf16.gmra.mxu0 %v735
  %v1461 = vpop.f32.mrf.mxu0
  %v1462 = vadd.f32 %v1309, %v1461
  %v1463 = vpop.f32.mrf.mxu0
  %v1464 = vadd.f32 %v1311, %v1463
  %1465 = vmatmul.bf16.gmra.mxu0 %v740
  %v1466 = vpop.f32.mrf.mxu0
  %v1467 = vadd.f32 %v1314, %v1466
  %v1468 = vpop.f32.mrf.mxu0
  %v1469 = vadd.f32 %v1316, %v1468
  %1470 = vmatmul.bf16.gmra.mxu0 %v745
  %v1471 = vpop.f32.mrf.mxu0
  %v1472 = vadd.f32 %v1319, %v1471
  %v1473 = vpop.f32.mrf.mxu0
  %v1474 = vadd.f32 %v1321, %v1473
  %1475 = vmatmul.bf16.gmra.mxu0 %v750
  %v1476 = vpop.f32.mrf.mxu0
  %v1477 = vadd.f32 %v1324, %v1476
  %v1478 = vpop.f32.mrf.mxu0
  %v1479 = vadd.f32 %v1326, %v1478
  %1480 = vmatmul.bf16.gmra.mxu0 %v755
  %v1481 = vpop.f32.mrf.mxu0
  %v1482 = vadd.f32 %v1329, %v1481
  %v1483 = vpop.f32.mrf.mxu0
  %v1484 = vadd.f32 %v1331, %v1483
  %1485 = vmatmul.bf16.gmra.mxu0 %v760
  %v1486 = vpop.f32.mrf.mxu0
  %v1487 = vadd.f32 %v1334, %v1486
  %v1488 = vpop.f32.mrf.mxu0
  %v1489 = vadd.f32 %v1336, %v1488
  %1490 = vmatmul.bf16.gmra.mxu0 %v765
  %v1491 = vpop.f32.mrf.mxu0
  %v1492 = vadd.f32 %v1339, %v1491
  %v1493 = vpop.f32.mrf.mxu0
  %v1494 = vadd.f32 %v1341, %v1493
  %1495 = vmatmul.bf16.gmra.mxu0 %v770
  %v1496 = vpop.f32.mrf.mxu0
  %v1497 = vadd.f32 %v1344, %v1496
  %v1498 = vpop.f32.mrf.mxu0
  %v1499 = vadd.f32 %v1346, %v1498
  %1500 = vmatmul.bf16.gmra.mxu0 %v775
  %v1501 = vpop.f32.mrf.mxu0
  %v1502 = vadd.f32 %v1349, %v1501
  %v1503 = vpop.f32.mrf.mxu0
  %v1504 = vadd.f32 %v1351, %v1503
  %1505 = vmatmul.bf16.gmra.mxu0 %v780
  %v1506 = vpop.f32.mrf.mxu0
  %v1507 = vadd.f32 %v1354, %v1506
  %v1508 = vpop.f32.mrf.mxu0
  %v1509 = vadd.f32 %v1356, %v1508
  %1510 = vmatmul.bf16.gmra.mxu0 %v785
  %v1511 = vpop.f32.mrf.mxu0
  %v1512 = vadd.f32 %v1359, %v1511
  %v1513 = vpop.f32.mrf.mxu0
  %v1514 = vadd.f32 %v1361, %v1513
  %1515 = vmatmul.bf16.gmra.mxu0 %v790
  %v1516 = vpop.f32.mrf.mxu0
  %v1517 = vadd.f32 %v1364, %v1516
  %v1518 = vpop.f32.mrf.mxu0
  %v1519 = vadd.f32 %v1366, %v1518
  %1520 = vmatmul.bf16.gmra.mxu0 %v795
  %v1521 = vpop.f32.mrf.mxu0
  %v1522 = vadd.f32 %v1369, %v1521
  %v1523 = vpop.f32.mrf.mxu0
  %v1524 = vadd.f32 %v1371, %v1523
  %1525 = vmatmul.bf16.gmra.mxu0 %v800
  %v1526 = vpop.f32.mrf.mxu0
  %v1527 = vadd.f32 %v1374, %v1526
  %v1528 = vpop.f32.mrf.mxu0
  %v1529 = vadd.f32 %v1376, %v1528
  %1530 = vmatmul.bf16.gmra.mxu0 %v805
  %v1531 = vpop.f32.mrf.mxu0
  %v1532 = vadd.f32 %v1379, %v1531
  %v1533 = vpop.f32.mrf.mxu0
  %v1534 = vadd.f32 %v1381, %v1533
  %1535 = vmatmul.bf16.gmra.mxu0 %v810
  %v1536 = vpop.f32.mrf.mxu0
  %v1537 = vadd.f32 %v1384, %v1536
  %v1538 = vpop.f32.mrf.mxu0
  %v1539 = vadd.f32 %v1386, %v1538
  %1540 = vmatmul.bf16.gmra.mxu0 %v815
  %v1541 = vpop.f32.mrf.mxu0
  %v1542 = vadd.f32 %v1389, %v1541
  %v1543 = vpop.f32.mrf.mxu0
  %v1544 = vadd.f32 %v1391, %v1543
  %1545 = vmatmul.bf16.gmra.mxu0 %v820
  %v1546 = vpop.f32.mrf.mxu0
  %v1547 = vadd.f32 %v1394, %v1546
  %v1548 = vpop.f32.mrf.mxu0
  %v1549 = vadd.f32 %v1396, %v1548
  %1550 = vmatmul.bf16.gmra.mxu0 %v825
  %v1551 = vpop.f32.mrf.mxu0
  %v1552 = vadd.f32 %v1399, %v1551
  %v1553 = vpop.f32.mrf.mxu0
  %v1554 = vadd.f32 %v1401, %v1553
  %1555 = vmatmul.bf16.gmra.mxu0 %v830
  %v1556 = vpop.f32.mrf.mxu0
  %v1557 = vadd.f32 %v1404, %v1556
  %v1558 = vpop.f32.mrf.mxu0
  %v1559 = vadd.f32 %v1406, %v1558
  %1560 = vmatmul.bf16.gmra.mxu0 %v835
  %v1561 = vpop.f32.mrf.mxu0
  %v1562 = vadd.f32 %v1409, %v1561
  %v1563 = vpop.f32.mrf.mxu0
  %v1564 = vadd.f32 %v1411, %v1563
  %1565 = vmatmul.bf16.gmra.mxu0 %v840
  %v1566 = vpop.f32.mrf.mxu0
  %v1567 = vadd.f32 %v1414, %v1566
  %v1568 = vpop.f32.mrf.mxu0
  %v1569 = vadd.f32 %v1416, %v1568
  %1570 = vmatmul.bf16.gmra.mxu0 %v845
  %v1571 = vpop.f32.mrf.mxu0
  %v1572 = vadd.f32 %v1419, %v1571
  %v1573 = vpop.f32.mrf.mxu0
  %v1574 = vadd.f32 %v1421, %v1573
  %1575 = vmatmul.bf16.gmra.mxu0 %v850
  %v1576 = vpop.f32.mrf.mxu0
  %v1577 = vadd.f32 %v1424, %v1576
  %v1578 = vpop.f32.mrf.mxu0
  %v1579 = vadd.f32 %v1426, %v1578
  %1580 = vmatmul.bf16.gmra.mxu0 %v855
  %v1581 = vpop.f32.mrf.mxu0
  %v1582 = vadd.f32 %v1429, %v1581
  %v1583 = vpop.f32.mrf.mxu0
  %v1584 = vadd.f32 %v1431, %v1583
  %1585 = vmatmul.bf16.gmra.mxu0 %v860
  %v1586 = vpop.f32.mrf.mxu0
  %v1587 = vadd.f32 %v1434, %v1586
  %v1588 = vpop.f32.mrf.mxu0
  %v1589 = vadd.f32 %v1436, %v1588
  %1590 = vmatmul.bf16.gmra.mxu0 %v865
  %v1591 = vpop.f32.mrf.mxu0
  %v1592 = vadd.f32 %v1439, %v1591
  %v1593 = vpop.f32.mrf.mxu0
  %1594 = vdwg.mxu0
  %1595 = vmatpush.bf16.msra.mxu0 %v1152
  %1596 = vmatpush.bf16.msra.mxu0 %v1151
  %1597 = vmatpush.bf16.msra.mxu0 %v1150
  %1598 = vmatpush.bf16.msra.mxu0 %v1149
  %1599 = vmatpush.bf16.msra.mxu0 %v1148
  %1600 = vmatpush.bf16.msra.mxu0 %v1147
  %1601 = vmatpush.bf16.msra.mxu0 %v1146
  %1602 = vmatpush.bf16.msra.mxu0 %v1145
  %1603 = vmatmul.bf16.gmra.mxu0 %v726
  %v1604 = vpop.f32.mrf.mxu0
  %v1605 = vadd.f32 %v1452, %v1604
  %v1606 = vpop.f32.mrf.mxu0
  %v1607 = vadd.f32 %v1454, %v1606
  %1608 = vmatmul.bf16.gmra.mxu0 %v731
  %v1609 = vpop.f32.mrf.mxu0
  %v1610 = vadd.f32 %v1457, %v1609
  %v1611 = vpop.f32.mrf.mxu0
  %v1612 = vadd.f32 %v1459, %v1611
  %1613 = vmatmul.bf16.gmra.mxu0 %v736
  %v1614 = vpop.f32.mrf.mxu0
  %v1615 = vadd.f32 %v1462, %v1614
  %v1616 = vpop.f32.mrf.mxu0
  %v1617 = vadd.f32 %v1464, %v1616
  %1618 = vmatmul.bf16.gmra.mxu0 %v741
  %v1619 = vpop.f32.mrf.mxu0
  %v1620 = vadd.f32 %v1467, %v1619
  %v1621 = vpop.f32.mrf.mxu0
  %v1622 = vadd.f32 %v1469, %v1621
  %1623 = vmatmul.bf16.gmra.mxu0 %v746
  %v1624 = vpop.f32.mrf.mxu0
  %v1625 = vadd.f32 %v1472, %v1624
  %v1626 = vpop.f32.mrf.mxu0
  %v1627 = vadd.f32 %v1474, %v1626
  %1628 = vmatmul.bf16.gmra.mxu0 %v751
  %v1629 = vpop.f32.mrf.mxu0
  %v1630 = vadd.f32 %v1477, %v1629
  %v1631 = vpop.f32.mrf.mxu0
  %v1632 = vadd.f32 %v1479, %v1631
  %1633 = vmatmul.bf16.gmra.mxu0 %v756
  %v1634 = vpop.f32.mrf.mxu0
  %v1635 = vadd.f32 %v1482, %v1634
  %v1636 = vpop.f32.mrf.mxu0
  %v1637 = vadd.f32 %v1484, %v1636
  %1638 = vmatmul.bf16.gmra.mxu0 %v761
  %v1639 = vpop.f32.mrf.mxu0
  %v1640 = vadd.f32 %v1487, %v1639
  %v1641 = vpop.f32.mrf.mxu0
  %v1642 = vadd.f32 %v1489, %v1641
  %1643 = vmatmul.bf16.gmra.mxu0 %v766
  %v1644 = vpop.f32.mrf.mxu0
  %v1645 = vadd.f32 %v1492, %v1644
  %v1646 = vpop.f32.mrf.mxu0
  %v1647 = vadd.f32 %v1494, %v1646
  %1648 = vmatmul.bf16.gmra.mxu0 %v771
  %v1649 = vpop.f32.mrf.mxu0
  %v1650 = vadd.f32 %v1497, %v1649
  %v1651 = vpop.f32.mrf.mxu0
  %v1652 = vadd.f32 %v1499, %v1651
  %1653 = vmatmul.bf16.gmra.mxu0 %v776
  %v1654 = vpop.f32.mrf.mxu0
  %v1655 = vadd.f32 %v1502, %v1654
  %v1656 = vpop.f32.mrf.mxu0
  %v1657 = vadd.f32 %v1504, %v1656
  %1658 = vmatmul.bf16.gmra.mxu0 %v781
  %v1659 = vpop.f32.mrf.mxu0
  %v1660 = vadd.f32 %v1507, %v1659
  %v1661 = vpop.f32.mrf.mxu0
  %v1662 = vadd.f32 %v1509, %v1661
  %1663 = vmatmul.bf16.gmra.mxu0 %v786
  %v1664 = vpop.f32.mrf.mxu0
  %v1665 = vadd.f32 %v1512, %v1664
  %v1666 = vpop.f32.mrf.mxu0
  %v1667 = vadd.f32 %v1514, %v1666
  %1668 = vmatmul.bf16.gmra.mxu0 %v791
  %v1669 = vpop.f32.mrf.mxu0
  %v1670 = vadd.f32 %v1517, %v1669
  %v1671 = vpop.f32.mrf.mxu0
  %v1672 = vadd.f32 %v1519, %v1671
  %1673 = vmatmul.bf16.gmra.mxu0 %v796
  %v1674 = vpop.f32.mrf.mxu0
  %v1675 = vadd.f32 %v1522, %v1674
  %v1676 = vpop.f32.mrf.mxu0
  %v1677 = vadd.f32 %v1524, %v1676
  %1678 = vmatmul.bf16.gmra.mxu0 %v801
  %v1679 = vpop.f32.mrf.mxu0
  %v1680 = vadd.f32 %v1527, %v1679
  %v1681 = vpop.f32.mrf.mxu0
  %v1682 = vadd.f32 %v1529, %v1681
  %1683 = vmatmul.bf16.gmra.mxu0 %v806
  %v1684 = vpop.f32.mrf.mxu0
  %v1685 = vadd.f32 %v1532, %v1684
  %v1686 = vpop.f32.mrf.mxu0
  %v1687 = vadd.f32 %v1534, %v1686
  %1688 = vmatmul.bf16.gmra.mxu0 %v811
  %v1689 = vpop.f32.mrf.mxu0
  %v1690 = vadd.f32 %v1537, %v1689
  %v1691 = vpop.f32.mrf.mxu0
  %v1692 = vadd.f32 %v1539, %v1691
  %1693 = vmatmul.bf16.gmra.mxu0 %v816
  %v1694 = vpop.f32.mrf.mxu0
  %v1695 = vadd.f32 %v1542, %v1694
  %v1696 = vpop.f32.mrf.mxu0
  %v1697 = vadd.f32 %v1544, %v1696
  %1698 = vmatmul.bf16.gmra.mxu0 %v821
  %v1699 = vpop.f32.mrf.mxu0
  %v1700 = vadd.f32 %v1547, %v1699
  %v1701 = vpop.f32.mrf.mxu0
  %v1702 = vadd.f32 %v1549, %v1701
  %1703 = vmatmul.bf16.gmra.mxu0 %v826
  %v1704 = vpop.f32.mrf.mxu0
  %v1705 = vadd.f32 %v1552, %v1704
  %v1706 = vpop.f32.mrf.mxu0
  %v1707 = vadd.f32 %v1554, %v1706
  %1708 = vmatmul.bf16.gmra.mxu0 %v831
  %v1709 = vpop.f32.mrf.mxu0
  %v1710 = vadd.f32 %v1557, %v1709
  %v1711 = vpop.f32.mrf.mxu0
  %v1712 = vadd.f32 %v1559, %v1711
  %1713 = vmatmul.bf16.gmra.mxu0 %v836
  %v1714 = vpop.f32.mrf.mxu0
  %v1715 = vadd.f32 %v1562, %v1714
  %v1716 = vpop.f32.mrf.mxu0
  %v1717 = vadd.f32 %v1564, %v1716
  %1718 = vmatmul.bf16.gmra.mxu0 %v841
  %v1719 = vpop.f32.mrf.mxu0
  %v1720 = vadd.f32 %v1567, %v1719
  %v1721 = vpop.f32.mrf.mxu0
  %v1722 = vadd.f32 %v1569, %v1721
  %1723 = vmatmul.bf16.gmra.mxu0 %v846
  %v1724 = vpop.f32.mrf.mxu0
  %v1725 = vadd.f32 %v1572, %v1724
  %v1726 = vpop.f32.mrf.mxu0
  %v1727 = vadd.f32 %v1574, %v1726
  %1728 = vmatmul.bf16.gmra.mxu0 %v851
  %v1729 = vpop.f32.mrf.mxu0
  %v1730 = vadd.f32 %v1577, %v1729
  %v1731 = vpop.f32.mrf.mxu0
  %v1732 = vadd.f32 %v1579, %v1731
  %1733 = vmatmul.bf16.gmra.mxu0 %v856
  %v1734 = vpop.f32.mrf.mxu0
  %v1735 = vadd.f32 %v1582, %v1734
  %v1736 = vpop.f32.mrf.mxu0
  %v1737 = vadd.f32 %v1584, %v1736
  %1738 = vmatmul.bf16.gmra.mxu0 %v861
  %v1739 = vpop.f32.mrf.mxu0
  %v1740 = vadd.f32 %v1587, %v1739
  %v1741 = vpop.f32.mrf.mxu0
  %v1742 = vadd.f32 %v1589, %v1741
  %1743 = vmatmul.bf16.gmra.mxu0 %v866
  %v1744 = vpop.f32.mrf.mxu0
  %v1745 = vadd.f32 %v1592, %v1744
  %v1746 = vpop.f32.mrf.mxu0
  %1747 = vdwg.mxu0
  %1748 = vmatpush.bf16.msra.mxu0 %v1160
  %1749 = vmatpush.bf16.msra.mxu0 %v1159
  %1750 = vmatpush.bf16.msra.mxu0 %v1158
  %1751 = vmatpush.bf16.msra.mxu0 %v1157
  %1752 = vmatpush.bf16.msra.mxu0 %v1156
  %1753 = vmatpush.bf16.msra.mxu0 %v1155
  %1754 = vmatpush.bf16.msra.mxu0 %v1154
  %1755 = vmatpush.bf16.msra.mxu0 %v1153
  %1756 = vmatmul.bf16.gmra.mxu0 %v727
  %v1757 = vpop.f32.mrf.mxu0
  %v1758 = vadd.f32 %v1605, %v1757
  %v1759 = vpop.f32.mrf.mxu0
  %v1760 = vadd.f32 %v1607, %v1759
  %1761 = vmatmul.bf16.gmra.mxu0 %v732
  %v1762 = vpop.f32.mrf.mxu0
  %v1763 = vadd.f32 %v1610, %v1762
  %v1764 = vpop.f32.mrf.mxu0
  %v1765 = vadd.f32 %v1612, %v1764
  %1766 = vmatmul.bf16.gmra.mxu0 %v737
  %v1767 = vpop.f32.mrf.mxu0
  %v1768 = vadd.f32 %v1615, %v1767
  %v1769 = vpop.f32.mrf.mxu0
  %v1770 = vadd.f32 %v1617, %v1769
  %1771 = vmatmul.bf16.gmra.mxu0 %v742
  %v1772 = vpop.f32.mrf.mxu0
  %v1773 = vadd.f32 %v1620, %v1772
  %v1774 = vpop.f32.mrf.mxu0
  %v1775 = vadd.f32 %v1622, %v1774
  %1776 = vmatmul.bf16.gmra.mxu0 %v747
  %v1777 = vpop.f32.mrf.mxu0
  %v1778 = vadd.f32 %v1625, %v1777
  %v1779 = vpop.f32.mrf.mxu0
  %v1780 = vadd.f32 %v1627, %v1779
  %1781 = vmatmul.bf16.gmra.mxu0 %v752
  %v1782 = vpop.f32.mrf.mxu0
  %v1783 = vadd.f32 %v1630, %v1782
  %v1784 = vpop.f32.mrf.mxu0
  %v1785 = vadd.f32 %v1632, %v1784
  %1786 = vmatmul.bf16.gmra.mxu0 %v757
  %v1787 = vpop.f32.mrf.mxu0
  %v1788 = vadd.f32 %v1635, %v1787
  %v1789 = vpop.f32.mrf.mxu0
  %v1790 = vadd.f32 %v1637, %v1789
  %1791 = vmatmul.bf16.gmra.mxu0 %v762
  %v1792 = vpop.f32.mrf.mxu0
  %v1793 = vadd.f32 %v1640, %v1792
  %v1794 = vpop.f32.mrf.mxu0
  %v1795 = vadd.f32 %v1642, %v1794
  %1796 = vmatmul.bf16.gmra.mxu0 %v767
  %v1797 = vpop.f32.mrf.mxu0
  %v1798 = vadd.f32 %v1645, %v1797
  %v1799 = vpop.f32.mrf.mxu0
  %v1800 = vadd.f32 %v1647, %v1799
  %1801 = vmatmul.bf16.gmra.mxu0 %v772
  %v1802 = vpop.f32.mrf.mxu0
  %v1803 = vadd.f32 %v1650, %v1802
  %v1804 = vpop.f32.mrf.mxu0
  %v1805 = vadd.f32 %v1652, %v1804
  %1806 = vmatmul.bf16.gmra.mxu0 %v777
  %v1807 = vpop.f32.mrf.mxu0
  %v1808 = vadd.f32 %v1655, %v1807
  %v1809 = vpop.f32.mrf.mxu0
  %v1810 = vadd.f32 %v1657, %v1809
  %1811 = vmatmul.bf16.gmra.mxu0 %v782
  %v1812 = vpop.f32.mrf.mxu0
  %v1813 = vadd.f32 %v1660, %v1812
  %v1814 = vpop.f32.mrf.mxu0
  %v1815 = vadd.f32 %v1662, %v1814
  %1816 = vmatmul.bf16.gmra.mxu0 %v787
  %v1817 = vpop.f32.mrf.mxu0
  %v1818 = vadd.f32 %v1665, %v1817
  %v1819 = vpop.f32.mrf.mxu0
  %v1820 = vadd.f32 %v1667, %v1819
  %1821 = vmatmul.bf16.gmra.mxu0 %v792
  %v1822 = vpop.f32.mrf.mxu0
  %v1823 = vadd.f32 %v1670, %v1822
  %v1824 = vpop.f32.mrf.mxu0
  %v1825 = vadd.f32 %v1672, %v1824
  %1826 = vmatmul.bf16.gmra.mxu0 %v797
  %v1827 = vpop.f32.mrf.mxu0
  %v1828 = vadd.f32 %v1675, %v1827
  %v1829 = vpop.f32.mrf.mxu0
  %v1830 = vadd.f32 %v1677, %v1829
  %1831 = vmatmul.bf16.gmra.mxu0 %v802
  %v1832 = vpop.f32.mrf.mxu0
  %v1833 = vadd.f32 %v1680, %v1832
  %v1834 = vpop.f32.mrf.mxu0
  %v1835 = vadd.f32 %v1682, %v1834
  %1836 = vmatmul.bf16.gmra.mxu0 %v807
  %v1837 = vpop.f32.mrf.mxu0
  %v1838 = vadd.f32 %v1685, %v1837
  %v1839 = vpop.f32.mrf.mxu0
  %v1840 = vadd.f32 %v1687, %v1839
  %1841 = vmatmul.bf16.gmra.mxu0 %v812
  %v1842 = vpop.f32.mrf.mxu0
  %v1843 = vadd.f32 %v1690, %v1842
  %v1844 = vpop.f32.mrf.mxu0
  %v1845 = vadd.f32 %v1692, %v1844
  %1846 = vmatmul.bf16.gmra.mxu0 %v817
  %v1847 = vpop.f32.mrf.mxu0
  %v1848 = vadd.f32 %v1695, %v1847
  %v1849 = vpop.f32.mrf.mxu0
  %v1850 = vadd.f32 %v1697, %v1849
  %1851 = vmatmul.bf16.gmra.mxu0 %v822
  %v1852 = vpop.f32.mrf.mxu0
  %v1853 = vadd.f32 %v1700, %v1852
  %v1854 = vpop.f32.mrf.mxu0
  %v1855 = vadd.f32 %v1702, %v1854
  %1856 = vmatmul.bf16.gmra.mxu0 %v827
  %v1857 = vpop.f32.mrf.mxu0
  %v1858 = vadd.f32 %v1705, %v1857
  %v1859 = vpop.f32.mrf.mxu0
  %v1860 = vadd.f32 %v1707, %v1859
  %1861 = vmatmul.bf16.gmra.mxu0 %v832
  %v1862 = vpop.f32.mrf.mxu0
  %v1863 = vadd.f32 %v1710, %v1862
  %v1864 = vpop.f32.mrf.mxu0
  %v1865 = vadd.f32 %v1712, %v1864
  %1866 = vmatmul.bf16.gmra.mxu0 %v837
  %v1867 = vpop.f32.mrf.mxu0
  %v1868 = vadd.f32 %v1715, %v1867
  %v1869 = vpop.f32.mrf.mxu0
  %v1870 = vadd.f32 %v1717, %v1869
  %1871 = vmatmul.bf16.gmra.mxu0 %v842
  %v1872 = vpop.f32.mrf.mxu0
  %v1873 = vadd.f32 %v1720, %v1872
  %v1874 = vpop.f32.mrf.mxu0
  %v1875 = vadd.f32 %v1722, %v1874
  %1876 = vmatmul.bf16.gmra.mxu0 %v847
  %v1877 = vpop.f32.mrf.mxu0
  %v1878 = vadd.f32 %v1725, %v1877
  %v1879 = vpop.f32.mrf.mxu0
  %v1880 = vadd.f32 %v1727, %v1879
  %1881 = vmatmul.bf16.gmra.mxu0 %v852
  %v1882 = vpop.f32.mrf.mxu0
  %v1883 = vadd.f32 %v1730, %v1882
  %v1884 = vpop.f32.mrf.mxu0
  %v1885 = vadd.f32 %v1732, %v1884
  %1886 = vmatmul.bf16.gmra.mxu0 %v857
  %v1887 = vpop.f32.mrf.mxu0
  %v1888 = vadd.f32 %v1735, %v1887
  %v1889 = vpop.f32.mrf.mxu0
  %v1890 = vadd.f32 %v1737, %v1889
  %1891 = vmatmul.bf16.gmra.mxu0 %v862
  %v1892 = vpop.f32.mrf.mxu0
  %v1893 = vadd.f32 %v1740, %v1892
  %v1894 = vpop.f32.mrf.mxu0
  %v1895 = vadd.f32 %v1742, %v1894
  %1896 = vmatmul.bf16.gmra.mxu0 %v867
  %v1897 = vpop.f32.mrf.mxu0
  %v1898 = vadd.f32 %v1745, %v1897
  %v1899 = vpop.f32.mrf.mxu0
  %1900 = vdwg.mxu0
  %1901 = vmatpush.bf16.msra.mxu0 0
  %1902 = vmatpush.bf16.msra.mxu0 0
  %1903 = vmatpush.bf16.msra.mxu0 0
  %1904 = vmatpush.bf16.msra.mxu0 0
  %1905 = vmatpush.bf16.msra.mxu0 %v1164
  %1906 = vmatpush.bf16.msra.mxu0 %v1163
  %1907 = vmatpush.bf16.msra.mxu0 %v1162
  %1908 = vmatpush.bf16.msra.mxu0 %v1161
  %1909 = vmatmul.bf16.gmra.mxu0 %v1203
  %v1910 = vpop.f32.mrf.mxu0
  %v1911 = vadd.f32 %v1758, %v1910
  %v1912 = vpop.f32.mrf.mxu0
  %v1913 = vadd.f32 %v1760, %v1912
  %1914 = vmatmul.bf16.gmra.mxu0 %v1206
  %v1915 = vpop.f32.mrf.mxu0
  %v1916 = vadd.f32 %v1763, %v1915
  %v1917 = vpop.f32.mrf.mxu0
  %v1918 = vadd.f32 %v1765, %v1917
  %1919 = vmatmul.bf16.gmra.mxu0 %v1209
  %v1920 = vpop.f32.mrf.mxu0
  %v1921 = vadd.f32 %v1768, %v1920
  %v1922 = vpop.f32.mrf.mxu0
  %v1923 = vadd.f32 %v1770, %v1922
  %1924 = vmatmul.bf16.gmra.mxu0 %v1212
  %v1925 = vpop.f32.mrf.mxu0
  %v1926 = vadd.f32 %v1773, %v1925
  %v1927 = vpop.f32.mrf.mxu0
  %v1928 = vadd.f32 %v1775, %v1927
  %1929 = vmatmul.bf16.gmra.mxu0 %v1215
  %v1930 = vpop.f32.mrf.mxu0
  %v1931 = vadd.f32 %v1778, %v1930
  %v1932 = vpop.f32.mrf.mxu0
  %v1933 = vadd.f32 %v1780, %v1932
  %1934 = vmatmul.bf16.gmra.mxu0 %v1218
  %v1935 = vpop.f32.mrf.mxu0
  %v1936 = vadd.f32 %v1783, %v1935
  %v1937 = vpop.f32.mrf.mxu0
  %v1938 = vadd.f32 %v1785, %v1937
  %1939 = vmatmul.bf16.gmra.mxu0 %v1221
  %v1940 = vpop.f32.mrf.mxu0
  %v1941 = vadd.f32 %v1788, %v1940
  %v1942 = vpop.f32.mrf.mxu0
  %v1943 = vadd.f32 %v1790, %v1942
  %1944 = vmatmul.bf16.gmra.mxu0 %v1224
  %v1945 = vpop.f32.mrf.mxu0
  %v1946 = vadd.f32 %v1793, %v1945
  %v1947 = vpop.f32.mrf.mxu0
  %v1948 = vadd.f32 %v1795, %v1947
  %1949 = vmatmul.bf16.gmra.mxu0 %v1227
  %v1950 = vpop.f32.mrf.mxu0
  %v1951 = vadd.f32 %v1798, %v1950
  %v1952 = vpop.f32.mrf.mxu0
  %v1953 = vadd.f32 %v1800, %v1952
  %1954 = vmatmul.bf16.gmra.mxu0 %v1230
  %v1955 = vpop.f32.mrf.mxu0
  %v1956 = vadd.f32 %v1803, %v1955
  %v1957 = vpop.f32.mrf.mxu0
  %v1958 = vadd.f32 %v1805, %v1957
  %1959 = vmatmul.bf16.gmra.mxu0 %v1233
  %v1960 = vpop.f32.mrf.mxu0
  %v1961 = vadd.f32 %v1808, %v1960
  %v1962 = vpop.f32.mrf.mxu0
  %v1963 = vadd.f32 %v1810, %v1962
  %1964 = vmatmul.bf16.gmra.mxu0 %v1236
  %v1965 = vpop.f32.mrf.mxu0
  %v1966 = vadd.f32 %v1813, %v1965
  %v1967 = vpop.f32.mrf.mxu0
  %v1968 = vadd.f32 %v1815, %v1967
  %1969 = vmatmul.bf16.gmra.mxu0 %v1239
  %v1970 = vpop.f32.mrf.mxu0
  %v1971 = vadd.f32 %v1818, %v1970
  %v1972 = vpop.f32.mrf.mxu0
  %v1973 = vadd.f32 %v1820, %v1972
  %1974 = vmatmul.bf16.gmra.mxu0 %v1242
  %v1975 = vpop.f32.mrf.mxu0
  %v1976 = vadd.f32 %v1823, %v1975
  %v1977 = vpop.f32.mrf.mxu0
  %v1978 = vadd.f32 %v1825, %v1977
  %1979 = vmatmul.bf16.gmra.mxu0 %v1245
  %v1980 = vpop.f32.mrf.mxu0
  %v1981 = vadd.f32 %v1828, %v1980
  %v1982 = vpop.f32.mrf.mxu0
  %v1983 = vadd.f32 %v1830, %v1982
  %1984 = vmatmul.bf16.gmra.mxu0 %v1248
  %v1985 = vpop.f32.mrf.mxu0
  %v1986 = vadd.f32 %v1833, %v1985
  %v1987 = vpop.f32.mrf.mxu0
  %v1988 = vadd.f32 %v1835, %v1987
  %1989 = vmatmul.bf16.gmra.mxu0 %v1251
  %v1990 = vpop.f32.mrf.mxu0
  %v1991 = vadd.f32 %v1838, %v1990
  %v1992 = vpop.f32.mrf.mxu0
  %v1993 = vadd.f32 %v1840, %v1992
  %1994 = vmatmul.bf16.gmra.mxu0 %v1254
  %v1995 = vpop.f32.mrf.mxu0
  %v1996 = vadd.f32 %v1843, %v1995
  %v1997 = vpop.f32.mrf.mxu0
  %v1998 = vadd.f32 %v1845, %v1997
  %1999 = vmatmul.bf16.gmra.mxu0 %v1257
  %v2000 = vpop.f32.mrf.mxu0
  %v2001 = vadd.f32 %v1848, %v2000
  %v2002 = vpop.f32.mrf.mxu0
  %v2003 = vadd.f32 %v1850, %v2002
  %2004 = vmatmul.bf16.gmra.mxu0 %v1260
  %v2005 = vpop.f32.mrf.mxu0
  %v2006 = vadd.f32 %v1853, %v2005
  %v2007 = vpop.f32.mrf.mxu0
  %v2008 = vadd.f32 %v1855, %v2007
  %2009 = vmatmul.bf16.gmra.mxu0 %v1263
  %v2010 = vpop.f32.mrf.mxu0
  %v2011 = vadd.f32 %v1858, %v2010
  %v2012 = vpop.f32.mrf.mxu0
  %v2013 = vadd.f32 %v1860, %v2012
  %2014 = vmatmul.bf16.gmra.mxu0 %v1266
  %v2015 = vpop.f32.mrf.mxu0
  %v2016 = vadd.f32 %v1863, %v2015
  %v2017 = vpop.f32.mrf.mxu0
  %v2018 = vadd.f32 %v1865, %v2017
  %2019 = vmatmul.bf16.gmra.mxu0 %v1269
  %v2020 = vpop.f32.mrf.mxu0
  %v2021 = vadd.f32 %v1868, %v2020
  %v2022 = vpop.f32.mrf.mxu0
  %v2023 = vadd.f32 %v1870, %v2022
  %2024 = vmatmul.bf16.gmra.mxu0 %v1272
  %v2025 = vpop.f32.mrf.mxu0
  %v2026 = vadd.f32 %v1873, %v2025
  %v2027 = vpop.f32.mrf.mxu0
  %v2028 = vadd.f32 %v1875, %v2027
  %2029 = vmatmul.bf16.gmra.mxu0 %v1275
  %v2030 = vpop.f32.mrf.mxu0
  %v2031 = vadd.f32 %v1878, %v2030
  %v2032 = vpop.f32.mrf.mxu0
  %v2033 = vadd.f32 %v1880, %v2032
  %2034 = vmatmul.bf16.gmra.mxu0 %v1278
  %v2035 = vpop.f32.mrf.mxu0
  %v2036 = vadd.f32 %v1883, %v2035
  %v2037 = vpop.f32.mrf.mxu0
  %v2038 = vadd.f32 %v1885, %v2037
  %2039 = vmatmul.bf16.gmra.mxu0 %v1281
  %v2040 = vpop.f32.mrf.mxu0
  %v2041 = vadd.f32 %v1888, %v2040
  %v2042 = vpop.f32.mrf.mxu0
  %v2043 = vadd.f32 %v1890, %v2042
  %2044 = vmatmul.bf16.gmra.mxu0 %v1284
  %v2045 = vpop.f32.mrf.mxu0
  %v2046 = vadd.f32 %v1893, %v2045
  %v2047 = vpop.f32.mrf.mxu0
  %v2048 = vadd.f32 %v1895, %v2047
  %2049 = vmatmul.bf16.gmra.mxu0 %v1287
  %v2050 = vpop.f32.mrf.mxu0
  %v2051 = vadd.f32 %v1898, %v2050
  %v2052 = vpop.f32.mrf.mxu0
  %2053 = vdwg.mxu0
  %v2054 = vpack.c.bf16 %v1911, %v1911
  %v2055 = vpack.c.bf16 %v1913, %v1913
  %v2056 = vpack.c.bf16 %v1916, %v1916
  %v2057 = vpack.c.bf16 %v1918, %v1918
  %v2058 = vpack.c.bf16 %v1921, %v1921
  %v2059 = vpack.c.bf16 %v1923, %v1923
  %v2060 = vpack.c.bf16 %v1926, %v1926
  %v2061 = vpack.c.bf16 %v1928, %v1928
  %v2062 = vpack.c.bf16 %v1931, %v1931
  %v2063 = vpack.c.bf16 %v1933, %v1933
  %v2064 = vpack.c.bf16 %v1936, %v1936
  %v2065 = vpack.c.bf16 %v1938, %v1938
  %v2066 = vpack.c.bf16 %v1941, %v1941
  %v2067 = vpack.c.bf16 %v1943, %v1943
  %v2068 = vpack.c.bf16 %v1946, %v1946
  %v2069 = vpack.c.bf16 %v1948, %v1948
  %v2070 = vpack.c.bf16 %v1951, %v1951
  %v2071 = vpack.c.bf16 %v1953, %v1953
  %v2072 = vpack.c.bf16 %v1956, %v1956
  %v2073 = vpack.c.bf16 %v1958, %v1958
  %v2074 = vpack.c.bf16 %v1961, %v1961
  %v2075 = vpack.c.bf16 %v1963, %v1963
  %v2076 = vpack.c.bf16 %v1966, %v1966
  %v2077 = vpack.c.bf16 %v1968, %v1968
  %v2078 = vpack.c.bf16 %v1971, %v1971
  %v2079 = vpack.c.bf16 %v1973, %v1973
  %v2080 = vpack.c.bf16 %v1976, %v1976
  %v2081 = vpack.c.bf16 %v1978, %v1978
  %v2082 = vpack.c.bf16 %v1981, %v1981
  %v2083 = vpack.c.bf16 %v1983, %v1983
  %v2084 = vpack.c.bf16 %v1986, %v1986
  %v2085 = vpack.c.bf16 %v1988, %v1988
  %v2086 = vpack.c.bf16 %v1991, %v1991
  %v2087 = vpack.c.bf16 %v1993, %v1993
  %v2088 = vpack.c.bf16 %v1996, %v1996
  %v2089 = vpack.c.bf16 %v1998, %v1998
  %v2090 = vpack.c.bf16 %v2001, %v2001
  %v2091 = vpack.c.bf16 %v2003, %v2003
  %v2092 = vpack.c.bf16 %v2006, %v2006
  %v2093 = vpack.c.bf16 %v2008, %v2008
  %v2094 = vpack.c.bf16 %v2011, %v2011
  %v2095 = vpack.c.bf16 %v2013, %v2013
  %v2096 = vpack.c.bf16 %v2016, %v2016
  %v2097 = vpack.c.bf16 %v2018, %v2018
  %v2098 = vpack.c.bf16 %v2021, %v2021
  %v2099 = vpack.c.bf16 %v2023, %v2023
  %v2100 = vpack.c.bf16 %v2026, %v2026
  %v2101 = vpack.c.bf16 %v2028, %v2028
  %v2102 = vpack.c.bf16 %v2031, %v2031
  %v2103 = vpack.c.bf16 %v2033, %v2033
  %v2104 = vpack.c.bf16 %v2036, %v2036
  %v2105 = vpack.c.bf16 %v2038, %v2038
  %v2106 = vpack.c.bf16 %v2041, %v2041
  %v2107 = vpack.c.bf16 %v2043, %v2043
  %v2108 = vpack.c.bf16 %v2046, %v2046
  %v2109 = vpack.c.bf16 %v2048, %v2048
  %v2110 = vpack.c.bf16 %v2051, %v2051
  %vm2111 = vcmask 519168
  %2112 = vst.msk [vmem:[%s5] sm:$0xf] %vm2111, %v2054
  %2113 = vst.msk [vmem:[%s5 + $0x4] sm:$0xf] %vm2111, %v2055
  %2114 = vst.msk [vmem:[%s5 + $0x8] sm:$0xf] %vm2111, %v2056
  %2115 = vst.msk [vmem:[%s5 + $0xc] sm:$0xf] %vm2111, %v2057
  %2116 = vst.msk [vmem:[%s5 + $0x10] sm:$0xf] %vm2111, %v2058
  %2117 = vst.msk [vmem:[%s5 + $0x14] sm:$0xf] %vm2111, %v2059
  %2118 = vst.msk [vmem:[%s5 + $0x18] sm:$0xf] %vm2111, %v2060
  %2119 = vst.msk [vmem:[%s5 + $0x1c] sm:$0xf] %vm2111, %v2061
  %2120 = vst.msk [vmem:[%s5 + $0x20] sm:$0xf] %vm2111, %v2062
  %2121 = vst.msk [vmem:[%s5 + $0x24] sm:$0xf] %vm2111, %v2063
  %2122 = vst.msk [vmem:[%s5 + $0x28] sm:$0xf] %vm2111, %v2064
  %2123 = vst.msk [vmem:[%s5 + $0x2c] sm:$0xf] %vm2111, %v2065
  %2124 = vst.msk [vmem:[%s5 + $0x30] sm:$0xf] %vm2111, %v2066
  %2125 = vst.msk [vmem:[%s5 + $0x34] sm:$0xf] %vm2111, %v2067
  %2126 = vst.msk [vmem:[%s5 + $0x38] sm:$0xf] %vm2111, %v2068
  %2127 = vst.msk [vmem:[%s5 + $0x3c] sm:$0xf] %vm2111, %v2069
  %2128 = vst.msk [vmem:[%s5 + $0x40] sm:$0xf] %vm2111, %v2070
  %2129 = vst.msk [vmem:[%s5 + $0x44] sm:$0xf] %vm2111, %v2071
  %2130 = vst.msk [vmem:[%s5 + $0x48] sm:$0xf] %vm2111, %v2072
  %2131 = vst.msk [vmem:[%s5 + $0x4c] sm:$0xf] %vm2111, %v2073
  %2132 = vst.msk [vmem:[%s5 + $0x50] sm:$0xf] %vm2111, %v2074
  %2133 = vst.msk [vmem:[%s5 + $0x54] sm:$0xf] %vm2111, %v2075
  %2134 = vst.msk [vmem:[%s5 + $0x58] sm:$0xf] %vm2111, %v2076
  %2135 = vst.msk [vmem:[%s5 + $0x5c] sm:$0xf] %vm2111, %v2077
  %2136 = vst.msk [vmem:[%s5 + $0x60] sm:$0xf] %vm2111, %v2078
  %2137 = vst.msk [vmem:[%s5 + $0x64] sm:$0xf] %vm2111, %v2079
  %2138 = vst.msk [vmem:[%s5 + $0x68] sm:$0xf] %vm2111, %v2080
  %2139 = vst.msk [vmem:[%s5 + $0x6c] sm:$0xf] %vm2111, %v2081
  %2140 = vst.msk [vmem:[%s5 + $0x70] sm:$0xf] %vm2111, %v2082
  %2141 = vst.msk [vmem:[%s5 + $0x74] sm:$0xf] %vm2111, %v2083
  %2142 = vst.msk [vmem:[%s5 + $0x78] sm:$0xf] %vm2111, %v2084
  %2143 = vst.msk [vmem:[%s5 + $0x7c] sm:$0xf] %vm2111, %v2085
  %2144 = vst.msk [vmem:[%s5 + $0x80] sm:$0xf] %vm2111, %v2086
  %2145 = vst.msk [vmem:[%s5 + $0x84] sm:$0xf] %vm2111, %v2087
  %2146 = vst.msk [vmem:[%s5 + $0x88] sm:$0xf] %vm2111, %v2088
  %2147 = vst.msk [vmem:[%s5 + $0x8c] sm:$0xf] %vm2111, %v2089
  %2148 = vst.msk [vmem:[%s5 + $0x90] sm:$0xf] %vm2111, %v2090
  %2149 = vst.msk [vmem:[%s5 + $0x94] sm:$0xf] %vm2111, %v2091
  %2150 = vst.msk [vmem:[%s5 + $0x98] sm:$0xf] %vm2111, %v2092
  %2151 = vst.msk [vmem:[%s5 + $0x9c] sm:$0xf] %vm2111, %v2093
  %2152 = vst.msk [vmem:[%s5 + $0xa0] sm:$0xf] %vm2111, %v2094
  %2153 = vst.msk [vmem:[%s5 + $0xa4] sm:$0xf] %vm2111, %v2095
  %2154 = vst.msk [vmem:[%s5 + $0xa8] sm:$0xf] %vm2111, %v2096
  %2155 = vst.msk [vmem:[%s5 + $0xac] sm:$0xf] %vm2111, %v2097
  %2156 = vst.msk [vmem:[%s5 + $0xb0] sm:$0xf] %vm2111, %v2098
  %2157 = vst.msk [vmem:[%s5 + $0xb4] sm:$0xf] %vm2111, %v2099
  %2158 = vst.msk [vmem:[%s5 + $0xb8] sm:$0xf] %vm2111, %v2100
  %2159 = vst.msk [vmem:[%s5 + $0xbc] sm:$0xf] %vm2111, %v2101
  %2160 = vst.msk [vmem:[%s5 + $0xc0] sm:$0xf] %vm2111, %v2102
  %2161 = vst.msk [vmem:[%s5 + $0xc4] sm:$0xf] %vm2111, %v2103
  %2162 = vst.msk [vmem:[%s5 + $0xc8] sm:$0xf] %vm2111, %v2104
  %2163 = vst.msk [vmem:[%s5 + $0xcc] sm:$0xf] %vm2111, %v2105
  %2164 = vst.msk [vmem:[%s5 + $0xd0] sm:$0xf] %vm2111, %v2106
  %2165 = vst.msk [vmem:[%s5 + $0xd4] sm:$0xf] %vm2111, %v2107
  %2166 = vst.msk [vmem:[%s5 + $0xd8] sm:$0xf] %vm2111, %v2108
  %2167 = vst.msk [vmem:[%s5 + $0xdc] sm:$0xf] %vm2111, %v2109
  %vm2168 = vcmask 516096
  %2169 = vst.msk [vmem:[%s5 + $0xe0] sm:$0x1] %vm2168, %v2110
  // Predicated region
  $region22: #{_lambda_.14} parent=0 // pred_check
    _
  $region23: #{_lambda_.14} parent=0 // pred_check_branch
    %2171 = sbr.rel (0) target = $region25
  $region24: #{_lambda_.14} parent=0 // pred_region
    _
  $region25: #{_lambda_.14} parent=0 // pred_fallthru
    _
  // Predicated region
  $region26: #{_lambda_.14} parent=0 // pred_check
    _
  $region27: #{_lambda_.14} parent=0 // pred_check_branch
    %2173 = sbr.rel (0) target = $region29
  $region28: #{_lambda_.14} parent=0 // pred_region
    _
  $region29: #{_lambda_.14} parent=0 // pred_fallthru
    _

// kernel: _lambda_.15
$region0: #{_lambda_.15}
  #allocation0 [shape = 'u32[]', space=smem, size = 0x4, offset = 0x4, fixed_abs, tag = 'smem constant byte address 0x4 - core index']
  #allocation1 [shape = 'u32[72,128]{1,0:T(1,128)}', space=vmem, size = 0x9000, scoped, tag = 'internal scratch']
  %s0 = inlined_call_operand.vmem [shape: bf16[14,2,7,128], index: 0, kind: input, shape index: {}]
  %s1 = inlined_call_operand.vmem [shape: f32[1,1,64], index: 1, kind: input, shape index: {}]
  %s2 = inlined_call_operand.vmem [shape: f32[1,1,64], index: 2, kind: input, shape index: {}]
  %s3 = inlined_call_operand.vmem [shape: bf16[14,7,64], index: 3, kind: output, shape index: {}]
  %s4 = sld [smem:[#allocation0]]
  $region22: #{_lambda_.15} parent=0
    _
  %s6 = ssub.s32 1, %s4
  %s7 = scalar_select 0, %s6, %s4
  // Predicated region
  $region2: #{_lambda_.15} parent=0 // pred_check
    _
  $region3: #{_lambda_.15} parent=0 // pred_check_branch
    %9 = sbr.rel (0) target = $region5
  $region4: #{_lambda_.15} parent=0 // pred_region
    _
  $region5: #{_lambda_.15} parent=0 // pred_fallthru
    _
  // Predicated region
  $region6: #{_lambda_.15} parent=0 // pred_check
    _
  $region7: #{_lambda_.15} parent=0 // pred_check_branch
    %11 = sbr.rel (0) target = $region9
  $region8: #{_lambda_.15} parent=0 // pred_region
    _
  $region9: #{_lambda_.15} parent=0 // pred_fallthru
    _
  // Predicated region
  $region10: #{_lambda_.15} parent=0 // pred_check
    _
  $region11: #{_lambda_.15} parent=0 // pred_check_branch
    %13 = sbr.rel (0) target = $region13
  $region12: #{_lambda_.15} parent=0 // pred_region
    _
  $region13: #{_lambda_.15} parent=0 // pred_fallthru
    _
  %v14 = vld [vmem:[%s0] sm:$0xf]
  %v15 = vld [vmem:[%s0 + $0x8] sm:$0xf]
  %v16 = vld [vmem:[%s0 + $0x10] sm:$0xf]
  %v17 = vld [vmem:[%s0 + $0x18] sm:$0xf]
  %v18 = vld [vmem:[%s0 + $0x20] sm:$0xf]
  %v19 = vld [vmem:[%s0 + $0x28] sm:$0xf]
  %v20 = vld [vmem:[%s0 + $0x30] sm:$0xf]
  %v21 = vld [vmem:[%s0 + $0x38] sm:$0xf]
  %v22 = vld [vmem:[%s0 + $0x40] sm:$0xf]
  %v23 = vld [vmem:[%s0 + $0x48] sm:$0xf]
  %v24 = vld [vmem:[%s0 + $0x50] sm:$0xf]
  %v25 = vld [vmem:[%s0 + $0x58] sm:$0xf]
  %v26 = vld [vmem:[%s0 + $0x60] sm:$0xf]
  %v27 = vld [vmem:[%s0 + $0x68] sm:$0xf]
  %v28 = vunpack.c.l.bf16 %v14
  %v29 = vunpack.c.l.bf16 %v15
  %v30 = vunpack.c.l.bf16 %v16
  %v31 = vunpack.c.l.bf16 %v17
  %v32 = vunpack.c.l.bf16 %v18
  %v33 = vunpack.c.l.bf16 %v19
  %v34 = vunpack.c.l.bf16 %v20
  %v35 = vunpack.c.l.bf16 %v21
  %v36 = vunpack.c.l.bf16 %v22
  %v37 = vunpack.c.l.bf16 %v23
  %v38 = vunpack.c.l.bf16 %v24
  %v39 = vunpack.c.l.bf16 %v25
  %v40 = vunpack.c.l.bf16 %v26
  %v41 = vunpack.c.l.bf16 %v27
  %s42 = scalar_lea.vmem %s0, 4
  %v43 = vld [vmem:[%s42] sm:$0xf]
  %v44 = vld [vmem:[%s42 + $0x8] sm:$0xf]
  %v45 = vld [vmem:[%s42 + $0x10] sm:$0xf]
  %v46 = vld [vmem:[%s42 + $0x18] sm:$0xf]
  %v47 = vld [vmem:[%s42 + $0x20] sm:$0xf]
  %v48 = vld [vmem:[%s42 + $0x28] sm:$0xf]
  %v49 = vld [vmem:[%s42 + $0x30] sm:$0xf]
  %v50 = vld [vmem:[%s42 + $0x38] sm:$0xf]
  %v51 = vld [vmem:[%s42 + $0x40] sm:$0xf]
  %v52 = vld [vmem:[%s42 + $0x48] sm:$0xf]
  %v53 = vld [vmem:[%s42 + $0x50] sm:$0xf]
  %v54 = vld [vmem:[%s42 + $0x58] sm:$0xf]
  %v55 = vld [vmem:[%s42 + $0x60] sm:$0xf]
  %v56 = vld [vmem:[%s42 + $0x68] sm:$0xf]
  %v57 = vunpack.c.l.bf16 %v43
  %v58 = vunpack.c.l.bf16 %v44
  %v59 = vunpack.c.l.bf16 %v45
  %v60 = vunpack.c.l.bf16 %v46
  %v61 = vunpack.c.l.bf16 %v47
  %v62 = vunpack.c.l.bf16 %v48
  %v63 = vunpack.c.l.bf16 %v49
  %v64 = vunpack.c.l.bf16 %v50
  %v65 = vunpack.c.l.bf16 %v51
  %v66 = vunpack.c.l.bf16 %v52
  %v67 = vunpack.c.l.bf16 %v53
  %v68 = vunpack.c.l.bf16 %v54
  %v69 = vunpack.c.l.bf16 %v55
  %v70 = vunpack.c.l.bf16 %v56
  %v71 = vmax.f32 %v28, %v57
  %v72 = vmax.f32 %v29, %v58
  %v73 = vmax.f32 %v30, %v59
  %v74 = vmax.f32 %v31, %v60
  %v75 = vmax.f32 %v32, %v61
  %v76 = vmax.f32 %v33, %v62
  %v77 = vmax.f32 %v34, %v63
  %v78 = vmax.f32 %v35, %v64
  %v79 = vmax.f32 %v36, %v65
  %v80 = vmax.f32 %v37, %v66
  %v81 = vmax.f32 %v38, %v67
  %v82 = vmax.f32 %v39, %v68
  %v83 = vmax.f32 %v40, %v69
  %v84 = vmax.f32 %v41, %v70
  %99 = vrot.lane.b32.xlu0 %v71, 64
  %v100 = vpop.permute.xlu0 %99
  %101 = vrot.lane.b32.xlu0 %v72, 64
  %v102 = vpop.permute.xlu0 %101
  %103 = vrot.lane.b32.xlu0 %v73, 64
  %v104 = vpop.permute.xlu0 %103
  %105 = vrot.lane.b32.xlu0 %v74, 64
  %v106 = vpop.permute.xlu0 %105
  %107 = vrot.lane.b32.xlu0 %v75, 64
  %v108 = vpop.permute.xlu0 %107
  %109 = vrot.lane.b32.xlu0 %v76, 64
  %v110 = vpop.permute.xlu0 %109
  %111 = vrot.lane.b32.xlu0 %v77, 64
  %v112 = vpop.permute.xlu0 %111
  %113 = vrot.lane.b32.xlu0 %v78, 64
  %v114 = vpop.permute.xlu0 %113
  %115 = vrot.lane.b32.xlu0 %v79, 64
  %v116 = vpop.permute.xlu0 %115
  %117 = vrot.lane.b32.xlu0 %v80, 64
  %v118 = vpop.permute.xlu0 %117
  %119 = vrot.lane.b32.xlu0 %v81, 64
  %v120 = vpop.permute.xlu0 %119
  %121 = vrot.lane.b32.xlu0 %v82, 64
  %v122 = vpop.permute.xlu0 %121
  %123 = vrot.lane.b32.xlu0 %v83, 64
  %v124 = vpop.permute.xlu0 %123
  %125 = vrot.lane.b32.xlu0 %v84, 64
  %v126 = vpop.permute.xlu0 %125
  %v141 = vmax.f32 %v71, %v100
  %v142 = vmax.f32 %v72, %v102
  %v143 = vmax.f32 %v73, %v104
  %v144 = vmax.f32 %v74, %v106
  %v145 = vmax.f32 %v75, %v108
  %v146 = vmax.f32 %v76, %v110
  %v147 = vmax.f32 %v77, %v112
  %v148 = vmax.f32 %v78, %v114
  %v149 = vmax.f32 %v79, %v116
  %v150 = vmax.f32 %v80, %v118
  %v151 = vmax.f32 %v81, %v120
  %v152 = vmax.f32 %v82, %v122
  %v153 = vmax.f32 %v83, %v124
  %v154 = vmax.f32 %v84, %v126
  %vm155 = vcmp.gt.f32.partialorder %v141, 0.0
  %vm156 = vcmp.gt.f32.partialorder %v142, 0.0
  %vm157 = vcmp.gt.f32.partialorder %v143, 0.0
  %vm158 = vcmp.gt.f32.partialorder %v144, 0.0
  %vm159 = vcmp.gt.f32.partialorder %v145, 0.0
  %vm160 = vcmp.gt.f32.partialorder %v146, 0.0
  %vm161 = vcmp.gt.f32.partialorder %v147, 0.0
  %vm162 = vcmp.gt.f32.partialorder %v148, 0.0
  %vm163 = vcmp.gt.f32.partialorder %v149, 0.0
  %vm164 = vcmp.gt.f32.partialorder %v150, 0.0
  %vm165 = vcmp.gt.f32.partialorder %v151, 0.0
  %vm166 = vcmp.gt.f32.partialorder %v152, 0.0
  %vm167 = vcmp.gt.f32.partialorder %v153, 0.0
  %vm168 = vcmp.gt.f32.partialorder %v154, 0.0
  %v169 = vmul.f32 %v141, 0.01
  %v170 = vmul.f32 %v142, 0.01
  %v171 = vmul.f32 %v143, 0.01
  %v172 = vmul.f32 %v144, 0.01
  %v173 = vmul.f32 %v145, 0.01
  %v174 = vmul.f32 %v146, 0.01
  %v175 = vmul.f32 %v147, 0.01
  %v176 = vmul.f32 %v148, 0.01
  %v177 = vmul.f32 %v149, 0.01
  %v178 = vmul.f32 %v150, 0.01
  %v179 = vmul.f32 %v151, 0.01
  %v180 = vmul.f32 %v152, 0.01
  %v181 = vmul.f32 %v153, 0.01
  %v182 = vmul.f32 %v154, 0.01
  %v183 = vsel %vm155, %v141, %v169
  %v184 = vsel %vm156, %v142, %v170
  %v185 = vsel %vm157, %v143, %v171
  %v186 = vsel %vm158, %v144, %v172
  %v187 = vsel %vm159, %v145, %v173
  %v188 = vsel %vm160, %v146, %v174
  %v189 = vsel %vm161, %v147, %v175
  %v190 = vsel %vm162, %v148, %v176
  %v191 = vsel %vm163, %v149, %v177
  %v192 = vsel %vm164, %v150, %v178
  %v193 = vsel %vm165, %v151, %v179
  %v194 = vsel %vm166, %v152, %v180
  %v195 = vsel %vm167, %v153, %v181
  %v196 = vsel %vm168, %v154, %v182
  %v197 = vld [vmem:[%s1] sm:$0x1]
  %v199 = vperm.slane %v197, 0
  %v201 = vmul.f32 %v183, %v199
  %v202 = vmul.f32 %v184, %v199
  %v203 = vmul.f32 %v185, %v199
  %v204 = vmul.f32 %v186, %v199
  %v205 = vmul.f32 %v187, %v199
  %v206 = vmul.f32 %v188, %v199
  %v207 = vmul.f32 %v189, %v199
  %v208 = vmul.f32 %v190, %v199
  %v209 = vmul.f32 %v191, %v199
  %v210 = vmul.f32 %v192, %v199
  %v211 = vmul.f32 %v193, %v199
  %v212 = vmul.f32 %v194, %v199
  %v213 = vmul.f32 %v195, %v199
  %v214 = vmul.f32 %v196, %v199
  %v215 = vld [vmem:[%s2] sm:$0x1]
  %v217 = vperm.slane %v215, 0
  %v219 = vadd.f32 %v201, %v217
  %v220 = vadd.f32 %v202, %v217
  %v221 = vadd.f32 %v203, %v217
  %v222 = vadd.f32 %v204, %v217
  %v223 = vadd.f32 %v205, %v217
  %v224 = vadd.f32 %v206, %v217
  %v225 = vadd.f32 %v207, %v217
  %v226 = vadd.f32 %v208, %v217
  %v227 = vadd.f32 %v209, %v217
  %v228 = vadd.f32 %v210, %v217
  %v229 = vadd.f32 %v211, %v217
  %v230 = vadd.f32 %v212, %v217
  %v231 = vadd.f32 %v213, %v217
  %v232 = vadd.f32 %v214, %v217
  %v233 = vpack.c.bf16 %v219, %v219
  %v234 = vpack.c.bf16 %v220, %v220
  %v235 = vpack.c.bf16 %v221, %v221
  %v236 = vpack.c.bf16 %v222, %v222
  %v237 = vpack.c.bf16 %v223, %v223
  %v238 = vpack.c.bf16 %v224, %v224
  %v239 = vpack.c.bf16 %v225, %v225
  %v240 = vpack.c.bf16 %v226, %v226
  %v241 = vpack.c.bf16 %v227, %v227
  %v242 = vpack.c.bf16 %v228, %v228
  %v243 = vpack.c.bf16 %v229, %v229
  %v244 = vpack.c.bf16 %v230, %v230
  %v245 = vpack.c.bf16 %v231, %v231
  %v246 = vpack.c.bf16 %v232, %v232
  %vm247 = vcmask 519168
  %vm248 = vsmask.f32 3328
  %vm249 = vmand %vm247, %vm248
  %v250 = vld [vmem:[%s3] sm:$0xf]
  %v251 = vsel %vm249, %v233, %v250
  %252 = vst [vmem:[%s3] sm:$0xf] %v251
  %v253 = vld [vmem:[%s3 + $0x4] sm:$0xf]
  %v254 = vsel %vm249, %v234, %v253
  %255 = vst [vmem:[%s3 + $0x4] sm:$0xf] %v254
  %v256 = vld [vmem:[%s3 + $0x8] sm:$0xf]
  %v257 = vsel %vm249, %v235, %v256
  %258 = vst [vmem:[%s3 + $0x8] sm:$0xf] %v257
  %v259 = vld [vmem:[%s3 + $0xc] sm:$0xf]
  %v260 = vsel %vm249, %v236, %v259
  %261 = vst [vmem:[%s3 + $0xc] sm:$0xf] %v260
  %v262 = vld [vmem:[%s3 + $0x10] sm:$0xf]
  %v263 = vsel %vm249, %v237, %v262
  %264 = vst [vmem:[%s3 + $0x10] sm:$0xf] %v263
  %v265 = vld [vmem:[%s3 + $0x14] sm:$0xf]
  %v266 = vsel %vm249, %v238, %v265
  %267 = vst [vmem:[%s3 + $0x14] sm:$0xf] %v266
  %v268 = vld [vmem:[%s3 + $0x18] sm:$0xf]
  %v269 = vsel %vm249, %v239, %v268
  %270 = vst [vmem:[%s3 + $0x18] sm:$0xf] %v269
  %v271 = vld [vmem:[%s3 + $0x1c] sm:$0xf]
  %v272 = vsel %vm249, %v240, %v271
  %273 = vst [vmem:[%s3 + $0x1c] sm:$0xf] %v272
  %v274 = vld [vmem:[%s3 + $0x20] sm:$0xf]
  %v275 = vsel %vm249, %v241, %v274
  %276 = vst [vmem:[%s3 + $0x20] sm:$0xf] %v275
  %v277 = vld [vmem:[%s3 + $0x24] sm:$0xf]
  %v278 = vsel %vm249, %v242, %v277
  %279 = vst [vmem:[%s3 + $0x24] sm:$0xf] %v278
  %v280 = vld [vmem:[%s3 + $0x28] sm:$0xf]
  %v281 = vsel %vm249, %v243, %v280
  %282 = vst [vmem:[%s3 + $0x28] sm:$0xf] %v281
  %v283 = vld [vmem:[%s3 + $0x2c] sm:$0xf]
  %v284 = vsel %vm249, %v244, %v283
  %285 = vst [vmem:[%s3 + $0x2c] sm:$0xf] %v284
  %v286 = vld [vmem:[%s3 + $0x30] sm:$0xf]
  %v287 = vsel %vm249, %v245, %v286
  %288 = vst [vmem:[%s3 + $0x30] sm:$0xf] %v287
  %v289 = vld [vmem:[%s3 + $0x34] sm:$0xf]
  %v290 = vsel %vm249, %v246, %v289
  %291 = vst [vmem:[%s3 + $0x34] sm:$0xf] %v290
  // Predicated region
  $region14: #{_lambda_.15} parent=0 // pred_check
    _
  $region15: #{_lambda_.15} parent=0 // pred_check_branch
    %293 = sbr.rel (0) target = $region17
  $region16: #{_lambda_.15} parent=0 // pred_region
    _
  $region17: #{_lambda_.15} parent=0 // pred_fallthru
    _
  // Predicated region
  $region18: #{_lambda_.15} parent=0 // pred_check
    _
  $region19: #{_lambda_.15} parent=0 // pred_check_branch
    %295 = sbr.rel (0) target = $region21
  $region20: #{_lambda_.15} parent=0 // pred_region
    _
  $region21: #{_lambda_.15} parent=0 // pred_fallthru
    _

// kernel: _lambda_.16
$region0: #{_lambda_.16}
  #allocation0 [shape = 'u32[]', space=smem, size = 0x4, offset = 0x4, fixed_abs, tag = 'smem constant byte address 0x4 - core index']
  #allocation1 [shape = 'u32[72,128]{1,0:T(1,128)}', space=vmem, size = 0x9000, scoped, tag = 'internal scratch']
  %s0 = inlined_call_operand.vmem [shape: bf16[98,576], index: 0, kind: input, shape index: {}]
  %s1 = inlined_call_operand.vmem [shape: bf16[576,128], index: 1, kind: input, shape index: {}]
  %s2 = inlined_call_operand.vmem [shape: f32[1,128], index: 2, kind: input, shape index: {}]
  %s3 = inlined_call_operand.vmem [shape: f32[1,128], index: 3, kind: input, shape index: {}]
  %s4 = inlined_call_operand.vmem [shape: f32[1,128], index: 4, kind: input, shape index: {}]
  %s5 = inlined_call_operand.vmem [shape: bf16[98,128], index: 5, kind: output, shape index: {}]
  %s6 = sld [smem:[#allocation0]]
  $region30: #{_lambda_.16} parent=0
    _
  %s8 = ssub.s32 1, %s6
  %s9 = scalar_select 0, %s8, %s6
  // Predicated region
  $region2: #{_lambda_.16} parent=0 // pred_check
    _
  $region3: #{_lambda_.16} parent=0 // pred_check_branch
    %11 = sbr.rel (0) target = $region5
  $region4: #{_lambda_.16} parent=0 // pred_region
    _
  $region5: #{_lambda_.16} parent=0 // pred_fallthru
    _
  // Predicated region
  $region6: #{_lambda_.16} parent=0 // pred_check
    _
  $region7: #{_lambda_.16} parent=0 // pred_check_branch
    %13 = sbr.rel (0) target = $region9
  $region8: #{_lambda_.16} parent=0 // pred_region
    _
  $region9: #{_lambda_.16} parent=0 // pred_fallthru
    _
  // Predicated region
  $region10: #{_lambda_.16} parent=0 // pred_check
    _
  $region11: #{_lambda_.16} parent=0 // pred_check_branch
    %15 = sbr.rel (0) target = $region13
  $region12: #{_lambda_.16} parent=0 // pred_region
    _
  $region13: #{_lambda_.16} parent=0 // pred_fallthru
    _
  // Predicated region
  $region14: #{_lambda_.16} parent=0 // pred_check
    _
  $region15: #{_lambda_.16} parent=0 // pred_check_branch
    %17 = sbr.rel (0) target = $region17
  $region16: #{_lambda_.16} parent=0 // pred_region
    _
  $region17: #{_lambda_.16} parent=0 // pred_fallthru
    _
  // Predicated region
  $region18: #{_lambda_.16} parent=0 // pred_check
    _
  $region19: #{_lambda_.16} parent=0 // pred_check_branch
    %19 = sbr.rel (0) target = $region21
  $region20: #{_lambda_.16} parent=0 // pred_region
    _
  $region21: #{_lambda_.16} parent=0 // pred_fallthru
    _
  %v21 = vld [vmem:[%s0] sm:$0xff]
  %v22 = vld [vmem:[%s0 + $0x8] sm:$0xff]
  %v23 = vld [vmem:[%s0 + $0x10] sm:$0xf]
  %v24 = vld [vmem:[%s0 + $0x14] sm:$0xff]
  %v25 = vld [vmem:[%s0 + $0x1c] sm:$0xff]
  %v26 = vld [vmem:[%s0 + $0x24] sm:$0xf]
  %v27 = vld [vmem:[%s0 + $0x28] sm:$0xff]
  %v28 = vld [vmem:[%s0 + $0x30] sm:$0xff]
  %v29 = vld [vmem:[%s0 + $0x38] sm:$0xf]
  %v30 = vld [vmem:[%s0 + $0x3c] sm:$0xff]
  %v31 = vld [vmem:[%s0 + $0x44] sm:$0xff]
  %v32 = vld [vmem:[%s0 + $0x4c] sm:$0xf]
  %v33 = vld [vmem:[%s0 + $0x50] sm:$0xff]
  %v34 = vld [vmem:[%s0 + $0x58] sm:$0xff]
  %v35 = vld [vmem:[%s0 + $0x60] sm:$0xf]
  %v36 = vld [vmem:[%s0 + $0x64] sm:$0xff]
  %v37 = vld [vmem:[%s0 + $0x6c] sm:$0xff]
  %v38 = vld [vmem:[%s0 + $0x74] sm:$0xf]
  %v39 = vld [vmem:[%s0 + $0x78] sm:$0xff]
  %v40 = vld [vmem:[%s0 + $0x80] sm:$0xff]
  %v41 = vld [vmem:[%s0 + $0x88] sm:$0xf]
  %v42 = vld [vmem:[%s0 + $0x8c] sm:$0xff]
  %v43 = vld [vmem:[%s0 + $0x94] sm:$0xff]
  %v44 = vld [vmem:[%s0 + $0x9c] sm:$0xf]
  %v45 = vld [vmem:[%s0 + $0xa0] sm:$0xff]
  %v46 = vld [vmem:[%s0 + $0xa8] sm:$0xff]
  %v47 = vld [vmem:[%s0 + $0xb0] sm:$0xf]
  %v48 = vld [vmem:[%s0 + $0xb4] sm:$0xff]
  %v49 = vld [vmem:[%s0 + $0xbc] sm:$0xff]
  %v50 = vld [vmem:[%s0 + $0xc4] sm:$0xf]
  %v51 = vld [vmem:[%s0 + $0xc8] sm:$0xff]
  %v52 = vld [vmem:[%s0 + $0xd0] sm:$0xff]
  %v53 = vld [vmem:[%s0 + $0xd8] sm:$0xf]
  %v54 = vld [vmem:[%s0 + $0xdc] sm:$0xff]
  %v55 = vld [vmem:[%s0 + $0xe4] sm:$0xff]
  %v56 = vld [vmem:[%s0 + $0xec] sm:$0xf]
  %v57 = vld [vmem:[%s0 + $0xf0] sm:$0x11]
  %v58 = vld [vmem:[%s0 + $0xf8] sm:$0x11]
  %v59 = vld [vmem:[%s0 + $0x100] sm:$0x1]
  %v60 = vld [vmem:[%s1] sm:$0xf]
  %v61 = vld [vmem:[%s1 + $0x4] sm:$0xf]
  %v62 = vld [vmem:[%s1 + $0x8] sm:$0xf]
  %v63 = vld [vmem:[%s1 + $0xc] sm:$0xf]
  %v64 = vld [vmem:[%s1 + $0x10] sm:$0xf]
  %v65 = vld [vmem:[%s1 + $0x14] sm:$0xf]
  %v66 = vld [vmem:[%s1 + $0x18] sm:$0xf]
  %v67 = vld [vmem:[%s1 + $0x1c] sm:$0xf]
  %v68 = vld [vmem:[%s1 + $0x20] sm:$0xf]
  %v69 = vld [vmem:[%s1 + $0x24] sm:$0xf]
  %v70 = vld [vmem:[%s1 + $0x28] sm:$0xf]
  %v71 = vld [vmem:[%s1 + $0x2c] sm:$0xf]
  %v72 = vld [vmem:[%s1 + $0x30] sm:$0xf]
  %v73 = vld [vmem:[%s1 + $0x34] sm:$0xf]
  %v74 = vld [vmem:[%s1 + $0x38] sm:$0xf]
  %v75 = vld [vmem:[%s1 + $0x3c] sm:$0xf]
  %v76 = vld [vmem:[%s1 + $0x40] sm:$0xf]
  %v77 = vld [vmem:[%s1 + $0x44] sm:$0xf]
  %v78 = vld [vmem:[%s1 + $0x48] sm:$0xf]
  %v79 = vld [vmem:[%s1 + $0x4c] sm:$0xf]
  %v80 = vld [vmem:[%s1 + $0x50] sm:$0xf]
  %v81 = vld [vmem:[%s1 + $0x54] sm:$0xf]
  %v82 = vld [vmem:[%s1 + $0x58] sm:$0xf]
  %v83 = vld [vmem:[%s1 + $0x5c] sm:$0xf]
  %v84 = vld [vmem:[%s1 + $0x60] sm:$0xf]
  %v85 = vld [vmem:[%s1 + $0x64] sm:$0xf]
  %v86 = vld [vmem:[%s1 + $0x68] sm:$0xf]
  %v87 = vld [vmem:[%s1 + $0x6c] sm:$0xf]
  %v88 = vld [vmem:[%s1 + $0x70] sm:$0xf]
  %v89 = vld [vmem:[%s1 + $0x74] sm:$0xf]
  %v90 = vld [vmem:[%s1 + $0x78] sm:$0xf]
  %v91 = vld [vmem:[%s1 + $0x7c] sm:$0xf]
  %v92 = vld [vmem:[%s1 + $0x80] sm:$0xf]
  %v93 = vld [vmem:[%s1 + $0x84] sm:$0xf]
  %v94 = vld [vmem:[%s1 + $0x88] sm:$0xf]
  %v95 = vld [vmem:[%s1 + $0x8c] sm:$0xf]
  %v96 = vld [vmem:[%s1 + $0x90] sm:$0xf]
  %v97 = vld [vmem:[%s1 + $0x94] sm:$0xf]
  %v98 = vld [vmem:[%s1 + $0x98] sm:$0xf]
  %v99 = vld [vmem:[%s1 + $0x9c] sm:$0xf]
  %v100 = vld [vmem:[%s1 + $0xa0] sm:$0xf]
  %v101 = vld [vmem:[%s1 + $0xa4] sm:$0xf]
  %v102 = vld [vmem:[%s1 + $0xa8] sm:$0xf]
  %v103 = vld [vmem:[%s1 + $0xac] sm:$0xf]
  %v104 = vld [vmem:[%s1 + $0xb0] sm:$0xf]
  %v105 = vld [vmem:[%s1 + $0xb4] sm:$0xf]
  %v106 = vld [vmem:[%s1 + $0xb8] sm:$0xf]
  %v107 = vld [vmem:[%s1 + $0xbc] sm:$0xf]
  %v108 = vld [vmem:[%s1 + $0xc0] sm:$0xf]
  %v109 = vld [vmem:[%s1 + $0xc4] sm:$0xf]
  %v110 = vld [vmem:[%s1 + $0xc8] sm:$0xf]
  %v111 = vld [vmem:[%s1 + $0xcc] sm:$0xf]
  %v112 = vld [vmem:[%s1 + $0xd0] sm:$0xf]
  %v113 = vld [vmem:[%s1 + $0xd4] sm:$0xf]
  %v114 = vld [vmem:[%s1 + $0xd8] sm:$0xf]
  %v115 = vld [vmem:[%s1 + $0xdc] sm:$0xf]
  %v116 = vld [vmem:[%s1 + $0xe0] sm:$0xf]
  %v117 = vld [vmem:[%s1 + $0xe4] sm:$0xf]
  %v118 = vld [vmem:[%s1 + $0xe8] sm:$0xf]
  %v119 = vld [vmem:[%s1 + $0xec] sm:$0xf]
  %v120 = vld [vmem:[%s1 + $0xf0] sm:$0xf]
  %v121 = vld [vmem:[%s1 + $0xf4] sm:$0xf]
  %v122 = vld [vmem:[%s1 + $0xf8] sm:$0xf]
  %v123 = vld [vmem:[%s1 + $0xfc] sm:$0xf]
  %v124 = vld [vmem:[%s1 + $0x100] sm:$0xf]
  %v125 = vld [vmem:[%s1 + $0x104] sm:$0xf]
  %v126 = vld [vmem:[%s1 + $0x108] sm:$0xf]
  %v127 = vld [vmem:[%s1 + $0x10c] sm:$0xf]
  %v128 = vld [vmem:[%s1 + $0x110] sm:$0xf]
  %v129 = vld [vmem:[%s1 + $0x114] sm:$0xf]
  %v130 = vld [vmem:[%s1 + $0x118] sm:$0xf]
  %v131 = vld [vmem:[%s1 + $0x11c] sm:$0xf]
  %v132 = vld [vmem:[%s2] sm:$0x1]
  %v134 = vperm.slane %v132, 0
  %v175 = vunpack.c.l.b16 %v21
  %v176 = vunpack.c.h.b16 %v21
  %v177 = vunpack.c.l.b16 %v22
  %v178 = vunpack.c.h.b16 %v22
  %v179 = vunpack.c.l.b16 %v23
  %v180 = vunpack.c.l.b16 %v24
  %v181 = vunpack.c.h.b16 %v24
  %v182 = vunpack.c.l.b16 %v25
  %v183 = vunpack.c.h.b16 %v25
  %v184 = vunpack.c.l.b16 %v26
  %v185 = vunpack.c.l.b16 %v27
  %v186 = vunpack.c.h.b16 %v27
  %v187 = vunpack.c.l.b16 %v28
  %v188 = vunpack.c.h.b16 %v28
  %v189 = vunpack.c.l.b16 %v29
  %v190 = vunpack.c.l.b16 %v30
  %v191 = vunpack.c.h.b16 %v30
  %v192 = vunpack.c.l.b16 %v31
  %v193 = vunpack.c.h.b16 %v31
  %v194 = vunpack.c.l.b16 %v32
  %v195 = vunpack.c.l.b16 %v33
  %v196 = vunpack.c.h.b16 %v33
  %v197 = vunpack.c.l.b16 %v34
  %v198 = vunpack.c.h.b16 %v34
  %v199 = vunpack.c.l.b16 %v35
  %v200 = vunpack.c.l.b16 %v36
  %v201 = vunpack.c.h.b16 %v36
  %v202 = vunpack.c.l.b16 %v37
  %v203 = vunpack.c.h.b16 %v37
  %v204 = vunpack.c.l.b16 %v38
  %v205 = vunpack.c.l.b16 %v39
  %v206 = vunpack.c.h.b16 %v39
  %v207 = vunpack.c.l.b16 %v40
  %v208 = vunpack.c.h.b16 %v40
  %v209 = vunpack.c.l.b16 %v41
  %v210 = vunpack.c.l.b16 %v42
  %v211 = vunpack.c.h.b16 %v42
  %v212 = vunpack.c.l.b16 %v43
  %v213 = vunpack.c.h.b16 %v43
  %v214 = vunpack.c.l.b16 %v44
  %v215 = vunpack.c.l.b16 %v45
  %v216 = vunpack.c.h.b16 %v45
  %v217 = vunpack.c.l.b16 %v46
  %v218 = vunpack.c.h.b16 %v46
  %v219 = vunpack.c.l.b16 %v47
  %v220 = vunpack.c.l.b16 %v48
  %v221 = vunpack.c.h.b16 %v48
  %v222 = vunpack.c.l.b16 %v49
  %v223 = vunpack.c.h.b16 %v49
  %v224 = vunpack.c.l.b16 %v50
  %v225 = vunpack.c.l.b16 %v51
  %v226 = vunpack.c.h.b16 %v51
  %v227 = vunpack.c.l.b16 %v52
  %v228 = vunpack.c.h.b16 %v52
  %v229 = vunpack.c.l.b16 %v53
  %v230 = vunpack.c.l.b16 %v54
  %v231 = vunpack.c.h.b16 %v54
  %v232 = vunpack.c.l.b16 %v55
  %v233 = vunpack.c.h.b16 %v55
  %v234 = vunpack.c.l.b16 %v56
  %v235 = vunpack.c.l.b16 %v57
  %v236 = vunpack.c.h.b16 %v57
  %v237 = vunpack.c.l.b16 %v58
  %v238 = vunpack.c.h.b16 %v58
  %v239 = vunpack.c.l.b16 %v59
  %v240 = vpack.c.b16 %v180, %v175
  %v241 = vpack.c.b16 %v181, %v176
  %v242 = vpack.c.b16 %v182, %v177
  %v243 = vpack.c.b16 %v183, %v178
  %v244 = vpack.c.b16 %v184, %v179
  %v245 = vpack.c.b16 %v190, %v185
  %v246 = vpack.c.b16 %v191, %v186
  %v247 = vpack.c.b16 %v192, %v187
  %v248 = vpack.c.b16 %v193, %v188
  %v249 = vpack.c.b16 %v194, %v189
  %v250 = vpack.c.b16 %v200, %v195
  %v251 = vpack.c.b16 %v201, %v196
  %v252 = vpack.c.b16 %v202, %v197
  %v253 = vpack.c.b16 %v203, %v198
  %v254 = vpack.c.b16 %v204, %v199
  %v255 = vpack.c.b16 %v210, %v205
  %v256 = vpack.c.b16 %v211, %v206
  %v257 = vpack.c.b16 %v212, %v207
  %v258 = vpack.c.b16 %v213, %v208
  %v259 = vpack.c.b16 %v214, %v209
  %v260 = vpack.c.b16 %v220, %v215
  %v261 = vpack.c.b16 %v221, %v216
  %v262 = vpack.c.b16 %v222, %v217
  %v263 = vpack.c.b16 %v223, %v218
  %v264 = vpack.c.b16 %v224, %v219
  %v265 = vpack.c.b16 %v230, %v225
  %v266 = vpack.c.b16 %v231, %v226
  %v267 = vpack.c.b16 %v232, %v227
  %v268 = vpack.c.b16 %v233, %v228
  %v269 = vpack.c.b16 %v234, %v229
  %v270 = vpack.c.b16 %v235, %v235
  %v271 = vpack.c.b16 %v236, %v236
  %v272 = vpack.c.b16 %v237, %v237
  %v273 = vpack.c.b16 %v238, %v238
  %v274 = vpack.c.b16 %v239, %v239
  %v375 = vunpack.c.l.b16 %v60
  %v376 = vunpack.c.l.b16 %v61
  %v377 = vunpack.c.l.b16 %v62
  %v378 = vunpack.c.l.b16 %v63
  %v379 = vunpack.c.l.b16 %v64
  %v380 = vunpack.c.l.b16 %v65
  %v381 = vunpack.c.l.b16 %v66
  %v382 = vunpack.c.l.b16 %v67
  %v383 = vunpack.c.l.b16 %v68
  %v384 = vunpack.c.l.b16 %v69
  %v385 = vunpack.c.l.b16 %v70
  %v386 = vunpack.c.l.b16 %v71
  %v387 = vunpack.c.l.b16 %v72
  %v388 = vunpack.c.l.b16 %v73
  %v389 = vunpack.c.l.b16 %v74
  %v390 = vunpack.c.l.b16 %v75
  %v391 = vunpack.c.l.b16 %v76
  %v392 = vunpack.c.l.b16 %v77
  %v393 = vunpack.c.l.b16 %v78
  %v394 = vunpack.c.l.b16 %v79
  %v395 = vunpack.c.l.b16 %v80
  %v396 = vunpack.c.l.b16 %v81
  %v397 = vunpack.c.l.b16 %v82
  %v398 = vunpack.c.l.b16 %v83
  %v399 = vunpack.c.l.b16 %v84
  %v400 = vunpack.c.l.b16 %v85
  %v401 = vunpack.c.l.b16 %v86
  %v402 = vunpack.c.l.b16 %v87
  %v403 = vunpack.c.l.b16 %v88
  %v404 = vunpack.c.l.b16 %v89
  %v405 = vunpack.c.l.b16 %v90
  %v406 = vunpack.c.l.b16 %v91
  %v407 = vunpack.c.l.b16 %v92
  %v408 = vunpack.c.l.b16 %v93
  %v409 = vunpack.c.l.b16 %v94
  %v410 = vunpack.c.l.b16 %v95
  %v411 = vunpack.c.l.b16 %v96
  %v412 = vunpack.c.l.b16 %v97
  %v413 = vunpack.c.l.b16 %v98
  %v414 = vunpack.c.l.b16 %v99
  %v415 = vunpack.c.l.b16 %v100
  %v416 = vunpack.c.l.b16 %v101
  %v417 = vunpack.c.l.b16 %v102
  %v418 = vunpack.c.l.b16 %v103
  %v419 = vunpack.c.l.b16 %v104
  %v420 = vunpack.c.l.b16 %v105
  %v421 = vunpack.c.l.b16 %v106
  %v422 = vunpack.c.l.b16 %v107
  %v423 = vunpack.c.l.b16 %v108
  %v424 = vunpack.c.l.b16 %v109
  %v425 = vunpack.c.l.b16 %v110
  %v426 = vunpack.c.l.b16 %v111
  %v427 = vunpack.c.l.b16 %v112
  %v428 = vunpack.c.l.b16 %v113
  %v429 = vunpack.c.l.b16 %v114
  %v430 = vunpack.c.l.b16 %v115
  %v431 = vunpack.c.l.b16 %v116
  %v432 = vunpack.c.l.b16 %v117
  %v433 = vunpack.c.l.b16 %v118
  %v434 = vunpack.c.l.b16 %v119
  %v435 = vunpack.c.l.b16 %v120
  %v436 = vunpack.c.l.b16 %v121
  %v437 = vunpack.c.l.b16 %v122
  %v438 = vunpack.c.l.b16 %v123
  %v439 = vunpack.c.l.b16 %v124
  %v440 = vunpack.c.l.b16 %v125
  %v441 = vunpack.c.l.b16 %v126
  %v442 = vunpack.c.l.b16 %v127
  %v443 = vunpack.c.l.b16 %v128
  %v444 = vunpack.c.l.b16 %v129
  %v445 = vunpack.c.l.b16 %v130
  %v446 = vunpack.c.l.b16 %v131
  %v447 = vpack.c.b16 %v376, %v375
  %v448 = vpack.c.b16 %v378, %v377
  %v449 = vpack.c.b16 %v380, %v379
  %v450 = vpack.c.b16 %v382, %v381
  %v451 = vpack.c.b16 %v384, %v383
  %v452 = vpack.c.b16 %v386, %v385
  %v453 = vpack.c.b16 %v388, %v387
  %v454 = vpack.c.b16 %v390, %v389
  %v455 = vpack.c.b16 %v392, %v391
  %v456 = vpack.c.b16 %v394, %v393
  %v457 = vpack.c.b16 %v396, %v395
  %v458 = vpack.c.b16 %v398, %v397
  %v459 = vpack.c.b16 %v400, %v399
  %v460 = vpack.c.b16 %v402, %v401
  %v461 = vpack.c.b16 %v404, %v403
  %v462 = vpack.c.b16 %v406, %v405
  %v463 = vpack.c.b16 %v408, %v407
  %v464 = vpack.c.b16 %v410, %v409
  %v465 = vpack.c.b16 %v412, %v411
  %v466 = vpack.c.b16 %v414, %v413
  %v467 = vpack.c.b16 %v416, %v415
  %v468 = vpack.c.b16 %v418, %v417
  %v469 = vpack.c.b16 %v420, %v419
  %v470 = vpack.c.b16 %v422, %v421
  %v471 = vpack.c.b16 %v424, %v423
  %v472 = vpack.c.b16 %v426, %v425
  %v473 = vpack.c.b16 %v428, %v427
  %v474 = vpack.c.b16 %v430, %v429
  %v475 = vpack.c.b16 %v432, %v431
  %v476 = vpack.c.b16 %v434, %v433
  %v477 = vpack.c.b16 %v436, %v435
  %v478 = vpack.c.b16 %v438, %v437
  %v479 = vpack.c.b16 %v440, %v439
  %v480 = vpack.c.b16 %v442, %v441
  %v481 = vpack.c.b16 %v444, %v443
  %v482 = vpack.c.b16 %v446, %v445
  %vm519 = vcmask 523264
  %v521 = vsel %vm519, %v244, 0
  %v524 = vsel %vm519, %v249, 0
  %v527 = vsel %vm519, %v254, 0
  %v530 = vsel %vm519, %v259, 0
  %v533 = vsel %vm519, %v264, 0
  %v536 = vsel %vm519, %v269, 0
  %v539 = vsel %vm519, %v274, 0
  %541 = vmatpush.bf16.msra.mxu0 %v454
  %542 = vmatpush.bf16.msra.mxu0 %v453
  %543 = vmatpush.bf16.msra.mxu0 %v452
  %544 = vmatpush.bf16.msra.mxu0 %v451
  %545 = vmatpush.bf16.msra.mxu0 %v450
  %546 = vmatpush.bf16.msra.mxu0 %v449
  %547 = vmatpush.bf16.msra.mxu0 %v448
  %548 = vmatpush.bf16.msra.mxu0 %v447
  %549 = vmatmul.bf16.gmra.mxu0 %v240
  %v550 = vpop.f32.mrf.mxu0
  %v551 = vadd.f32 %v134, %v550
  %v552 = vpop.f32.mrf.mxu0
  %v553 = vadd.f32 %v134, %v552
  %554 = vmatmul.bf16.gmra.mxu0 %v245
  %v555 = vpop.f32.mrf.mxu0
  %v556 = vadd.f32 %v134, %v555
  %v557 = vpop.f32.mrf.mxu0
  %v558 = vadd.f32 %v134, %v557
  %559 = vmatmul.bf16.gmra.mxu0 %v250
  %v560 = vpop.f32.mrf.mxu0
  %v561 = vadd.f32 %v134, %v560
  %v562 = vpop.f32.mrf.mxu0
  %v563 = vadd.f32 %v134, %v562
  %564 = vmatmul.bf16.gmra.mxu0 %v255
  %v565 = vpop.f32.mrf.mxu0
  %v566 = vadd.f32 %v134, %v565
  %v567 = vpop.f32.mrf.mxu0
  %v568 = vadd.f32 %v134, %v567
  %569 = vmatmul.bf16.gmra.mxu0 %v260
  %v570 = vpop.f32.mrf.mxu0
  %v571 = vadd.f32 %v134, %v570
  %v572 = vpop.f32.mrf.mxu0
  %v573 = vadd.f32 %v134, %v572
  %574 = vmatmul.bf16.gmra.mxu0 %v265
  %v575 = vpop.f32.mrf.mxu0
  %v576 = vadd.f32 %v134, %v575
  %v577 = vpop.f32.mrf.mxu0
  %v578 = vadd.f32 %v134, %v577
  %579 = vmatmul.bf16.gmra.mxu0 %v270
  %v580 = vpop.f32.mrf.mxu0
  %v581 = vadd.f32 %v134, %v580
  %v582 = vpop.f32.mrf.mxu0
  %583 = vdwg.mxu0
  %584 = vmatpush.bf16.msra.mxu0 %v462
  %585 = vmatpush.bf16.msra.mxu0 %v461
  %586 = vmatpush.bf16.msra.mxu0 %v460
  %587 = vmatpush.bf16.msra.mxu0 %v459
  %588 = vmatpush.bf16.msra.mxu0 %v458
  %589 = vmatpush.bf16.msra.mxu0 %v457
  %590 = vmatpush.bf16.msra.mxu0 %v456
  %591 = vmatpush.bf16.msra.mxu0 %v455
  %592 = vmatmul.bf16.gmra.mxu0 %v241
  %v593 = vpop.f32.mrf.mxu0
  %v594 = vadd.f32 %v551, %v593
  %v595 = vpop.f32.mrf.mxu0
  %v596 = vadd.f32 %v553, %v595
  %597 = vmatmul.bf16.gmra.mxu0 %v246
  %v598 = vpop.f32.mrf.mxu0
  %v599 = vadd.f32 %v556, %v598
  %v600 = vpop.f32.mrf.mxu0
  %v601 = vadd.f32 %v558, %v600
  %602 = vmatmul.bf16.gmra.mxu0 %v251
  %v603 = vpop.f32.mrf.mxu0
  %v604 = vadd.f32 %v561, %v603
  %v605 = vpop.f32.mrf.mxu0
  %v606 = vadd.f32 %v563, %v605
  %607 = vmatmul.bf16.gmra.mxu0 %v256
  %v608 = vpop.f32.mrf.mxu0
  %v609 = vadd.f32 %v566, %v608
  %v610 = vpop.f32.mrf.mxu0
  %v611 = vadd.f32 %v568, %v610
  %612 = vmatmul.bf16.gmra.mxu0 %v261
  %v613 = vpop.f32.mrf.mxu0
  %v614 = vadd.f32 %v571, %v613
  %v615 = vpop.f32.mrf.mxu0
  %v616 = vadd.f32 %v573, %v615
  %617 = vmatmul.bf16.gmra.mxu0 %v266
  %v618 = vpop.f32.mrf.mxu0
  %v619 = vadd.f32 %v576, %v618
  %v620 = vpop.f32.mrf.mxu0
  %v621 = vadd.f32 %v578, %v620
  %622 = vmatmul.bf16.gmra.mxu0 %v271
  %v623 = vpop.f32.mrf.mxu0
  %v624 = vadd.f32 %v581, %v623
  %v625 = vpop.f32.mrf.mxu0
  %626 = vdwg.mxu0
  %627 = vmatpush.bf16.msra.mxu0 %v470
  %628 = vmatpush.bf16.msra.mxu0 %v469
  %629 = vmatpush.bf16.msra.mxu0 %v468
  %630 = vmatpush.bf16.msra.mxu0 %v467
  %631 = vmatpush.bf16.msra.mxu0 %v466
  %632 = vmatpush.bf16.msra.mxu0 %v465
  %633 = vmatpush.bf16.msra.mxu0 %v464
  %634 = vmatpush.bf16.msra.mxu0 %v463
  %635 = vmatmul.bf16.gmra.mxu0 %v242
  %v636 = vpop.f32.mrf.mxu0
  %v637 = vadd.f32 %v594, %v636
  %v638 = vpop.f32.mrf.mxu0
  %v639 = vadd.f32 %v596, %v638
  %640 = vmatmul.bf16.gmra.mxu0 %v247
  %v641 = vpop.f32.mrf.mxu0
  %v642 = vadd.f32 %v599, %v641
  %v643 = vpop.f32.mrf.mxu0
  %v644 = vadd.f32 %v601, %v643
  %645 = vmatmul.bf16.gmra.mxu0 %v252
  %v646 = vpop.f32.mrf.mxu0
  %v647 = vadd.f32 %v604, %v646
  %v648 = vpop.f32.mrf.mxu0
  %v649 = vadd.f32 %v606, %v648
  %650 = vmatmul.bf16.gmra.mxu0 %v257
  %v651 = vpop.f32.mrf.mxu0
  %v652 = vadd.f32 %v609, %v651
  %v653 = vpop.f32.mrf.mxu0
  %v654 = vadd.f32 %v611, %v653
  %655 = vmatmul.bf16.gmra.mxu0 %v262
  %v656 = vpop.f32.mrf.mxu0
  %v657 = vadd.f32 %v614, %v656
  %v658 = vpop.f32.mrf.mxu0
  %v659 = vadd.f32 %v616, %v658
  %660 = vmatmul.bf16.gmra.mxu0 %v267
  %v661 = vpop.f32.mrf.mxu0
  %v662 = vadd.f32 %v619, %v661
  %v663 = vpop.f32.mrf.mxu0
  %v664 = vadd.f32 %v621, %v663
  %665 = vmatmul.bf16.gmra.mxu0 %v272
  %v666 = vpop.f32.mrf.mxu0
  %v667 = vadd.f32 %v624, %v666
  %v668 = vpop.f32.mrf.mxu0
  %669 = vdwg.mxu0
  %670 = vmatpush.bf16.msra.mxu0 %v478
  %671 = vmatpush.bf16.msra.mxu0 %v477
  %672 = vmatpush.bf16.msra.mxu0 %v476
  %673 = vmatpush.bf16.msra.mxu0 %v475
  %674 = vmatpush.bf16.msra.mxu0 %v474
  %675 = vmatpush.bf16.msra.mxu0 %v473
  %676 = vmatpush.bf16.msra.mxu0 %v472
  %677 = vmatpush.bf16.msra.mxu0 %v471
  %678 = vmatmul.bf16.gmra.mxu0 %v243
  %v679 = vpop.f32.mrf.mxu0
  %v680 = vadd.f32 %v637, %v679
  %v681 = vpop.f32.mrf.mxu0
  %v682 = vadd.f32 %v639, %v681
  %683 = vmatmul.bf16.gmra.mxu0 %v248
  %v684 = vpop.f32.mrf.mxu0
  %v685 = vadd.f32 %v642, %v684
  %v686 = vpop.f32.mrf.mxu0
  %v687 = vadd.f32 %v644, %v686
  %688 = vmatmul.bf16.gmra.mxu0 %v253
  %v689 = vpop.f32.mrf.mxu0
  %v690 = vadd.f32 %v647, %v689
  %v691 = vpop.f32.mrf.mxu0
  %v692 = vadd.f32 %v649, %v691
  %693 = vmatmul.bf16.gmra.mxu0 %v258
  %v694 = vpop.f32.mrf.mxu0
  %v695 = vadd.f32 %v652, %v694
  %v696 = vpop.f32.mrf.mxu0
  %v697 = vadd.f32 %v654, %v696
  %698 = vmatmul.bf16.gmra.mxu0 %v263
  %v699 = vpop.f32.mrf.mxu0
  %v700 = vadd.f32 %v657, %v699
  %v701 = vpop.f32.mrf.mxu0
  %v702 = vadd.f32 %v659, %v701
  %703 = vmatmul.bf16.gmra.mxu0 %v268
  %v704 = vpop.f32.mrf.mxu0
  %v705 = vadd.f32 %v662, %v704
  %v706 = vpop.f32.mrf.mxu0
  %v707 = vadd.f32 %v664, %v706
  %708 = vmatmul.bf16.gmra.mxu0 %v273
  %v709 = vpop.f32.mrf.mxu0
  %v710 = vadd.f32 %v667, %v709
  %v711 = vpop.f32.mrf.mxu0
  %712 = vdwg.mxu0
  %713 = vmatpush.bf16.msra.mxu0 0
  %714 = vmatpush.bf16.msra.mxu0 0
  %715 = vmatpush.bf16.msra.mxu0 0
  %716 = vmatpush.bf16.msra.mxu0 0
  %717 = vmatpush.bf16.msra.mxu0 %v482
  %718 = vmatpush.bf16.msra.mxu0 %v481
  %719 = vmatpush.bf16.msra.mxu0 %v480
  %720 = vmatpush.bf16.msra.mxu0 %v479
  %721 = vmatmul.bf16.gmra.mxu0 %v521
  %v722 = vpop.f32.mrf.mxu0
  %v723 = vadd.f32 %v680, %v722
  %v724 = vpop.f32.mrf.mxu0
  %v725 = vadd.f32 %v682, %v724
  %726 = vmatmul.bf16.gmra.mxu0 %v524
  %v727 = vpop.f32.mrf.mxu0
  %v728 = vadd.f32 %v685, %v727
  %v729 = vpop.f32.mrf.mxu0
  %v730 = vadd.f32 %v687, %v729
  %731 = vmatmul.bf16.gmra.mxu0 %v527
  %v732 = vpop.f32.mrf.mxu0
  %v733 = vadd.f32 %v690, %v732
  %v734 = vpop.f32.mrf.mxu0
  %v735 = vadd.f32 %v692, %v734
  %736 = vmatmul.bf16.gmra.mxu0 %v530
  %v737 = vpop.f32.mrf.mxu0
  %v738 = vadd.f32 %v695, %v737
  %v739 = vpop.f32.mrf.mxu0
  %v740 = vadd.f32 %v697, %v739
  %741 = vmatmul.bf16.gmra.mxu0 %v533
  %v742 = vpop.f32.mrf.mxu0
  %v743 = vadd.f32 %v700, %v742
  %v744 = vpop.f32.mrf.mxu0
  %v745 = vadd.f32 %v702, %v744
  %746 = vmatmul.bf16.gmra.mxu0 %v536
  %v747 = vpop.f32.mrf.mxu0
  %v748 = vadd.f32 %v705, %v747
  %v749 = vpop.f32.mrf.mxu0
  %v750 = vadd.f32 %v707, %v749
  %751 = vmatmul.bf16.gmra.mxu0 %v539
  %v752 = vpop.f32.mrf.mxu0
  %v753 = vadd.f32 %v710, %v752
  %v754 = vpop.f32.mrf.mxu0
  %755 = vdwg.mxu0
  %v756 = vpack.c.bf16 %v723, %v723
  %v757 = vpack.c.bf16 %v725, %v725
  %v758 = vpack.c.bf16 %v728, %v728
  %v759 = vpack.c.bf16 %v730, %v730
  %v760 = vpack.c.bf16 %v733, %v733
  %v761 = vpack.c.bf16 %v735, %v735
  %v762 = vpack.c.bf16 %v738, %v738
  %v763 = vpack.c.bf16 %v740, %v740
  %v764 = vpack.c.bf16 %v743, %v743
  %v765 = vpack.c.bf16 %v745, %v745
  %v766 = vpack.c.bf16 %v748, %v748
  %v767 = vpack.c.bf16 %v750, %v750
  %v768 = vpack.c.bf16 %v753, %v753
  %769 = vst [vmem:[%s5] sm:$0xf] %v756
  %770 = vst [vmem:[%s5 + $0x4] sm:$0xf] %v757
  %771 = vst [vmem:[%s5 + $0x8] sm:$0xf] %v758
  %772 = vst [vmem:[%s5 + $0xc] sm:$0xf] %v759
  %773 = vst [vmem:[%s5 + $0x10] sm:$0xf] %v760
  %774 = vst [vmem:[%s5 + $0x14] sm:$0xf] %v761
  %775 = vst [vmem:[%s5 + $0x18] sm:$0xf] %v762
  %776 = vst [vmem:[%s5 + $0x1c] sm:$0xf] %v763
  %777 = vst [vmem:[%s5 + $0x20] sm:$0xf] %v764
  %778 = vst [vmem:[%s5 + $0x24] sm:$0xf] %v765
  %779 = vst [vmem:[%s5 + $0x28] sm:$0xf] %v766
  %780 = vst [vmem:[%s5 + $0x2c] sm:$0xf] %v767
  %781 = vst [vmem:[%s5 + $0x30] sm:$0x1] %v768
  // Predicated region
  $region22: #{_lambda_.16} parent=0 // pred_check
    _
  $region23: #{_lambda_.16} parent=0 // pred_check_branch
    %783 = sbr.rel (0) target = $region25
  $region24: #{_lambda_.16} parent=0 // pred_region
    _
  $region25: #{_lambda_.16} parent=0 // pred_fallthru
    _
  // Predicated region
  $region26: #{_lambda_.16} parent=0 // pred_check
    _
  $region27: #{_lambda_.16} parent=0 // pred_check_branch
    %785 = sbr.rel (0) target = $region29
  $region28: #{_lambda_.16} parent=0 // pred_region
    _
  $region29: #{_lambda_.16} parent=0 // pred_fallthru
    _

// kernel: _lambda_.17
$region0: #{_lambda_.17}
  #allocation0 [shape = 'u32[]', space=smem, size = 0x4, offset = 0x4, fixed_abs, tag = 'smem constant byte address 0x4 - core index']
  #allocation1 [shape = 'u32[72,128]{1,0:T(1,128)}', space=vmem, size = 0x9000, scoped, tag = 'internal scratch']
  %s0 = inlined_call_operand.vmem [shape: bf16[6,2,3,256], index: 0, kind: input, shape index: {}]
  %s1 = inlined_call_operand.vmem [shape: f32[1,1,128], index: 1, kind: input, shape index: {}]
  %s2 = inlined_call_operand.vmem [shape: f32[1,1,128], index: 2, kind: input, shape index: {}]
  %s3 = inlined_call_operand.vmem [shape: bf16[6,3,128], index: 3, kind: output, shape index: {}]
  %s4 = sld [smem:[#allocation0]]
  $region22: #{_lambda_.17} parent=0
    _
  %s6 = ssub.s32 1, %s4
  %s7 = scalar_select 0, %s6, %s4
  // Predicated region
  $region2: #{_lambda_.17} parent=0 // pred_check
    _
  $region3: #{_lambda_.17} parent=0 // pred_check_branch
    %9 = sbr.rel (0) target = $region5
  $region4: #{_lambda_.17} parent=0 // pred_region
    _
  $region5: #{_lambda_.17} parent=0 // pred_fallthru
    _
  // Predicated region
  $region6: #{_lambda_.17} parent=0 // pred_check
    _
  $region7: #{_lambda_.17} parent=0 // pred_check_branch
    %11 = sbr.rel (0) target = $region9
  $region8: #{_lambda_.17} parent=0 // pred_region
    _
  $region9: #{_lambda_.17} parent=0 // pred_fallthru
    _
  // Predicated region
  $region10: #{_lambda_.17} parent=0 // pred_check
    _
  $region11: #{_lambda_.17} parent=0 // pred_check_branch
    %13 = sbr.rel (0) target = $region13
  $region12: #{_lambda_.17} parent=0 // pred_region
    _
  $region13: #{_lambda_.17} parent=0 // pred_fallthru
    _
  %v14 = vld [vmem:[%s0] sm:$0xf]
  %v15 = vld [vmem:[%s0 + $0x8] sm:$0xf]
  %v16 = vld [vmem:[%s0 + $0x10] sm:$0xf]
  %v17 = vld [vmem:[%s0 + $0x18] sm:$0xf]
  %v18 = vld [vmem:[%s0 + $0x20] sm:$0xf]
  %v19 = vld [vmem:[%s0 + $0x28] sm:$0xf]
  %v20 = vunpack.c.l.bf16 %v14
  %v21 = vunpack.c.l.bf16 %v15
  %v22 = vunpack.c.l.bf16 %v16
  %v23 = vunpack.c.l.bf16 %v17
  %v24 = vunpack.c.l.bf16 %v18
  %v25 = vunpack.c.l.bf16 %v19
  %s26 = scalar_lea.vmem %s0, 4
  %v27 = vld [vmem:[%s26] sm:$0xf]
  %v28 = vld [vmem:[%s26 + $0x8] sm:$0xf]
  %v29 = vld [vmem:[%s26 + $0x10] sm:$0xf]
  %v30 = vld [vmem:[%s26 + $0x18] sm:$0xf]
  %v31 = vld [vmem:[%s26 + $0x20] sm:$0xf]
  %v32 = vld [vmem:[%s26 + $0x28] sm:$0xf]
  %v33 = vunpack.c.l.bf16 %v27
  %v34 = vunpack.c.l.bf16 %v28
  %v35 = vunpack.c.l.bf16 %v29
  %v36 = vunpack.c.l.bf16 %v30
  %v37 = vunpack.c.l.bf16 %v31
  %v38 = vunpack.c.l.bf16 %v32
  %v39 = vmax.f32 %v20, %v33
  %v40 = vmax.f32 %v21, %v34
  %v41 = vmax.f32 %v22, %v35
  %v42 = vmax.f32 %v23, %v36
  %v43 = vmax.f32 %v24, %v37
  %v44 = vmax.f32 %v25, %v38
  %v51 = vrot.slane %v39, 4
  %v52 = vrot.slane %v40, 4
  %v53 = vrot.slane %v41, 4
  %v54 = vrot.slane %v42, 4
  %v55 = vrot.slane %v43, 4
  %v56 = vrot.slane %v44, 4
  %v63 = vmax.f32 %v39, %v51
  %v64 = vmax.f32 %v40, %v52
  %v65 = vmax.f32 %v41, %v53
  %v66 = vmax.f32 %v42, %v54
  %v67 = vmax.f32 %v43, %v55
  %v68 = vmax.f32 %v44, %v56
  %vm69 = vcmp.gt.f32.partialorder %v63, 0.0
  %vm70 = vcmp.gt.f32.partialorder %v64, 0.0
  %vm71 = vcmp.gt.f32.partialorder %v65, 0.0
  %vm72 = vcmp.gt.f32.partialorder %v66, 0.0
  %vm73 = vcmp.gt.f32.partialorder %v67, 0.0
  %vm74 = vcmp.gt.f32.partialorder %v68, 0.0
  %v75 = vmul.f32 %v63, 0.01
  %v76 = vmul.f32 %v64, 0.01
  %v77 = vmul.f32 %v65, 0.01
  %v78 = vmul.f32 %v66, 0.01
  %v79 = vmul.f32 %v67, 0.01
  %v80 = vmul.f32 %v68, 0.01
  %v81 = vsel %vm69, %v63, %v75
  %v82 = vsel %vm70, %v64, %v76
  %v83 = vsel %vm71, %v65, %v77
  %v84 = vsel %vm72, %v66, %v78
  %v85 = vsel %vm73, %v67, %v79
  %v86 = vsel %vm74, %v68, %v80
  %v87 = vld [vmem:[%s1] sm:$0x1]
  %v89 = vperm.slane %v87, 0
  %v91 = vmul.f32 %v81, %v89
  %v92 = vmul.f32 %v82, %v89
  %v93 = vmul.f32 %v83, %v89
  %v94 = vmul.f32 %v84, %v89
  %v95 = vmul.f32 %v85, %v89
  %v96 = vmul.f32 %v86, %v89
  %v97 = vld [vmem:[%s2] sm:$0x1]
  %v99 = vperm.slane %v97, 0
  %v101 = vadd.f32 %v91, %v99
  %v102 = vadd.f32 %v92, %v99
  %v103 = vadd.f32 %v93, %v99
  %v104 = vadd.f32 %v94, %v99
  %v105 = vadd.f32 %v95, %v99
  %v106 = vadd.f32 %v96, %v99
  %v107 = vpack.c.bf16 %v101, %v101
  %v108 = vpack.c.bf16 %v102, %v102
  %v109 = vpack.c.bf16 %v103, %v103
  %v110 = vpack.c.bf16 %v104, %v104
  %v111 = vpack.c.bf16 %v105, %v105
  %v112 = vpack.c.bf16 %v106, %v106
  %vm113 = vcmask 1041408
  %vm114 = vsmask.f32 1280
  %vm115 = vmand %vm113, %vm114
  %v116 = vld [vmem:[%s3] sm:$0x3]
  %v117 = vsel %vm115, %v107, %v116
  %118 = vst [vmem:[%s3] sm:$0x3] %v117
  %v119 = vld [vmem:[%s3 + $0x2] sm:$0x3]
  %v120 = vsel %vm115, %v108, %v119
  %121 = vst [vmem:[%s3 + $0x2] sm:$0x3] %v120
  %v122 = vld [vmem:[%s3 + $0x4] sm:$0x3]
  %v123 = vsel %vm115, %v109, %v122
  %124 = vst [vmem:[%s3 + $0x4] sm:$0x3] %v123
  %v125 = vld [vmem:[%s3 + $0x6] sm:$0x3]
  %v126 = vsel %vm115, %v110, %v125
  %127 = vst [vmem:[%s3 + $0x6] sm:$0x3] %v126
  %v128 = vld [vmem:[%s3 + $0x8] sm:$0x3]
  %v129 = vsel %vm115, %v111, %v128
  %130 = vst [vmem:[%s3 + $0x8] sm:$0x3] %v129
  %v131 = vld [vmem:[%s3 + $0xa] sm:$0x3]
  %v132 = vsel %vm115, %v112, %v131
  %133 = vst [vmem:[%s3 + $0xa] sm:$0x3] %v132
  // Predicated region
  $region14: #{_lambda_.17} parent=0 // pred_check
    _
  $region15: #{_lambda_.17} parent=0 // pred_check_branch
    %135 = sbr.rel (0) target = $region17
  $region16: #{_lambda_.17} parent=0 // pred_region
    _
  $region17: #{_lambda_.17} parent=0 // pred_fallthru
    _
  // Predicated region
  $region18: #{_lambda_.17} parent=0 // pred_check
    _
  $region19: #{_lambda_.17} parent=0 // pred_check_branch
    %137 = sbr.rel (0) target = $region21
  $region20: #{_lambda_.17} parent=0 // pred_region
    _
  $region21: #{_lambda_.17} parent=0 // pred_fallthru
    _

// kernel: _lambda_.19
$region0: #{_lambda_.19}
  #allocation0 [shape = 'u32[]', space=smem, size = 0x4, offset = 0x4, fixed_abs, tag = 'smem constant byte address 0x4 - core index']
  #allocation1 [shape = 'u32[72,128]{1,0:T(1,128)}', space=vmem, size = 0x9000, scoped, tag = 'internal scratch']
  %s0 = inlined_call_operand.vmem [shape: bf16[2,2,1,128], index: 0, kind: input, shape index: {}]
  %s1 = inlined_call_operand.vmem [shape: f32[1,1,64], index: 1, kind: input, shape index: {}]
  %s2 = inlined_call_operand.vmem [shape: f32[1,1,64], index: 2, kind: input, shape index: {}]
  %s3 = inlined_call_operand.vmem [shape: bf16[2,1,64], index: 3, kind: output, shape index: {}]
  %s4 = sld [smem:[#allocation0]]
  $region22: #{_lambda_.19} parent=0
    _
  %s6 = ssub.s32 1, %s4
  %s7 = scalar_select 0, %s6, %s4
  // Predicated region
  $region2: #{_lambda_.19} parent=0 // pred_check
    _
  $region3: #{_lambda_.19} parent=0 // pred_check_branch
    %9 = sbr.rel (0) target = $region5
  $region4: #{_lambda_.19} parent=0 // pred_region
    _
  $region5: #{_lambda_.19} parent=0 // pred_fallthru
    _
  // Predicated region
  $region6: #{_lambda_.19} parent=0 // pred_check
    _
  $region7: #{_lambda_.19} parent=0 // pred_check_branch
    %11 = sbr.rel (0) target = $region9
  $region8: #{_lambda_.19} parent=0 // pred_region
    _
  $region9: #{_lambda_.19} parent=0 // pred_fallthru
    _
  // Predicated region
  $region10: #{_lambda_.19} parent=0 // pred_check
    _
  $region11: #{_lambda_.19} parent=0 // pred_check_branch
    %13 = sbr.rel (0) target = $region13
  $region12: #{_lambda_.19} parent=0 // pred_region
    _
  $region13: #{_lambda_.19} parent=0 // pred_fallthru
    _
  %v14 = vld [vmem:[%s0] sm:$0x1]
  %v15 = vld [vmem:[%s0 + $0x2] sm:$0x1]
  %v16 = vunpack.c.l.bf16 %v14
  %v17 = vunpack.c.l.bf16 %v15
  %s18 = scalar_lea.vmem %s0, 1
  %v19 = vld [vmem:[%s18] sm:$0x1]
  %v20 = vld [vmem:[%s18 + $0x2] sm:$0x1]
  %v21 = vunpack.c.l.bf16 %v19
  %v22 = vunpack.c.l.bf16 %v20
  %v23 = vmax.f32 %v16, %v21
  %v24 = vmax.f32 %v17, %v22
  %27 = vrot.lane.b32.xlu0 %v23, 64
  %v28 = vpop.permute.xlu0 %27
  %29 = vrot.lane.b32.xlu0 %v24, 64
  %v30 = vpop.permute.xlu0 %29
  %v33 = vmax.f32 %v23, %v28
  %v34 = vmax.f32 %v24, %v30
  %vm35 = vcmp.gt.f32.partialorder %v33, 0.0
  %vm36 = vcmp.gt.f32.partialorder %v34, 0.0
  %v37 = vmul.f32 %v33, 0.01
  %v38 = vmul.f32 %v34, 0.01
  %v39 = vsel %vm35, %v33, %v37
  %v40 = vsel %vm36, %v34, %v38
  %v41 = vld [vmem:[%s1] sm:$0x1]
  %v42 = vmul.f32 %v39, %v41
  %v43 = vmul.f32 %v40, %v41
  %v44 = vld [vmem:[%s2] sm:$0x1]
  %v45 = vadd.f32 %v42, %v44
  %v46 = vadd.f32 %v43, %v44
  %v47 = vpack.c.bf16 %v45, %v45
  %v48 = vpack.c.bf16 %v46, %v46
  %vm49 = vcmask 516096
  %vm50 = vsmask.f32 256
  %vm51 = vmand %vm49, %vm50
  %v52 = vld [vmem:[%s3] sm:$0x1]
  %v53 = vsel %vm51, %v47, %v52
  %54 = vst [vmem:[%s3] sm:$0x1] %v53
  %v55 = vld [vmem:[%s3 + $0x1] sm:$0x1]
  %v56 = vsel %vm51, %v48, %v55
  %57 = vst [vmem:[%s3 + $0x1] sm:$0x1] %v56
  // Predicated region
  $region14: #{_lambda_.19} parent=0 // pred_check
    _
  $region15: #{_lambda_.19} parent=0 // pred_check_branch
    %59 = sbr.rel (0) target = $region17
  $region16: #{_lambda_.19} parent=0 // pred_region
    _
  $region17: #{_lambda_.19} parent=0 // pred_fallthru
    _
  // Predicated region
  $region18: #{_lambda_.19} parent=0 // pred_check
    _
  $region19: #{_lambda_.19} parent=0 // pred_check_branch
    %61 = sbr.rel (0) target = $region21
  $region20: #{_lambda_.19} parent=0 // pred_region
    _
  $region21: #{_lambda_.19} parent=0 // pred_fallthru
    _

// kernel: _lambda_.18
$region0: #{_lambda_.18}
  #allocation0 [shape = 'u32[]', space=smem, size = 0x4, offset = 0x4, fixed_abs, tag = 'smem constant byte address 0x4 - core index']
  #allocation1 [shape = 'u32[72,128]{1,0:T(1,128)}', space=vmem, size = 0x9000, scoped, tag = 'internal scratch']
  %s0 = inlined_call_operand.vmem [shape: bf16[18,1152], index: 0, kind: input, shape index: {}]
  %s1 = inlined_call_operand.vmem [shape: bf16[1152,64], index: 1, kind: input, shape index: {}]
  %s2 = inlined_call_operand.vmem [shape: f32[1,64], index: 2, kind: input, shape index: {}]
  %s3 = inlined_call_operand.vmem [shape: f32[1,64], index: 3, kind: input, shape index: {}]
  %s4 = inlined_call_operand.vmem [shape: f32[1,64], index: 4, kind: input, shape index: {}]
  %s5 = inlined_call_operand.vmem [shape: bf16[18,64], index: 5, kind: output, shape index: {}]
  %s6 = sld [smem:[#allocation0]]
  $region30: #{_lambda_.18} parent=0
    _
  %s8 = ssub.s32 1, %s6
  %s9 = scalar_select 0, %s8, %s6
  // Predicated region
  $region2: #{_lambda_.18} parent=0 // pred_check
    _
  $region3: #{_lambda_.18} parent=0 // pred_check_branch
    %11 = sbr.rel (0) target = $region5
  $region4: #{_lambda_.18} parent=0 // pred_region
    _
  $region5: #{_lambda_.18} parent=0 // pred_fallthru
    _
  // Predicated region
  $region6: #{_lambda_.18} parent=0 // pred_check
    _
  $region7: #{_lambda_.18} parent=0 // pred_check_branch
    %13 = sbr.rel (0) target = $region9
  $region8: #{_lambda_.18} parent=0 // pred_region
    _
  $region9: #{_lambda_.18} parent=0 // pred_fallthru
    _
  // Predicated region
  $region10: #{_lambda_.18} parent=0 // pred_check
    _
  $region11: #{_lambda_.18} parent=0 // pred_check_branch
    %15 = sbr.rel (0) target = $region13
  $region12: #{_lambda_.18} parent=0 // pred_region
    _
  $region13: #{_lambda_.18} parent=0 // pred_fallthru
    _
  // Predicated region
  $region14: #{_lambda_.18} parent=0 // pred_check
    _
  $region15: #{_lambda_.18} parent=0 // pred_check_branch
    %17 = sbr.rel (0) target = $region17
  $region16: #{_lambda_.18} parent=0 // pred_region
    _
  $region17: #{_lambda_.18} parent=0 // pred_fallthru
    _
  // Predicated region
  $region18: #{_lambda_.18} parent=0 // pred_check
    _
  $region19: #{_lambda_.18} parent=0 // pred_check_branch
    %19 = sbr.rel (0) target = $region21
  $region20: #{_lambda_.18} parent=0 // pred_region
    _
  $region21: #{_lambda_.18} parent=0 // pred_fallthru
    _
  %v20 = vld [vmem:[%s0] sm:$0xff]
  %v21 = vld [vmem:[%s0 + $0x8] sm:$0xff]
  %v22 = vld [vmem:[%s0 + $0x10] sm:$0xff]
  %v23 = vld [vmem:[%s0 + $0x18] sm:$0xff]
  %v24 = vld [vmem:[%s0 + $0x20] sm:$0xf]
  %v25 = vld [vmem:[%s0 + $0x24] sm:$0xff]
  %v26 = vld [vmem:[%s0 + $0x2c] sm:$0xff]
  %v27 = vld [vmem:[%s0 + $0x34] sm:$0xff]
  %v28 = vld [vmem:[%s0 + $0x3c] sm:$0xff]
  %v29 = vld [vmem:[%s0 + $0x44] sm:$0xf]
  %v30 = vld [vmem:[%s0 + $0x48] sm:$0x11]
  %v31 = vld [vmem:[%s0 + $0x50] sm:$0x11]
  %v32 = vld [vmem:[%s0 + $0x58] sm:$0x11]
  %v33 = vld [vmem:[%s0 + $0x60] sm:$0x11]
  %v34 = vld [vmem:[%s0 + $0x68] sm:$0x1]
  %v35 = vld [vmem:[%s1] sm:$0xf]
  %v36 = vld [vmem:[%s1 + $0x4] sm:$0xf]
  %v37 = vld [vmem:[%s1 + $0x8] sm:$0xf]
  %v38 = vld [vmem:[%s1 + $0xc] sm:$0xf]
  %v39 = vld [vmem:[%s1 + $0x10] sm:$0xf]
  %v40 = vld [vmem:[%s1 + $0x14] sm:$0xf]
  %v41 = vld [vmem:[%s1 + $0x18] sm:$0xf]
  %v42 = vld [vmem:[%s1 + $0x1c] sm:$0xf]
  %v43 = vld [vmem:[%s1 + $0x20] sm:$0xf]
  %v44 = vld [vmem:[%s1 + $0x24] sm:$0xf]
  %v45 = vld [vmem:[%s1 + $0x28] sm:$0xf]
  %v46 = vld [vmem:[%s1 + $0x2c] sm:$0xf]
  %v47 = vld [vmem:[%s1 + $0x30] sm:$0xf]
  %v48 = vld [vmem:[%s1 + $0x34] sm:$0xf]
  %v49 = vld [vmem:[%s1 + $0x38] sm:$0xf]
  %v50 = vld [vmem:[%s1 + $0x3c] sm:$0xf]
  %v51 = vld [vmem:[%s1 + $0x40] sm:$0xf]
  %v52 = vld [vmem:[%s1 + $0x44] sm:$0xf]
  %v53 = vld [vmem:[%s1 + $0x48] sm:$0xf]
  %v54 = vld [vmem:[%s1 + $0x4c] sm:$0xf]
  %v55 = vld [vmem:[%s1 + $0x50] sm:$0xf]
  %v56 = vld [vmem:[%s1 + $0x54] sm:$0xf]
  %v57 = vld [vmem:[%s1 + $0x58] sm:$0xf]
  %v58 = vld [vmem:[%s1 + $0x5c] sm:$0xf]
  %v59 = vld [vmem:[%s1 + $0x60] sm:$0xf]
  %v60 = vld [vmem:[%s1 + $0x64] sm:$0xf]
  %v61 = vld [vmem:[%s1 + $0x68] sm:$0xf]
  %v62 = vld [vmem:[%s1 + $0x6c] sm:$0xf]
  %v63 = vld [vmem:[%s1 + $0x70] sm:$0xf]
  %v64 = vld [vmem:[%s1 + $0x74] sm:$0xf]
  %v65 = vld [vmem:[%s1 + $0x78] sm:$0xf]
  %v66 = vld [vmem:[%s1 + $0x7c] sm:$0xf]
  %v67 = vld [vmem:[%s1 + $0x80] sm:$0xf]
  %v68 = vld [vmem:[%s1 + $0x84] sm:$0xf]
  %v69 = vld [vmem:[%s1 + $0x88] sm:$0xf]
  %v70 = vld [vmem:[%s1 + $0x8c] sm:$0xf]
  %v71 = vld [vmem:[%s1 + $0x90] sm:$0xf]
  %v72 = vld [vmem:[%s1 + $0x94] sm:$0xf]
  %v73 = vld [vmem:[%s1 + $0x98] sm:$0xf]
  %v74 = vld [vmem:[%s1 + $0x9c] sm:$0xf]
  %v75 = vld [vmem:[%s1 + $0xa0] sm:$0xf]
  %v76 = vld [vmem:[%s1 + $0xa4] sm:$0xf]
  %v77 = vld [vmem:[%s1 + $0xa8] sm:$0xf]
  %v78 = vld [vmem:[%s1 + $0xac] sm:$0xf]
  %v79 = vld [vmem:[%s1 + $0xb0] sm:$0xf]
  %v80 = vld [vmem:[%s1 + $0xb4] sm:$0xf]
  %v81 = vld [vmem:[%s1 + $0xb8] sm:$0xf]
  %v82 = vld [vmem:[%s1 + $0xbc] sm:$0xf]
  %v83 = vld [vmem:[%s1 + $0xc0] sm:$0xf]
  %v84 = vld [vmem:[%s1 + $0xc4] sm:$0xf]
  %v85 = vld [vmem:[%s1 + $0xc8] sm:$0xf]
  %v86 = vld [vmem:[%s1 + $0xcc] sm:$0xf]
  %v87 = vld [vmem:[%s1 + $0xd0] sm:$0xf]
  %v88 = vld [vmem:[%s1 + $0xd4] sm:$0xf]
  %v89 = vld [vmem:[%s1 + $0xd8] sm:$0xf]
  %v90 = vld [vmem:[%s1 + $0xdc] sm:$0xf]
  %v91 = vld [vmem:[%s1 + $0xe0] sm:$0xf]
  %v92 = vld [vmem:[%s1 + $0xe4] sm:$0xf]
  %v93 = vld [vmem:[%s1 + $0xe8] sm:$0xf]
  %v94 = vld [vmem:[%s1 + $0xec] sm:$0xf]
  %v95 = vld [vmem:[%s1 + $0xf0] sm:$0xf]
  %v96 = vld [vmem:[%s1 + $0xf4] sm:$0xf]
  %v97 = vld [vmem:[%s1 + $0xf8] sm:$0xf]
  %v98 = vld [vmem:[%s1 + $0xfc] sm:$0xf]
  %v99 = vld [vmem:[%s1 + $0x100] sm:$0xf]
  %v100 = vld [vmem:[%s1 + $0x104] sm:$0xf]
  %v101 = vld [vmem:[%s1 + $0x108] sm:$0xf]
  %v102 = vld [vmem:[%s1 + $0x10c] sm:$0xf]
  %v103 = vld [vmem:[%s1 + $0x110] sm:$0xf]
  %v104 = vld [vmem:[%s1 + $0x114] sm:$0xf]
  %v105 = vld [vmem:[%s1 + $0x118] sm:$0xf]
  %v106 = vld [vmem:[%s1 + $0x11c] sm:$0xf]
  %v107 = vld [vmem:[%s1 + $0x120] sm:$0xf]
  %v108 = vld [vmem:[%s1 + $0x124] sm:$0xf]
  %v109 = vld [vmem:[%s1 + $0x128] sm:$0xf]
  %v110 = vld [vmem:[%s1 + $0x12c] sm:$0xf]
  %v111 = vld [vmem:[%s1 + $0x130] sm:$0xf]
  %v112 = vld [vmem:[%s1 + $0x134] sm:$0xf]
  %v113 = vld [vmem:[%s1 + $0x138] sm:$0xf]
  %v114 = vld [vmem:[%s1 + $0x13c] sm:$0xf]
  %v115 = vld [vmem:[%s1 + $0x140] sm:$0xf]
  %v116 = vld [vmem:[%s1 + $0x144] sm:$0xf]
  %v117 = vld [vmem:[%s1 + $0x148] sm:$0xf]
  %v118 = vld [vmem:[%s1 + $0x14c] sm:$0xf]
  %v119 = vld [vmem:[%s1 + $0x150] sm:$0xf]
  %v120 = vld [vmem:[%s1 + $0x154] sm:$0xf]
  %v121 = vld [vmem:[%s1 + $0x158] sm:$0xf]
  %v122 = vld [vmem:[%s1 + $0x15c] sm:$0xf]
  %v123 = vld [vmem:[%s1 + $0x160] sm:$0xf]
  %v124 = vld [vmem:[%s1 + $0x164] sm:$0xf]
  %v125 = vld [vmem:[%s1 + $0x168] sm:$0xf]
  %v126 = vld [vmem:[%s1 + $0x16c] sm:$0xf]
  %v127 = vld [vmem:[%s1 + $0x170] sm:$0xf]
  %v128 = vld [vmem:[%s1 + $0x174] sm:$0xf]
  %v129 = vld [vmem:[%s1 + $0x178] sm:$0xf]
  %v130 = vld [vmem:[%s1 + $0x17c] sm:$0xf]
  %v131 = vld [vmem:[%s1 + $0x180] sm:$0xf]
  %v132 = vld [vmem:[%s1 + $0x184] sm:$0xf]
  %v133 = vld [vmem:[%s1 + $0x188] sm:$0xf]
  %v134 = vld [vmem:[%s1 + $0x18c] sm:$0xf]
  %v135 = vld [vmem:[%s1 + $0x190] sm:$0xf]
  %v136 = vld [vmem:[%s1 + $0x194] sm:$0xf]
  %v137 = vld [vmem:[%s1 + $0x198] sm:$0xf]
  %v138 = vld [vmem:[%s1 + $0x19c] sm:$0xf]
  %v139 = vld [vmem:[%s1 + $0x1a0] sm:$0xf]
  %v140 = vld [vmem:[%s1 + $0x1a4] sm:$0xf]
  %v141 = vld [vmem:[%s1 + $0x1a8] sm:$0xf]
  %v142 = vld [vmem:[%s1 + $0x1ac] sm:$0xf]
  %v143 = vld [vmem:[%s1 + $0x1b0] sm:$0xf]
  %v144 = vld [vmem:[%s1 + $0x1b4] sm:$0xf]
  %v145 = vld [vmem:[%s1 + $0x1b8] sm:$0xf]
  %v146 = vld [vmem:[%s1 + $0x1bc] sm:$0xf]
  %v147 = vld [vmem:[%s1 + $0x1c0] sm:$0xf]
  %v148 = vld [vmem:[%s1 + $0x1c4] sm:$0xf]
  %v149 = vld [vmem:[%s1 + $0x1c8] sm:$0xf]
  %v150 = vld [vmem:[%s1 + $0x1cc] sm:$0xf]
  %v151 = vld [vmem:[%s1 + $0x1d0] sm:$0xf]
  %v152 = vld [vmem:[%s1 + $0x1d4] sm:$0xf]
  %v153 = vld [vmem:[%s1 + $0x1d8] sm:$0xf]
  %v154 = vld [vmem:[%s1 + $0x1dc] sm:$0xf]
  %v155 = vld [vmem:[%s1 + $0x1e0] sm:$0xf]
  %v156 = vld [vmem:[%s1 + $0x1e4] sm:$0xf]
  %v157 = vld [vmem:[%s1 + $0x1e8] sm:$0xf]
  %v158 = vld [vmem:[%s1 + $0x1ec] sm:$0xf]
  %v159 = vld [vmem:[%s1 + $0x1f0] sm:$0xf]
  %v160 = vld [vmem:[%s1 + $0x1f4] sm:$0xf]
  %v161 = vld [vmem:[%s1 + $0x1f8] sm:$0xf]
  %v162 = vld [vmem:[%s1 + $0x1fc] sm:$0xf]
  %v163 = vld [vmem:[%s1 + $0x200] sm:$0xf]
  %v164 = vld [vmem:[%s1 + $0x204] sm:$0xf]
  %v165 = vld [vmem:[%s1 + $0x208] sm:$0xf]
  %v166 = vld [vmem:[%s1 + $0x20c] sm:$0xf]
  %v167 = vld [vmem:[%s1 + $0x210] sm:$0xf]
  %v168 = vld [vmem:[%s1 + $0x214] sm:$0xf]
  %v169 = vld [vmem:[%s1 + $0x218] sm:$0xf]
  %v170 = vld [vmem:[%s1 + $0x21c] sm:$0xf]
  %v171 = vld [vmem:[%s1 + $0x220] sm:$0xf]
  %v172 = vld [vmem:[%s1 + $0x224] sm:$0xf]
  %v173 = vld [vmem:[%s1 + $0x228] sm:$0xf]
  %v174 = vld [vmem:[%s1 + $0x22c] sm:$0xf]
  %v175 = vld [vmem:[%s1 + $0x230] sm:$0xf]
  %v176 = vld [vmem:[%s1 + $0x234] sm:$0xf]
  %v177 = vld [vmem:[%s1 + $0x238] sm:$0xf]
  %v178 = vld [vmem:[%s1 + $0x23c] sm:$0xf]
  %v179 = vld [vmem:[%s2] sm:$0x1]
  %v181 = vperm.slane %v179, 0
  %v198 = vunpack.c.l.b16 %v20
  %v199 = vunpack.c.h.b16 %v20
  %v200 = vunpack.c.l.b16 %v21
  %v201 = vunpack.c.h.b16 %v21
  %v202 = vunpack.c.l.b16 %v22
  %v203 = vunpack.c.h.b16 %v22
  %v204 = vunpack.c.l.b16 %v23
  %v205 = vunpack.c.h.b16 %v23
  %v206 = vunpack.c.l.b16 %v24
  %v207 = vunpack.c.l.b16 %v25
  %v208 = vunpack.c.h.b16 %v25
  %v209 = vunpack.c.l.b16 %v26
  %v210 = vunpack.c.h.b16 %v26
  %v211 = vunpack.c.l.b16 %v27
  %v212 = vunpack.c.h.b16 %v27
  %v213 = vunpack.c.l.b16 %v28
  %v214 = vunpack.c.h.b16 %v28
  %v215 = vunpack.c.l.b16 %v29
  %v216 = vunpack.c.l.b16 %v30
  %v217 = vunpack.c.h.b16 %v30
  %v218 = vunpack.c.l.b16 %v31
  %v219 = vunpack.c.h.b16 %v31
  %v220 = vunpack.c.l.b16 %v32
  %v221 = vunpack.c.h.b16 %v32
  %v222 = vunpack.c.l.b16 %v33
  %v223 = vunpack.c.h.b16 %v33
  %v224 = vunpack.c.l.b16 %v34
  %v225 = vpack.c.b16 %v207, %v198
  %v226 = vpack.c.b16 %v208, %v199
  %v227 = vpack.c.b16 %v209, %v200
  %v228 = vpack.c.b16 %v210, %v201
  %v229 = vpack.c.b16 %v211, %v202
  %v230 = vpack.c.b16 %v212, %v203
  %v231 = vpack.c.b16 %v213, %v204
  %v232 = vpack.c.b16 %v214, %v205
  %v233 = vpack.c.b16 %v215, %v206
  %v234 = vpack.c.b16 %v216, %v216
  %v235 = vpack.c.b16 %v217, %v217
  %v236 = vpack.c.b16 %v218, %v218
  %v237 = vpack.c.b16 %v219, %v219
  %v238 = vpack.c.b16 %v220, %v220
  %v239 = vpack.c.b16 %v221, %v221
  %v240 = vpack.c.b16 %v222, %v222
  %v241 = vpack.c.b16 %v223, %v223
  %v242 = vpack.c.b16 %v224, %v224
  %v405 = vunpack.c.l.b16 %v35
  %v406 = vunpack.c.l.b16 %v36
  %v407 = vunpack.c.l.b16 %v37
  %v408 = vunpack.c.l.b16 %v38
  %v409 = vunpack.c.l.b16 %v39
  %v410 = vunpack.c.l.b16 %v40
  %v411 = vunpack.c.l.b16 %v41
  %v412 = vunpack.c.l.b16 %v42
  %v413 = vunpack.c.l.b16 %v43
  %v414 = vunpack.c.l.b16 %v44
  %v415 = vunpack.c.l.b16 %v45
  %v416 = vunpack.c.l.b16 %v46
  %v417 = vunpack.c.l.b16 %v47
  %v418 = vunpack.c.l.b16 %v48
  %v419 = vunpack.c.l.b16 %v49
  %v420 = vunpack.c.l.b16 %v50
  %v421 = vunpack.c.l.b16 %v51
  %v422 = vunpack.c.l.b16 %v52
  %v423 = vunpack.c.l.b16 %v53
  %v424 = vunpack.c.l.b16 %v54
  %v425 = vunpack.c.l.b16 %v55
  %v426 = vunpack.c.l.b16 %v56
  %v427 = vunpack.c.l.b16 %v57
  %v428 = vunpack.c.l.b16 %v58
  %v429 = vunpack.c.l.b16 %v59
  %v430 = vunpack.c.l.b16 %v60
  %v431 = vunpack.c.l.b16 %v61
  %v432 = vunpack.c.l.b16 %v62
  %v433 = vunpack.c.l.b16 %v63
  %v434 = vunpack.c.l.b16 %v64
  %v435 = vunpack.c.l.b16 %v65
  %v436 = vunpack.c.l.b16 %v66
  %v437 = vunpack.c.l.b16 %v67
  %v438 = vunpack.c.l.b16 %v68
  %v439 = vunpack.c.l.b16 %v69
  %v440 = vunpack.c.l.b16 %v70
  %v441 = vunpack.c.l.b16 %v71
  %v442 = vunpack.c.l.b16 %v72
  %v443 = vunpack.c.l.b16 %v73
  %v444 = vunpack.c.l.b16 %v74
  %v445 = vunpack.c.l.b16 %v75
  %v446 = vunpack.c.l.b16 %v76
  %v447 = vunpack.c.l.b16 %v77
  %v448 = vunpack.c.l.b16 %v78
  %v449 = vunpack.c.l.b16 %v79
  %v450 = vunpack.c.l.b16 %v80
  %v451 = vunpack.c.l.b16 %v81
  %v452 = vunpack.c.l.b16 %v82
  %v453 = vunpack.c.l.b16 %v83
  %v454 = vunpack.c.l.b16 %v84
  %v455 = vunpack.c.l.b16 %v85
  %v456 = vunpack.c.l.b16 %v86
  %v457 = vunpack.c.l.b16 %v87
  %v458 = vunpack.c.l.b16 %v88
  %v459 = vunpack.c.l.b16 %v89
  %v460 = vunpack.c.l.b16 %v90
  %v461 = vunpack.c.l.b16 %v91
  %v462 = vunpack.c.l.b16 %v92
  %v463 = vunpack.c.l.b16 %v93
  %v464 = vunpack.c.l.b16 %v94
  %v465 = vunpack.c.l.b16 %v95
  %v466 = vunpack.c.l.b16 %v96
  %v467 = vunpack.c.l.b16 %v97
  %v468 = vunpack.c.l.b16 %v98
  %v469 = vunpack.c.l.b16 %v99
  %v470 = vunpack.c.l.b16 %v100
  %v471 = vunpack.c.l.b16 %v101
  %v472 = vunpack.c.l.b16 %v102
  %v473 = vunpack.c.l.b16 %v103
  %v474 = vunpack.c.l.b16 %v104
  %v475 = vunpack.c.l.b16 %v105
  %v476 = vunpack.c.l.b16 %v106
  %v477 = vunpack.c.l.b16 %v107
  %v478 = vunpack.c.l.b16 %v108
  %v479 = vunpack.c.l.b16 %v109
  %v480 = vunpack.c.l.b16 %v110
  %v481 = vunpack.c.l.b16 %v111
  %v482 = vunpack.c.l.b16 %v112
  %v483 = vunpack.c.l.b16 %v113
  %v484 = vunpack.c.l.b16 %v114
  %v485 = vunpack.c.l.b16 %v115
  %v486 = vunpack.c.l.b16 %v116
  %v487 = vunpack.c.l.b16 %v117
  %v488 = vunpack.c.l.b16 %v118
  %v489 = vunpack.c.l.b16 %v119
  %v490 = vunpack.c.l.b16 %v120
  %v491 = vunpack.c.l.b16 %v121
  %v492 = vunpack.c.l.b16 %v122
  %v493 = vunpack.c.l.b16 %v123
  %v494 = vunpack.c.l.b16 %v124
  %v495 = vunpack.c.l.b16 %v125
  %v496 = vunpack.c.l.b16 %v126
  %v497 = vunpack.c.l.b16 %v127
  %v498 = vunpack.c.l.b16 %v128
  %v499 = vunpack.c.l.b16 %v129
  %v500 = vunpack.c.l.b16 %v130
  %v501 = vunpack.c.l.b16 %v131
  %v502 = vunpack.c.l.b16 %v132
  %v503 = vunpack.c.l.b16 %v133
  %v504 = vunpack.c.l.b16 %v134
  %v505 = vunpack.c.l.b16 %v135
  %v506 = vunpack.c.l.b16 %v136
  %v507 = vunpack.c.l.b16 %v137
  %v508 = vunpack.c.l.b16 %v138
  %v509 = vunpack.c.l.b16 %v139
  %v510 = vunpack.c.l.b16 %v140
  %v511 = vunpack.c.l.b16 %v141
  %v512 = vunpack.c.l.b16 %v142
  %v513 = vunpack.c.l.b16 %v143
  %v514 = vunpack.c.l.b16 %v144
  %v515 = vunpack.c.l.b16 %v145
  %v516 = vunpack.c.l.b16 %v146
  %v517 = vunpack.c.l.b16 %v147
  %v518 = vunpack.c.l.b16 %v148
  %v519 = vunpack.c.l.b16 %v149
  %v520 = vunpack.c.l.b16 %v150
  %v521 = vunpack.c.l.b16 %v151
  %v522 = vunpack.c.l.b16 %v152
  %v523 = vunpack.c.l.b16 %v153
  %v524 = vunpack.c.l.b16 %v154
  %v525 = vunpack.c.l.b16 %v155
  %v526 = vunpack.c.l.b16 %v156
  %v527 = vunpack.c.l.b16 %v157
  %v528 = vunpack.c.l.b16 %v158
  %v529 = vunpack.c.l.b16 %v159
  %v530 = vunpack.c.l.b16 %v160
  %v531 = vunpack.c.l.b16 %v161
  %v532 = vunpack.c.l.b16 %v162
  %v533 = vunpack.c.l.b16 %v163
  %v534 = vunpack.c.l.b16 %v164
  %v535 = vunpack.c.l.b16 %v165
  %v536 = vunpack.c.l.b16 %v166
  %v537 = vunpack.c.l.b16 %v167
  %v538 = vunpack.c.l.b16 %v168
  %v539 = vunpack.c.l.b16 %v169
  %v540 = vunpack.c.l.b16 %v170
  %v541 = vunpack.c.l.b16 %v171
  %v542 = vunpack.c.l.b16 %v172
  %v543 = vunpack.c.l.b16 %v173
  %v544 = vunpack.c.l.b16 %v174
  %v545 = vunpack.c.l.b16 %v175
  %v546 = vunpack.c.l.b16 %v176
  %v547 = vunpack.c.l.b16 %v177
  %v548 = vunpack.c.l.b16 %v178
  %v549 = vpack.c.b16 %v406, %v405
  %v550 = vpack.c.b16 %v408, %v407
  %v551 = vpack.c.b16 %v410, %v409
  %v552 = vpack.c.b16 %v412, %v411
  %v553 = vpack.c.b16 %v414, %v413
  %v554 = vpack.c.b16 %v416, %v415
  %v555 = vpack.c.b16 %v418, %v417
  %v556 = vpack.c.b16 %v420, %v419
  %v557 = vpack.c.b16 %v422, %v421
  %v558 = vpack.c.b16 %v424, %v423
  %v559 = vpack.c.b16 %v426, %v425
  %v560 = vpack.c.b16 %v428, %v427
  %v561 = vpack.c.b16 %v430, %v429
  %v562 = vpack.c.b16 %v432, %v431
  %v563 = vpack.c.b16 %v434, %v433
  %v564 = vpack.c.b16 %v436, %v435
  %v565 = vpack.c.b16 %v438, %v437
  %v566 = vpack.c.b16 %v440, %v439
  %v567 = vpack.c.b16 %v442, %v441
  %v568 = vpack.c.b16 %v444, %v443
  %v569 = vpack.c.b16 %v446, %v445
  %v570 = vpack.c.b16 %v448, %v447
  %v571 = vpack.c.b16 %v450, %v449
  %v572 = vpack.c.b16 %v452, %v451
  %v573 = vpack.c.b16 %v454, %v453
  %v574 = vpack.c.b16 %v456, %v455
  %v575 = vpack.c.b16 %v458, %v457
  %v576 = vpack.c.b16 %v460, %v459
  %v577 = vpack.c.b16 %v462, %v461
  %v578 = vpack.c.b16 %v464, %v463
  %v579 = vpack.c.b16 %v466, %v465
  %v580 = vpack.c.b16 %v468, %v467
  %v581 = vpack.c.b16 %v470, %v469
  %v582 = vpack.c.b16 %v472, %v471
  %v583 = vpack.c.b16 %v474, %v473
  %v584 = vpack.c.b16 %v476, %v475
  %v585 = vpack.c.b16 %v478, %v477
  %v586 = vpack.c.b16 %v480, %v479
  %v587 = vpack.c.b16 %v482, %v481
  %v588 = vpack.c.b16 %v484, %v483
  %v589 = vpack.c.b16 %v486, %v485
  %v590 = vpack.c.b16 %v488, %v487
  %v591 = vpack.c.b16 %v490, %v489
  %v592 = vpack.c.b16 %v492, %v491
  %v593 = vpack.c.b16 %v494, %v493
  %v594 = vpack.c.b16 %v496, %v495
  %v595 = vpack.c.b16 %v498, %v497
  %v596 = vpack.c.b16 %v500, %v499
  %v597 = vpack.c.b16 %v502, %v501
  %v598 = vpack.c.b16 %v504, %v503
  %v599 = vpack.c.b16 %v506, %v505
  %v600 = vpack.c.b16 %v508, %v507
  %v601 = vpack.c.b16 %v510, %v509
  %v602 = vpack.c.b16 %v512, %v511
  %v603 = vpack.c.b16 %v514, %v513
  %v604 = vpack.c.b16 %v516, %v515
  %v605 = vpack.c.b16 %v518, %v517
  %v606 = vpack.c.b16 %v520, %v519
  %v607 = vpack.c.b16 %v522, %v521
  %v608 = vpack.c.b16 %v524, %v523
  %v609 = vpack.c.b16 %v526, %v525
  %v610 = vpack.c.b16 %v528, %v527
  %v611 = vpack.c.b16 %v530, %v529
  %v612 = vpack.c.b16 %v532, %v531
  %v613 = vpack.c.b16 %v534, %v533
  %v614 = vpack.c.b16 %v536, %v535
  %v615 = vpack.c.b16 %v538, %v537
  %v616 = vpack.c.b16 %v540, %v539
  %v617 = vpack.c.b16 %v542, %v541
  %v618 = vpack.c.b16 %v544, %v543
  %v619 = vpack.c.b16 %v546, %v545
  %v620 = vpack.c.b16 %v548, %v547
  %693 = vmatpush.bf16.msra.mxu0 %v556
  %694 = vmatpush.bf16.msra.mxu0 %v555
  %695 = vmatpush.bf16.msra.mxu0 %v554
  %696 = vmatpush.bf16.msra.mxu0 %v553
  %697 = vmatpush.bf16.msra.mxu0 %v552
  %698 = vmatpush.bf16.msra.mxu0 %v551
  %699 = vmatpush.bf16.msra.mxu0 %v550
  %700 = vmatpush.bf16.msra.mxu0 %v549
  %701 = vmatmul.bf16.gmra.mxu0 %v225
  %v702 = vpop.f32.mrf.mxu0
  %v703 = vadd.f32 %v181, %v702
  %v704 = vpop.f32.mrf.mxu0
  %v705 = vadd.f32 %v181, %v704
  %706 = vmatmul.bf16.gmra.mxu0 %v234
  %v707 = vpop.f32.mrf.mxu0
  %v708 = vadd.f32 %v181, %v707
  %v709 = vpop.f32.mrf.mxu0
  %710 = vdwg.mxu0
  %711 = vmatpush.bf16.msra.mxu0 %v564
  %712 = vmatpush.bf16.msra.mxu0 %v563
  %713 = vmatpush.bf16.msra.mxu0 %v562
  %714 = vmatpush.bf16.msra.mxu0 %v561
  %715 = vmatpush.bf16.msra.mxu0 %v560
  %716 = vmatpush.bf16.msra.mxu0 %v559
  %717 = vmatpush.bf16.msra.mxu0 %v558
  %718 = vmatpush.bf16.msra.mxu0 %v557
  %719 = vmatmul.bf16.gmra.mxu0 %v226
  %v720 = vpop.f32.mrf.mxu0
  %v721 = vadd.f32 %v703, %v720
  %v722 = vpop.f32.mrf.mxu0
  %v723 = vadd.f32 %v705, %v722
  %724 = vmatmul.bf16.gmra.mxu0 %v235
  %v725 = vpop.f32.mrf.mxu0
  %v726 = vadd.f32 %v708, %v725
  %v727 = vpop.f32.mrf.mxu0
  %728 = vdwg.mxu0
  %729 = vmatpush.bf16.msra.mxu0 %v572
  %730 = vmatpush.bf16.msra.mxu0 %v571
  %731 = vmatpush.bf16.msra.mxu0 %v570
  %732 = vmatpush.bf16.msra.mxu0 %v569
  %733 = vmatpush.bf16.msra.mxu0 %v568
  %734 = vmatpush.bf16.msra.mxu0 %v567
  %735 = vmatpush.bf16.msra.mxu0 %v566
  %736 = vmatpush.bf16.msra.mxu0 %v565
  %737 = vmatmul.bf16.gmra.mxu0 %v227
  %v738 = vpop.f32.mrf.mxu0
  %v739 = vadd.f32 %v721, %v738
  %v740 = vpop.f32.mrf.mxu0
  %v741 = vadd.f32 %v723, %v740
  %742 = vmatmul.bf16.gmra.mxu0 %v236
  %v743 = vpop.f32.mrf.mxu0
  %v744 = vadd.f32 %v726, %v743
  %v745 = vpop.f32.mrf.mxu0
  %746 = vdwg.mxu0
  %747 = vmatpush.bf16.msra.mxu0 %v580
  %748 = vmatpush.bf16.msra.mxu0 %v579
  %749 = vmatpush.bf16.msra.mxu0 %v578
  %750 = vmatpush.bf16.msra.mxu0 %v577
  %751 = vmatpush.bf16.msra.mxu0 %v576
  %752 = vmatpush.bf16.msra.mxu0 %v575
  %753 = vmatpush.bf16.msra.mxu0 %v574
  %754 = vmatpush.bf16.msra.mxu0 %v573
  %755 = vmatmul.bf16.gmra.mxu0 %v228
  %v756 = vpop.f32.mrf.mxu0
  %v757 = vadd.f32 %v739, %v756
  %v758 = vpop.f32.mrf.mxu0
  %v759 = vadd.f32 %v741, %v758
  %760 = vmatmul.bf16.gmra.mxu0 %v237
  %v761 = vpop.f32.mrf.mxu0
  %v762 = vadd.f32 %v744, %v761
  %v763 = vpop.f32.mrf.mxu0
  %764 = vdwg.mxu0
  %765 = vmatpush.bf16.msra.mxu0 %v588
  %766 = vmatpush.bf16.msra.mxu0 %v587
  %767 = vmatpush.bf16.msra.mxu0 %v586
  %768 = vmatpush.bf16.msra.mxu0 %v585
  %769 = vmatpush.bf16.msra.mxu0 %v584
  %770 = vmatpush.bf16.msra.mxu0 %v583
  %771 = vmatpush.bf16.msra.mxu0 %v582
  %772 = vmatpush.bf16.msra.mxu0 %v581
  %773 = vmatmul.bf16.gmra.mxu0 %v229
  %v774 = vpop.f32.mrf.mxu0
  %v775 = vadd.f32 %v757, %v774
  %v776 = vpop.f32.mrf.mxu0
  %v777 = vadd.f32 %v759, %v776
  %778 = vmatmul.bf16.gmra.mxu0 %v238
  %v779 = vpop.f32.mrf.mxu0
  %v780 = vadd.f32 %v762, %v779
  %v781 = vpop.f32.mrf.mxu0
  %782 = vdwg.mxu0
  %783 = vmatpush.bf16.msra.mxu0 %v596
  %784 = vmatpush.bf16.msra.mxu0 %v595
  %785 = vmatpush.bf16.msra.mxu0 %v594
  %786 = vmatpush.bf16.msra.mxu0 %v593
  %787 = vmatpush.bf16.msra.mxu0 %v592
  %788 = vmatpush.bf16.msra.mxu0 %v591
  %789 = vmatpush.bf16.msra.mxu0 %v590
  %790 = vmatpush.bf16.msra.mxu0 %v589
  %791 = vmatmul.bf16.gmra.mxu0 %v230
  %v792 = vpop.f32.mrf.mxu0
  %v793 = vadd.f32 %v775, %v792
  %v794 = vpop.f32.mrf.mxu0
  %v795 = vadd.f32 %v777, %v794
  %796 = vmatmul.bf16.gmra.mxu0 %v239
  %v797 = vpop.f32.mrf.mxu0
  %v798 = vadd.f32 %v780, %v797
  %v799 = vpop.f32.mrf.mxu0
  %800 = vdwg.mxu0
  %801 = vmatpush.bf16.msra.mxu0 %v604
  %802 = vmatpush.bf16.msra.mxu0 %v603
  %803 = vmatpush.bf16.msra.mxu0 %v602
  %804 = vmatpush.bf16.msra.mxu0 %v601
  %805 = vmatpush.bf16.msra.mxu0 %v600
  %806 = vmatpush.bf16.msra.mxu0 %v599
  %807 = vmatpush.bf16.msra.mxu0 %v598
  %808 = vmatpush.bf16.msra.mxu0 %v597
  %809 = vmatmul.bf16.gmra.mxu0 %v231
  %v810 = vpop.f32.mrf.mxu0
  %v811 = vadd.f32 %v793, %v810
  %v812 = vpop.f32.mrf.mxu0
  %v813 = vadd.f32 %v795, %v812
  %814 = vmatmul.bf16.gmra.mxu0 %v240
  %v815 = vpop.f32.mrf.mxu0
  %v816 = vadd.f32 %v798, %v815
  %v817 = vpop.f32.mrf.mxu0
  %818 = vdwg.mxu0
  %819 = vmatpush.bf16.msra.mxu0 %v612
  %820 = vmatpush.bf16.msra.mxu0 %v611
  %821 = vmatpush.bf16.msra.mxu0 %v610
  %822 = vmatpush.bf16.msra.mxu0 %v609
  %823 = vmatpush.bf16.msra.mxu0 %v608
  %824 = vmatpush.bf16.msra.mxu0 %v607
  %825 = vmatpush.bf16.msra.mxu0 %v606
  %826 = vmatpush.bf16.msra.mxu0 %v605
  %827 = vmatmul.bf16.gmra.mxu0 %v232
  %v828 = vpop.f32.mrf.mxu0
  %v829 = vadd.f32 %v811, %v828
  %v830 = vpop.f32.mrf.mxu0
  %v831 = vadd.f32 %v813, %v830
  %832 = vmatmul.bf16.gmra.mxu0 %v241
  %v833 = vpop.f32.mrf.mxu0
  %v834 = vadd.f32 %v816, %v833
  %v835 = vpop.f32.mrf.mxu0
  %836 = vdwg.mxu0
  %837 = vmatpush.bf16.msra.mxu0 %v620
  %838 = vmatpush.bf16.msra.mxu0 %v619
  %839 = vmatpush.bf16.msra.mxu0 %v618
  %840 = vmatpush.bf16.msra.mxu0 %v617
  %841 = vmatpush.bf16.msra.mxu0 %v616
  %842 = vmatpush.bf16.msra.mxu0 %v615
  %843 = vmatpush.bf16.msra.mxu0 %v614
  %844 = vmatpush.bf16.msra.mxu0 %v613
  %845 = vmatmul.bf16.gmra.mxu0 %v233
  %v846 = vpop.f32.mrf.mxu0
  %v847 = vadd.f32 %v829, %v846
  %v848 = vpop.f32.mrf.mxu0
  %v849 = vadd.f32 %v831, %v848
  %850 = vmatmul.bf16.gmra.mxu0 %v242
  %v851 = vpop.f32.mrf.mxu0
  %v852 = vadd.f32 %v834, %v851
  %v853 = vpop.f32.mrf.mxu0
  %854 = vdwg.mxu0
  %v855 = vpack.c.bf16 %v847, %v847
  %v856 = vpack.c.bf16 %v849, %v849
  %v857 = vpack.c.bf16 %v852, %v852
  %vm858 = vcmask 519168
  %859 = vst.msk [vmem:[%s5] sm:$0xf] %vm858, %v855
  %860 = vst.msk [vmem:[%s5 + $0x4] sm:$0xf] %vm858, %v856
  %vm861 = vcmask 516096
  %862 = vst.msk [vmem:[%s5 + $0x8] sm:$0x1] %vm861, %v857
  // Predicated region
  $region22: #{_lambda_.18} parent=0 // pred_check
    _
  $region23: #{_lambda_.18} parent=0 // pred_check_branch
    %864 = sbr.rel (0) target = $region25
  $region24: #{_lambda_.18} parent=0 // pred_region
    _
  $region25: #{_lambda_.18} parent=0 // pred_fallthru
    _
  // Predicated region
  $region26: #{_lambda_.18} parent=0 // pred_check
    _
  $region27: #{_lambda_.18} parent=0 // pred_check_branch
    %866 = sbr.rel (0) target = $region29
  $region28: #{_lambda_.18} parent=0 // pred_region
    _
  $region29: #{_lambda_.18} parent=0 // pred_fallthru
    _

</llo_original>
